<compile_context>
chip_gen: v6e
topology: v6e:2x2x1
jax: 0.10.0
libtpu: 0.0.40
codegen_flags: <defaults>
</compile_context>

<pallas_src>
import functools

import jax
import jax.numpy as jnp
from jax.experimental import pallas as pl
from jax.experimental.pallas import tpu as pltpu


# Left/right halo width of the padded scratch buffers.  16 keeps the interior
# store sublane-aligned for bf16 (native (16, 128) tiling); only 1 halo column
# is logically needed for the 3x3 "SAME" convs, the rest stays zero.
LPAD = 16


# -----------------------------------------------------------------------------
# Fused kernel: one batch element per grid step, everything stays in VMEM.
# -----------------------------------------------------------------------------
def _decompose_kernel(x_ref, we_ref, be_ref, w1_ref, b1_ref, w2_ref, b2_ref,
                      wd_ref, bd_ref, out_ref, midpad_ref, pada_ref, padb_ref,
                      *, neg_slope):
    # x_ref     : (1, H, W, 1)                 input tile (single channel)
    # we_ref    : (9, Cm)           f32        extract weights, tap-major
    # be_ref    : (1, Cm)           f32        extract bias
    # w1_ref    : (9*Cm, 2*Cm)      bf16       fused conv1 [vis1 | ir1]
    # b1_ref    : (1, 2*Cm)         f32
    # w2_ref    : (9*2*Cm, 2*Cm)    bf16       fused conv2 (block-diagonal)
    # b2_ref    : (1, 2*Cm)         f32
    # wd_ref    : (9*2*Cm, 2)       bf16       fused decode [vis_dec | ir_dec]
    # bd_ref    : (1, 2)            f32
    # out_ref   : (1, H, W, 2)                 channel 0 = vis, channel 1 = ir
    # midpad_ref: (H+2, W+2*LPAD, Cm)   bf16   padded shared mid features
    # pada_ref  : (H+2, W+2*LPAD, 2*Cm) bf16   padded fused x1
    # padb_ref  : (H+2, W+2*LPAD, 2*Cm) bf16   padded fused x2
    _, H, W, _ = x_ref.shape
    Cm = we_ref.shape[1]

    def lrelu(v):
        return jnp.where(v > 0, v, neg_slope * v)

    def mm(p, w_ref):
        # im2col matmul: bf16 inputs, f32 accumulation on the MXU.
        return jax.lax.dot_general(
            p, w_ref[...], dimension_numbers=(((2,), (0,)), ((), ())),
            preferred_element_type=jnp.float32)

    def patches(ref):
        # im2col from a pre-zeroed padded bf16 scratch: one aligned full load,
        # then the 9 shifted 3x3-tap windows lane-concatenated (already bf16,
        # so the concat moves half the bytes of an f32 build).
        full = ref[...]
        return jnp.concatenate(
            [full[dy:dy + H, LPAD - 1 + dx:LPAD - 1 + dx + W, :]
             for dy in range(3) for dx in range(3)],
            axis=-1)                                       # (H, W, 9*C) bf16

    # Scratch is uninitialized (and per-core under "parallel" grid semantics),
    # so the zero halo must be (re)established every grid step.  A full dense
    # zero store is cheap and keeps every later store tile-aligned.
    midpad_ref[...] = jnp.zeros(midpad_ref.shape, midpad_ref.dtype)
    pada_ref[...] = jnp.zeros(pada_ref.shape, pada_ref.dtype)
    padb_ref[...] = jnp.zeros(padb_ref.shape, padb_ref.dtype)

    # ---- extract layer (Cin = 1): skip the MXU, 9 broadcast FMAs on the VPU ----
    x1c = x_ref[0].astype(jnp.float32)                     # (H, W, 1)
    zr = jnp.zeros((1, W, 1), jnp.float32)
    zc = jnp.zeros((H + 2, 1, 1), jnp.float32)
    xp = jnp.concatenate([zc, jnp.concatenate([zr, x1c, zr], axis=0), zc],
                         axis=1)                           # (H+2, W+2, 1)
    we = we_ref[...]                                       # (9, Cm)
    acc = jnp.zeros((H, W, Cm), jnp.float32)
    for t in range(9):
        dy, dx = divmod(t, 3)
        acc = acc + xp[dy:dy + H, dx:dx + W, :] * we[t]
    mid = lrelu(acc + be_ref[...])                         # (H, W, Cm) f32
    midpad_ref[1:H + 1, LPAD:LPAD + W, :] = mid.astype(midpad_ref.dtype)

    # ---- fused conv1 of both branches: Cm -> 2*Cm, one K=9*Cm matmul ----
    x1 = lrelu(mm(patches(midpad_ref), w1_ref) + b1_ref[...])
    pada_ref[1:H + 1, LPAD:LPAD + W, :] = x1.astype(pada_ref.dtype)

    # ---- fused conv2: block-diagonal 2*Cm -> 2*Cm, one K=18*Cm matmul ----
    x2 = lrelu(mm(patches(pada_ref), w2_ref) + b2_ref[...])
    padb_ref[1:H + 1, LPAD:LPAD + W, :] = x2.astype(padb_ref.dtype)

    # ---- fused decode: 2*Cm -> 2 (vis, ir) + Tanh, one K=18*Cm matmul ----
    y = jnp.tanh(mm(patches(padb_ref), wd_ref) + bd_ref[...])  # (H, W, 2) f32
    out_ref[0] = y.astype(out_ref.dtype)


# -----------------------------------------------------------------------------
# Wrapper: NCHW in/out, all weight packing hoisted out of the kernel.
# -----------------------------------------------------------------------------
@jax.jit
def decompose_net_forward(x_nchw, params):
    """DecomposeNet forward. x_nchw: (N, 1, H, W) -> (vis, ir), each (N, 1, H, W)."""
    N, Cin, H, W = x_nchw.shape
    Cm = params["b_e"].shape[0]
    assert Cin == 1, "kernel specializes the module default in_channels=1"
    assert params["w_vd"].shape[-1] == 1 and params["w_id"].shape[-1] == 1

    x_nhwc = jnp.transpose(x_nchw, (0, 2, 3, 1))           # (N, H, W, 1)

    # --- hoisted weight packing (once per forward, not per grid step) ---
    # Extract conv stays f32 (VPU path).
    we = params["w_e"].reshape(9, Cm).astype(jnp.float32)          # tap-major
    be = params["b_e"].reshape(1, Cm).astype(jnp.float32)

    # Fused conv1: output channels = [vis1 (0..Cm-1) | ir1 (Cm..2Cm-1)].
    w1 = jnp.concatenate([params["w_v1"], params["w_i1"]],
                         axis=-1).reshape(9 * Cm, 2 * Cm).astype(jnp.bfloat16)
    b1 = jnp.concatenate([params["b_v1"], params["b_i1"]]
                         ).reshape(1, 2 * Cm).astype(jnp.float32)

    # Fused conv2: block-diagonal so the vis half only sees vis channels and
    # the ir half only sees ir channels (zero blocks occupy idle MXU columns).
    z = jnp.zeros((9, Cm, Cm), jnp.float32)
    wv2 = params["w_v2"].reshape(9, Cm, Cm)
    wi2 = params["w_i2"].reshape(9, Cm, Cm)
    w2 = jnp.concatenate([jnp.concatenate([wv2, z], axis=-1),
                          jnp.concatenate([z, wi2], axis=-1)],
                         axis=1).reshape(18 * Cm, 2 * Cm).astype(jnp.bfloat16)
    b2 = jnp.concatenate([params["b_v2"], params["b_i2"]]
                         ).reshape(1, 2 * Cm).astype(jnp.float32)

    # Fused decode: column 0 = vis (reads vis channels), column 1 = ir.
    z1 = jnp.zeros((9, Cm, 1), jnp.float32)
    wvd = params["w_vd"].reshape(9, Cm, 1)
    wid = params["w_id"].reshape(9, Cm, 1)
    wd = jnp.concatenate([jnp.concatenate([wvd, z1], axis=-1),
                          jnp.concatenate([z1, wid], axis=-1)],
                         axis=1).reshape(18 * Cm, 2).astype(jnp.bfloat16)
    bd = jnp.concatenate([params["b_vd"], params["b_id"]]
                         ).reshape(1, 2).astype(jnp.float32)

    # --- explicit scoped-VMEM limit from the working set (+50% headroom) ---
    pw = W + 2 * LPAD
    bytes_scratch = (H + 2) * pw * (5 * Cm) * 2             # 3 bf16 padded scratches
    bytes_io = 2 * 2 * (H * W * 128 * 4)                    # lane-padded x/out blocks, dbl-buffered
    bytes_patches = H * W * (9 * Cm + 2 * 18 * Cm) * 2      # transient bf16 im2col tensors
    bytes_acts = H * W * (5 * Cm + 2) * 4                   # f32 mid/x1/x2/y values
    est = bytes_scratch + bytes_io + bytes_patches + bytes_acts + (2 << 20)
    vmem_limit = int(min(max(est * 3 // 2, 32 * 1024 * 1024), 96 * 1024 * 1024))

    kernel = functools.partial(_decompose_kernel, neg_slope=0.01)
    out = pl.pallas_call(
        kernel,
        out_shape=jax.ShapeDtypeStruct((N, H, W, 2), x_nchw.dtype),
        grid_spec=pltpu.PrefetchScalarGridSpec(
            num_scalar_prefetch=0,
            grid=(N,),
            in_specs=[
                pl.BlockSpec((1, H, W, 1), lambda n: (n, 0, 0, 0)),    # x
                pl.BlockSpec((9, Cm), lambda n: (0, 0)),               # w_extract
                pl.BlockSpec((1, Cm), lambda n: (0, 0)),               # b_extract
                pl.BlockSpec((9 * Cm, 2 * Cm), lambda n: (0, 0)),      # w1 (bf16)
                pl.BlockSpec((1, 2 * Cm), lambda n: (0, 0)),           # b1
                pl.BlockSpec((18 * Cm, 2 * Cm), lambda n: (0, 0)),     # w2 (bf16)
                pl.BlockSpec((1, 2 * Cm), lambda n: (0, 0)),           # b2
                pl.BlockSpec((18 * Cm, 2), lambda n: (0, 0)),          # w_dec (bf16)
                pl.BlockSpec((1, 2), lambda n: (0, 0)),                # b_dec
            ],
            out_specs=pl.BlockSpec((1, H, W, 2), lambda n: (n, 0, 0, 0)),
            scratch_shapes=[
                pltpu.VMEM((H + 2, pw, Cm), jnp.bfloat16),
                pltpu.VMEM((H + 2, pw, 2 * Cm), jnp.bfloat16),
                pltpu.VMEM((H + 2, pw, 2 * Cm), jnp.bfloat16),
            ],
        ),
        compiler_params=pltpu.CompilerParams(
            dimension_semantics=("parallel",),
            vmem_limit_bytes=vmem_limit,
        ),
    )(x_nhwc, we, be, w1, b1, w2, b2, wd, bd)

    vis = jnp.transpose(out[..., 0:1], (0, 3, 1, 2))        # (N, 1, H, W)
    ir = jnp.transpose(out[..., 1:2], (0, 3, 1, 2))
    return vis, ir


# -----------------------------------------------------------------------------
# Parameter init mimicking PyTorch Conv2d defaults: U(-1/sqrt(fan_in), +...).
# -----------------------------------------------------------------------------
def init_decompose_net_params(key, in_channels=1, mid_channels=16,
                              vis_channels=1, ir_channels=1):
    def conv_init(k, cin, cout):
        kw, kb = jax.random.split(k)
        bound = 1.0 / (cin * 9) ** 0.5
        w = jax.random.uniform(kw, (3, 3, cin, cout), jnp.float32, -bound, bound)
        b = jax.random.uniform(kb, (cout,), jnp.float32, -bound, bound)
        return w, b

    ks = jax.random.split(key, 7)
    p = {}
    p["w_e"], p["b_e"] = conv_init(ks[0], in_channels, mid_channels)
    p["w_v1"], p["b_v1"] = conv_init(ks[1], mid_channels, mid_channels)
    p["w_v2"], p["b_v2"] = conv_init(ks[2], mid_channels, mid_channels)
    p["w_vd"], p["b_vd"] = conv_init(ks[3], mid_channels, vis_channels)
    p["w_i1"], p["b_i1"] = conv_init(ks[4], mid_channels, mid_channels)
    p["w_i2"], p["b_i2"] = conv_init(ks[5], mid_channels, mid_channels)
    p["w_id"], p["b_id"] = conv_init(ks[6], mid_channels, ir_channels)
    return p


# -----------------------------------------------------------------------------
# Pure-JAX (lax.conv) reference for a correctness sanity check.
# -----------------------------------------------------------------------------
def _ref_conv(x, w, b):
    y = jax.lax.conv_general_dilated(
        x, w, (1, 1), "SAME", dimension_numbers=("NHWC", "HWIO", "NHWC"))
    return y + b


def _ref_forward(x_nchw, p):
    lrelu = lambda v: jnp.where(v > 0, v, 0.01 * v)
    x = jnp.transpose(x_nchw, (0, 2, 3, 1))
    mid = lrelu(_ref_conv(x, p["w_e"], p["b_e"]))

    def branch(w1, b1, w2, b2, wd, bd):
        a = lrelu(_ref_conv(mid, w1, b1))
        a = lrelu(_ref_conv(a, w2, b2))
        return jnp.tanh(_ref_conv(a, wd, bd))

    vis = branch(p["w_v1"], p["b_v1"], p["w_v2"], p["b_v2"], p["w_vd"], p["b_vd"])
    ir = branch(p["w_i1"], p["b_i1"], p["w_i2"], p["b_i2"], p["w_id"], p["b_id"])
    return (jnp.transpose(vis, (0, 3, 1, 2)),
            jnp.transpose(ir, (0, 3, 1, 2)))


if __name__ == "__main__":
    key = jax.random.PRNGKey(0)
    k_x, k_p = jax.random.split(key)

    N, Cin, H, W = 2, 1, 16, 16          # module default: in_channels=1
    mid = 16
    x = jax.random.normal(k_x, (N, Cin, H, W), jnp.float32)   # PyTorch-style NCHW
    params = init_decompose_net_params(k_p, in_channels=Cin, mid_channels=mid)

    vis, ir = decompose_net_forward(x, params)
    vis = jax.block_until_ready(vis)
    ir = jax.block_until_ready(ir)

    assert vis.shape == (N, 1, H, W), vis.shape
    assert ir.shape == (N, 1, H, W), ir.shape

    rvis, rir = _ref_forward(x, params)
    rvis = jax.block_until_ready(rvis)
    rir = jax.block_until_ready(rir)

    # bf16 matmul inputs / bf16 activation scratch (f32 accumulation) =>
    # loosened-but-tight tolerance.
    assert jnp.allclose(vis, rvis, atol=2e-2, rtol=2e-2), "vis mismatch vs reference"
    assert jnp.allclose(ir, rir, atol=2e-2, rtol=2e-2), "ir mismatch vs reference"

    print("KERNEL_OK")
</pallas_src>

<mosaic_0001>
module attributes {stable_mosaic.version = 11 : i64} {
  func.func @_decompose_kernel(%arg0: i32, %arg1: memref<1x16x16x1xf32, #tpu.memory_space<vmem>>, %arg2: memref<9x16xf32, #tpu.memory_space<vmem>>, %arg3: memref<1x16xf32, #tpu.memory_space<vmem>>, %arg4: memref<144x32xbf16, #tpu.memory_space<vmem>>, %arg5: memref<1x32xf32, #tpu.memory_space<vmem>>, %arg6: memref<288x32xbf16, #tpu.memory_space<vmem>>, %arg7: memref<1x32xf32, #tpu.memory_space<vmem>>, %arg8: memref<288x2xbf16, #tpu.memory_space<vmem>>, %arg9: memref<1x2xf32, #tpu.memory_space<vmem>>, %arg10: memref<1x16x16x2xf32, #tpu.memory_space<vmem>>, %arg11: memref<18x48x16xbf16, #tpu.memory_space<vmem>>, %arg12: memref<18x48x32xbf16, #tpu.memory_space<vmem>>, %arg13: memref<18x48x32xbf16, #tpu.memory_space<vmem>>) attributes {dimension_semantics = [#tpu.dimension_semantics<parallel>], iteration_bounds = array<i64: 2>, scalar_prefetch = 0 : i64, scratch_operands = 3 : i64, tpu.core_type = #tpu.core_type<tc>, window_params = [{transform_indices = @transform_0, window_bounds = array<i64: 1, 16, 16, 1>}, {pipeline_mode = #tpu.pipeline_mode<synchronous>, transform_indices = @transform_1, window_bounds = array<i64: 9, 16>}, {pipeline_mode = #tpu.pipeline_mode<synchronous>, transform_indices = @transform_2, window_bounds = array<i64: 1, 16>}, {pipeline_mode = #tpu.pipeline_mode<synchronous>, transform_indices = @transform_3, window_bounds = array<i64: 144, 32>}, {pipeline_mode = #tpu.pipeline_mode<synchronous>, transform_indices = @transform_4, window_bounds = array<i64: 1, 32>}, {pipeline_mode = #tpu.pipeline_mode<synchronous>, transform_indices = @transform_5, window_bounds = array<i64: 288, 32>}, {pipeline_mode = #tpu.pipeline_mode<synchronous>, transform_indices = @transform_6, window_bounds = array<i64: 1, 32>}, {pipeline_mode = #tpu.pipeline_mode<synchronous>, transform_indices = @transform_7, window_bounds = array<i64: 288, 2>}, {pipeline_mode = #tpu.pipeline_mode<synchronous>, transform_indices = @transform_8, window_bounds = array<i64: 1, 2>}, {transform_indices = @transform_9, window_bounds = array<i64: 1, 16, 16, 2>}]} {
    %cst = arith.constant 0.000000e+00 : bf16
    %0 = vector.broadcast %cst : bf16 to vector<18x48x16xbf16>
    %c0 = arith.constant 0 : index
    %c0_0 = arith.constant 0 : index
    %c0_1 = arith.constant 0 : index
    %1 = vector.load %arg11[%c0, %c0_0, %c0_1] : memref<18x48x16xbf16, #tpu.memory_space<vmem>>, vector<18x48x16xbf16>
    tpu.vector_store %arg11[%c0, %c0_0, %c0_1], %0 {strides = array<i32>} : memref<18x48x16xbf16, #tpu.memory_space<vmem>>, vector<18x48x16xbf16>,
    %cst_2 = arith.constant 0.000000e+00 : bf16
    %2 = vector.broadcast %cst_2 : bf16 to vector<18x48x32xbf16>
    %c0_3 = arith.constant 0 : index
    %c0_4 = arith.constant 0 : index
    %c0_5 = arith.constant 0 : index
    %3 = vector.load %arg12[%c0_3, %c0_4, %c0_5] : memref<18x48x32xbf16, #tpu.memory_space<vmem>>, vector<18x48x32xbf16>
    tpu.vector_store %arg12[%c0_3, %c0_4, %c0_5], %2 {strides = array<i32>} : memref<18x48x32xbf16, #tpu.memory_space<vmem>>, vector<18x48x32xbf16>,
    %cst_6 = arith.constant 0.000000e+00 : bf16
    %4 = vector.broadcast %cst_6 : bf16 to vector<18x48x32xbf16>
    %c0_7 = arith.constant 0 : index
    %c0_8 = arith.constant 0 : index
    %c0_9 = arith.constant 0 : index
    %5 = vector.load %arg13[%c0_7, %c0_8, %c0_9] : memref<18x48x32xbf16, #tpu.memory_space<vmem>>, vector<18x48x32xbf16>
    tpu.vector_store %arg13[%c0_7, %c0_8, %c0_9], %4 {strides = array<i32>} : memref<18x48x32xbf16, #tpu.memory_space<vmem>>, vector<18x48x32xbf16>,
    %c0_10 = arith.constant 0 : index
    %c0_11 = arith.constant 0 : index
    %c0_12 = arith.constant 0 : index
    %c0_13 = arith.constant 0 : index
    %6 = vector.load %arg1[%c0_10, %c0_11, %c0_12, %c0_13] : memref<1x16x16x1xf32, #tpu.memory_space<vmem>>, vector<1x16x16x1xf32>
    %7 = vector.shape_cast %6 : vector<1x16x16x1xf32> to vector<16x16x1xf32>
    %cst_14 = arith.constant 0.000000e+00 : f32
    %8 = vector.broadcast %cst_14 : f32 to vector<1x16x1xf32>
    %cst_15 = arith.constant 0.000000e+00 : f32
    %9 = vector.broadcast %cst_15 : f32 to vector<18x1x1xf32>
    %10 = tpu.concatenate %8, %7, %8 in 0 : vector<1x16x1xf32>, vector<16x16x1xf32>, vector<1x16x1xf32> -> vector<18x16x1xf32>
    %11 = tpu.concatenate %9, %10, %9 in 1 : vector<18x1x1xf32>, vector<18x16x1xf32>, vector<18x1x1xf32> -> vector<18x18x1xf32>
    %c0_16 = arith.constant 0 : index
    %c0_17 = arith.constant 0 : index
    %12 = vector.load %arg2[%c0_16, %c0_17] : memref<9x16xf32, #tpu.memory_space<vmem>>, vector<9x16xf32>
    %cst_18 = arith.constant 0.000000e+00 : f32
    %13 = vector.broadcast %cst_18 : f32 to vector<16x16x16xf32>
    %14 = vector.extract_strided_slice %11 {offsets = [0, 0, 0], sizes = [16, 16, 1], strides = [1, 1, 1]} : vector<18x18x1xf32> to vector<16x16x1xf32>
    %15 = vector.extract_strided_slice %12 {offsets = [0, 0], sizes = [1, 16], strides = [1, 1]} : vector<9x16xf32> to vector<1x16xf32>
    %16 = vector.shape_cast %15 : vector<1x16xf32> to vector<16xf32>
    %17 = vector.shape_cast %16 : vector<16xf32> to vector<1x1x16xf32>
    %18 = vector.broadcast %14 : vector<16x16x1xf32> to vector<16x16x16xf32>
    %19 = vector.broadcast %17 : vector<1x1x16xf32> to vector<16x16x16xf32>
    %20 = arith.mulf %18, %19 : vector<16x16x16xf32>
    %21 = arith.addf %13, %20 : vector<16x16x16xf32>
    %22 = vector.extract_strided_slice %11 {offsets = [0, 1, 0], sizes = [16, 16, 1], strides = [1, 1, 1]} : vector<18x18x1xf32> to vector<16x16x1xf32>
    %23 = vector.extract_strided_slice %12 {offsets = [1, 0], sizes = [1, 16], strides = [1, 1]} : vector<9x16xf32> to vector<1x16xf32>
    %24 = vector.shape_cast %23 : vector<1x16xf32> to vector<16xf32>
    %25 = vector.shape_cast %24 : vector<16xf32> to vector<1x1x16xf32>
    %26 = vector.broadcast %22 : vector<16x16x1xf32> to vector<16x16x16xf32>
    %27 = vector.broadcast %25 : vector<1x1x16xf32> to vector<16x16x16xf32>
    %28 = arith.mulf %26, %27 : vector<16x16x16xf32>
    %29 = arith.addf %21, %28 : vector<16x16x16xf32>
    %30 = vector.extract_strided_slice %11 {offsets = [0, 2, 0], sizes = [16, 16, 1], strides = [1, 1, 1]} : vector<18x18x1xf32> to vector<16x16x1xf32>
    %31 = vector.extract_strided_slice %12 {offsets = [2, 0], sizes = [1, 16], strides = [1, 1]} : vector<9x16xf32> to vector<1x16xf32>
    %32 = vector.shape_cast %31 : vector<1x16xf32> to vector<16xf32>
    %33 = vector.shape_cast %32 : vector<16xf32> to vector<1x1x16xf32>
    %34 = vector.broadcast %30 : vector<16x16x1xf32> to vector<16x16x16xf32>
    %35 = vector.broadcast %33 : vector<1x1x16xf32> to vector<16x16x16xf32>
    %36 = arith.mulf %34, %35 : vector<16x16x16xf32>
    %37 = arith.addf %29, %36 : vector<16x16x16xf32>
    %38 = vector.extract_strided_slice %11 {offsets = [1, 0, 0], sizes = [16, 16, 1], strides = [1, 1, 1]} : vector<18x18x1xf32> to vector<16x16x1xf32>
    %39 = vector.extract_strided_slice %12 {offsets = [3, 0], sizes = [1, 16], strides = [1, 1]} : vector<9x16xf32> to vector<1x16xf32>
    %40 = vector.shape_cast %39 : vector<1x16xf32> to vector<16xf32>
    %41 = vector.shape_cast %40 : vector<16xf32> to vector<1x1x16xf32>
    %42 = vector.broadcast %38 : vector<16x16x1xf32> to vector<16x16x16xf32>
    %43 = vector.broadcast %41 : vector<1x1x16xf32> to vector<16x16x16xf32>
    %44 = arith.mulf %42, %43 : vector<16x16x16xf32>
    %45 = arith.addf %37, %44 : vector<16x16x16xf32>
    %46 = vector.extract_strided_slice %11 {offsets = [1, 1, 0], sizes = [16, 16, 1], strides = [1, 1, 1]} : vector<18x18x1xf32> to vector<16x16x1xf32>
    %47 = vector.extract_strided_slice %12 {offsets = [4, 0], sizes = [1, 16], strides = [1, 1]} : vector<9x16xf32> to vector<1x16xf32>
    %48 = vector.shape_cast %47 : vector<1x16xf32> to vector<16xf32>
    %49 = vector.shape_cast %48 : vector<16xf32> to vector<1x1x16xf32>
    %50 = vector.broadcast %46 : vector<16x16x1xf32> to vector<16x16x16xf32>
    %51 = vector.broadcast %49 : vector<1x1x16xf32> to vector<16x16x16xf32>
    %52 = arith.mulf %50, %51 : vector<16x16x16xf32>
    %53 = arith.addf %45, %52 : vector<16x16x16xf32>
    %54 = vector.extract_strided_slice %11 {offsets = [1, 2, 0], sizes = [16, 16, 1], strides = [1, 1, 1]} : vector<18x18x1xf32> to vector<16x16x1xf32>
    %55 = vector.extract_strided_slice %12 {offsets = [5, 0], sizes = [1, 16], strides = [1, 1]} : vector<9x16xf32> to vector<1x16xf32>
    %56 = vector.shape_cast %55 : vector<1x16xf32> to vector<16xf32>
    %57 = vector.shape_cast %56 : vector<16xf32> to vector<1x1x16xf32>
    %58 = vector.broadcast %54 : vector<16x16x1xf32> to vector<16x16x16xf32>
    %59 = vector.broadcast %57 : vector<1x1x16xf32> to vector<16x16x16xf32>
    %60 = arith.mulf %58, %59 : vector<16x16x16xf32>
    %61 = arith.addf %53, %60 : vector<16x16x16xf32>
    %62 = vector.extract_strided_slice %11 {offsets = [2, 0, 0], sizes = [16, 16, 1], strides = [1, 1, 1]} : vector<18x18x1xf32> to vector<16x16x1xf32>
    %63 = vector.extract_strided_slice %12 {offsets = [6, 0], sizes = [1, 16], strides = [1, 1]} : vector<9x16xf32> to vector<1x16xf32>
    %64 = vector.shape_cast %63 : vector<1x16xf32> to vector<16xf32>
    %65 = vector.shape_cast %64 : vector<16xf32> to vector<1x1x16xf32>
    %66 = vector.broadcast %62 : vector<16x16x1xf32> to vector<16x16x16xf32>
    %67 = vector.broadcast %65 : vector<1x1x16xf32> to vector<16x16x16xf32>
    %68 = arith.mulf %66, %67 : vector<16x16x16xf32>
    %69 = arith.addf %61, %68 : vector<16x16x16xf32>
    %70 = vector.extract_strided_slice %11 {offsets = [2, 1, 0], sizes = [16, 16, 1], strides = [1, 1, 1]} : vector<18x18x1xf32> to vector<16x16x1xf32>
    %71 = vector.extract_strided_slice %12 {offsets = [7, 0], sizes = [1, 16], strides = [1, 1]} : vector<9x16xf32> to vector<1x16xf32>
    %72 = vector.shape_cast %71 : vector<1x16xf32> to vector<16xf32>
    %73 = vector.shape_cast %72 : vector<16xf32> to vector<1x1x16xf32>
    %74 = vector.broadcast %70 : vector<16x16x1xf32> to vector<16x16x16xf32>
    %75 = vector.broadcast %73 : vector<1x1x16xf32> to vector<16x16x16xf32>
    %76 = arith.mulf %74, %75 : vector<16x16x16xf32>
    %77 = arith.addf %69, %76 : vector<16x16x16xf32>
    %78 = vector.extract_strided_slice %11 {offsets = [2, 2, 0], sizes = [16, 16, 1], strides = [1, 1, 1]} : vector<18x18x1xf32> to vector<16x16x1xf32>
    %79 = vector.extract_strided_slice %12 {offsets = [8, 0], sizes = [1, 16], strides = [1, 1]} : vector<9x16xf32> to vector<1x16xf32>
    %80 = vector.shape_cast %79 : vector<1x16xf32> to vector<16xf32>
    %81 = vector.shape_cast %80 : vector<16xf32> to vector<1x1x16xf32>
    %82 = vector.broadcast %78 : vector<16x16x1xf32> to vector<16x16x16xf32>
    %83 = vector.broadcast %81 : vector<1x1x16xf32> to vector<16x16x16xf32>
    %84 = arith.mulf %82, %83 : vector<16x16x16xf32>
    %85 = arith.addf %77, %84 : vector<16x16x16xf32>
    %c0_19 = arith.constant 0 : index
    %c0_20 = arith.constant 0 : index
    %86 = vector.load %arg3[%c0_19, %c0_20] : memref<1x16xf32, #tpu.memory_space<vmem>>, vector<1x16xf32>
    %87 = vector.shape_cast %86 : vector<1x16xf32> to vector<1x1x16xf32>
    %88 = vector.broadcast %87 : vector<1x1x16xf32> to vector<16x16x16xf32>
    %89 = arith.addf %85, %88 : vector<16x16x16xf32>
    %cst_21 = arith.constant 0.000000e+00 : f32
    %90 = vector.broadcast %cst_21 : f32 to vector<16x16x16xf32>
    %91 = arith.cmpf ogt, %89, %90 : vector<16x16x16xf32>
    %cst_22 = arith.constant 0.00999999977 : f32
    %92 = vector.broadcast %cst_22 : f32 to vector<16x16x16xf32>
    %93 = arith.mulf %92, %89 : vector<16x16x16xf32>
    %94 = arith.select %91, %89, %93 : vector<16x16x16xi1>, vector<16x16x16xf32>
    %95 = arith.truncf %94 : vector<16x16x16xf32> to vector<16x16x16xbf16>
    %c1 = arith.constant 1 : index
    %c16 = arith.constant 16 : index
    %c0_23 = arith.constant 0 : index
    %96 = vector.load %arg11[%c1, %c16, %c0_23] : memref<18x48x16xbf16, #tpu.memory_space<vmem>>, vector<16x16x16xbf16>
    tpu.vector_store %arg11[%c1, %c16, %c0_23], %95 {strides = array<i32>} : memref<18x48x16xbf16, #tpu.memory_space<vmem>>, vector<16x16x16xbf16>,
    %c0_24 = arith.constant 0 : index
    %c0_25 = arith.constant 0 : index
    %c0_26 = arith.constant 0 : index
    %97 = vector.load %arg11[%c0_24, %c0_25, %c0_26] : memref<18x48x16xbf16, #tpu.memory_space<vmem>>, vector<18x48x16xbf16>
    %98 = vector.extract_strided_slice %97 {offsets = [0, 15, 0], sizes = [16, 16, 16], strides = [1, 1, 1]} : vector<18x48x16xbf16> to vector<16x16x16xbf16>
    %99 = vector.extract_strided_slice %97 {offsets = [0, 16, 0], sizes = [16, 16, 16], strides = [1, 1, 1]} : vector<18x48x16xbf16> to vector<16x16x16xbf16>
    %100 = vector.extract_strided_slice %97 {offsets = [0, 17, 0], sizes = [16, 16, 16], strides = [1, 1, 1]} : vector<18x48x16xbf16> to vector<16x16x16xbf16>
    %101 = vector.extract_strided_slice %97 {offsets = [1, 15, 0], sizes = [16, 16, 16], strides = [1, 1, 1]} : vector<18x48x16xbf16> to vector<16x16x16xbf16>
    %102 = vector.extract_strided_slice %97 {offsets = [1, 16, 0], sizes = [16, 16, 16], strides = [1, 1, 1]} : vector<18x48x16xbf16> to vector<16x16x16xbf16>
    %103 = vector.extract_strided_slice %97 {offsets = [1, 17, 0], sizes = [16, 16, 16], strides = [1, 1, 1]} : vector<18x48x16xbf16> to vector<16x16x16xbf16>
    %104 = vector.extract_strided_slice %97 {offsets = [2, 15, 0], sizes = [16, 16, 16], strides = [1, 1, 1]} : vector<18x48x16xbf16> to vector<16x16x16xbf16>
    %105 = vector.extract_strided_slice %97 {offsets = [2, 16, 0], sizes = [16, 16, 16], strides = [1, 1, 1]} : vector<18x48x16xbf16> to vector<16x16x16xbf16>
    %106 = vector.extract_strided_slice %97 {offsets = [2, 17, 0], sizes = [16, 16, 16], strides = [1, 1, 1]} : vector<18x48x16xbf16> to vector<16x16x16xbf16>
    %107 = tpu.concatenate %98, %99, %100, %101, %102, %103, %104, %105, %106 in 2 : vector<16x16x16xbf16>, vector<16x16x16xbf16>, vector<16x16x16xbf16>, vector<16x16x16xbf16>, vector<16x16x16xbf16>, vector<16x16x16xbf16>, vector<16x16x16xbf16>, vector<16x16x16xbf16>, vector<16x16x16xbf16> -> vector<16x16x144xbf16>
    %c0_27 = arith.constant 0 : index
    %c0_28 = arith.constant 0 : index
    %108 = vector.load %arg4[%c0_27, %c0_28] : memref<144x32xbf16, #tpu.memory_space<vmem>>, vector<144x32xbf16>
    %cst_29 = arith.constant dense<0.000000e+00> : vector<16x16x32xf32>
    %109 = tpu.matmul %107, %108, %cst_29 {dimension_numbers = #tpu.dot_dimension_numbers<[2], [0], [0, 1], [1], [0, 0, 0, 1, 1, 1], [], []>} : vector<16x16x144xbf16>, vector<144x32xbf16>, vector<16x16x32xf32> -> vector<16x16x32xf32>
    %c0_30 = arith.constant 0 : index
    %c0_31 = arith.constant 0 : index
    %110 = vector.load %arg5[%c0_30, %c0_31] : memref<1x32xf32, #tpu.memory_space<vmem>>, vector<1x32xf32>
    %111 = vector.shape_cast %110 : vector<1x32xf32> to vector<1x1x32xf32>
    %112 = vector.broadcast %111 : vector<1x1x32xf32> to vector<16x16x32xf32>
    %113 = arith.addf %109, %112 : vector<16x16x32xf32>
    %cst_32 = arith.constant 0.000000e+00 : f32
    %114 = vector.broadcast %cst_32 : f32 to vector<16x16x32xf32>
    %115 = arith.cmpf ogt, %113, %114 : vector<16x16x32xf32>
    %cst_33 = arith.constant 0.00999999977 : f32
    %116 = vector.broadcast %cst_33 : f32 to vector<16x16x32xf32>
    %117 = arith.mulf %116, %113 : vector<16x16x32xf32>
    %118 = arith.select %115, %113, %117 : vector<16x16x32xi1>, vector<16x16x32xf32>
    %119 = arith.truncf %118 : vector<16x16x32xf32> to vector<16x16x32xbf16>
    %c1_34 = arith.constant 1 : index
    %c16_35 = arith.constant 16 : index
    %c0_36 = arith.constant 0 : index
    %120 = vector.load %arg12[%c1_34, %c16_35, %c0_36] : memref<18x48x32xbf16, #tpu.memory_space<vmem>>, vector<16x16x32xbf16>
    tpu.vector_store %arg12[%c1_34, %c16_35, %c0_36], %119 {strides = array<i32>} : memref<18x48x32xbf16, #tpu.memory_space<vmem>>, vector<16x16x32xbf16>,
    %c0_37 = arith.constant 0 : index
    %c0_38 = arith.constant 0 : index
    %c0_39 = arith.constant 0 : index
    %121 = vector.load %arg12[%c0_37, %c0_38, %c0_39] : memref<18x48x32xbf16, #tpu.memory_space<vmem>>, vector<18x48x32xbf16>
    %122 = vector.extract_strided_slice %121 {offsets = [0, 15, 0], sizes = [16, 16, 32], strides = [1, 1, 1]} : vector<18x48x32xbf16> to vector<16x16x32xbf16>
    %123 = vector.extract_strided_slice %121 {offsets = [0, 16, 0], sizes = [16, 16, 32], strides = [1, 1, 1]} : vector<18x48x32xbf16> to vector<16x16x32xbf16>
    %124 = vector.extract_strided_slice %121 {offsets = [0, 17, 0], sizes = [16, 16, 32], strides = [1, 1, 1]} : vector<18x48x32xbf16> to vector<16x16x32xbf16>
    %125 = vector.extract_strided_slice %121 {offsets = [1, 15, 0], sizes = [16, 16, 32], strides = [1, 1, 1]} : vector<18x48x32xbf16> to vector<16x16x32xbf16>
    %126 = vector.extract_strided_slice %121 {offsets = [1, 16, 0], sizes = [16, 16, 32], strides = [1, 1, 1]} : vector<18x48x32xbf16> to vector<16x16x32xbf16>
    %127 = vector.extract_strided_slice %121 {offsets = [1, 17, 0], sizes = [16, 16, 32], strides = [1, 1, 1]} : vector<18x48x32xbf16> to vector<16x16x32xbf16>
    %128 = vector.extract_strided_slice %121 {offsets = [2, 15, 0], sizes = [16, 16, 32], strides = [1, 1, 1]} : vector<18x48x32xbf16> to vector<16x16x32xbf16>
    %129 = vector.extract_strided_slice %121 {offsets = [2, 16, 0], sizes = [16, 16, 32], strides = [1, 1, 1]} : vector<18x48x32xbf16> to vector<16x16x32xbf16>
    %130 = vector.extract_strided_slice %121 {offsets = [2, 17, 0], sizes = [16, 16, 32], strides = [1, 1, 1]} : vector<18x48x32xbf16> to vector<16x16x32xbf16>
    %131 = tpu.concatenate %122, %123, %124, %125, %126, %127, %128, %129, %130 in 2 : vector<16x16x32xbf16>, vector<16x16x32xbf16>, vector<16x16x32xbf16>, vector<16x16x32xbf16>, vector<16x16x32xbf16>, vector<16x16x32xbf16>, vector<16x16x32xbf16>, vector<16x16x32xbf16>, vector<16x16x32xbf16> -> vector<16x16x288xbf16>
    %c0_40 = arith.constant 0 : index
    %c0_41 = arith.constant 0 : index
    %132 = vector.load %arg6[%c0_40, %c0_41] : memref<288x32xbf16, #tpu.memory_space<vmem>>, vector<288x32xbf16>
    %cst_42 = arith.constant dense<0.000000e+00> : vector<16x16x32xf32>
    %133 = tpu.matmul %131, %132, %cst_42 {dimension_numbers = #tpu.dot_dimension_numbers<[2], [0], [0, 1], [1], [0, 0, 0, 1, 1, 1], [], []>} : vector<16x16x288xbf16>, vector<288x32xbf16>, vector<16x16x32xf32> -> vector<16x16x32xf32>
    %c0_43 = arith.constant 0 : index
    %c0_44 = arith.constant 0 : index
    %134 = vector.load %arg7[%c0_43, %c0_44] : memref<1x32xf32, #tpu.memory_space<vmem>>, vector<1x32xf32>
    %135 = vector.shape_cast %134 : vector<1x32xf32> to vector<1x1x32xf32>
    %136 = vector.broadcast %135 : vector<1x1x32xf32> to vector<16x16x32xf32>
    %137 = arith.addf %133, %136 : vector<16x16x32xf32>
    %cst_45 = arith.constant 0.000000e+00 : f32
    %138 = vector.broadcast %cst_45 : f32 to vector<16x16x32xf32>
    %139 = arith.cmpf ogt, %137, %138 : vector<16x16x32xf32>
    %cst_46 = arith.constant 0.00999999977 : f32
    %140 = vector.broadcast %cst_46 : f32 to vector<16x16x32xf32>
    %141 = arith.mulf %140, %137 : vector<16x16x32xf32>
    %142 = arith.select %139, %137, %141 : vector<16x16x32xi1>, vector<16x16x32xf32>
    %143 = arith.truncf %142 : vector<16x16x32xf32> to vector<16x16x32xbf16>
    %c1_47 = arith.constant 1 : index
    %c16_48 = arith.constant 16 : index
    %c0_49 = arith.constant 0 : index
    %144 = vector.load %arg13[%c1_47, %c16_48, %c0_49] : memref<18x48x32xbf16, #tpu.memory_space<vmem>>, vector<16x16x32xbf16>
    tpu.vector_store %arg13[%c1_47, %c16_48, %c0_49], %143 {strides = array<i32>} : memref<18x48x32xbf16, #tpu.memory_space<vmem>>, vector<16x16x32xbf16>,
    %c0_50 = arith.constant 0 : index
    %c0_51 = arith.constant 0 : index
    %c0_52 = arith.constant 0 : index
    %145 = vector.load %arg13[%c0_50, %c0_51, %c0_52] : memref<18x48x32xbf16, #tpu.memory_space<vmem>>, vector<18x48x32xbf16>
    %146 = vector.extract_strided_slice %145 {offsets = [0, 15, 0], sizes = [16, 16, 32], strides = [1, 1, 1]} : vector<18x48x32xbf16> to vector<16x16x32xbf16>
    %147 = vector.extract_strided_slice %145 {offsets = [0, 16, 0], sizes = [16, 16, 32], strides = [1, 1, 1]} : vector<18x48x32xbf16> to vector<16x16x32xbf16>
    %148 = vector.extract_strided_slice %145 {offsets = [0, 17, 0], sizes = [16, 16, 32], strides = [1, 1, 1]} : vector<18x48x32xbf16> to vector<16x16x32xbf16>
    %149 = vector.extract_strided_slice %145 {offsets = [1, 15, 0], sizes = [16, 16, 32], strides = [1, 1, 1]} : vector<18x48x32xbf16> to vector<16x16x32xbf16>
    %150 = vector.extract_strided_slice %145 {offsets = [1, 16, 0], sizes = [16, 16, 32], strides = [1, 1, 1]} : vector<18x48x32xbf16> to vector<16x16x32xbf16>
    %151 = vector.extract_strided_slice %145 {offsets = [1, 17, 0], sizes = [16, 16, 32], strides = [1, 1, 1]} : vector<18x48x32xbf16> to vector<16x16x32xbf16>
    %152 = vector.extract_strided_slice %145 {offsets = [2, 15, 0], sizes = [16, 16, 32], strides = [1, 1, 1]} : vector<18x48x32xbf16> to vector<16x16x32xbf16>
    %153 = vector.extract_strided_slice %145 {offsets = [2, 16, 0], sizes = [16, 16, 32], strides = [1, 1, 1]} : vector<18x48x32xbf16> to vector<16x16x32xbf16>
    %154 = vector.extract_strided_slice %145 {offsets = [2, 17, 0], sizes = [16, 16, 32], strides = [1, 1, 1]} : vector<18x48x32xbf16> to vector<16x16x32xbf16>
    %155 = tpu.concatenate %146, %147, %148, %149, %150, %151, %152, %153, %154 in 2 : vector<16x16x32xbf16>, vector<16x16x32xbf16>, vector<16x16x32xbf16>, vector<16x16x32xbf16>, vector<16x16x32xbf16>, vector<16x16x32xbf16>, vector<16x16x32xbf16>, vector<16x16x32xbf16>, vector<16x16x32xbf16> -> vector<16x16x288xbf16>
    %c0_53 = arith.constant 0 : index
    %c0_54 = arith.constant 0 : index
    %156 = vector.load %arg8[%c0_53, %c0_54] : memref<288x2xbf16, #tpu.memory_space<vmem>>, vector<288x2xbf16>
    %cst_55 = arith.constant dense<0.000000e+00> : vector<16x16x2xf32>
    %157 = tpu.matmul %155, %156, %cst_55 {dimension_numbers = #tpu.dot_dimension_numbers<[2], [0], [0, 1], [1], [0, 0, 0, 1, 1, 1], [], []>} : vector<16x16x288xbf16>, vector<288x2xbf16>, vector<16x16x2xf32> -> vector<16x16x2xf32>
    %c0_56 = arith.constant 0 : index
    %c0_57 = arith.constant 0 : index
    %158 = vector.load %arg9[%c0_56, %c0_57] : memref<1x2xf32, #tpu.memory_space<vmem>>, vector<1x2xf32>
    %159 = vector.shape_cast %158 : vector<1x2xf32> to vector<1x1x2xf32>
    %160 = vector.broadcast %159 : vector<1x1x2xf32> to vector<16x16x2xf32>
    %161 = arith.addf %157, %160 : vector<16x16x2xf32>
    %162 = math.tanh %161 : vector<16x16x2xf32>
    %c0_58 = arith.constant 0 : index
    %c0_59 = arith.constant 0 : index
    %c0_60 = arith.constant 0 : index
    %c0_61 = arith.constant 0 : index
    %163 = vector.load %arg10[%c0_58, %c0_59, %c0_60, %c0_61] : memref<1x16x16x2xf32, #tpu.memory_space<vmem>>, vector<1x16x16x2xf32>
    %164 = vector.shape_cast %163 : vector<1x16x16x2xf32> to vector<16x16x2xf32>
    %165 = vector.shape_cast %162 : vector<16x16x2xf32> to vector<1x16x16x2xf32>
    tpu.vector_store %arg10[%c0_58, %c0_59, %c0_60, %c0_61], %165 {strides = array<i32>} : memref<1x16x16x2xf32, #tpu.memory_space<vmem>>, vector<1x16x16x2xf32>,
    return
  }
  func.func @transform_0(%arg0: i32) -> (i32, i32, i32, i32) {
    %c0_i32 = arith.constant 0 : i32
    %c0_i32_0 = arith.constant 0 : i32
    %c0_i32_1 = arith.constant 0 : i32
    %c0_i32_2 = arith.constant 0 : i32
    return %arg0, %c0_i32, %c0_i32_0, %c0_i32_1 : i32, i32, i32, i32
  }
  func.func @transform_1(%arg0: i32) -> (i32, i32) {
    %c0_i32 = arith.constant 0 : i32
    %c0_i32_0 = arith.constant 0 : i32
    %c0_i32_1 = arith.constant 0 : i32
    return %c0_i32, %c0_i32_0 : i32, i32
  }
  func.func @transform_2(%arg0: i32) -> (i32, i32) {
    %c0_i32 = arith.constant 0 : i32
    %c0_i32_0 = arith.constant 0 : i32
    %c0_i32_1 = arith.constant 0 : i32
    return %c0_i32, %c0_i32_0 : i32, i32
  }
  func.func @transform_3(%arg0: i32) -> (i32, i32) {
    %c0_i32 = arith.constant 0 : i32
    %c0_i32_0 = arith.constant 0 : i32
    %c0_i32_1 = arith.constant 0 : i32
    return %c0_i32, %c0_i32_0 : i32, i32
  }
  func.func @transform_4(%arg0: i32) -> (i32, i32) {
    %c0_i32 = arith.constant 0 : i32
    %c0_i32_0 = arith.constant 0 : i32
    %c0_i32_1 = arith.constant 0 : i32
    return %c0_i32, %c0_i32_0 : i32, i32
  }
  func.func @transform_5(%arg0: i32) -> (i32, i32) {
    %c0_i32 = arith.constant 0 : i32
    %c0_i32_0 = arith.constant 0 : i32
    %c0_i32_1 = arith.constant 0 : i32
    return %c0_i32, %c0_i32_0 : i32, i32
  }
  func.func @transform_6(%arg0: i32) -> (i32, i32) {
    %c0_i32 = arith.constant 0 : i32
    %c0_i32_0 = arith.constant 0 : i32
    %c0_i32_1 = arith.constant 0 : i32
    return %c0_i32, %c0_i32_0 : i32, i32
  }
  func.func @transform_7(%arg0: i32) -> (i32, i32) {
    %c0_i32 = arith.constant 0 : i32
    %c0_i32_0 = arith.constant 0 : i32
    %c0_i32_1 = arith.constant 0 : i32
    return %c0_i32, %c0_i32_0 : i32, i32
  }
  func.func @transform_8(%arg0: i32) -> (i32, i32) {
    %c0_i32 = arith.constant 0 : i32
    %c0_i32_0 = arith.constant 0 : i32
    %c0_i32_1 = arith.constant 0 : i32
    return %c0_i32, %c0_i32_0 : i32, i32
  }
  func.func @transform_9(%arg0: i32) -> (i32, i32, i32, i32) {
    %c0_i32 = arith.constant 0 : i32
    %c0_i32_0 = arith.constant 0 : i32
    %c0_i32_1 = arith.constant 0 : i32
    %c0_i32_2 = arith.constant 0 : i32
    return %arg0, %c0_i32, %c0_i32_0, %c0_i32_1 : i32, i32, i32, i32
  }
}

</mosaic_0001>

<llo_original>
// kernel: decompose_net_forward.1
$region0: #{decompose_net_forward.1}
  #allocation0 [shape = 'u32[]', space=smem, size = 0x4, offset = 0x4, fixed_abs, tag = 'smem constant byte address 0x4 - core index']
  #allocation1 [shape = 'u32[144,128]{1,0:T(1,128)}', space=vmem, size = 0x12000, scoped, tag = 'internal scratch']
  #allocation2 [shape = 'bf16[18,48,16]{2,1,0:T(8,128)(2,1)}', space=vmem, size = 0x36000, scoped, tag = 'scratch operand']
  #allocation3 [shape = 'bf16[18,48,32]{2,1,0:T(8,128)(2,1)}', space=vmem, size = 0x36000, scoped, tag = 'scratch operand']
  #allocation4 [shape = 'bf16[18,48,32]{2,1,0:T(8,128)(2,1)}', space=vmem, size = 0x36000, scoped, tag = 'scratch operand']
  %s0 = inlined_call_operand.vmem [shape: f32[2,16,16,1], index: 0, kind: input, shape index: {}]
  %s1 = inlined_call_operand.vmem [shape: f32[9,16], index: 1, kind: input, shape index: {}]
  %s2 = inlined_call_operand.vmem [shape: f32[1,16], index: 2, kind: input, shape index: {}]
  %s3 = inlined_call_operand.vmem [shape: bf16[144,32], index: 3, kind: input, shape index: {}]
  %s4 = inlined_call_operand.vmem [shape: f32[1,32], index: 4, kind: input, shape index: {}]
  %s5 = inlined_call_operand.vmem [shape: bf16[288,32], index: 5, kind: input, shape index: {}]
  %s6 = inlined_call_operand.vmem [shape: f32[1,32], index: 6, kind: input, shape index: {}]
  %s7 = inlined_call_operand.vmem [shape: bf16[288,2], index: 7, kind: input, shape index: {}]
  %s8 = inlined_call_operand.vmem [shape: f32[1,2], index: 8, kind: input, shape index: {}]
  %s9 = inlined_call_operand.vmem [shape: f32[2,16,16,2], index: 9, kind: output, shape index: {}]
  %s10 = sld [smem:[#allocation0]]
  $region69: #{decompose_net_forward.1} parent=0
    _
  %s12 = ssub.s32 1, %s10
  %s13 = scalar_select 0, %s12, %s10
  loop: start=0, step=1, limit=4
  $region2: #{decompose_net_forward.1} parent=0 // loop_pre_header
    _
  $region3: #{decompose_net_forward.1} parent=0 // loop_header
    %s15 = sphi 0, %s19
    %p16 = scmp.ge.s32.totalorder %s15, 4
    %s25 = sphi 0, %s27
    %s28 = sphi 0, %s25
    %s29 = sphi 0, %s28
    %s45 = sphi 0, %s29
    %s49 = sphi 0, %s49
    %s51 = sphi 0, %s49
    %s52 = sphi 0, %s51
    %s66 = sphi 0, %s52
    %s70 = sphi 0, %s70
    %s72 = sphi 0, %s70
    %s73 = sphi 0, %s72
    %s87 = sphi 0, %s73
    %s91 = sphi 0, %s91
    %s93 = sphi 0, %s91
    %s94 = sphi 0, %s93
    %s108 = sphi 0, %s94
    %s112 = sphi 0, %s112
    %s114 = sphi 0, %s112
    %s115 = sphi 0, %s114
    %s129 = sphi 0, %s115
    %s133 = sphi 0, %s133
    %s135 = sphi 0, %s133
    %s136 = sphi 0, %s135
    %s150 = sphi 0, %s136
    %s154 = sphi 0, %s154
    %s156 = sphi 0, %s154
    %s157 = sphi 0, %s156
    %s171 = sphi 0, %s157
    %s175 = sphi 0, %s175
    %s177 = sphi 0, %s175
    %s178 = sphi 0, %s177
    %s192 = sphi 0, %s178
    %s196 = sphi 0, %s196
    %s198 = sphi 0, %s196
    %s199 = sphi 0, %s198
    %s213 = sphi 0, %s199
    %s219 = sphi 0, %s221
    %s222 = sphi 0, %s219
    %s223 = sphi 0, %s222
    %s239 = sphi 0, %s223
  $region4: #{decompose_net_forward.1} parent=0 // loop_header_branch
    %18 = sbr.rel (%p16) target = $region8
  $region5: #{decompose_net_forward.1} parent=0 // loop_body
    %s20 = ssub.s32 %s15, 1
    %s21 = ssub.s32 %s15, 2
    %s22 = sadd.s32 %s15, 1
    %s23 = ssub.s32 %s15, %s22
    %p24 = scmp.eq.s32.totalorder %s23, 0
    %s26 = sadd.s32 %s25, 1
    %s27 = scalar_select %p24, %s25, %s26
    %p30 = pneg %p24
    %p31 = scmp.eq.s32.totalorder %s15, 1
    %p32 = por %p30, %p31
    %p33 = scmp.ne.s32.totalorder %s25, %s28
    %p34 = scmp.eq.s32.totalorder %s15, 0
    %p35 = por %p33, %p34
    %p36 = scmp.ne.s32.totalorder %s25, %s28
    %p37 = scmp.eq.s32.totalorder %s20, 1
    %p38 = por %p36, %p37
    %p39 = scmp.ne.s32.totalorder %s28, %s29
    %p40 = scmp.eq.s32.totalorder %s20, 0
    %p41 = por %p39, %p40
    %p42 = scmp.ne.s32.totalorder %s28, %s29
    %p43 = scmp.eq.s32.totalorder %s21, 1
    %p44 = por %p42, %p43
    %p46 = scmp.ne.s32.totalorder %s29, %s45
    %p47 = scmp.eq.s32.totalorder %s21, 0
    %p48 = por %p46, %p47
    %s50 = sadd.s32 %s49, 1
    %p53 = scmp.eq.s32.totalorder %s15, 1
    %p54 = scmp.ne.s32.totalorder %s49, %s51
    %p55 = scmp.eq.s32.totalorder %s15, 0
    %p56 = por %p54, %p55
    %p57 = scmp.ne.s32.totalorder %s49, %s51
    %p58 = scmp.eq.s32.totalorder %s20, 1
    %p59 = por %p57, %p58
    %p60 = scmp.ne.s32.totalorder %s51, %s52
    %p61 = scmp.eq.s32.totalorder %s20, 0
    %p62 = por %p60, %p61
    %p63 = scmp.ne.s32.totalorder %s51, %s52
    %p64 = scmp.eq.s32.totalorder %s21, 1
    %p65 = por %p63, %p64
    %p67 = scmp.ne.s32.totalorder %s52, %s66
    %p68 = scmp.eq.s32.totalorder %s21, 0
    %p69 = por %p67, %p68
    %s71 = sadd.s32 %s70, 1
    %p74 = scmp.eq.s32.totalorder %s15, 1
    %p75 = scmp.ne.s32.totalorder %s70, %s72
    %p76 = scmp.eq.s32.totalorder %s15, 0
    %p77 = por %p75, %p76
    %p78 = scmp.ne.s32.totalorder %s70, %s72
    %p79 = scmp.eq.s32.totalorder %s20, 1
    %p80 = por %p78, %p79
    %p81 = scmp.ne.s32.totalorder %s72, %s73
    %p82 = scmp.eq.s32.totalorder %s20, 0
    %p83 = por %p81, %p82
    %p84 = scmp.ne.s32.totalorder %s72, %s73
    %p85 = scmp.eq.s32.totalorder %s21, 1
    %p86 = por %p84, %p85
    %p88 = scmp.ne.s32.totalorder %s73, %s87
    %p89 = scmp.eq.s32.totalorder %s21, 0
    %p90 = por %p88, %p89
    %s92 = sadd.s32 %s91, 1
    %p95 = scmp.eq.s32.totalorder %s15, 1
    %p96 = scmp.ne.s32.totalorder %s91, %s93
    %p97 = scmp.eq.s32.totalorder %s15, 0
    %p98 = por %p96, %p97
    %p99 = scmp.ne.s32.totalorder %s91, %s93
    %p100 = scmp.eq.s32.totalorder %s20, 1
    %p101 = por %p99, %p100
    %p102 = scmp.ne.s32.totalorder %s93, %s94
    %p103 = scmp.eq.s32.totalorder %s20, 0
    %p104 = por %p102, %p103
    %p105 = scmp.ne.s32.totalorder %s93, %s94
    %p106 = scmp.eq.s32.totalorder %s21, 1
    %p107 = por %p105, %p106
    %p109 = scmp.ne.s32.totalorder %s94, %s108
    %p110 = scmp.eq.s32.totalorder %s21, 0
    %p111 = por %p109, %p110
    %s113 = sadd.s32 %s112, 1
    %p116 = scmp.eq.s32.totalorder %s15, 1
    %p117 = scmp.ne.s32.totalorder %s112, %s114
    %p118 = scmp.eq.s32.totalorder %s15, 0
    %p119 = por %p117, %p118
    %p120 = scmp.ne.s32.totalorder %s112, %s114
    %p121 = scmp.eq.s32.totalorder %s20, 1
    %p122 = por %p120, %p121
    %p123 = scmp.ne.s32.totalorder %s114, %s115
    %p124 = scmp.eq.s32.totalorder %s20, 0
    %p125 = por %p123, %p124
    %p126 = scmp.ne.s32.totalorder %s114, %s115
    %p127 = scmp.eq.s32.totalorder %s21, 1
    %p128 = por %p126, %p127
    %p130 = scmp.ne.s32.totalorder %s115, %s129
    %p131 = scmp.eq.s32.totalorder %s21, 0
    %p132 = por %p130, %p131
    %s134 = sadd.s32 %s133, 1
    %p137 = scmp.eq.s32.totalorder %s15, 1
    %p138 = scmp.ne.s32.totalorder %s133, %s135
    %p139 = scmp.eq.s32.totalorder %s15, 0
    %p140 = por %p138, %p139
    %p141 = scmp.ne.s32.totalorder %s133, %s135
    %p142 = scmp.eq.s32.totalorder %s20, 1
    %p143 = por %p141, %p142
    %p144 = scmp.ne.s32.totalorder %s135, %s136
    %p145 = scmp.eq.s32.totalorder %s20, 0
    %p146 = por %p144, %p145
    %p147 = scmp.ne.s32.totalorder %s135, %s136
    %p148 = scmp.eq.s32.totalorder %s21, 1
    %p149 = por %p147, %p148
    %p151 = scmp.ne.s32.totalorder %s136, %s150
    %p152 = scmp.eq.s32.totalorder %s21, 0
    %p153 = por %p151, %p152
    %s155 = sadd.s32 %s154, 1
    %p158 = scmp.eq.s32.totalorder %s15, 1
    %p159 = scmp.ne.s32.totalorder %s154, %s156
    %p160 = scmp.eq.s32.totalorder %s15, 0
    %p161 = por %p159, %p160
    %p162 = scmp.ne.s32.totalorder %s154, %s156
    %p163 = scmp.eq.s32.totalorder %s20, 1
    %p164 = por %p162, %p163
    %p165 = scmp.ne.s32.totalorder %s156, %s157
    %p166 = scmp.eq.s32.totalorder %s20, 0
    %p167 = por %p165, %p166
    %p168 = scmp.ne.s32.totalorder %s156, %s157
    %p169 = scmp.eq.s32.totalorder %s21, 1
    %p170 = por %p168, %p169
    %p172 = scmp.ne.s32.totalorder %s157, %s171
    %p173 = scmp.eq.s32.totalorder %s21, 0
    %p174 = por %p172, %p173
    %s176 = sadd.s32 %s175, 1
    %p179 = scmp.eq.s32.totalorder %s15, 1
    %p180 = scmp.ne.s32.totalorder %s175, %s177
    %p181 = scmp.eq.s32.totalorder %s15, 0
    %p182 = por %p180, %p181
    %p183 = scmp.ne.s32.totalorder %s175, %s177
    %p184 = scmp.eq.s32.totalorder %s20, 1
    %p185 = por %p183, %p184
    %p186 = scmp.ne.s32.totalorder %s177, %s178
    %p187 = scmp.eq.s32.totalorder %s20, 0
    %p188 = por %p186, %p187
    %p189 = scmp.ne.s32.totalorder %s177, %s178
    %p190 = scmp.eq.s32.totalorder %s21, 1
    %p191 = por %p189, %p190
    %p193 = scmp.ne.s32.totalorder %s178, %s192
    %p194 = scmp.eq.s32.totalorder %s21, 0
    %p195 = por %p193, %p194
    %s197 = sadd.s32 %s196, 1
    %p200 = scmp.eq.s32.totalorder %s15, 1
    %p201 = scmp.ne.s32.totalorder %s196, %s198
    %p202 = scmp.eq.s32.totalorder %s15, 0
    %p203 = por %p201, %p202
    %p204 = scmp.ne.s32.totalorder %s196, %s198
    %p205 = scmp.eq.s32.totalorder %s20, 1
    %p206 = por %p204, %p205
    %p207 = scmp.ne.s32.totalorder %s198, %s199
    %p208 = scmp.eq.s32.totalorder %s20, 0
    %p209 = por %p207, %p208
    %p210 = scmp.ne.s32.totalorder %s198, %s199
    %p211 = scmp.eq.s32.totalorder %s21, 1
    %p212 = por %p210, %p211
    %p214 = scmp.ne.s32.totalorder %s199, %s213
    %p215 = scmp.eq.s32.totalorder %s21, 0
    %p216 = por %p214, %p215
    %s217 = ssub.s32 %s15, %s22
    %p218 = scmp.eq.s32.totalorder %s217, 0
    %s220 = sadd.s32 %s219, 1
    %s221 = scalar_select %p218, %s219, %s220
    %p224 = pneg %p218
    %p225 = scmp.eq.s32.totalorder %s15, 1
    %p226 = por %p224, %p225
    %p227 = scmp.ne.s32.totalorder %s219, %s222
    %p228 = scmp.eq.s32.totalorder %s15, 0
    %p229 = por %p227, %p228
    %p230 = scmp.ne.s32.totalorder %s219, %s222
    %p231 = scmp.eq.s32.totalorder %s20, 1
    %p232 = por %p230, %p231
    %p233 = scmp.ne.s32.totalorder %s222, %s223
    %p234 = scmp.eq.s32.totalorder %s20, 0
    %p235 = por %p233, %p234
    %p236 = scmp.ne.s32.totalorder %s222, %s223
    %p237 = scmp.eq.s32.totalorder %s21, 1
    %p238 = por %p236, %p237
    %p240 = scmp.ne.s32.totalorder %s223, %s239
    %p241 = scmp.eq.s32.totalorder %s21, 0
    %p242 = por %p240, %p241
    %p243 = scmp.le.s32.totalorder 1, %s15
    %p244 = scmp.lt.s32.totalorder %s15, 3
    %p245 = pnand %p243, %p244
    %p246 = pneg %p245
    // Predicated region
    $region9: #{decompose_net_forward.1} parent=5 // pred_check
      _
    $region10: #{decompose_net_forward.1} parent=5 // pred_check_branch
      %248 = sbr.rel (%p245) target = $region12
    $region11: #{decompose_net_forward.1} parent=5 // pred_region
      %s249 = ssub.s32 %s15, 1
      // Predicated region
      $region13: #{decompose_net_forward.1} parent=11 // pred_check
        %p250 = pneg %p62
      $region14: #{decompose_net_forward.1} parent=11 // pred_check_branch
        %252 = sbr.rel (%p250) target = $region16
      $region15: #{decompose_net_forward.1} parent=11 // pred_region
        _
      $region16: #{decompose_net_forward.1} parent=11 // pred_fallthru
        _
      // Predicated region
      $region17: #{decompose_net_forward.1} parent=11 // pred_check
        %p253 = pneg %p83
      $region18: #{decompose_net_forward.1} parent=11 // pred_check_branch
        %255 = sbr.rel (%p253) target = $region20
      $region19: #{decompose_net_forward.1} parent=11 // pred_region
        _
      $region20: #{decompose_net_forward.1} parent=11 // pred_fallthru
        _
      // Predicated region
      $region21: #{decompose_net_forward.1} parent=11 // pred_check
        %p256 = pneg %p104
      $region22: #{decompose_net_forward.1} parent=11 // pred_check_branch
        %258 = sbr.rel (%p256) target = $region24
      $region23: #{decompose_net_forward.1} parent=11 // pred_region
        _
      $region24: #{decompose_net_forward.1} parent=11 // pred_fallthru
        _
      // Predicated region
      $region25: #{decompose_net_forward.1} parent=11 // pred_check
        %p259 = pneg %p125
      $region26: #{decompose_net_forward.1} parent=11 // pred_check_branch
        %261 = sbr.rel (%p259) target = $region28
      $region27: #{decompose_net_forward.1} parent=11 // pred_region
        _
      $region28: #{decompose_net_forward.1} parent=11 // pred_fallthru
        _
      // Predicated region
      $region29: #{decompose_net_forward.1} parent=11 // pred_check
        %p262 = pneg %p146
      $region30: #{decompose_net_forward.1} parent=11 // pred_check_branch
        %264 = sbr.rel (%p262) target = $region32
      $region31: #{decompose_net_forward.1} parent=11 // pred_region
        _
      $region32: #{decompose_net_forward.1} parent=11 // pred_fallthru
        _
      // Predicated region
      $region33: #{decompose_net_forward.1} parent=11 // pred_check
        %p265 = pneg %p167
      $region34: #{decompose_net_forward.1} parent=11 // pred_check_branch
        %267 = sbr.rel (%p265) target = $region36
      $region35: #{decompose_net_forward.1} parent=11 // pred_region
        _
      $region36: #{decompose_net_forward.1} parent=11 // pred_fallthru
        _
      // Predicated region
      $region37: #{decompose_net_forward.1} parent=11 // pred_check
        %p268 = pneg %p188
      $region38: #{decompose_net_forward.1} parent=11 // pred_check_branch
        %270 = sbr.rel (%p268) target = $region40
      $region39: #{decompose_net_forward.1} parent=11 // pred_region
        _
      $region40: #{decompose_net_forward.1} parent=11 // pred_fallthru
        _
      // Predicated region
      $region41: #{decompose_net_forward.1} parent=11 // pred_check
        %p271 = pneg %p209
      $region42: #{decompose_net_forward.1} parent=11 // pred_check_branch
        %273 = sbr.rel (%p271) target = $region44
      $region43: #{decompose_net_forward.1} parent=11 // pred_region
        _
      $region44: #{decompose_net_forward.1} parent=11 // pred_fallthru
        _
    $region12: #{decompose_net_forward.1} parent=5 // pred_fallthru
      _
    %p274 = scmp.lt.s32.totalorder %s15, 2
    // Predicated region
    $region45: #{decompose_net_forward.1} parent=5 // pred_check
      %p275 = pneg %p274
    $region46: #{decompose_net_forward.1} parent=5 // pred_check_branch
      %277 = sbr.rel (%p275) target = $region48
    $region47: #{decompose_net_forward.1} parent=5 // pred_region
      // Predicated region
      $region49: #{decompose_net_forward.1} parent=47 // pred_check
        %p278 = pneg %p35
      $region50: #{decompose_net_forward.1} parent=47 // pred_check_branch
        %280 = sbr.rel (%p278) target = $region52
      $region51: #{decompose_net_forward.1} parent=47 // pred_region
        %p281 = scmp.lt.s32.totalorder %s15, 1
        %s282 = scalar_select %p281, %s15, 1
        %s283 = smul.addr %s282, 32
        %s284 = smul.addr %s283, 8
        %s285 = scalar_lea.vmem %s0, %s284
      $region52: #{decompose_net_forward.1} parent=47 // pred_fallthru
        _
    $region48: #{decompose_net_forward.1} parent=5 // pred_fallthru
      _
    %p286 = scmp.le.s32.totalorder 1, %s15
    %p287 = scmp.lt.s32.totalorder %s15, 3
    %p288 = pnand %p286, %p287
    %p289 = pneg %p288
    // Predicated region
    $region53: #{decompose_net_forward.1} parent=5 // pred_check
      _
    $region54: #{decompose_net_forward.1} parent=5 // pred_check_branch
      %291 = sbr.rel (%p288) target = $region56
    $region55: #{decompose_net_forward.1} parent=5 // pred_region
      %s292 = ssub.s32 %s15, 1
      %p293 = scmp.lt.s32.totalorder %s20, 1
      %s294 = scalar_select %p293, %s20, 1
      %s295 = smul.addr %s294, 32
      %s296 = smul.addr %s295, 8
      %s297 = scalar_lea.vmem %s0, %s296
      %p298 = pneg %p41
      %p299 = pneg %p38
      %p300 = pneg %p62
      %p301 = pneg %p59
      %p302 = pneg %p83
      %p303 = pneg %p80
      %p304 = pneg %p104
      %p305 = pneg %p101
      %p306 = pneg %p125
      %p307 = pneg %p122
      %p308 = pneg %p146
      %p309 = pneg %p143
      %p310 = pneg %p167
      %p311 = pneg %p164
      %p312 = pneg %p188
      %p313 = pneg %p185
      %p314 = pneg %p209
      %p315 = pneg %p206
      %p316 = pneg %p235
      %p317 = pneg %p232
      %p318 = scmp.lt.s32.totalorder %s20, 1
      %s319 = scalar_select %p318, %s20, 1
      %s320 = smul.addr %s319, 32
      %s321 = smul.addr %s320, 8
      %s322 = scalar_lea.vmem %s9, %s321
      %p323 = scmp.lt.s32.totalorder %s20, 1
      %s324 = scalar_select %p323, %s20, 1
      %s325 = smul.addr %s324, 32
      %s326 = smul.addr %s325, 8
      %s327 = scalar_lea.vmem %s0, %s326
      %p328 = scmp.lt.s32.totalorder %s20, 1
      %s329 = scalar_select %p328, %s20, 1
      %s330 = smul.addr %s329, 32
      %s331 = smul.addr %s330, 8
      %s332 = scalar_lea.vmem %s9, %s331
      %vm334 = vcmask 125952
      %335 = vst.msk [vmem:[#allocation2] sm:$0xf] %vm334, 0
      %336 = vst.msk [vmem:[#allocation2 + $0x4] sm:$0xf] %vm334, 0
      %337 = vst.msk [vmem:[#allocation2 + $0x8] sm:$0xf] %vm334, 0
      %338 = vst.msk [vmem:[#allocation2 + $0xc] sm:$0xf] %vm334, 0
      %339 = vst.msk [vmem:[#allocation2 + $0x10] sm:$0xf] %vm334, 0
      %340 = vst.msk [vmem:[#allocation2 + $0x14] sm:$0xf] %vm334, 0
      %341 = vst.msk [vmem:[#allocation2 + $0x18] sm:$0xf] %vm334, 0
      %342 = vst.msk [vmem:[#allocation2 + $0x1c] sm:$0xf] %vm334, 0
      %343 = vst.msk [vmem:[#allocation2 + $0x20] sm:$0xf] %vm334, 0
      %344 = vst.msk [vmem:[#allocation2 + $0x24] sm:$0xf] %vm334, 0
      %345 = vst.msk [vmem:[#allocation2 + $0x28] sm:$0xf] %vm334, 0
      %346 = vst.msk [vmem:[#allocation2 + $0x2c] sm:$0xf] %vm334, 0
      %347 = vst.msk [vmem:[#allocation2 + $0x30] sm:$0xf] %vm334, 0
      %348 = vst.msk [vmem:[#allocation2 + $0x34] sm:$0xf] %vm334, 0
      %349 = vst.msk [vmem:[#allocation2 + $0x38] sm:$0xf] %vm334, 0
      %350 = vst.msk [vmem:[#allocation2 + $0x3c] sm:$0xf] %vm334, 0
      %351 = vst.msk [vmem:[#allocation2 + $0x40] sm:$0xf] %vm334, 0
      %352 = vst.msk [vmem:[#allocation2 + $0x44] sm:$0xf] %vm334, 0
      %353 = vst.msk [vmem:[#allocation2 + $0x48] sm:$0xf] %vm334, 0
      %354 = vst.msk [vmem:[#allocation2 + $0x4c] sm:$0xf] %vm334, 0
      %355 = vst.msk [vmem:[#allocation2 + $0x50] sm:$0xf] %vm334, 0
      %356 = vst.msk [vmem:[#allocation2 + $0x54] sm:$0xf] %vm334, 0
      %357 = vst.msk [vmem:[#allocation2 + $0x58] sm:$0xf] %vm334, 0
      %358 = vst.msk [vmem:[#allocation2 + $0x5c] sm:$0xf] %vm334, 0
      %359 = vst.msk [vmem:[#allocation2 + $0x60] sm:$0xf] %vm334, 0
      %360 = vst.msk [vmem:[#allocation2 + $0x64] sm:$0xf] %vm334, 0
      %361 = vst.msk [vmem:[#allocation2 + $0x68] sm:$0xf] %vm334, 0
      %362 = vst.msk [vmem:[#allocation2 + $0x6c] sm:$0xf] %vm334, 0
      %363 = vst.msk [vmem:[#allocation2 + $0x70] sm:$0xf] %vm334, 0
      %364 = vst.msk [vmem:[#allocation2 + $0x74] sm:$0xf] %vm334, 0
      %365 = vst.msk [vmem:[#allocation2 + $0x78] sm:$0xf] %vm334, 0
      %366 = vst.msk [vmem:[#allocation2 + $0x7c] sm:$0xf] %vm334, 0
      %367 = vst.msk [vmem:[#allocation2 + $0x80] sm:$0xf] %vm334, 0
      %368 = vst.msk [vmem:[#allocation2 + $0x84] sm:$0xf] %vm334, 0
      %369 = vst.msk [vmem:[#allocation2 + $0x88] sm:$0xf] %vm334, 0
      %370 = vst.msk [vmem:[#allocation2 + $0x8c] sm:$0xf] %vm334, 0
      %371 = vst.msk [vmem:[#allocation2 + $0x90] sm:$0xf] %vm334, 0
      %372 = vst.msk [vmem:[#allocation2 + $0x94] sm:$0xf] %vm334, 0
      %373 = vst.msk [vmem:[#allocation2 + $0x98] sm:$0xf] %vm334, 0
      %374 = vst.msk [vmem:[#allocation2 + $0x9c] sm:$0xf] %vm334, 0
      %375 = vst.msk [vmem:[#allocation2 + $0xa0] sm:$0xf] %vm334, 0
      %376 = vst.msk [vmem:[#allocation2 + $0xa4] sm:$0xf] %vm334, 0
      %377 = vst.msk [vmem:[#allocation2 + $0xa8] sm:$0xf] %vm334, 0
      %378 = vst.msk [vmem:[#allocation2 + $0xac] sm:$0xf] %vm334, 0
      %379 = vst.msk [vmem:[#allocation2 + $0xb0] sm:$0xf] %vm334, 0
      %380 = vst.msk [vmem:[#allocation2 + $0xb4] sm:$0xf] %vm334, 0
      %381 = vst.msk [vmem:[#allocation2 + $0xb8] sm:$0xf] %vm334, 0
      %382 = vst.msk [vmem:[#allocation2 + $0xbc] sm:$0xf] %vm334, 0
      %383 = vst.msk [vmem:[#allocation2 + $0xc0] sm:$0xf] %vm334, 0
      %384 = vst.msk [vmem:[#allocation2 + $0xc4] sm:$0xf] %vm334, 0
      %385 = vst.msk [vmem:[#allocation2 + $0xc8] sm:$0xf] %vm334, 0
      %386 = vst.msk [vmem:[#allocation2 + $0xcc] sm:$0xf] %vm334, 0
      %387 = vst.msk [vmem:[#allocation2 + $0xd0] sm:$0xf] %vm334, 0
      %388 = vst.msk [vmem:[#allocation2 + $0xd4] sm:$0xf] %vm334, 0
      %389 = vst.msk [vmem:[#allocation2 + $0xd8] sm:$0xf] %vm334, 0
      %390 = vst.msk [vmem:[#allocation2 + $0xdc] sm:$0xf] %vm334, 0
      %391 = vst.msk [vmem:[#allocation2 + $0xe0] sm:$0xf] %vm334, 0
      %392 = vst.msk [vmem:[#allocation2 + $0xe4] sm:$0xf] %vm334, 0
      %393 = vst.msk [vmem:[#allocation2 + $0xe8] sm:$0xf] %vm334, 0
      %394 = vst.msk [vmem:[#allocation2 + $0xec] sm:$0xf] %vm334, 0
      %395 = vst.msk [vmem:[#allocation2 + $0xf0] sm:$0xf] %vm334, 0
      %396 = vst.msk [vmem:[#allocation2 + $0xf4] sm:$0xf] %vm334, 0
      %397 = vst.msk [vmem:[#allocation2 + $0xf8] sm:$0xf] %vm334, 0
      %398 = vst.msk [vmem:[#allocation2 + $0xfc] sm:$0xf] %vm334, 0
      %399 = vst.msk [vmem:[#allocation2 + $0x100] sm:$0xf] %vm334, 0
      %400 = vst.msk [vmem:[#allocation2 + $0x104] sm:$0xf] %vm334, 0
      %401 = vst.msk [vmem:[#allocation2 + $0x108] sm:$0xf] %vm334, 0
      %402 = vst.msk [vmem:[#allocation2 + $0x10c] sm:$0xf] %vm334, 0
      %403 = vst.msk [vmem:[#allocation2 + $0x110] sm:$0xf] %vm334, 0
      %404 = vst.msk [vmem:[#allocation2 + $0x114] sm:$0xf] %vm334, 0
      %405 = vst.msk [vmem:[#allocation2 + $0x118] sm:$0xf] %vm334, 0
      %406 = vst.msk [vmem:[#allocation2 + $0x11c] sm:$0xf] %vm334, 0
      %407 = vst.msk [vmem:[#allocation2 + $0x120] sm:$0xf] %vm334, 0
      %408 = vst.msk [vmem:[#allocation2 + $0x124] sm:$0xf] %vm334, 0
      %409 = vst.msk [vmem:[#allocation2 + $0x128] sm:$0xf] %vm334, 0
      %410 = vst.msk [vmem:[#allocation2 + $0x12c] sm:$0xf] %vm334, 0
      %411 = vst.msk [vmem:[#allocation2 + $0x130] sm:$0xf] %vm334, 0
      %412 = vst.msk [vmem:[#allocation2 + $0x134] sm:$0xf] %vm334, 0
      %413 = vst.msk [vmem:[#allocation2 + $0x138] sm:$0xf] %vm334, 0
      %414 = vst.msk [vmem:[#allocation2 + $0x13c] sm:$0xf] %vm334, 0
      %415 = vst.msk [vmem:[#allocation2 + $0x140] sm:$0xf] %vm334, 0
      %416 = vst.msk [vmem:[#allocation2 + $0x144] sm:$0xf] %vm334, 0
      %417 = vst.msk [vmem:[#allocation2 + $0x148] sm:$0xf] %vm334, 0
      %418 = vst.msk [vmem:[#allocation2 + $0x14c] sm:$0xf] %vm334, 0
      %419 = vst.msk [vmem:[#allocation2 + $0x150] sm:$0xf] %vm334, 0
      %420 = vst.msk [vmem:[#allocation2 + $0x154] sm:$0xf] %vm334, 0
      %421 = vst.msk [vmem:[#allocation2 + $0x158] sm:$0xf] %vm334, 0
      %422 = vst.msk [vmem:[#allocation2 + $0x15c] sm:$0xf] %vm334, 0
      %423 = vst.msk [vmem:[#allocation2 + $0x160] sm:$0xf] %vm334, 0
      %424 = vst.msk [vmem:[#allocation2 + $0x164] sm:$0xf] %vm334, 0
      %425 = vst.msk [vmem:[#allocation2 + $0x168] sm:$0xf] %vm334, 0
      %426 = vst.msk [vmem:[#allocation2 + $0x16c] sm:$0xf] %vm334, 0
      %427 = vst.msk [vmem:[#allocation2 + $0x170] sm:$0xf] %vm334, 0
      %428 = vst.msk [vmem:[#allocation2 + $0x174] sm:$0xf] %vm334, 0
      %429 = vst.msk [vmem:[#allocation2 + $0x178] sm:$0xf] %vm334, 0
      %430 = vst.msk [vmem:[#allocation2 + $0x17c] sm:$0xf] %vm334, 0
      %431 = vst.msk [vmem:[#allocation2 + $0x180] sm:$0xf] %vm334, 0
      %432 = vst.msk [vmem:[#allocation2 + $0x184] sm:$0xf] %vm334, 0
      %433 = vst.msk [vmem:[#allocation2 + $0x188] sm:$0xf] %vm334, 0
      %434 = vst.msk [vmem:[#allocation2 + $0x18c] sm:$0xf] %vm334, 0
      %435 = vst.msk [vmem:[#allocation2 + $0x190] sm:$0xf] %vm334, 0
      %436 = vst.msk [vmem:[#allocation2 + $0x194] sm:$0xf] %vm334, 0
      %437 = vst.msk [vmem:[#allocation2 + $0x198] sm:$0xf] %vm334, 0
      %438 = vst.msk [vmem:[#allocation2 + $0x19c] sm:$0xf] %vm334, 0
      %439 = vst.msk [vmem:[#allocation2 + $0x1a0] sm:$0xf] %vm334, 0
      %440 = vst.msk [vmem:[#allocation2 + $0x1a4] sm:$0xf] %vm334, 0
      %441 = vst.msk [vmem:[#allocation2 + $0x1a8] sm:$0xf] %vm334, 0
      %442 = vst.msk [vmem:[#allocation2 + $0x1ac] sm:$0xf] %vm334, 0
      %vm443 = vcmask 257024
      %444 = vst.msk [vmem:[#allocation3] sm:$0xf] %vm443, 0
      %445 = vst.msk [vmem:[#allocation3 + $0x4] sm:$0xf] %vm443, 0
      %446 = vst.msk [vmem:[#allocation3 + $0x8] sm:$0xf] %vm443, 0
      %447 = vst.msk [vmem:[#allocation3 + $0xc] sm:$0xf] %vm443, 0
      %448 = vst.msk [vmem:[#allocation3 + $0x10] sm:$0xf] %vm443, 0
      %449 = vst.msk [vmem:[#allocation3 + $0x14] sm:$0xf] %vm443, 0
      %450 = vst.msk [vmem:[#allocation3 + $0x18] sm:$0xf] %vm443, 0
      %451 = vst.msk [vmem:[#allocation3 + $0x1c] sm:$0xf] %vm443, 0
      %452 = vst.msk [vmem:[#allocation3 + $0x20] sm:$0xf] %vm443, 0
      %453 = vst.msk [vmem:[#allocation3 + $0x24] sm:$0xf] %vm443, 0
      %454 = vst.msk [vmem:[#allocation3 + $0x28] sm:$0xf] %vm443, 0
      %455 = vst.msk [vmem:[#allocation3 + $0x2c] sm:$0xf] %vm443, 0
      %456 = vst.msk [vmem:[#allocation3 + $0x30] sm:$0xf] %vm443, 0
      %457 = vst.msk [vmem:[#allocation3 + $0x34] sm:$0xf] %vm443, 0
      %458 = vst.msk [vmem:[#allocation3 + $0x38] sm:$0xf] %vm443, 0
      %459 = vst.msk [vmem:[#allocation3 + $0x3c] sm:$0xf] %vm443, 0
      %460 = vst.msk [vmem:[#allocation3 + $0x40] sm:$0xf] %vm443, 0
      %461 = vst.msk [vmem:[#allocation3 + $0x44] sm:$0xf] %vm443, 0
      %462 = vst.msk [vmem:[#allocation3 + $0x48] sm:$0xf] %vm443, 0
      %463 = vst.msk [vmem:[#allocation3 + $0x4c] sm:$0xf] %vm443, 0
      %464 = vst.msk [vmem:[#allocation3 + $0x50] sm:$0xf] %vm443, 0
      %465 = vst.msk [vmem:[#allocation3 + $0x54] sm:$0xf] %vm443, 0
      %466 = vst.msk [vmem:[#allocation3 + $0x58] sm:$0xf] %vm443, 0
      %467 = vst.msk [vmem:[#allocation3 + $0x5c] sm:$0xf] %vm443, 0
      %468 = vst.msk [vmem:[#allocation3 + $0x60] sm:$0xf] %vm443, 0
      %469 = vst.msk [vmem:[#allocation3 + $0x64] sm:$0xf] %vm443, 0
      %470 = vst.msk [vmem:[#allocation3 + $0x68] sm:$0xf] %vm443, 0
      %471 = vst.msk [vmem:[#allocation3 + $0x6c] sm:$0xf] %vm443, 0
      %472 = vst.msk [vmem:[#allocation3 + $0x70] sm:$0xf] %vm443, 0
      %473 = vst.msk [vmem:[#allocation3 + $0x74] sm:$0xf] %vm443, 0
      %474 = vst.msk [vmem:[#allocation3 + $0x78] sm:$0xf] %vm443, 0
      %475 = vst.msk [vmem:[#allocation3 + $0x7c] sm:$0xf] %vm443, 0
      %476 = vst.msk [vmem:[#allocation3 + $0x80] sm:$0xf] %vm443, 0
      %477 = vst.msk [vmem:[#allocation3 + $0x84] sm:$0xf] %vm443, 0
      %478 = vst.msk [vmem:[#allocation3 + $0x88] sm:$0xf] %vm443, 0
      %479 = vst.msk [vmem:[#allocation3 + $0x8c] sm:$0xf] %vm443, 0
      %480 = vst.msk [vmem:[#allocation3 + $0x90] sm:$0xf] %vm443, 0
      %481 = vst.msk [vmem:[#allocation3 + $0x94] sm:$0xf] %vm443, 0
      %482 = vst.msk [vmem:[#allocation3 + $0x98] sm:$0xf] %vm443, 0
      %483 = vst.msk [vmem:[#allocation3 + $0x9c] sm:$0xf] %vm443, 0
      %484 = vst.msk [vmem:[#allocation3 + $0xa0] sm:$0xf] %vm443, 0
      %485 = vst.msk [vmem:[#allocation3 + $0xa4] sm:$0xf] %vm443, 0
      %486 = vst.msk [vmem:[#allocation3 + $0xa8] sm:$0xf] %vm443, 0
      %487 = vst.msk [vmem:[#allocation3 + $0xac] sm:$0xf] %vm443, 0
      %488 = vst.msk [vmem:[#allocation3 + $0xb0] sm:$0xf] %vm443, 0
      %489 = vst.msk [vmem:[#allocation3 + $0xb4] sm:$0xf] %vm443, 0
      %490 = vst.msk [vmem:[#allocation3 + $0xb8] sm:$0xf] %vm443, 0
      %491 = vst.msk [vmem:[#allocation3 + $0xbc] sm:$0xf] %vm443, 0
      %492 = vst.msk [vmem:[#allocation3 + $0xc0] sm:$0xf] %vm443, 0
      %493 = vst.msk [vmem:[#allocation3 + $0xc4] sm:$0xf] %vm443, 0
      %494 = vst.msk [vmem:[#allocation3 + $0xc8] sm:$0xf] %vm443, 0
      %495 = vst.msk [vmem:[#allocation3 + $0xcc] sm:$0xf] %vm443, 0
      %496 = vst.msk [vmem:[#allocation3 + $0xd0] sm:$0xf] %vm443, 0
      %497 = vst.msk [vmem:[#allocation3 + $0xd4] sm:$0xf] %vm443, 0
      %498 = vst.msk [vmem:[#allocation3 + $0xd8] sm:$0xf] %vm443, 0
      %499 = vst.msk [vmem:[#allocation3 + $0xdc] sm:$0xf] %vm443, 0
      %500 = vst.msk [vmem:[#allocation3 + $0xe0] sm:$0xf] %vm443, 0
      %501 = vst.msk [vmem:[#allocation3 + $0xe4] sm:$0xf] %vm443, 0
      %502 = vst.msk [vmem:[#allocation3 + $0xe8] sm:$0xf] %vm443, 0
      %503 = vst.msk [vmem:[#allocation3 + $0xec] sm:$0xf] %vm443, 0
      %504 = vst.msk [vmem:[#allocation3 + $0xf0] sm:$0xf] %vm443, 0
      %505 = vst.msk [vmem:[#allocation3 + $0xf4] sm:$0xf] %vm443, 0
      %506 = vst.msk [vmem:[#allocation3 + $0xf8] sm:$0xf] %vm443, 0
      %507 = vst.msk [vmem:[#allocation3 + $0xfc] sm:$0xf] %vm443, 0
      %508 = vst.msk [vmem:[#allocation3 + $0x100] sm:$0xf] %vm443, 0
      %509 = vst.msk [vmem:[#allocation3 + $0x104] sm:$0xf] %vm443, 0
      %510 = vst.msk [vmem:[#allocation3 + $0x108] sm:$0xf] %vm443, 0
      %511 = vst.msk [vmem:[#allocation3 + $0x10c] sm:$0xf] %vm443, 0
      %512 = vst.msk [vmem:[#allocation3 + $0x110] sm:$0xf] %vm443, 0
      %513 = vst.msk [vmem:[#allocation3 + $0x114] sm:$0xf] %vm443, 0
      %514 = vst.msk [vmem:[#allocation3 + $0x118] sm:$0xf] %vm443, 0
      %515 = vst.msk [vmem:[#allocation3 + $0x11c] sm:$0xf] %vm443, 0
      %516 = vst.msk [vmem:[#allocation3 + $0x120] sm:$0xf] %vm443, 0
      %517 = vst.msk [vmem:[#allocation3 + $0x124] sm:$0xf] %vm443, 0
      %518 = vst.msk [vmem:[#allocation3 + $0x128] sm:$0xf] %vm443, 0
      %519 = vst.msk [vmem:[#allocation3 + $0x12c] sm:$0xf] %vm443, 0
      %520 = vst.msk [vmem:[#allocation3 + $0x130] sm:$0xf] %vm443, 0
      %521 = vst.msk [vmem:[#allocation3 + $0x134] sm:$0xf] %vm443, 0
      %522 = vst.msk [vmem:[#allocation3 + $0x138] sm:$0xf] %vm443, 0
      %523 = vst.msk [vmem:[#allocation3 + $0x13c] sm:$0xf] %vm443, 0
      %524 = vst.msk [vmem:[#allocation3 + $0x140] sm:$0xf] %vm443, 0
      %525 = vst.msk [vmem:[#allocation3 + $0x144] sm:$0xf] %vm443, 0
      %526 = vst.msk [vmem:[#allocation3 + $0x148] sm:$0xf] %vm443, 0
      %527 = vst.msk [vmem:[#allocation3 + $0x14c] sm:$0xf] %vm443, 0
      %528 = vst.msk [vmem:[#allocation3 + $0x150] sm:$0xf] %vm443, 0
      %529 = vst.msk [vmem:[#allocation3 + $0x154] sm:$0xf] %vm443, 0
      %530 = vst.msk [vmem:[#allocation3 + $0x158] sm:$0xf] %vm443, 0
      %531 = vst.msk [vmem:[#allocation3 + $0x15c] sm:$0xf] %vm443, 0
      %532 = vst.msk [vmem:[#allocation3 + $0x160] sm:$0xf] %vm443, 0
      %533 = vst.msk [vmem:[#allocation3 + $0x164] sm:$0xf] %vm443, 0
      %534 = vst.msk [vmem:[#allocation3 + $0x168] sm:$0xf] %vm443, 0
      %535 = vst.msk [vmem:[#allocation3 + $0x16c] sm:$0xf] %vm443, 0
      %536 = vst.msk [vmem:[#allocation3 + $0x170] sm:$0xf] %vm443, 0
      %537 = vst.msk [vmem:[#allocation3 + $0x174] sm:$0xf] %vm443, 0
      %538 = vst.msk [vmem:[#allocation3 + $0x178] sm:$0xf] %vm443, 0
      %539 = vst.msk [vmem:[#allocation3 + $0x17c] sm:$0xf] %vm443, 0
      %540 = vst.msk [vmem:[#allocation3 + $0x180] sm:$0xf] %vm443, 0
      %541 = vst.msk [vmem:[#allocation3 + $0x184] sm:$0xf] %vm443, 0
      %542 = vst.msk [vmem:[#allocation3 + $0x188] sm:$0xf] %vm443, 0
      %543 = vst.msk [vmem:[#allocation3 + $0x18c] sm:$0xf] %vm443, 0
      %544 = vst.msk [vmem:[#allocation3 + $0x190] sm:$0xf] %vm443, 0
      %545 = vst.msk [vmem:[#allocation3 + $0x194] sm:$0xf] %vm443, 0
      %546 = vst.msk [vmem:[#allocation3 + $0x198] sm:$0xf] %vm443, 0
      %547 = vst.msk [vmem:[#allocation3 + $0x19c] sm:$0xf] %vm443, 0
      %548 = vst.msk [vmem:[#allocation3 + $0x1a0] sm:$0xf] %vm443, 0
      %549 = vst.msk [vmem:[#allocation3 + $0x1a4] sm:$0xf] %vm443, 0
      %550 = vst.msk [vmem:[#allocation3 + $0x1a8] sm:$0xf] %vm443, 0
      %551 = vst.msk [vmem:[#allocation3 + $0x1ac] sm:$0xf] %vm443, 0
      %552 = vst.msk [vmem:[#allocation4] sm:$0xf] %vm443, 0
      %553 = vst.msk [vmem:[#allocation4 + $0x4] sm:$0xf] %vm443, 0
      %554 = vst.msk [vmem:[#allocation4 + $0x8] sm:$0xf] %vm443, 0
      %555 = vst.msk [vmem:[#allocation4 + $0xc] sm:$0xf] %vm443, 0
      %556 = vst.msk [vmem:[#allocation4 + $0x10] sm:$0xf] %vm443, 0
      %557 = vst.msk [vmem:[#allocation4 + $0x14] sm:$0xf] %vm443, 0
      %558 = vst.msk [vmem:[#allocation4 + $0x18] sm:$0xf] %vm443, 0
      %559 = vst.msk [vmem:[#allocation4 + $0x1c] sm:$0xf] %vm443, 0
      %560 = vst.msk [vmem:[#allocation4 + $0x20] sm:$0xf] %vm443, 0
      %561 = vst.msk [vmem:[#allocation4 + $0x24] sm:$0xf] %vm443, 0
      %562 = vst.msk [vmem:[#allocation4 + $0x28] sm:$0xf] %vm443, 0
      %563 = vst.msk [vmem:[#allocation4 + $0x2c] sm:$0xf] %vm443, 0
      %564 = vst.msk [vmem:[#allocation4 + $0x30] sm:$0xf] %vm443, 0
      %565 = vst.msk [vmem:[#allocation4 + $0x34] sm:$0xf] %vm443, 0
      %566 = vst.msk [vmem:[#allocation4 + $0x38] sm:$0xf] %vm443, 0
      %567 = vst.msk [vmem:[#allocation4 + $0x3c] sm:$0xf] %vm443, 0
      %568 = vst.msk [vmem:[#allocation4 + $0x40] sm:$0xf] %vm443, 0
      %569 = vst.msk [vmem:[#allocation4 + $0x44] sm:$0xf] %vm443, 0
      %570 = vst.msk [vmem:[#allocation4 + $0x48] sm:$0xf] %vm443, 0
      %571 = vst.msk [vmem:[#allocation4 + $0x4c] sm:$0xf] %vm443, 0
      %572 = vst.msk [vmem:[#allocation4 + $0x50] sm:$0xf] %vm443, 0
      %573 = vst.msk [vmem:[#allocation4 + $0x54] sm:$0xf] %vm443, 0
      %574 = vst.msk [vmem:[#allocation4 + $0x58] sm:$0xf] %vm443, 0
      %575 = vst.msk [vmem:[#allocation4 + $0x5c] sm:$0xf] %vm443, 0
      %576 = vst.msk [vmem:[#allocation4 + $0x60] sm:$0xf] %vm443, 0
      %577 = vst.msk [vmem:[#allocation4 + $0x64] sm:$0xf] %vm443, 0
      %578 = vst.msk [vmem:[#allocation4 + $0x68] sm:$0xf] %vm443, 0
      %579 = vst.msk [vmem:[#allocation4 + $0x6c] sm:$0xf] %vm443, 0
      %580 = vst.msk [vmem:[#allocation4 + $0x70] sm:$0xf] %vm443, 0
      %581 = vst.msk [vmem:[#allocation4 + $0x74] sm:$0xf] %vm443, 0
      %582 = vst.msk [vmem:[#allocation4 + $0x78] sm:$0xf] %vm443, 0
      %583 = vst.msk [vmem:[#allocation4 + $0x7c] sm:$0xf] %vm443, 0
      %584 = vst.msk [vmem:[#allocation4 + $0x80] sm:$0xf] %vm443, 0
      %585 = vst.msk [vmem:[#allocation4 + $0x84] sm:$0xf] %vm443, 0
      %586 = vst.msk [vmem:[#allocation4 + $0x88] sm:$0xf] %vm443, 0
      %587 = vst.msk [vmem:[#allocation4 + $0x8c] sm:$0xf] %vm443, 0
      %588 = vst.msk [vmem:[#allocation4 + $0x90] sm:$0xf] %vm443, 0
      %589 = vst.msk [vmem:[#allocation4 + $0x94] sm:$0xf] %vm443, 0
      %590 = vst.msk [vmem:[#allocation4 + $0x98] sm:$0xf] %vm443, 0
      %591 = vst.msk [vmem:[#allocation4 + $0x9c] sm:$0xf] %vm443, 0
      %592 = vst.msk [vmem:[#allocation4 + $0xa0] sm:$0xf] %vm443, 0
      %593 = vst.msk [vmem:[#allocation4 + $0xa4] sm:$0xf] %vm443, 0
      %594 = vst.msk [vmem:[#allocation4 + $0xa8] sm:$0xf] %vm443, 0
      %595 = vst.msk [vmem:[#allocation4 + $0xac] sm:$0xf] %vm443, 0
      %596 = vst.msk [vmem:[#allocation4 + $0xb0] sm:$0xf] %vm443, 0
      %597 = vst.msk [vmem:[#allocation4 + $0xb4] sm:$0xf] %vm443, 0
      %598 = vst.msk [vmem:[#allocation4 + $0xb8] sm:$0xf] %vm443, 0
      %599 = vst.msk [vmem:[#allocation4 + $0xbc] sm:$0xf] %vm443, 0
      %600 = vst.msk [vmem:[#allocation4 + $0xc0] sm:$0xf] %vm443, 0
      %601 = vst.msk [vmem:[#allocation4 + $0xc4] sm:$0xf] %vm443, 0
      %602 = vst.msk [vmem:[#allocation4 + $0xc8] sm:$0xf] %vm443, 0
      %603 = vst.msk [vmem:[#allocation4 + $0xcc] sm:$0xf] %vm443, 0
      %604 = vst.msk [vmem:[#allocation4 + $0xd0] sm:$0xf] %vm443, 0
      %605 = vst.msk [vmem:[#allocation4 + $0xd4] sm:$0xf] %vm443, 0
      %606 = vst.msk [vmem:[#allocation4 + $0xd8] sm:$0xf] %vm443, 0
      %607 = vst.msk [vmem:[#allocation4 + $0xdc] sm:$0xf] %vm443, 0
      %608 = vst.msk [vmem:[#allocation4 + $0xe0] sm:$0xf] %vm443, 0
      %609 = vst.msk [vmem:[#allocation4 + $0xe4] sm:$0xf] %vm443, 0
      %610 = vst.msk [vmem:[#allocation4 + $0xe8] sm:$0xf] %vm443, 0
      %611 = vst.msk [vmem:[#allocation4 + $0xec] sm:$0xf] %vm443, 0
      %612 = vst.msk [vmem:[#allocation4 + $0xf0] sm:$0xf] %vm443, 0
      %613 = vst.msk [vmem:[#allocation4 + $0xf4] sm:$0xf] %vm443, 0
      %614 = vst.msk [vmem:[#allocation4 + $0xf8] sm:$0xf] %vm443, 0
      %615 = vst.msk [vmem:[#allocation4 + $0xfc] sm:$0xf] %vm443, 0
      %616 = vst.msk [vmem:[#allocation4 + $0x100] sm:$0xf] %vm443, 0
      %617 = vst.msk [vmem:[#allocation4 + $0x104] sm:$0xf] %vm443, 0
      %618 = vst.msk [vmem:[#allocation4 + $0x108] sm:$0xf] %vm443, 0
      %619 = vst.msk [vmem:[#allocation4 + $0x10c] sm:$0xf] %vm443, 0
      %620 = vst.msk [vmem:[#allocation4 + $0x110] sm:$0xf] %vm443, 0
      %621 = vst.msk [vmem:[#allocation4 + $0x114] sm:$0xf] %vm443, 0
      %622 = vst.msk [vmem:[#allocation4 + $0x118] sm:$0xf] %vm443, 0
      %623 = vst.msk [vmem:[#allocation4 + $0x11c] sm:$0xf] %vm443, 0
      %624 = vst.msk [vmem:[#allocation4 + $0x120] sm:$0xf] %vm443, 0
      %625 = vst.msk [vmem:[#allocation4 + $0x124] sm:$0xf] %vm443, 0
      %626 = vst.msk [vmem:[#allocation4 + $0x128] sm:$0xf] %vm443, 0
      %627 = vst.msk [vmem:[#allocation4 + $0x12c] sm:$0xf] %vm443, 0
      %628 = vst.msk [vmem:[#allocation4 + $0x130] sm:$0xf] %vm443, 0
      %629 = vst.msk [vmem:[#allocation4 + $0x134] sm:$0xf] %vm443, 0
      %630 = vst.msk [vmem:[#allocation4 + $0x138] sm:$0xf] %vm443, 0
      %631 = vst.msk [vmem:[#allocation4 + $0x13c] sm:$0xf] %vm443, 0
      %632 = vst.msk [vmem:[#allocation4 + $0x140] sm:$0xf] %vm443, 0
      %633 = vst.msk [vmem:[#allocation4 + $0x144] sm:$0xf] %vm443, 0
      %634 = vst.msk [vmem:[#allocation4 + $0x148] sm:$0xf] %vm443, 0
      %635 = vst.msk [vmem:[#allocation4 + $0x14c] sm:$0xf] %vm443, 0
      %636 = vst.msk [vmem:[#allocation4 + $0x150] sm:$0xf] %vm443, 0
      %637 = vst.msk [vmem:[#allocation4 + $0x154] sm:$0xf] %vm443, 0
      %638 = vst.msk [vmem:[#allocation4 + $0x158] sm:$0xf] %vm443, 0
      %639 = vst.msk [vmem:[#allocation4 + $0x15c] sm:$0xf] %vm443, 0
      %640 = vst.msk [vmem:[#allocation4 + $0x160] sm:$0xf] %vm443, 0
      %641 = vst.msk [vmem:[#allocation4 + $0x164] sm:$0xf] %vm443, 0
      %642 = vst.msk [vmem:[#allocation4 + $0x168] sm:$0xf] %vm443, 0
      %643 = vst.msk [vmem:[#allocation4 + $0x16c] sm:$0xf] %vm443, 0
      %644 = vst.msk [vmem:[#allocation4 + $0x170] sm:$0xf] %vm443, 0
      %645 = vst.msk [vmem:[#allocation4 + $0x174] sm:$0xf] %vm443, 0
      %646 = vst.msk [vmem:[#allocation4 + $0x178] sm:$0xf] %vm443, 0
      %647 = vst.msk [vmem:[#allocation4 + $0x17c] sm:$0xf] %vm443, 0
      %648 = vst.msk [vmem:[#allocation4 + $0x180] sm:$0xf] %vm443, 0
      %649 = vst.msk [vmem:[#allocation4 + $0x184] sm:$0xf] %vm443, 0
      %650 = vst.msk [vmem:[#allocation4 + $0x188] sm:$0xf] %vm443, 0
      %651 = vst.msk [vmem:[#allocation4 + $0x18c] sm:$0xf] %vm443, 0
      %652 = vst.msk [vmem:[#allocation4 + $0x190] sm:$0xf] %vm443, 0
      %653 = vst.msk [vmem:[#allocation4 + $0x194] sm:$0xf] %vm443, 0
      %654 = vst.msk [vmem:[#allocation4 + $0x198] sm:$0xf] %vm443, 0
      %655 = vst.msk [vmem:[#allocation4 + $0x19c] sm:$0xf] %vm443, 0
      %656 = vst.msk [vmem:[#allocation4 + $0x1a0] sm:$0xf] %vm443, 0
      %657 = vst.msk [vmem:[#allocation4 + $0x1a4] sm:$0xf] %vm443, 0
      %658 = vst.msk [vmem:[#allocation4 + $0x1a8] sm:$0xf] %vm443, 0
      %659 = vst.msk [vmem:[#allocation4 + $0x1ac] sm:$0xf] %vm443, 0
      %v660 = vld [vmem:[%s327] sm:$0xff]
      %v661 = vld [vmem:[%s327 + $0x8] sm:$0xff]
      %v662 = vld [vmem:[%s327 + $0x10] sm:$0xff]
      %v663 = vld [vmem:[%s327 + $0x18] sm:$0xff]
      %v664 = vld [vmem:[%s327 + $0x20] sm:$0xff]
      %v665 = vld [vmem:[%s327 + $0x28] sm:$0xff]
      %v666 = vld [vmem:[%s327 + $0x30] sm:$0xff]
      %v667 = vld [vmem:[%s327 + $0x38] sm:$0xff]
      %v668 = vld [vmem:[%s327 + $0x40] sm:$0xff]
      %v669 = vld [vmem:[%s327 + $0x48] sm:$0xff]
      %v670 = vld [vmem:[%s327 + $0x50] sm:$0xff]
      %v671 = vld [vmem:[%s327 + $0x58] sm:$0xff]
      %v672 = vld [vmem:[%s327 + $0x60] sm:$0xff]
      %v673 = vld [vmem:[%s327 + $0x68] sm:$0xff]
      %v674 = vld [vmem:[%s327 + $0x70] sm:$0xff]
      %v675 = vld [vmem:[%s327 + $0x78] sm:$0xff]
      %v676 = vld [vmem:[%s327 + $0x80] sm:$0xff]
      %v677 = vld [vmem:[%s327 + $0x88] sm:$0xff]
      %v678 = vld [vmem:[%s327 + $0x90] sm:$0xff]
      %v679 = vld [vmem:[%s327 + $0x98] sm:$0xff]
      %v680 = vld [vmem:[%s327 + $0xa0] sm:$0xff]
      %v681 = vld [vmem:[%s327 + $0xa8] sm:$0xff]
      %v682 = vld [vmem:[%s327 + $0xb0] sm:$0xff]
      %v683 = vld [vmem:[%s327 + $0xb8] sm:$0xff]
      %v684 = vld [vmem:[%s327 + $0xc0] sm:$0xff]
      %v685 = vld [vmem:[%s327 + $0xc8] sm:$0xff]
      %v686 = vld [vmem:[%s327 + $0xd0] sm:$0xff]
      %v687 = vld [vmem:[%s327 + $0xd8] sm:$0xff]
      %v688 = vld [vmem:[%s327 + $0xe0] sm:$0xff]
      %v689 = vld [vmem:[%s327 + $0xe8] sm:$0xff]
      %v690 = vld [vmem:[%s327 + $0xf0] sm:$0xff]
      %v691 = vld [vmem:[%s327 + $0xf8] sm:$0xff]
      %vm725 = vcmask 1040384
      %v726 = vrot.slane 0.0, 7
      %v727 = vsel %vm725, %v726, %v726
      %v728 = vrot.slane %v660, 7
      %v729 = vrot.slane %v661, 7
      %v730 = vsel %vm725, %v728, %v729
      %v731 = vrot.slane %v662, 7
      %v732 = vrot.slane %v663, 7
      %v733 = vsel %vm725, %v731, %v732
      %v734 = vrot.slane %v664, 7
      %v735 = vrot.slane %v665, 7
      %v736 = vsel %vm725, %v734, %v735
      %v737 = vrot.slane %v666, 7
      %v738 = vrot.slane %v667, 7
      %v739 = vsel %vm725, %v737, %v738
      %v740 = vrot.slane %v668, 7
      %v741 = vrot.slane %v669, 7
      %v742 = vsel %vm725, %v740, %v741
      %v743 = vrot.slane %v670, 7
      %v744 = vrot.slane %v671, 7
      %v745 = vsel %vm725, %v743, %v744
      %v746 = vrot.slane %v672, 7
      %v747 = vrot.slane %v673, 7
      %v748 = vsel %vm725, %v746, %v747
      %v749 = vrot.slane %v674, 7
      %v750 = vrot.slane %v675, 7
      %v751 = vsel %vm725, %v749, %v750
      %v752 = vrot.slane %v676, 7
      %v753 = vrot.slane %v677, 7
      %v754 = vsel %vm725, %v752, %v753
      %v755 = vrot.slane %v678, 7
      %v756 = vrot.slane %v679, 7
      %v757 = vsel %vm725, %v755, %v756
      %v758 = vrot.slane %v680, 7
      %v759 = vrot.slane %v681, 7
      %v760 = vsel %vm725, %v758, %v759
      %v761 = vrot.slane %v682, 7
      %v762 = vrot.slane %v683, 7
      %v763 = vsel %vm725, %v761, %v762
      %v764 = vrot.slane %v684, 7
      %v765 = vrot.slane %v685, 7
      %v766 = vsel %vm725, %v764, %v765
      %v767 = vrot.slane %v686, 7
      %v768 = vrot.slane %v687, 7
      %v769 = vsel %vm725, %v767, %v768
      %v770 = vrot.slane %v688, 7
      %v771 = vrot.slane %v689, 7
      %v772 = vsel %vm725, %v770, %v771
      %v773 = vrot.slane %v690, 7
      %v774 = vrot.slane %v691, 7
      %v775 = vsel %vm725, %v773, %v774
      %v809 = vsel %vm725, 0.0, %v726
      %v810 = vsel %vm725, 0.0, %v728
      %v811 = vsel %vm725, 0.0, %v731
      %v812 = vsel %vm725, 0.0, %v734
      %v813 = vsel %vm725, 0.0, %v737
      %v814 = vsel %vm725, 0.0, %v740
      %v815 = vsel %vm725, 0.0, %v743
      %v816 = vsel %vm725, 0.0, %v746
      %v817 = vsel %vm725, 0.0, %v749
      %v818 = vsel %vm725, 0.0, %v752
      %v819 = vsel %vm725, 0.0, %v755
      %v820 = vsel %vm725, 0.0, %v758
      %v821 = vsel %vm725, 0.0, %v761
      %v822 = vsel %vm725, 0.0, %v764
      %v823 = vsel %vm725, 0.0, %v767
      %v824 = vsel %vm725, 0.0, %v770
      %v825 = vsel %vm725, 0.0, %v773
      %v826 = vsel %vm725, %v726, 0.0
      %v827 = vsel %vm725, %v729, 0.0
      %v828 = vsel %vm725, %v732, 0.0
      %v829 = vsel %vm725, %v735, 0.0
      %v830 = vsel %vm725, %v738, 0.0
      %v831 = vsel %vm725, %v741, 0.0
      %v832 = vsel %vm725, %v744, 0.0
      %v833 = vsel %vm725, %v747, 0.0
      %v834 = vsel %vm725, %v750, 0.0
      %v835 = vsel %vm725, %v753, 0.0
      %v836 = vsel %vm725, %v756, 0.0
      %v837 = vsel %vm725, %v759, 0.0
      %v838 = vsel %vm725, %v762, 0.0
      %v839 = vsel %vm725, %v765, 0.0
      %v840 = vsel %vm725, %v768, 0.0
      %v841 = vsel %vm725, %v771, 0.0
      %v842 = vsel %vm725, %v774, 0.0
      %v843 = vld [vmem:[%s1] sm:$0xff]
      %v844 = vld [vmem:[%s1 + $0x8] sm:$0x1]
      %846 = vset.pattern.permute.xlu0 0
      %847 = vperm.xlu0 %846, %v809
      %v848 = vpop.permute.xlu0 %847
      %850 = vset.pattern.permute.xlu0 0
      %851 = vperm.xlu0 %850, %v727
      %v852 = vpop.permute.xlu0 %851
      %855 = vset.pattern.permute.xlu0 0
      %856 = vperm.xlu0 %855, %v810
      %v857 = vpop.permute.xlu0 %856
      %859 = vset.pattern.permute.xlu0 0
      %860 = vperm.xlu0 %859, %v730
      %v861 = vpop.permute.xlu0 %860
      %864 = vset.pattern.permute.xlu0 0
      %865 = vperm.xlu0 %864, %v811
      %v866 = vpop.permute.xlu0 %865
      %868 = vset.pattern.permute.xlu0 0
      %869 = vperm.xlu0 %868, %v733
      %v870 = vpop.permute.xlu0 %869
      %873 = vset.pattern.permute.xlu0 0
      %874 = vperm.xlu0 %873, %v812
      %v875 = vpop.permute.xlu0 %874
      %877 = vset.pattern.permute.xlu0 0
      %878 = vperm.xlu0 %877, %v736
      %v879 = vpop.permute.xlu0 %878
      %882 = vset.pattern.permute.xlu0 0
      %883 = vperm.xlu0 %882, %v813
      %v884 = vpop.permute.xlu0 %883
      %886 = vset.pattern.permute.xlu0 0
      %887 = vperm.xlu0 %886, %v739
      %v888 = vpop.permute.xlu0 %887
      %891 = vset.pattern.permute.xlu0 0
      %892 = vperm.xlu0 %891, %v814
      %v893 = vpop.permute.xlu0 %892
      %895 = vset.pattern.permute.xlu0 0
      %896 = vperm.xlu0 %895, %v742
      %v897 = vpop.permute.xlu0 %896
      %900 = vset.pattern.permute.xlu0 0
      %901 = vperm.xlu0 %900, %v815
      %v902 = vpop.permute.xlu0 %901
      %904 = vset.pattern.permute.xlu0 0
      %905 = vperm.xlu0 %904, %v745
      %v906 = vpop.permute.xlu0 %905
      %909 = vset.pattern.permute.xlu0 0
      %910 = vperm.xlu0 %909, %v816
      %v911 = vpop.permute.xlu0 %910
      %913 = vset.pattern.permute.xlu0 0
      %914 = vperm.xlu0 %913, %v748
      %v915 = vpop.permute.xlu0 %914
      %918 = vset.pattern.permute.xlu0 0
      %919 = vperm.xlu0 %918, %v817
      %v920 = vpop.permute.xlu0 %919
      %922 = vset.pattern.permute.xlu0 0
      %923 = vperm.xlu0 %922, %v751
      %v924 = vpop.permute.xlu0 %923
      %927 = vset.pattern.permute.xlu0 0
      %928 = vperm.xlu0 %927, %v818
      %v929 = vpop.permute.xlu0 %928
      %931 = vset.pattern.permute.xlu0 0
      %932 = vperm.xlu0 %931, %v754
      %v933 = vpop.permute.xlu0 %932
      %936 = vset.pattern.permute.xlu0 0
      %937 = vperm.xlu0 %936, %v819
      %v938 = vpop.permute.xlu0 %937
      %940 = vset.pattern.permute.xlu0 0
      %941 = vperm.xlu0 %940, %v757
      %v942 = vpop.permute.xlu0 %941
      %945 = vset.pattern.permute.xlu0 0
      %946 = vperm.xlu0 %945, %v820
      %v947 = vpop.permute.xlu0 %946
      %949 = vset.pattern.permute.xlu0 0
      %950 = vperm.xlu0 %949, %v760
      %v951 = vpop.permute.xlu0 %950
      %954 = vset.pattern.permute.xlu0 0
      %955 = vperm.xlu0 %954, %v821
      %v956 = vpop.permute.xlu0 %955
      %958 = vset.pattern.permute.xlu0 0
      %959 = vperm.xlu0 %958, %v763
      %v960 = vpop.permute.xlu0 %959
      %963 = vset.pattern.permute.xlu0 0
      %964 = vperm.xlu0 %963, %v822
      %v965 = vpop.permute.xlu0 %964
      %967 = vset.pattern.permute.xlu0 0
      %968 = vperm.xlu0 %967, %v766
      %v969 = vpop.permute.xlu0 %968
      %972 = vset.pattern.permute.xlu0 0
      %973 = vperm.xlu0 %972, %v823
      %v974 = vpop.permute.xlu0 %973
      %976 = vset.pattern.permute.xlu0 0
      %977 = vperm.xlu0 %976, %v769
      %v978 = vpop.permute.xlu0 %977
      %981 = vset.pattern.permute.xlu0 0
      %982 = vperm.xlu0 %981, %v824
      %v983 = vpop.permute.xlu0 %982
      %985 = vset.pattern.permute.xlu0 0
      %986 = vperm.xlu0 %985, %v772
      %v987 = vpop.permute.xlu0 %986
      %v989 = vlaneseq
      %v990 = vshrl.u32 %v989, 7
      %v991 = vsub.s32 0, %v990
      %v992 = vrot.slane %v843, %v991
      %v993 = vmul.f32 %v848, %v992
      %v994 = vmul.f32 %v852, %v992
      %v995 = vmul.f32 %v857, %v992
      %v996 = vmul.f32 %v861, %v992
      %v997 = vmul.f32 %v866, %v992
      %v998 = vmul.f32 %v870, %v992
      %v999 = vmul.f32 %v875, %v992
      %v1000 = vmul.f32 %v879, %v992
      %v1001 = vmul.f32 %v884, %v992
      %v1002 = vmul.f32 %v888, %v992
      %v1003 = vmul.f32 %v893, %v992
      %v1004 = vmul.f32 %v897, %v992
      %v1005 = vmul.f32 %v902, %v992
      %v1006 = vmul.f32 %v906, %v992
      %v1007 = vmul.f32 %v911, %v992
      %v1008 = vmul.f32 %v915, %v992
      %v1009 = vmul.f32 %v920, %v992
      %v1010 = vmul.f32 %v924, %v992
      %v1011 = vmul.f32 %v929, %v992
      %v1012 = vmul.f32 %v933, %v992
      %v1013 = vmul.f32 %v938, %v992
      %v1014 = vmul.f32 %v942, %v992
      %v1015 = vmul.f32 %v947, %v992
      %v1016 = vmul.f32 %v951, %v992
      %v1017 = vmul.f32 %v956, %v992
      %v1018 = vmul.f32 %v960, %v992
      %v1019 = vmul.f32 %v965, %v992
      %v1020 = vmul.f32 %v969, %v992
      %v1021 = vmul.f32 %v974, %v992
      %v1022 = vmul.f32 %v978, %v992
      %v1023 = vmul.f32 %v983, %v992
      %v1024 = vmul.f32 %v987, %v992
      %v1025 = vadd.f32 %v993, 0.0
      %v1026 = vadd.f32 %v994, 0.0
      %v1027 = vadd.f32 %v995, 0.0
      %v1028 = vadd.f32 %v996, 0.0
      %v1029 = vadd.f32 %v997, 0.0
      %v1030 = vadd.f32 %v998, 0.0
      %v1031 = vadd.f32 %v999, 0.0
      %v1032 = vadd.f32 %v1000, 0.0
      %v1033 = vadd.f32 %v1001, 0.0
      %v1034 = vadd.f32 %v1002, 0.0
      %v1035 = vadd.f32 %v1003, 0.0
      %v1036 = vadd.f32 %v1004, 0.0
      %v1037 = vadd.f32 %v1005, 0.0
      %v1038 = vadd.f32 %v1006, 0.0
      %v1039 = vadd.f32 %v1007, 0.0
      %v1040 = vadd.f32 %v1008, 0.0
      %v1041 = vadd.f32 %v1009, 0.0
      %v1042 = vadd.f32 %v1010, 0.0
      %v1043 = vadd.f32 %v1011, 0.0
      %v1044 = vadd.f32 %v1012, 0.0
      %v1045 = vadd.f32 %v1013, 0.0
      %v1046 = vadd.f32 %v1014, 0.0
      %v1047 = vadd.f32 %v1015, 0.0
      %v1048 = vadd.f32 %v1016, 0.0
      %v1049 = vadd.f32 %v1017, 0.0
      %v1050 = vadd.f32 %v1018, 0.0
      %v1051 = vadd.f32 %v1019, 0.0
      %v1052 = vadd.f32 %v1020, 0.0
      %v1053 = vadd.f32 %v1021, 0.0
      %v1054 = vadd.f32 %v1022, 0.0
      %v1055 = vadd.f32 %v1023, 0.0
      %v1056 = vadd.f32 %v1024, 0.0
      %1058 = vset.pattern.permute.xlu0 0
      %1059 = vperm.xlu0 %1058, %v826
      %v1060 = vpop.permute.xlu0 %1059
      %1063 = vset.pattern.permute.xlu0 0
      %1064 = vperm.xlu0 %1063, %v827
      %v1065 = vpop.permute.xlu0 %1064
      %1068 = vset.pattern.permute.xlu0 0
      %1069 = vperm.xlu0 %1068, %v828
      %v1070 = vpop.permute.xlu0 %1069
      %1073 = vset.pattern.permute.xlu0 0
      %1074 = vperm.xlu0 %1073, %v829
      %v1075 = vpop.permute.xlu0 %1074
      %1078 = vset.pattern.permute.xlu0 0
      %1079 = vperm.xlu0 %1078, %v830
      %v1080 = vpop.permute.xlu0 %1079
      %1083 = vset.pattern.permute.xlu0 0
      %1084 = vperm.xlu0 %1083, %v831
      %v1085 = vpop.permute.xlu0 %1084
      %1088 = vset.pattern.permute.xlu0 0
      %1089 = vperm.xlu0 %1088, %v832
      %v1090 = vpop.permute.xlu0 %1089
      %1093 = vset.pattern.permute.xlu0 0
      %1094 = vperm.xlu0 %1093, %v833
      %v1095 = vpop.permute.xlu0 %1094
      %1098 = vset.pattern.permute.xlu0 0
      %1099 = vperm.xlu0 %1098, %v834
      %v1100 = vpop.permute.xlu0 %1099
      %1103 = vset.pattern.permute.xlu0 0
      %1104 = vperm.xlu0 %1103, %v835
      %v1105 = vpop.permute.xlu0 %1104
      %1108 = vset.pattern.permute.xlu0 0
      %1109 = vperm.xlu0 %1108, %v836
      %v1110 = vpop.permute.xlu0 %1109
      %1113 = vset.pattern.permute.xlu0 0
      %1114 = vperm.xlu0 %1113, %v837
      %v1115 = vpop.permute.xlu0 %1114
      %1118 = vset.pattern.permute.xlu0 0
      %1119 = vperm.xlu0 %1118, %v838
      %v1120 = vpop.permute.xlu0 %1119
      %1123 = vset.pattern.permute.xlu0 0
      %1124 = vperm.xlu0 %1123, %v839
      %v1125 = vpop.permute.xlu0 %1124
      %1128 = vset.pattern.permute.xlu0 0
      %1129 = vperm.xlu0 %1128, %v840
      %v1130 = vpop.permute.xlu0 %1129
      %1133 = vset.pattern.permute.xlu0 0
      %1134 = vperm.xlu0 %1133, %v841
      %v1135 = vpop.permute.xlu0 %1134
      %v1137 = vlaneseq
      %v1138 = vshrl.u32 %v1137, 7
      %v1139 = vsub.s32 1, %v1138
      %v1140 = vrot.slane %v843, %v1139
      %v1141 = vmul.f32 %v848, %v1140
      %v1142 = vmul.f32 %v852, %v1140
      %v1143 = vmul.f32 %v1060, %v1140
      %v1144 = vmul.f32 %v857, %v1140
      %v1145 = vmul.f32 %v861, %v1140
      %v1146 = vmul.f32 %v1065, %v1140
      %v1147 = vmul.f32 %v866, %v1140
      %v1148 = vmul.f32 %v870, %v1140
      %v1149 = vmul.f32 %v1070, %v1140
      %v1150 = vmul.f32 %v875, %v1140
      %v1151 = vmul.f32 %v879, %v1140
      %v1152 = vmul.f32 %v1075, %v1140
      %v1153 = vmul.f32 %v884, %v1140
      %v1154 = vmul.f32 %v888, %v1140
      %v1155 = vmul.f32 %v1080, %v1140
      %v1156 = vmul.f32 %v893, %v1140
      %v1157 = vmul.f32 %v897, %v1140
      %v1158 = vmul.f32 %v1085, %v1140
      %v1159 = vmul.f32 %v902, %v1140
      %v1160 = vmul.f32 %v906, %v1140
      %v1161 = vmul.f32 %v1090, %v1140
      %v1162 = vmul.f32 %v911, %v1140
      %v1163 = vmul.f32 %v915, %v1140
      %v1164 = vmul.f32 %v1095, %v1140
      %v1165 = vmul.f32 %v920, %v1140
      %v1166 = vmul.f32 %v924, %v1140
      %v1167 = vmul.f32 %v1100, %v1140
      %v1168 = vmul.f32 %v929, %v1140
      %v1169 = vmul.f32 %v933, %v1140
      %v1170 = vmul.f32 %v1105, %v1140
      %v1171 = vmul.f32 %v938, %v1140
      %v1172 = vmul.f32 %v942, %v1140
      %v1173 = vmul.f32 %v1110, %v1140
      %v1174 = vmul.f32 %v947, %v1140
      %v1175 = vmul.f32 %v951, %v1140
      %v1176 = vmul.f32 %v1115, %v1140
      %v1177 = vmul.f32 %v956, %v1140
      %v1178 = vmul.f32 %v960, %v1140
      %v1179 = vmul.f32 %v1120, %v1140
      %v1180 = vmul.f32 %v965, %v1140
      %v1181 = vmul.f32 %v969, %v1140
      %v1182 = vmul.f32 %v1125, %v1140
      %v1183 = vmul.f32 %v974, %v1140
      %v1184 = vmul.f32 %v978, %v1140
      %v1185 = vmul.f32 %v1130, %v1140
      %v1186 = vmul.f32 %v983, %v1140
      %v1187 = vmul.f32 %v987, %v1140
      %v1188 = vmul.f32 %v1135, %v1140
      %vm1237 = vcmask 1046528
      %v1238 = vrot.slane %v1141, 1
      %v1239 = vrot.slane %v1142, 1
      %v1240 = vsel %vm1237, %v1238, %v1239
      %v1241 = vrot.slane %v1143, 1
      %v1242 = vsel %vm1237, %v1239, %v1241
      %v1243 = vrot.slane %v1144, 1
      %v1244 = vrot.slane %v1145, 1
      %v1245 = vsel %vm1237, %v1243, %v1244
      %v1246 = vrot.slane %v1146, 1
      %v1247 = vsel %vm1237, %v1244, %v1246
      %v1248 = vrot.slane %v1147, 1
      %v1249 = vrot.slane %v1148, 1
      %v1250 = vsel %vm1237, %v1248, %v1249
      %v1251 = vrot.slane %v1149, 1
      %v1252 = vsel %vm1237, %v1249, %v1251
      %v1253 = vrot.slane %v1150, 1
      %v1254 = vrot.slane %v1151, 1
      %v1255 = vsel %vm1237, %v1253, %v1254
      %v1256 = vrot.slane %v1152, 1
      %v1257 = vsel %vm1237, %v1254, %v1256
      %v1258 = vrot.slane %v1153, 1
      %v1259 = vrot.slane %v1154, 1
      %v1260 = vsel %vm1237, %v1258, %v1259
      %v1261 = vrot.slane %v1155, 1
      %v1262 = vsel %vm1237, %v1259, %v1261
      %v1263 = vrot.slane %v1156, 1
      %v1264 = vrot.slane %v1157, 1
      %v1265 = vsel %vm1237, %v1263, %v1264
      %v1266 = vrot.slane %v1158, 1
      %v1267 = vsel %vm1237, %v1264, %v1266
      %v1268 = vrot.slane %v1159, 1
      %v1269 = vrot.slane %v1160, 1
      %v1270 = vsel %vm1237, %v1268, %v1269
      %v1271 = vrot.slane %v1161, 1
      %v1272 = vsel %vm1237, %v1269, %v1271
      %v1273 = vrot.slane %v1162, 1
      %v1274 = vrot.slane %v1163, 1
      %v1275 = vsel %vm1237, %v1273, %v1274
      %v1276 = vrot.slane %v1164, 1
      %v1277 = vsel %vm1237, %v1274, %v1276
      %v1278 = vrot.slane %v1165, 1
      %v1279 = vrot.slane %v1166, 1
      %v1280 = vsel %vm1237, %v1278, %v1279
      %v1281 = vrot.slane %v1167, 1
      %v1282 = vsel %vm1237, %v1279, %v1281
      %v1283 = vrot.slane %v1168, 1
      %v1284 = vrot.slane %v1169, 1
      %v1285 = vsel %vm1237, %v1283, %v1284
      %v1286 = vrot.slane %v1170, 1
      %v1287 = vsel %vm1237, %v1284, %v1286
      %v1288 = vrot.slane %v1171, 1
      %v1289 = vrot.slane %v1172, 1
      %v1290 = vsel %vm1237, %v1288, %v1289
      %v1291 = vrot.slane %v1173, 1
      %v1292 = vsel %vm1237, %v1289, %v1291
      %v1293 = vrot.slane %v1174, 1
      %v1294 = vrot.slane %v1175, 1
      %v1295 = vsel %vm1237, %v1293, %v1294
      %v1296 = vrot.slane %v1176, 1
      %v1297 = vsel %vm1237, %v1294, %v1296
      %v1298 = vrot.slane %v1177, 1
      %v1299 = vrot.slane %v1178, 1
      %v1300 = vsel %vm1237, %v1298, %v1299
      %v1301 = vrot.slane %v1179, 1
      %v1302 = vsel %vm1237, %v1299, %v1301
      %v1303 = vrot.slane %v1180, 1
      %v1304 = vrot.slane %v1181, 1
      %v1305 = vsel %vm1237, %v1303, %v1304
      %v1306 = vrot.slane %v1182, 1
      %v1307 = vsel %vm1237, %v1304, %v1306
      %v1308 = vrot.slane %v1183, 1
      %v1309 = vrot.slane %v1184, 1
      %v1310 = vsel %vm1237, %v1308, %v1309
      %v1311 = vrot.slane %v1185, 1
      %v1312 = vsel %vm1237, %v1309, %v1311
      %v1313 = vrot.slane %v1186, 1
      %v1314 = vrot.slane %v1187, 1
      %v1315 = vsel %vm1237, %v1313, %v1314
      %v1316 = vrot.slane %v1188, 1
      %v1317 = vsel %vm1237, %v1314, %v1316
      %v1350 = vadd.f32 %v1025, %v1240
      %v1351 = vadd.f32 %v1026, %v1242
      %v1352 = vadd.f32 %v1027, %v1245
      %v1353 = vadd.f32 %v1028, %v1247
      %v1354 = vadd.f32 %v1029, %v1250
      %v1355 = vadd.f32 %v1030, %v1252
      %v1356 = vadd.f32 %v1031, %v1255
      %v1357 = vadd.f32 %v1032, %v1257
      %v1358 = vadd.f32 %v1033, %v1260
      %v1359 = vadd.f32 %v1034, %v1262
      %v1360 = vadd.f32 %v1035, %v1265
      %v1361 = vadd.f32 %v1036, %v1267
      %v1362 = vadd.f32 %v1037, %v1270
      %v1363 = vadd.f32 %v1038, %v1272
      %v1364 = vadd.f32 %v1039, %v1275
      %v1365 = vadd.f32 %v1040, %v1277
      %v1366 = vadd.f32 %v1041, %v1280
      %v1367 = vadd.f32 %v1042, %v1282
      %v1368 = vadd.f32 %v1043, %v1285
      %v1369 = vadd.f32 %v1044, %v1287
      %v1370 = vadd.f32 %v1045, %v1290
      %v1371 = vadd.f32 %v1046, %v1292
      %v1372 = vadd.f32 %v1047, %v1295
      %v1373 = vadd.f32 %v1048, %v1297
      %v1374 = vadd.f32 %v1049, %v1300
      %v1375 = vadd.f32 %v1050, %v1302
      %v1376 = vadd.f32 %v1051, %v1305
      %v1377 = vadd.f32 %v1052, %v1307
      %v1378 = vadd.f32 %v1053, %v1310
      %v1379 = vadd.f32 %v1054, %v1312
      %v1380 = vadd.f32 %v1055, %v1315
      %v1381 = vadd.f32 %v1056, %v1317
      %v1382 = vlaneseq
      %v1383 = vshrl.u32 %v1382, 7
      %v1384 = vsub.s32 2, %v1383
      %v1385 = vrot.slane %v843, %v1384
      %v1386 = vmul.f32 %v848, %v1385
      %v1387 = vmul.f32 %v852, %v1385
      %v1388 = vmul.f32 %v1060, %v1385
      %v1389 = vmul.f32 %v857, %v1385
      %v1390 = vmul.f32 %v861, %v1385
      %v1391 = vmul.f32 %v1065, %v1385
      %v1392 = vmul.f32 %v866, %v1385
      %v1393 = vmul.f32 %v870, %v1385
      %v1394 = vmul.f32 %v1070, %v1385
      %v1395 = vmul.f32 %v875, %v1385
      %v1396 = vmul.f32 %v879, %v1385
      %v1397 = vmul.f32 %v1075, %v1385
      %v1398 = vmul.f32 %v884, %v1385
      %v1399 = vmul.f32 %v888, %v1385
      %v1400 = vmul.f32 %v1080, %v1385
      %v1401 = vmul.f32 %v893, %v1385
      %v1402 = vmul.f32 %v897, %v1385
      %v1403 = vmul.f32 %v1085, %v1385
      %v1404 = vmul.f32 %v902, %v1385
      %v1405 = vmul.f32 %v906, %v1385
      %v1406 = vmul.f32 %v1090, %v1385
      %v1407 = vmul.f32 %v911, %v1385
      %v1408 = vmul.f32 %v915, %v1385
      %v1409 = vmul.f32 %v1095, %v1385
      %v1410 = vmul.f32 %v920, %v1385
      %v1411 = vmul.f32 %v924, %v1385
      %v1412 = vmul.f32 %v1100, %v1385
      %v1413 = vmul.f32 %v929, %v1385
      %v1414 = vmul.f32 %v933, %v1385
      %v1415 = vmul.f32 %v1105, %v1385
      %v1416 = vmul.f32 %v938, %v1385
      %v1417 = vmul.f32 %v942, %v1385
      %v1418 = vmul.f32 %v1110, %v1385
      %v1419 = vmul.f32 %v947, %v1385
      %v1420 = vmul.f32 %v951, %v1385
      %v1421 = vmul.f32 %v1115, %v1385
      %v1422 = vmul.f32 %v956, %v1385
      %v1423 = vmul.f32 %v960, %v1385
      %v1424 = vmul.f32 %v1120, %v1385
      %v1425 = vmul.f32 %v965, %v1385
      %v1426 = vmul.f32 %v969, %v1385
      %v1427 = vmul.f32 %v1125, %v1385
      %v1428 = vmul.f32 %v974, %v1385
      %v1429 = vmul.f32 %v978, %v1385
      %v1430 = vmul.f32 %v1130, %v1385
      %v1431 = vmul.f32 %v983, %v1385
      %v1432 = vmul.f32 %v987, %v1385
      %v1433 = vmul.f32 %v1135, %v1385
      %vm1482 = vcmask 1045504
      %v1483 = vrot.slane %v1386, 2
      %v1484 = vrot.slane %v1387, 2
      %v1485 = vsel %vm1482, %v1483, %v1484
      %v1486 = vrot.slane %v1388, 2
      %v1487 = vsel %vm1482, %v1484, %v1486
      %v1488 = vrot.slane %v1389, 2
      %v1489 = vrot.slane %v1390, 2
      %v1490 = vsel %vm1482, %v1488, %v1489
      %v1491 = vrot.slane %v1391, 2
      %v1492 = vsel %vm1482, %v1489, %v1491
      %v1493 = vrot.slane %v1392, 2
      %v1494 = vrot.slane %v1393, 2
      %v1495 = vsel %vm1482, %v1493, %v1494
      %v1496 = vrot.slane %v1394, 2
      %v1497 = vsel %vm1482, %v1494, %v1496
      %v1498 = vrot.slane %v1395, 2
      %v1499 = vrot.slane %v1396, 2
      %v1500 = vsel %vm1482, %v1498, %v1499
      %v1501 = vrot.slane %v1397, 2
      %v1502 = vsel %vm1482, %v1499, %v1501
      %v1503 = vrot.slane %v1398, 2
      %v1504 = vrot.slane %v1399, 2
      %v1505 = vsel %vm1482, %v1503, %v1504
      %v1506 = vrot.slane %v1400, 2
      %v1507 = vsel %vm1482, %v1504, %v1506
      %v1508 = vrot.slane %v1401, 2
      %v1509 = vrot.slane %v1402, 2
      %v1510 = vsel %vm1482, %v1508, %v1509
      %v1511 = vrot.slane %v1403, 2
      %v1512 = vsel %vm1482, %v1509, %v1511
      %v1513 = vrot.slane %v1404, 2
      %v1514 = vrot.slane %v1405, 2
      %v1515 = vsel %vm1482, %v1513, %v1514
      %v1516 = vrot.slane %v1406, 2
      %v1517 = vsel %vm1482, %v1514, %v1516
      %v1518 = vrot.slane %v1407, 2
      %v1519 = vrot.slane %v1408, 2
      %v1520 = vsel %vm1482, %v1518, %v1519
      %v1521 = vrot.slane %v1409, 2
      %v1522 = vsel %vm1482, %v1519, %v1521
      %v1523 = vrot.slane %v1410, 2
      %v1524 = vrot.slane %v1411, 2
      %v1525 = vsel %vm1482, %v1523, %v1524
      %v1526 = vrot.slane %v1412, 2
      %v1527 = vsel %vm1482, %v1524, %v1526
      %v1528 = vrot.slane %v1413, 2
      %v1529 = vrot.slane %v1414, 2
      %v1530 = vsel %vm1482, %v1528, %v1529
      %v1531 = vrot.slane %v1415, 2
      %v1532 = vsel %vm1482, %v1529, %v1531
      %v1533 = vrot.slane %v1416, 2
      %v1534 = vrot.slane %v1417, 2
      %v1535 = vsel %vm1482, %v1533, %v1534
      %v1536 = vrot.slane %v1418, 2
      %v1537 = vsel %vm1482, %v1534, %v1536
      %v1538 = vrot.slane %v1419, 2
      %v1539 = vrot.slane %v1420, 2
      %v1540 = vsel %vm1482, %v1538, %v1539
      %v1541 = vrot.slane %v1421, 2
      %v1542 = vsel %vm1482, %v1539, %v1541
      %v1543 = vrot.slane %v1422, 2
      %v1544 = vrot.slane %v1423, 2
      %v1545 = vsel %vm1482, %v1543, %v1544
      %v1546 = vrot.slane %v1424, 2
      %v1547 = vsel %vm1482, %v1544, %v1546
      %v1548 = vrot.slane %v1425, 2
      %v1549 = vrot.slane %v1426, 2
      %v1550 = vsel %vm1482, %v1548, %v1549
      %v1551 = vrot.slane %v1427, 2
      %v1552 = vsel %vm1482, %v1549, %v1551
      %v1553 = vrot.slane %v1428, 2
      %v1554 = vrot.slane %v1429, 2
      %v1555 = vsel %vm1482, %v1553, %v1554
      %v1556 = vrot.slane %v1430, 2
      %v1557 = vsel %vm1482, %v1554, %v1556
      %v1558 = vrot.slane %v1431, 2
      %v1559 = vrot.slane %v1432, 2
      %v1560 = vsel %vm1482, %v1558, %v1559
      %v1561 = vrot.slane %v1433, 2
      %v1562 = vsel %vm1482, %v1559, %v1561
      %v1595 = vadd.f32 %v1350, %v1485
      %v1596 = vadd.f32 %v1351, %v1487
      %v1597 = vadd.f32 %v1352, %v1490
      %v1598 = vadd.f32 %v1353, %v1492
      %v1599 = vadd.f32 %v1354, %v1495
      %v1600 = vadd.f32 %v1355, %v1497
      %v1601 = vadd.f32 %v1356, %v1500
      %v1602 = vadd.f32 %v1357, %v1502
      %v1603 = vadd.f32 %v1358, %v1505
      %v1604 = vadd.f32 %v1359, %v1507
      %v1605 = vadd.f32 %v1360, %v1510
      %v1606 = vadd.f32 %v1361, %v1512
      %v1607 = vadd.f32 %v1362, %v1515
      %v1608 = vadd.f32 %v1363, %v1517
      %v1609 = vadd.f32 %v1364, %v1520
      %v1610 = vadd.f32 %v1365, %v1522
      %v1611 = vadd.f32 %v1366, %v1525
      %v1612 = vadd.f32 %v1367, %v1527
      %v1613 = vadd.f32 %v1368, %v1530
      %v1614 = vadd.f32 %v1369, %v1532
      %v1615 = vadd.f32 %v1370, %v1535
      %v1616 = vadd.f32 %v1371, %v1537
      %v1617 = vadd.f32 %v1372, %v1540
      %v1618 = vadd.f32 %v1373, %v1542
      %v1619 = vadd.f32 %v1374, %v1545
      %v1620 = vadd.f32 %v1375, %v1547
      %v1621 = vadd.f32 %v1376, %v1550
      %v1622 = vadd.f32 %v1377, %v1552
      %v1623 = vadd.f32 %v1378, %v1555
      %v1624 = vadd.f32 %v1379, %v1557
      %v1625 = vadd.f32 %v1380, %v1560
      %v1626 = vadd.f32 %v1381, %v1562
      %1628 = vset.pattern.permute.xlu0 0
      %1629 = vperm.xlu0 %1628, %v825
      %v1630 = vpop.permute.xlu0 %1629
      %1632 = vset.pattern.permute.xlu0 0
      %1633 = vperm.xlu0 %1632, %v775
      %v1634 = vpop.permute.xlu0 %1633
      %v1636 = vlaneseq
      %v1637 = vshrl.u32 %v1636, 7
      %v1638 = vsub.s32 3, %v1637
      %v1639 = vrot.slane %v843, %v1638
      %v1640 = vmul.f32 %v857, %v1639
      %v1641 = vmul.f32 %v861, %v1639
      %v1642 = vmul.f32 %v866, %v1639
      %v1643 = vmul.f32 %v870, %v1639
      %v1644 = vmul.f32 %v875, %v1639
      %v1645 = vmul.f32 %v879, %v1639
      %v1646 = vmul.f32 %v884, %v1639
      %v1647 = vmul.f32 %v888, %v1639
      %v1648 = vmul.f32 %v893, %v1639
      %v1649 = vmul.f32 %v897, %v1639
      %v1650 = vmul.f32 %v902, %v1639
      %v1651 = vmul.f32 %v906, %v1639
      %v1652 = vmul.f32 %v911, %v1639
      %v1653 = vmul.f32 %v915, %v1639
      %v1654 = vmul.f32 %v920, %v1639
      %v1655 = vmul.f32 %v924, %v1639
      %v1656 = vmul.f32 %v929, %v1639
      %v1657 = vmul.f32 %v933, %v1639
      %v1658 = vmul.f32 %v938, %v1639
      %v1659 = vmul.f32 %v942, %v1639
      %v1660 = vmul.f32 %v947, %v1639
      %v1661 = vmul.f32 %v951, %v1639
      %v1662 = vmul.f32 %v956, %v1639
      %v1663 = vmul.f32 %v960, %v1639
      %v1664 = vmul.f32 %v965, %v1639
      %v1665 = vmul.f32 %v969, %v1639
      %v1666 = vmul.f32 %v974, %v1639
      %v1667 = vmul.f32 %v978, %v1639
      %v1668 = vmul.f32 %v983, %v1639
      %v1669 = vmul.f32 %v987, %v1639
      %v1670 = vmul.f32 %v1630, %v1639
      %v1671 = vmul.f32 %v1634, %v1639
      %v1672 = vadd.f32 %v1595, %v1640
      %v1673 = vadd.f32 %v1596, %v1641
      %v1674 = vadd.f32 %v1597, %v1642
      %v1675 = vadd.f32 %v1598, %v1643
      %v1676 = vadd.f32 %v1599, %v1644
      %v1677 = vadd.f32 %v1600, %v1645
      %v1678 = vadd.f32 %v1601, %v1646
      %v1679 = vadd.f32 %v1602, %v1647
      %v1680 = vadd.f32 %v1603, %v1648
      %v1681 = vadd.f32 %v1604, %v1649
      %v1682 = vadd.f32 %v1605, %v1650
      %v1683 = vadd.f32 %v1606, %v1651
      %v1684 = vadd.f32 %v1607, %v1652
      %v1685 = vadd.f32 %v1608, %v1653
      %v1686 = vadd.f32 %v1609, %v1654
      %v1687 = vadd.f32 %v1610, %v1655
      %v1688 = vadd.f32 %v1611, %v1656
      %v1689 = vadd.f32 %v1612, %v1657
      %v1690 = vadd.f32 %v1613, %v1658
      %v1691 = vadd.f32 %v1614, %v1659
      %v1692 = vadd.f32 %v1615, %v1660
      %v1693 = vadd.f32 %v1616, %v1661
      %v1694 = vadd.f32 %v1617, %v1662
      %v1695 = vadd.f32 %v1618, %v1663
      %v1696 = vadd.f32 %v1619, %v1664
      %v1697 = vadd.f32 %v1620, %v1665
      %v1698 = vadd.f32 %v1621, %v1666
      %v1699 = vadd.f32 %v1622, %v1667
      %v1700 = vadd.f32 %v1623, %v1668
      %v1701 = vadd.f32 %v1624, %v1669
      %v1702 = vadd.f32 %v1625, %v1670
      %v1703 = vadd.f32 %v1626, %v1671
      %1705 = vset.pattern.permute.xlu0 0
      %1706 = vperm.xlu0 %1705, %v842
      %v1707 = vpop.permute.xlu0 %1706
      %v1709 = vlaneseq
      %v1710 = vshrl.u32 %v1709, 7
      %v1711 = vsub.s32 4, %v1710
      %v1712 = vrot.slane %v843, %v1711
      %v1713 = vmul.f32 %v857, %v1712
      %v1714 = vmul.f32 %v861, %v1712
      %v1715 = vmul.f32 %v1065, %v1712
      %v1716 = vmul.f32 %v866, %v1712
      %v1717 = vmul.f32 %v870, %v1712
      %v1718 = vmul.f32 %v1070, %v1712
      %v1719 = vmul.f32 %v875, %v1712
      %v1720 = vmul.f32 %v879, %v1712
      %v1721 = vmul.f32 %v1075, %v1712
      %v1722 = vmul.f32 %v884, %v1712
      %v1723 = vmul.f32 %v888, %v1712
      %v1724 = vmul.f32 %v1080, %v1712
      %v1725 = vmul.f32 %v893, %v1712
      %v1726 = vmul.f32 %v897, %v1712
      %v1727 = vmul.f32 %v1085, %v1712
      %v1728 = vmul.f32 %v902, %v1712
      %v1729 = vmul.f32 %v906, %v1712
      %v1730 = vmul.f32 %v1090, %v1712
      %v1731 = vmul.f32 %v911, %v1712
      %v1732 = vmul.f32 %v915, %v1712
      %v1733 = vmul.f32 %v1095, %v1712
      %v1734 = vmul.f32 %v920, %v1712
      %v1735 = vmul.f32 %v924, %v1712
      %v1736 = vmul.f32 %v1100, %v1712
      %v1737 = vmul.f32 %v929, %v1712
      %v1738 = vmul.f32 %v933, %v1712
      %v1739 = vmul.f32 %v1105, %v1712
      %v1740 = vmul.f32 %v938, %v1712
      %v1741 = vmul.f32 %v942, %v1712
      %v1742 = vmul.f32 %v1110, %v1712
      %v1743 = vmul.f32 %v947, %v1712
      %v1744 = vmul.f32 %v951, %v1712
      %v1745 = vmul.f32 %v1115, %v1712
      %v1746 = vmul.f32 %v956, %v1712
      %v1747 = vmul.f32 %v960, %v1712
      %v1748 = vmul.f32 %v1120, %v1712
      %v1749 = vmul.f32 %v965, %v1712
      %v1750 = vmul.f32 %v969, %v1712
      %v1751 = vmul.f32 %v1125, %v1712
      %v1752 = vmul.f32 %v974, %v1712
      %v1753 = vmul.f32 %v978, %v1712
      %v1754 = vmul.f32 %v1130, %v1712
      %v1755 = vmul.f32 %v983, %v1712
      %v1756 = vmul.f32 %v987, %v1712
      %v1757 = vmul.f32 %v1135, %v1712
      %v1758 = vmul.f32 %v1630, %v1712
      %v1759 = vmul.f32 %v1634, %v1712
      %v1760 = vmul.f32 %v1707, %v1712
      %v1809 = vrot.slane %v1713, 1
      %v1810 = vrot.slane %v1714, 1
      %v1811 = vsel %vm1237, %v1809, %v1810
      %v1812 = vrot.slane %v1715, 1
      %v1813 = vsel %vm1237, %v1810, %v1812
      %v1814 = vrot.slane %v1716, 1
      %v1815 = vrot.slane %v1717, 1
      %v1816 = vsel %vm1237, %v1814, %v1815
      %v1817 = vrot.slane %v1718, 1
      %v1818 = vsel %vm1237, %v1815, %v1817
      %v1819 = vrot.slane %v1719, 1
      %v1820 = vrot.slane %v1720, 1
      %v1821 = vsel %vm1237, %v1819, %v1820
      %v1822 = vrot.slane %v1721, 1
      %v1823 = vsel %vm1237, %v1820, %v1822
      %v1824 = vrot.slane %v1722, 1
      %v1825 = vrot.slane %v1723, 1
      %v1826 = vsel %vm1237, %v1824, %v1825
      %v1827 = vrot.slane %v1724, 1
      %v1828 = vsel %vm1237, %v1825, %v1827
      %v1829 = vrot.slane %v1725, 1
      %v1830 = vrot.slane %v1726, 1
      %v1831 = vsel %vm1237, %v1829, %v1830
      %v1832 = vrot.slane %v1727, 1
      %v1833 = vsel %vm1237, %v1830, %v1832
      %v1834 = vrot.slane %v1728, 1
      %v1835 = vrot.slane %v1729, 1
      %v1836 = vsel %vm1237, %v1834, %v1835
      %v1837 = vrot.slane %v1730, 1
      %v1838 = vsel %vm1237, %v1835, %v1837
      %v1839 = vrot.slane %v1731, 1
      %v1840 = vrot.slane %v1732, 1
      %v1841 = vsel %vm1237, %v1839, %v1840
      %v1842 = vrot.slane %v1733, 1
      %v1843 = vsel %vm1237, %v1840, %v1842
      %v1844 = vrot.slane %v1734, 1
      %v1845 = vrot.slane %v1735, 1
      %v1846 = vsel %vm1237, %v1844, %v1845
      %v1847 = vrot.slane %v1736, 1
      %v1848 = vsel %vm1237, %v1845, %v1847
      %v1849 = vrot.slane %v1737, 1
      %v1850 = vrot.slane %v1738, 1
      %v1851 = vsel %vm1237, %v1849, %v1850
      %v1852 = vrot.slane %v1739, 1
      %v1853 = vsel %vm1237, %v1850, %v1852
      %v1854 = vrot.slane %v1740, 1
      %v1855 = vrot.slane %v1741, 1
      %v1856 = vsel %vm1237, %v1854, %v1855
      %v1857 = vrot.slane %v1742, 1
      %v1858 = vsel %vm1237, %v1855, %v1857
      %v1859 = vrot.slane %v1743, 1
      %v1860 = vrot.slane %v1744, 1
      %v1861 = vsel %vm1237, %v1859, %v1860
      %v1862 = vrot.slane %v1745, 1
      %v1863 = vsel %vm1237, %v1860, %v1862
      %v1864 = vrot.slane %v1746, 1
      %v1865 = vrot.slane %v1747, 1
      %v1866 = vsel %vm1237, %v1864, %v1865
      %v1867 = vrot.slane %v1748, 1
      %v1868 = vsel %vm1237, %v1865, %v1867
      %v1869 = vrot.slane %v1749, 1
      %v1870 = vrot.slane %v1750, 1
      %v1871 = vsel %vm1237, %v1869, %v1870
      %v1872 = vrot.slane %v1751, 1
      %v1873 = vsel %vm1237, %v1870, %v1872
      %v1874 = vrot.slane %v1752, 1
      %v1875 = vrot.slane %v1753, 1
      %v1876 = vsel %vm1237, %v1874, %v1875
      %v1877 = vrot.slane %v1754, 1
      %v1878 = vsel %vm1237, %v1875, %v1877
      %v1879 = vrot.slane %v1755, 1
      %v1880 = vrot.slane %v1756, 1
      %v1881 = vsel %vm1237, %v1879, %v1880
      %v1882 = vrot.slane %v1757, 1
      %v1883 = vsel %vm1237, %v1880, %v1882
      %v1884 = vrot.slane %v1758, 1
      %v1885 = vrot.slane %v1759, 1
      %v1886 = vsel %vm1237, %v1884, %v1885
      %v1887 = vrot.slane %v1760, 1
      %v1888 = vsel %vm1237, %v1885, %v1887
      %v1921 = vadd.f32 %v1672, %v1811
      %v1922 = vadd.f32 %v1673, %v1813
      %v1923 = vadd.f32 %v1674, %v1816
      %v1924 = vadd.f32 %v1675, %v1818
      %v1925 = vadd.f32 %v1676, %v1821
      %v1926 = vadd.f32 %v1677, %v1823
      %v1927 = vadd.f32 %v1678, %v1826
      %v1928 = vadd.f32 %v1679, %v1828
      %v1929 = vadd.f32 %v1680, %v1831
      %v1930 = vadd.f32 %v1681, %v1833
      %v1931 = vadd.f32 %v1682, %v1836
      %v1932 = vadd.f32 %v1683, %v1838
      %v1933 = vadd.f32 %v1684, %v1841
      %v1934 = vadd.f32 %v1685, %v1843
      %v1935 = vadd.f32 %v1686, %v1846
      %v1936 = vadd.f32 %v1687, %v1848
      %v1937 = vadd.f32 %v1688, %v1851
      %v1938 = vadd.f32 %v1689, %v1853
      %v1939 = vadd.f32 %v1690, %v1856
      %v1940 = vadd.f32 %v1691, %v1858
      %v1941 = vadd.f32 %v1692, %v1861
      %v1942 = vadd.f32 %v1693, %v1863
      %v1943 = vadd.f32 %v1694, %v1866
      %v1944 = vadd.f32 %v1695, %v1868
      %v1945 = vadd.f32 %v1696, %v1871
      %v1946 = vadd.f32 %v1697, %v1873
      %v1947 = vadd.f32 %v1698, %v1876
      %v1948 = vadd.f32 %v1699, %v1878
      %v1949 = vadd.f32 %v1700, %v1881
      %v1950 = vadd.f32 %v1701, %v1883
      %v1951 = vadd.f32 %v1702, %v1886
      %v1952 = vadd.f32 %v1703, %v1888
      %v1953 = vlaneseq
      %v1954 = vshrl.u32 %v1953, 7
      %v1955 = vsub.s32 5, %v1954
      %v1956 = vrot.slane %v843, %v1955
      %v1957 = vmul.f32 %v857, %v1956
      %v1958 = vmul.f32 %v861, %v1956
      %v1959 = vmul.f32 %v1065, %v1956
      %v1960 = vmul.f32 %v866, %v1956
      %v1961 = vmul.f32 %v870, %v1956
      %v1962 = vmul.f32 %v1070, %v1956
      %v1963 = vmul.f32 %v875, %v1956
      %v1964 = vmul.f32 %v879, %v1956
      %v1965 = vmul.f32 %v1075, %v1956
      %v1966 = vmul.f32 %v884, %v1956
      %v1967 = vmul.f32 %v888, %v1956
      %v1968 = vmul.f32 %v1080, %v1956
      %v1969 = vmul.f32 %v893, %v1956
      %v1970 = vmul.f32 %v897, %v1956
      %v1971 = vmul.f32 %v1085, %v1956
      %v1972 = vmul.f32 %v902, %v1956
      %v1973 = vmul.f32 %v906, %v1956
      %v1974 = vmul.f32 %v1090, %v1956
      %v1975 = vmul.f32 %v911, %v1956
      %v1976 = vmul.f32 %v915, %v1956
      %v1977 = vmul.f32 %v1095, %v1956
      %v1978 = vmul.f32 %v920, %v1956
      %v1979 = vmul.f32 %v924, %v1956
      %v1980 = vmul.f32 %v1100, %v1956
      %v1981 = vmul.f32 %v929, %v1956
      %v1982 = vmul.f32 %v933, %v1956
      %v1983 = vmul.f32 %v1105, %v1956
      %v1984 = vmul.f32 %v938, %v1956
      %v1985 = vmul.f32 %v942, %v1956
      %v1986 = vmul.f32 %v1110, %v1956
      %v1987 = vmul.f32 %v947, %v1956
      %v1988 = vmul.f32 %v951, %v1956
      %v1989 = vmul.f32 %v1115, %v1956
      %v1990 = vmul.f32 %v956, %v1956
      %v1991 = vmul.f32 %v960, %v1956
      %v1992 = vmul.f32 %v1120, %v1956
      %v1993 = vmul.f32 %v965, %v1956
      %v1994 = vmul.f32 %v969, %v1956
      %v1995 = vmul.f32 %v1125, %v1956
      %v1996 = vmul.f32 %v974, %v1956
      %v1997 = vmul.f32 %v978, %v1956
      %v1998 = vmul.f32 %v1130, %v1956
      %v1999 = vmul.f32 %v983, %v1956
      %v2000 = vmul.f32 %v987, %v1956
      %v2001 = vmul.f32 %v1135, %v1956
      %v2002 = vmul.f32 %v1630, %v1956
      %v2003 = vmul.f32 %v1634, %v1956
      %v2004 = vmul.f32 %v1707, %v1956
      %v2053 = vrot.slane %v1957, 2
      %v2054 = vrot.slane %v1958, 2
      %v2055 = vsel %vm1482, %v2053, %v2054
      %v2056 = vrot.slane %v1959, 2
      %v2057 = vsel %vm1482, %v2054, %v2056
      %v2058 = vrot.slane %v1960, 2
      %v2059 = vrot.slane %v1961, 2
      %v2060 = vsel %vm1482, %v2058, %v2059
      %v2061 = vrot.slane %v1962, 2
      %v2062 = vsel %vm1482, %v2059, %v2061
      %v2063 = vrot.slane %v1963, 2
      %v2064 = vrot.slane %v1964, 2
      %v2065 = vsel %vm1482, %v2063, %v2064
      %v2066 = vrot.slane %v1965, 2
      %v2067 = vsel %vm1482, %v2064, %v2066
      %v2068 = vrot.slane %v1966, 2
      %v2069 = vrot.slane %v1967, 2
      %v2070 = vsel %vm1482, %v2068, %v2069
      %v2071 = vrot.slane %v1968, 2
      %v2072 = vsel %vm1482, %v2069, %v2071
      %v2073 = vrot.slane %v1969, 2
      %v2074 = vrot.slane %v1970, 2
      %v2075 = vsel %vm1482, %v2073, %v2074
      %v2076 = vrot.slane %v1971, 2
      %v2077 = vsel %vm1482, %v2074, %v2076
      %v2078 = vrot.slane %v1972, 2
      %v2079 = vrot.slane %v1973, 2
      %v2080 = vsel %vm1482, %v2078, %v2079
      %v2081 = vrot.slane %v1974, 2
      %v2082 = vsel %vm1482, %v2079, %v2081
      %v2083 = vrot.slane %v1975, 2
      %v2084 = vrot.slane %v1976, 2
      %v2085 = vsel %vm1482, %v2083, %v2084
      %v2086 = vrot.slane %v1977, 2
      %v2087 = vsel %vm1482, %v2084, %v2086
      %v2088 = vrot.slane %v1978, 2
      %v2089 = vrot.slane %v1979, 2
      %v2090 = vsel %vm1482, %v2088, %v2089
      %v2091 = vrot.slane %v1980, 2
      %v2092 = vsel %vm1482, %v2089, %v2091
      %v2093 = vrot.slane %v1981, 2
      %v2094 = vrot.slane %v1982, 2
      %v2095 = vsel %vm1482, %v2093, %v2094
      %v2096 = vrot.slane %v1983, 2
      %v2097 = vsel %vm1482, %v2094, %v2096
      %v2098 = vrot.slane %v1984, 2
      %v2099 = vrot.slane %v1985, 2
      %v2100 = vsel %vm1482, %v2098, %v2099
      %v2101 = vrot.slane %v1986, 2
      %v2102 = vsel %vm1482, %v2099, %v2101
      %v2103 = vrot.slane %v1987, 2
      %v2104 = vrot.slane %v1988, 2
      %v2105 = vsel %vm1482, %v2103, %v2104
      %v2106 = vrot.slane %v1989, 2
      %v2107 = vsel %vm1482, %v2104, %v2106
      %v2108 = vrot.slane %v1990, 2
      %v2109 = vrot.slane %v1991, 2
      %v2110 = vsel %vm1482, %v2108, %v2109
      %v2111 = vrot.slane %v1992, 2
      %v2112 = vsel %vm1482, %v2109, %v2111
      %v2113 = vrot.slane %v1993, 2
      %v2114 = vrot.slane %v1994, 2
      %v2115 = vsel %vm1482, %v2113, %v2114
      %v2116 = vrot.slane %v1995, 2
      %v2117 = vsel %vm1482, %v2114, %v2116
      %v2118 = vrot.slane %v1996, 2
      %v2119 = vrot.slane %v1997, 2
      %v2120 = vsel %vm1482, %v2118, %v2119
      %v2121 = vrot.slane %v1998, 2
      %v2122 = vsel %vm1482, %v2119, %v2121
      %v2123 = vrot.slane %v1999, 2
      %v2124 = vrot.slane %v2000, 2
      %v2125 = vsel %vm1482, %v2123, %v2124
      %v2126 = vrot.slane %v2001, 2
      %v2127 = vsel %vm1482, %v2124, %v2126
      %v2128 = vrot.slane %v2002, 2
      %v2129 = vrot.slane %v2003, 2
      %v2130 = vsel %vm1482, %v2128, %v2129
      %v2131 = vrot.slane %v2004, 2
      %v2132 = vsel %vm1482, %v2129, %v2131
      %v2165 = vadd.f32 %v1921, %v2055
      %v2166 = vadd.f32 %v1922, %v2057
      %v2167 = vadd.f32 %v1923, %v2060
      %v2168 = vadd.f32 %v1924, %v2062
      %v2169 = vadd.f32 %v1925, %v2065
      %v2170 = vadd.f32 %v1926, %v2067
      %v2171 = vadd.f32 %v1927, %v2070
      %v2172 = vadd.f32 %v1928, %v2072
      %v2173 = vadd.f32 %v1929, %v2075
      %v2174 = vadd.f32 %v1930, %v2077
      %v2175 = vadd.f32 %v1931, %v2080
      %v2176 = vadd.f32 %v1932, %v2082
      %v2177 = vadd.f32 %v1933, %v2085
      %v2178 = vadd.f32 %v1934, %v2087
      %v2179 = vadd.f32 %v1935, %v2090
      %v2180 = vadd.f32 %v1936, %v2092
      %v2181 = vadd.f32 %v1937, %v2095
      %v2182 = vadd.f32 %v1938, %v2097
      %v2183 = vadd.f32 %v1939, %v2100
      %v2184 = vadd.f32 %v1940, %v2102
      %v2185 = vadd.f32 %v1941, %v2105
      %v2186 = vadd.f32 %v1942, %v2107
      %v2187 = vadd.f32 %v1943, %v2110
      %v2188 = vadd.f32 %v1944, %v2112
      %v2189 = vadd.f32 %v1945, %v2115
      %v2190 = vadd.f32 %v1946, %v2117
      %v2191 = vadd.f32 %v1947, %v2120
      %v2192 = vadd.f32 %v1948, %v2122
      %v2193 = vadd.f32 %v1949, %v2125
      %v2194 = vadd.f32 %v1950, %v2127
      %v2195 = vadd.f32 %v1951, %v2130
      %v2196 = vadd.f32 %v1952, %v2132
      %v2197 = vlaneseq
      %v2198 = vshrl.u32 %v2197, 7
      %v2199 = vsub.s32 6, %v2198
      %v2200 = vrot.slane %v843, %v2199
      %v2201 = vmul.f32 %v866, %v2200
      %v2202 = vmul.f32 %v870, %v2200
      %v2203 = vmul.f32 %v875, %v2200
      %v2204 = vmul.f32 %v879, %v2200
      %v2205 = vmul.f32 %v884, %v2200
      %v2206 = vmul.f32 %v888, %v2200
      %v2207 = vmul.f32 %v893, %v2200
      %v2208 = vmul.f32 %v897, %v2200
      %v2209 = vmul.f32 %v902, %v2200
      %v2210 = vmul.f32 %v906, %v2200
      %v2211 = vmul.f32 %v911, %v2200
      %v2212 = vmul.f32 %v915, %v2200
      %v2213 = vmul.f32 %v920, %v2200
      %v2214 = vmul.f32 %v924, %v2200
      %v2215 = vmul.f32 %v929, %v2200
      %v2216 = vmul.f32 %v933, %v2200
      %v2217 = vmul.f32 %v938, %v2200
      %v2218 = vmul.f32 %v942, %v2200
      %v2219 = vmul.f32 %v947, %v2200
      %v2220 = vmul.f32 %v951, %v2200
      %v2221 = vmul.f32 %v956, %v2200
      %v2222 = vmul.f32 %v960, %v2200
      %v2223 = vmul.f32 %v965, %v2200
      %v2224 = vmul.f32 %v969, %v2200
      %v2225 = vmul.f32 %v974, %v2200
      %v2226 = vmul.f32 %v978, %v2200
      %v2227 = vmul.f32 %v983, %v2200
      %v2228 = vmul.f32 %v987, %v2200
      %v2229 = vmul.f32 %v1630, %v2200
      %v2230 = vmul.f32 %v1634, %v2200
      %v2231 = vmul.f32 %v848, %v2200
      %v2232 = vmul.f32 %v852, %v2200
      %v2233 = vadd.f32 %v2165, %v2201
      %v2234 = vadd.f32 %v2166, %v2202
      %v2235 = vadd.f32 %v2167, %v2203
      %v2236 = vadd.f32 %v2168, %v2204
      %v2237 = vadd.f32 %v2169, %v2205
      %v2238 = vadd.f32 %v2170, %v2206
      %v2239 = vadd.f32 %v2171, %v2207
      %v2240 = vadd.f32 %v2172, %v2208
      %v2241 = vadd.f32 %v2173, %v2209
      %v2242 = vadd.f32 %v2174, %v2210
      %v2243 = vadd.f32 %v2175, %v2211
      %v2244 = vadd.f32 %v2176, %v2212
      %v2245 = vadd.f32 %v2177, %v2213
      %v2246 = vadd.f32 %v2178, %v2214
      %v2247 = vadd.f32 %v2179, %v2215
      %v2248 = vadd.f32 %v2180, %v2216
      %v2249 = vadd.f32 %v2181, %v2217
      %v2250 = vadd.f32 %v2182, %v2218
      %v2251 = vadd.f32 %v2183, %v2219
      %v2252 = vadd.f32 %v2184, %v2220
      %v2253 = vadd.f32 %v2185, %v2221
      %v2254 = vadd.f32 %v2186, %v2222
      %v2255 = vadd.f32 %v2187, %v2223
      %v2256 = vadd.f32 %v2188, %v2224
      %v2257 = vadd.f32 %v2189, %v2225
      %v2258 = vadd.f32 %v2190, %v2226
      %v2259 = vadd.f32 %v2191, %v2227
      %v2260 = vadd.f32 %v2192, %v2228
      %v2261 = vadd.f32 %v2193, %v2229
      %v2262 = vadd.f32 %v2194, %v2230
      %v2263 = vadd.f32 %v2195, %v2231
      %v2264 = vadd.f32 %v2196, %v2232
      %v2265 = vlaneseq
      %v2266 = vshrl.u32 %v2265, 7
      %v2267 = vsub.s32 7, %v2266
      %v2268 = vrot.slane %v843, %v2267
      %v2269 = vmul.f32 %v866, %v2268
      %v2270 = vmul.f32 %v870, %v2268
      %v2271 = vmul.f32 %v1070, %v2268
      %v2272 = vmul.f32 %v875, %v2268
      %v2273 = vmul.f32 %v879, %v2268
      %v2274 = vmul.f32 %v1075, %v2268
      %v2275 = vmul.f32 %v884, %v2268
      %v2276 = vmul.f32 %v888, %v2268
      %v2277 = vmul.f32 %v1080, %v2268
      %v2278 = vmul.f32 %v893, %v2268
      %v2279 = vmul.f32 %v897, %v2268
      %v2280 = vmul.f32 %v1085, %v2268
      %v2281 = vmul.f32 %v902, %v2268
      %v2282 = vmul.f32 %v906, %v2268
      %v2283 = vmul.f32 %v1090, %v2268
      %v2284 = vmul.f32 %v911, %v2268
      %v2285 = vmul.f32 %v915, %v2268
      %v2286 = vmul.f32 %v1095, %v2268
      %v2287 = vmul.f32 %v920, %v2268
      %v2288 = vmul.f32 %v924, %v2268
      %v2289 = vmul.f32 %v1100, %v2268
      %v2290 = vmul.f32 %v929, %v2268
      %v2291 = vmul.f32 %v933, %v2268
      %v2292 = vmul.f32 %v1105, %v2268
      %v2293 = vmul.f32 %v938, %v2268
      %v2294 = vmul.f32 %v942, %v2268
      %v2295 = vmul.f32 %v1110, %v2268
      %v2296 = vmul.f32 %v947, %v2268
      %v2297 = vmul.f32 %v951, %v2268
      %v2298 = vmul.f32 %v1115, %v2268
      %v2299 = vmul.f32 %v956, %v2268
      %v2300 = vmul.f32 %v960, %v2268
      %v2301 = vmul.f32 %v1120, %v2268
      %v2302 = vmul.f32 %v965, %v2268
      %v2303 = vmul.f32 %v969, %v2268
      %v2304 = vmul.f32 %v1125, %v2268
      %v2305 = vmul.f32 %v974, %v2268
      %v2306 = vmul.f32 %v978, %v2268
      %v2307 = vmul.f32 %v1130, %v2268
      %v2308 = vmul.f32 %v983, %v2268
      %v2309 = vmul.f32 %v987, %v2268
      %v2310 = vmul.f32 %v1135, %v2268
      %v2311 = vmul.f32 %v1630, %v2268
      %v2312 = vmul.f32 %v1634, %v2268
      %v2313 = vmul.f32 %v1707, %v2268
      %v2314 = vmul.f32 %v848, %v2268
      %v2315 = vmul.f32 %v852, %v2268
      %v2316 = vmul.f32 %v1060, %v2268
      %v2365 = vrot.slane %v2269, 1
      %v2366 = vrot.slane %v2270, 1
      %v2367 = vsel %vm1237, %v2365, %v2366
      %v2368 = vrot.slane %v2271, 1
      %v2369 = vsel %vm1237, %v2366, %v2368
      %v2370 = vrot.slane %v2272, 1
      %v2371 = vrot.slane %v2273, 1
      %v2372 = vsel %vm1237, %v2370, %v2371
      %v2373 = vrot.slane %v2274, 1
      %v2374 = vsel %vm1237, %v2371, %v2373
      %v2375 = vrot.slane %v2275, 1
      %v2376 = vrot.slane %v2276, 1
      %v2377 = vsel %vm1237, %v2375, %v2376
      %v2378 = vrot.slane %v2277, 1
      %v2379 = vsel %vm1237, %v2376, %v2378
      %v2380 = vrot.slane %v2278, 1
      %v2381 = vrot.slane %v2279, 1
      %v2382 = vsel %vm1237, %v2380, %v2381
      %v2383 = vrot.slane %v2280, 1
      %v2384 = vsel %vm1237, %v2381, %v2383
      %v2385 = vrot.slane %v2281, 1
      %v2386 = vrot.slane %v2282, 1
      %v2387 = vsel %vm1237, %v2385, %v2386
      %v2388 = vrot.slane %v2283, 1
      %v2389 = vsel %vm1237, %v2386, %v2388
      %v2390 = vrot.slane %v2284, 1
      %v2391 = vrot.slane %v2285, 1
      %v2392 = vsel %vm1237, %v2390, %v2391
      %v2393 = vrot.slane %v2286, 1
      %v2394 = vsel %vm1237, %v2391, %v2393
      %v2395 = vrot.slane %v2287, 1
      %v2396 = vrot.slane %v2288, 1
      %v2397 = vsel %vm1237, %v2395, %v2396
      %v2398 = vrot.slane %v2289, 1
      %v2399 = vsel %vm1237, %v2396, %v2398
      %v2400 = vrot.slane %v2290, 1
      %v2401 = vrot.slane %v2291, 1
      %v2402 = vsel %vm1237, %v2400, %v2401
      %v2403 = vrot.slane %v2292, 1
      %v2404 = vsel %vm1237, %v2401, %v2403
      %v2405 = vrot.slane %v2293, 1
      %v2406 = vrot.slane %v2294, 1
      %v2407 = vsel %vm1237, %v2405, %v2406
      %v2408 = vrot.slane %v2295, 1
      %v2409 = vsel %vm1237, %v2406, %v2408
      %v2410 = vrot.slane %v2296, 1
      %v2411 = vrot.slane %v2297, 1
      %v2412 = vsel %vm1237, %v2410, %v2411
      %v2413 = vrot.slane %v2298, 1
      %v2414 = vsel %vm1237, %v2411, %v2413
      %v2415 = vrot.slane %v2299, 1
      %v2416 = vrot.slane %v2300, 1
      %v2417 = vsel %vm1237, %v2415, %v2416
      %v2418 = vrot.slane %v2301, 1
      %v2419 = vsel %vm1237, %v2416, %v2418
      %v2420 = vrot.slane %v2302, 1
      %v2421 = vrot.slane %v2303, 1
      %v2422 = vsel %vm1237, %v2420, %v2421
      %v2423 = vrot.slane %v2304, 1
      %v2424 = vsel %vm1237, %v2421, %v2423
      %v2425 = vrot.slane %v2305, 1
      %v2426 = vrot.slane %v2306, 1
      %v2427 = vsel %vm1237, %v2425, %v2426
      %v2428 = vrot.slane %v2307, 1
      %v2429 = vsel %vm1237, %v2426, %v2428
      %v2430 = vrot.slane %v2308, 1
      %v2431 = vrot.slane %v2309, 1
      %v2432 = vsel %vm1237, %v2430, %v2431
      %v2433 = vrot.slane %v2310, 1
      %v2434 = vsel %vm1237, %v2431, %v2433
      %v2435 = vrot.slane %v2311, 1
      %v2436 = vrot.slane %v2312, 1
      %v2437 = vsel %vm1237, %v2435, %v2436
      %v2438 = vrot.slane %v2313, 1
      %v2439 = vsel %vm1237, %v2436, %v2438
      %v2440 = vrot.slane %v2314, 1
      %v2441 = vrot.slane %v2315, 1
      %v2442 = vsel %vm1237, %v2440, %v2441
      %v2443 = vrot.slane %v2316, 1
      %v2444 = vsel %vm1237, %v2441, %v2443
      %v2477 = vadd.f32 %v2233, %v2367
      %v2478 = vadd.f32 %v2234, %v2369
      %v2479 = vadd.f32 %v2235, %v2372
      %v2480 = vadd.f32 %v2236, %v2374
      %v2481 = vadd.f32 %v2237, %v2377
      %v2482 = vadd.f32 %v2238, %v2379
      %v2483 = vadd.f32 %v2239, %v2382
      %v2484 = vadd.f32 %v2240, %v2384
      %v2485 = vadd.f32 %v2241, %v2387
      %v2486 = vadd.f32 %v2242, %v2389
      %v2487 = vadd.f32 %v2243, %v2392
      %v2488 = vadd.f32 %v2244, %v2394
      %v2489 = vadd.f32 %v2245, %v2397
      %v2490 = vadd.f32 %v2246, %v2399
      %v2491 = vadd.f32 %v2247, %v2402
      %v2492 = vadd.f32 %v2248, %v2404
      %v2493 = vadd.f32 %v2249, %v2407
      %v2494 = vadd.f32 %v2250, %v2409
      %v2495 = vadd.f32 %v2251, %v2412
      %v2496 = vadd.f32 %v2252, %v2414
      %v2497 = vadd.f32 %v2253, %v2417
      %v2498 = vadd.f32 %v2254, %v2419
      %v2499 = vadd.f32 %v2255, %v2422
      %v2500 = vadd.f32 %v2256, %v2424
      %v2501 = vadd.f32 %v2257, %v2427
      %v2502 = vadd.f32 %v2258, %v2429
      %v2503 = vadd.f32 %v2259, %v2432
      %v2504 = vadd.f32 %v2260, %v2434
      %v2505 = vadd.f32 %v2261, %v2437
      %v2506 = vadd.f32 %v2262, %v2439
      %v2507 = vadd.f32 %v2263, %v2442
      %v2508 = vadd.f32 %v2264, %v2444
      %v2509 = vlaneseq
      %v2510 = vshrl.u32 %v2509, 7
      %v2511 = vsub.s32 0, %v2510
      %v2512 = vrot.slane %v844, %v2511
      %v2513 = vmul.f32 %v866, %v2512
      %v2514 = vmul.f32 %v870, %v2512
      %v2515 = vmul.f32 %v1070, %v2512
      %v2516 = vmul.f32 %v875, %v2512
      %v2517 = vmul.f32 %v879, %v2512
      %v2518 = vmul.f32 %v1075, %v2512
      %v2519 = vmul.f32 %v884, %v2512
      %v2520 = vmul.f32 %v888, %v2512
      %v2521 = vmul.f32 %v1080, %v2512
      %v2522 = vmul.f32 %v893, %v2512
      %v2523 = vmul.f32 %v897, %v2512
      %v2524 = vmul.f32 %v1085, %v2512
      %v2525 = vmul.f32 %v902, %v2512
      %v2526 = vmul.f32 %v906, %v2512
      %v2527 = vmul.f32 %v1090, %v2512
      %v2528 = vmul.f32 %v911, %v2512
      %v2529 = vmul.f32 %v915, %v2512
      %v2530 = vmul.f32 %v1095, %v2512
      %v2531 = vmul.f32 %v920, %v2512
      %v2532 = vmul.f32 %v924, %v2512
      %v2533 = vmul.f32 %v1100, %v2512
      %v2534 = vmul.f32 %v929, %v2512
      %v2535 = vmul.f32 %v933, %v2512
      %v2536 = vmul.f32 %v1105, %v2512
      %v2537 = vmul.f32 %v938, %v2512
      %v2538 = vmul.f32 %v942, %v2512
      %v2539 = vmul.f32 %v1110, %v2512
      %v2540 = vmul.f32 %v947, %v2512
      %v2541 = vmul.f32 %v951, %v2512
      %v2542 = vmul.f32 %v1115, %v2512
      %v2543 = vmul.f32 %v956, %v2512
      %v2544 = vmul.f32 %v960, %v2512
      %v2545 = vmul.f32 %v1120, %v2512
      %v2546 = vmul.f32 %v965, %v2512
      %v2547 = vmul.f32 %v969, %v2512
      %v2548 = vmul.f32 %v1125, %v2512
      %v2549 = vmul.f32 %v974, %v2512
      %v2550 = vmul.f32 %v978, %v2512
      %v2551 = vmul.f32 %v1130, %v2512
      %v2552 = vmul.f32 %v983, %v2512
      %v2553 = vmul.f32 %v987, %v2512
      %v2554 = vmul.f32 %v1135, %v2512
      %v2555 = vmul.f32 %v1630, %v2512
      %v2556 = vmul.f32 %v1634, %v2512
      %v2557 = vmul.f32 %v1707, %v2512
      %v2558 = vmul.f32 %v848, %v2512
      %v2559 = vmul.f32 %v852, %v2512
      %v2560 = vmul.f32 %v1060, %v2512
      %v2609 = vrot.slane %v2513, 2
      %v2610 = vrot.slane %v2514, 2
      %v2611 = vsel %vm1482, %v2609, %v2610
      %v2612 = vrot.slane %v2515, 2
      %v2613 = vsel %vm1482, %v2610, %v2612
      %v2614 = vrot.slane %v2516, 2
      %v2615 = vrot.slane %v2517, 2
      %v2616 = vsel %vm1482, %v2614, %v2615
      %v2617 = vrot.slane %v2518, 2
      %v2618 = vsel %vm1482, %v2615, %v2617
      %v2619 = vrot.slane %v2519, 2
      %v2620 = vrot.slane %v2520, 2
      %v2621 = vsel %vm1482, %v2619, %v2620
      %v2622 = vrot.slane %v2521, 2
      %v2623 = vsel %vm1482, %v2620, %v2622
      %v2624 = vrot.slane %v2522, 2
      %v2625 = vrot.slane %v2523, 2
      %v2626 = vsel %vm1482, %v2624, %v2625
      %v2627 = vrot.slane %v2524, 2
      %v2628 = vsel %vm1482, %v2625, %v2627
      %v2629 = vrot.slane %v2525, 2
      %v2630 = vrot.slane %v2526, 2
      %v2631 = vsel %vm1482, %v2629, %v2630
      %v2632 = vrot.slane %v2527, 2
      %v2633 = vsel %vm1482, %v2630, %v2632
      %v2634 = vrot.slane %v2528, 2
      %v2635 = vrot.slane %v2529, 2
      %v2636 = vsel %vm1482, %v2634, %v2635
      %v2637 = vrot.slane %v2530, 2
      %v2638 = vsel %vm1482, %v2635, %v2637
      %v2639 = vrot.slane %v2531, 2
      %v2640 = vrot.slane %v2532, 2
      %v2641 = vsel %vm1482, %v2639, %v2640
      %v2642 = vrot.slane %v2533, 2
      %v2643 = vsel %vm1482, %v2640, %v2642
      %v2644 = vrot.slane %v2534, 2
      %v2645 = vrot.slane %v2535, 2
      %v2646 = vsel %vm1482, %v2644, %v2645
      %v2647 = vrot.slane %v2536, 2
      %v2648 = vsel %vm1482, %v2645, %v2647
      %v2649 = vrot.slane %v2537, 2
      %v2650 = vrot.slane %v2538, 2
      %v2651 = vsel %vm1482, %v2649, %v2650
      %v2652 = vrot.slane %v2539, 2
      %v2653 = vsel %vm1482, %v2650, %v2652
      %v2654 = vrot.slane %v2540, 2
      %v2655 = vrot.slane %v2541, 2
      %v2656 = vsel %vm1482, %v2654, %v2655
      %v2657 = vrot.slane %v2542, 2
      %v2658 = vsel %vm1482, %v2655, %v2657
      %v2659 = vrot.slane %v2543, 2
      %v2660 = vrot.slane %v2544, 2
      %v2661 = vsel %vm1482, %v2659, %v2660
      %v2662 = vrot.slane %v2545, 2
      %v2663 = vsel %vm1482, %v2660, %v2662
      %v2664 = vrot.slane %v2546, 2
      %v2665 = vrot.slane %v2547, 2
      %v2666 = vsel %vm1482, %v2664, %v2665
      %v2667 = vrot.slane %v2548, 2
      %v2668 = vsel %vm1482, %v2665, %v2667
      %v2669 = vrot.slane %v2549, 2
      %v2670 = vrot.slane %v2550, 2
      %v2671 = vsel %vm1482, %v2669, %v2670
      %v2672 = vrot.slane %v2551, 2
      %v2673 = vsel %vm1482, %v2670, %v2672
      %v2674 = vrot.slane %v2552, 2
      %v2675 = vrot.slane %v2553, 2
      %v2676 = vsel %vm1482, %v2674, %v2675
      %v2677 = vrot.slane %v2554, 2
      %v2678 = vsel %vm1482, %v2675, %v2677
      %v2679 = vrot.slane %v2555, 2
      %v2680 = vrot.slane %v2556, 2
      %v2681 = vsel %vm1482, %v2679, %v2680
      %v2682 = vrot.slane %v2557, 2
      %v2683 = vsel %vm1482, %v2680, %v2682
      %v2684 = vrot.slane %v2558, 2
      %v2685 = vrot.slane %v2559, 2
      %v2686 = vsel %vm1482, %v2684, %v2685
      %v2687 = vrot.slane %v2560, 2
      %v2688 = vsel %vm1482, %v2685, %v2687
      %v2721 = vadd.f32 %v2477, %v2611
      %v2722 = vadd.f32 %v2478, %v2613
      %v2723 = vadd.f32 %v2479, %v2616
      %v2724 = vadd.f32 %v2480, %v2618
      %v2725 = vadd.f32 %v2481, %v2621
      %v2726 = vadd.f32 %v2482, %v2623
      %v2727 = vadd.f32 %v2483, %v2626
      %v2728 = vadd.f32 %v2484, %v2628
      %v2729 = vadd.f32 %v2485, %v2631
      %v2730 = vadd.f32 %v2486, %v2633
      %v2731 = vadd.f32 %v2487, %v2636
      %v2732 = vadd.f32 %v2488, %v2638
      %v2733 = vadd.f32 %v2489, %v2641
      %v2734 = vadd.f32 %v2490, %v2643
      %v2735 = vadd.f32 %v2491, %v2646
      %v2736 = vadd.f32 %v2492, %v2648
      %v2737 = vadd.f32 %v2493, %v2651
      %v2738 = vadd.f32 %v2494, %v2653
      %v2739 = vadd.f32 %v2495, %v2656
      %v2740 = vadd.f32 %v2496, %v2658
      %v2741 = vadd.f32 %v2497, %v2661
      %v2742 = vadd.f32 %v2498, %v2663
      %v2743 = vadd.f32 %v2499, %v2666
      %v2744 = vadd.f32 %v2500, %v2668
      %v2745 = vadd.f32 %v2501, %v2671
      %v2746 = vadd.f32 %v2502, %v2673
      %v2747 = vadd.f32 %v2503, %v2676
      %v2748 = vadd.f32 %v2504, %v2678
      %v2749 = vadd.f32 %v2505, %v2681
      %v2750 = vadd.f32 %v2506, %v2683
      %v2751 = vadd.f32 %v2507, %v2686
      %v2752 = vadd.f32 %v2508, %v2688
      %v2753 = vld [vmem:[%s2] sm:$0x1]
      %v2755 = vlaneseq
      %v2756 = vshrl.u32 %v2755, 7
      %v2757 = vsub.s32 0, %v2756
      %v2758 = vrot.slane %v2753, %v2757
      %v2760 = vadd.f32 %v2721, %v2758
      %v2761 = vadd.f32 %v2722, %v2758
      %v2762 = vadd.f32 %v2723, %v2758
      %v2763 = vadd.f32 %v2724, %v2758
      %v2764 = vadd.f32 %v2725, %v2758
      %v2765 = vadd.f32 %v2726, %v2758
      %v2766 = vadd.f32 %v2727, %v2758
      %v2767 = vadd.f32 %v2728, %v2758
      %v2768 = vadd.f32 %v2729, %v2758
      %v2769 = vadd.f32 %v2730, %v2758
      %v2770 = vadd.f32 %v2731, %v2758
      %v2771 = vadd.f32 %v2732, %v2758
      %v2772 = vadd.f32 %v2733, %v2758
      %v2773 = vadd.f32 %v2734, %v2758
      %v2774 = vadd.f32 %v2735, %v2758
      %v2775 = vadd.f32 %v2736, %v2758
      %v2776 = vadd.f32 %v2737, %v2758
      %v2777 = vadd.f32 %v2738, %v2758
      %v2778 = vadd.f32 %v2739, %v2758
      %v2779 = vadd.f32 %v2740, %v2758
      %v2780 = vadd.f32 %v2741, %v2758
      %v2781 = vadd.f32 %v2742, %v2758
      %v2782 = vadd.f32 %v2743, %v2758
      %v2783 = vadd.f32 %v2744, %v2758
      %v2784 = vadd.f32 %v2745, %v2758
      %v2785 = vadd.f32 %v2746, %v2758
      %v2786 = vadd.f32 %v2747, %v2758
      %v2787 = vadd.f32 %v2748, %v2758
      %v2788 = vadd.f32 %v2749, %v2758
      %v2789 = vadd.f32 %v2750, %v2758
      %v2790 = vadd.f32 %v2751, %v2758
      %v2791 = vadd.f32 %v2752, %v2758
      %vm2792 = vcmp.gt.f32.partialorder %v2760, 0.0
      %vm2793 = vcmp.gt.f32.partialorder %v2761, 0.0
      %vm2794 = vcmp.gt.f32.partialorder %v2762, 0.0
      %vm2795 = vcmp.gt.f32.partialorder %v2763, 0.0
      %vm2796 = vcmp.gt.f32.partialorder %v2764, 0.0
      %vm2797 = vcmp.gt.f32.partialorder %v2765, 0.0
      %vm2798 = vcmp.gt.f32.partialorder %v2766, 0.0
      %vm2799 = vcmp.gt.f32.partialorder %v2767, 0.0
      %vm2800 = vcmp.gt.f32.partialorder %v2768, 0.0
      %vm2801 = vcmp.gt.f32.partialorder %v2769, 0.0
      %vm2802 = vcmp.gt.f32.partialorder %v2770, 0.0
      %vm2803 = vcmp.gt.f32.partialorder %v2771, 0.0
      %vm2804 = vcmp.gt.f32.partialorder %v2772, 0.0
      %vm2805 = vcmp.gt.f32.partialorder %v2773, 0.0
      %vm2806 = vcmp.gt.f32.partialorder %v2774, 0.0
      %vm2807 = vcmp.gt.f32.partialorder %v2775, 0.0
      %vm2808 = vcmp.gt.f32.partialorder %v2776, 0.0
      %vm2809 = vcmp.gt.f32.partialorder %v2777, 0.0
      %vm2810 = vcmp.gt.f32.partialorder %v2778, 0.0
      %vm2811 = vcmp.gt.f32.partialorder %v2779, 0.0
      %vm2812 = vcmp.gt.f32.partialorder %v2780, 0.0
      %vm2813 = vcmp.gt.f32.partialorder %v2781, 0.0
      %vm2814 = vcmp.gt.f32.partialorder %v2782, 0.0
      %vm2815 = vcmp.gt.f32.partialorder %v2783, 0.0
      %vm2816 = vcmp.gt.f32.partialorder %v2784, 0.0
      %vm2817 = vcmp.gt.f32.partialorder %v2785, 0.0
      %vm2818 = vcmp.gt.f32.partialorder %v2786, 0.0
      %vm2819 = vcmp.gt.f32.partialorder %v2787, 0.0
      %vm2820 = vcmp.gt.f32.partialorder %v2788, 0.0
      %vm2821 = vcmp.gt.f32.partialorder %v2789, 0.0
      %vm2822 = vcmp.gt.f32.partialorder %v2790, 0.0
      %vm2823 = vcmp.gt.f32.partialorder %v2791, 0.0
      %v2824 = vmul.f32 %v2760, 0.01
      %v2825 = vmul.f32 %v2761, 0.01
      %v2826 = vmul.f32 %v2762, 0.01
      %v2827 = vmul.f32 %v2763, 0.01
      %v2828 = vmul.f32 %v2764, 0.01
      %v2829 = vmul.f32 %v2765, 0.01
      %v2830 = vmul.f32 %v2766, 0.01
      %v2831 = vmul.f32 %v2767, 0.01
      %v2832 = vmul.f32 %v2768, 0.01
      %v2833 = vmul.f32 %v2769, 0.01
      %v2834 = vmul.f32 %v2770, 0.01
      %v2835 = vmul.f32 %v2771, 0.01
      %v2836 = vmul.f32 %v2772, 0.01
      %v2837 = vmul.f32 %v2773, 0.01
      %v2838 = vmul.f32 %v2774, 0.01
      %v2839 = vmul.f32 %v2775, 0.01
      %v2840 = vmul.f32 %v2776, 0.01
      %v2841 = vmul.f32 %v2777, 0.01
      %v2842 = vmul.f32 %v2778, 0.01
      %v2843 = vmul.f32 %v2779, 0.01
      %v2844 = vmul.f32 %v2780, 0.01
      %v2845 = vmul.f32 %v2781, 0.01
      %v2846 = vmul.f32 %v2782, 0.01
      %v2847 = vmul.f32 %v2783, 0.01
      %v2848 = vmul.f32 %v2784, 0.01
      %v2849 = vmul.f32 %v2785, 0.01
      %v2850 = vmul.f32 %v2786, 0.01
      %v2851 = vmul.f32 %v2787, 0.01
      %v2852 = vmul.f32 %v2788, 0.01
      %v2853 = vmul.f32 %v2789, 0.01
      %v2854 = vmul.f32 %v2790, 0.01
      %v2855 = vmul.f32 %v2791, 0.01
      %v2856 = vsel %vm2792, %v2760, %v2824
      %v2857 = vsel %vm2793, %v2761, %v2825
      %v2858 = vsel %vm2794, %v2762, %v2826
      %v2859 = vsel %vm2795, %v2763, %v2827
      %v2860 = vsel %vm2796, %v2764, %v2828
      %v2861 = vsel %vm2797, %v2765, %v2829
      %v2862 = vsel %vm2798, %v2766, %v2830
      %v2863 = vsel %vm2799, %v2767, %v2831
      %v2864 = vsel %vm2800, %v2768, %v2832
      %v2865 = vsel %vm2801, %v2769, %v2833
      %v2866 = vsel %vm2802, %v2770, %v2834
      %v2867 = vsel %vm2803, %v2771, %v2835
      %v2868 = vsel %vm2804, %v2772, %v2836
      %v2869 = vsel %vm2805, %v2773, %v2837
      %v2870 = vsel %vm2806, %v2774, %v2838
      %v2871 = vsel %vm2807, %v2775, %v2839
      %v2872 = vsel %vm2808, %v2776, %v2840
      %v2873 = vsel %vm2809, %v2777, %v2841
      %v2874 = vsel %vm2810, %v2778, %v2842
      %v2875 = vsel %vm2811, %v2779, %v2843
      %v2876 = vsel %vm2812, %v2780, %v2844
      %v2877 = vsel %vm2813, %v2781, %v2845
      %v2878 = vsel %vm2814, %v2782, %v2846
      %v2879 = vsel %vm2815, %v2783, %v2847
      %v2880 = vsel %vm2816, %v2784, %v2848
      %v2881 = vsel %vm2817, %v2785, %v2849
      %v2882 = vsel %vm2818, %v2786, %v2850
      %v2883 = vsel %vm2819, %v2787, %v2851
      %v2884 = vsel %vm2820, %v2788, %v2852
      %v2885 = vsel %vm2821, %v2789, %v2853
      %v2886 = vsel %vm2822, %v2790, %v2854
      %v2887 = vsel %vm2823, %v2791, %v2855
      %v2888 = vpack.c.bf16 %v2857, %v2856
      %v2889 = vpack.c.bf16 %v2859, %v2858
      %v2890 = vpack.c.bf16 %v2861, %v2860
      %v2891 = vpack.c.bf16 %v2863, %v2862
      %v2892 = vpack.c.bf16 %v2865, %v2864
      %v2893 = vpack.c.bf16 %v2867, %v2866
      %v2894 = vpack.c.bf16 %v2869, %v2868
      %v2895 = vpack.c.bf16 %v2871, %v2870
      %v2896 = vpack.c.bf16 %v2873, %v2872
      %v2897 = vpack.c.bf16 %v2875, %v2874
      %v2898 = vpack.c.bf16 %v2877, %v2876
      %v2899 = vpack.c.bf16 %v2879, %v2878
      %v2900 = vpack.c.bf16 %v2881, %v2880
      %v2901 = vpack.c.bf16 %v2883, %v2882
      %v2902 = vpack.c.bf16 %v2885, %v2884
      %v2903 = vpack.c.bf16 %v2887, %v2886
      %v2920 = vunpack.c.l.b16 %v2888
      %v2921 = vunpack.c.h.b16 %v2888
      %v2922 = vunpack.c.l.b16 %v2889
      %v2923 = vunpack.c.h.b16 %v2889
      %v2924 = vunpack.c.l.b16 %v2890
      %v2925 = vunpack.c.h.b16 %v2890
      %v2926 = vunpack.c.l.b16 %v2891
      %v2927 = vunpack.c.h.b16 %v2891
      %v2928 = vunpack.c.l.b16 %v2892
      %v2929 = vunpack.c.h.b16 %v2892
      %v2930 = vunpack.c.l.b16 %v2893
      %v2931 = vunpack.c.h.b16 %v2893
      %v2932 = vunpack.c.l.b16 %v2894
      %v2933 = vunpack.c.h.b16 %v2894
      %v2934 = vunpack.c.l.b16 %v2895
      %v2935 = vunpack.c.h.b16 %v2895
      %v2936 = vunpack.c.l.b16 %v2896
      %v2937 = vunpack.c.h.b16 %v2896
      %v2938 = vunpack.c.l.b16 %v2897
      %v2939 = vunpack.c.h.b16 %v2897
      %v2940 = vunpack.c.l.b16 %v2898
      %v2941 = vunpack.c.h.b16 %v2898
      %v2942 = vunpack.c.l.b16 %v2899
      %v2943 = vunpack.c.h.b16 %v2899
      %v2944 = vunpack.c.l.b16 %v2900
      %v2945 = vunpack.c.h.b16 %v2900
      %v2946 = vunpack.c.l.b16 %v2901
      %v2947 = vunpack.c.h.b16 %v2901
      %v2948 = vunpack.c.l.b16 %v2902
      %v2949 = vunpack.c.h.b16 %v2902
      %v2950 = vunpack.c.l.b16 %v2903
      %v2951 = vunpack.c.h.b16 %v2903
      %v2952 = vpack.c.b16 %v2920, %v2920
      %v2953 = vpack.c.b16 %v2921, %v2921
      %v2954 = vpack.c.b16 %v2922, %v2922
      %v2955 = vpack.c.b16 %v2923, %v2923
      %v2956 = vpack.c.b16 %v2924, %v2924
      %v2957 = vpack.c.b16 %v2925, %v2925
      %v2958 = vpack.c.b16 %v2926, %v2926
      %v2959 = vpack.c.b16 %v2927, %v2927
      %v2960 = vpack.c.b16 %v2928, %v2928
      %v2961 = vpack.c.b16 %v2929, %v2929
      %v2962 = vpack.c.b16 %v2930, %v2930
      %v2963 = vpack.c.b16 %v2931, %v2931
      %v2964 = vpack.c.b16 %v2932, %v2932
      %v2965 = vpack.c.b16 %v2933, %v2933
      %v2966 = vpack.c.b16 %v2934, %v2934
      %v2967 = vpack.c.b16 %v2935, %v2935
      %v2968 = vpack.c.b16 %v2936, %v2936
      %v2969 = vpack.c.b16 %v2937, %v2937
      %v2970 = vpack.c.b16 %v2938, %v2938
      %v2971 = vpack.c.b16 %v2939, %v2939
      %v2972 = vpack.c.b16 %v2940, %v2940
      %v2973 = vpack.c.b16 %v2941, %v2941
      %v2974 = vpack.c.b16 %v2942, %v2942
      %v2975 = vpack.c.b16 %v2943, %v2943
      %v2976 = vpack.c.b16 %v2944, %v2944
      %v2977 = vpack.c.b16 %v2945, %v2945
      %v2978 = vpack.c.b16 %v2946, %v2946
      %v2979 = vpack.c.b16 %v2947, %v2947
      %v2980 = vpack.c.b16 %v2948, %v2948
      %v2981 = vpack.c.b16 %v2949, %v2949
      %v2982 = vpack.c.b16 %v2950, %v2950
      %v2983 = vpack.c.b16 %v2951, %v2951
      %s3016 = scalar_lea.vmem [#allocation2], 24
      %3017 = vst.msk [vmem:[%s3016 + $0x8] sm:$0xf] %vm334, %v2952
      %3018 = vst.msk [vmem:[%s3016 + $0xc] sm:$0xf] %vm334, %v2953
      %3019 = vst.msk [vmem:[%s3016 + $0x20] sm:$0xf] %vm334, %v2954
      %3020 = vst.msk [vmem:[%s3016 + $0x24] sm:$0xf] %vm334, %v2955
      %3021 = vst.msk [vmem:[%s3016 + $0x38] sm:$0xf] %vm334, %v2956
      %3022 = vst.msk [vmem:[%s3016 + $0x3c] sm:$0xf] %vm334, %v2957
      %3023 = vst.msk [vmem:[%s3016 + $0x50] sm:$0xf] %vm334, %v2958
      %3024 = vst.msk [vmem:[%s3016 + $0x54] sm:$0xf] %vm334, %v2959
      %3025 = vst.msk [vmem:[%s3016 + $0x68] sm:$0xf] %vm334, %v2960
      %3026 = vst.msk [vmem:[%s3016 + $0x6c] sm:$0xf] %vm334, %v2961
      %3027 = vst.msk [vmem:[%s3016 + $0x80] sm:$0xf] %vm334, %v2962
      %3028 = vst.msk [vmem:[%s3016 + $0x84] sm:$0xf] %vm334, %v2963
      %3029 = vst.msk [vmem:[%s3016 + $0x98] sm:$0xf] %vm334, %v2964
      %3030 = vst.msk [vmem:[%s3016 + $0x9c] sm:$0xf] %vm334, %v2965
      %3031 = vst.msk [vmem:[%s3016 + $0xb0] sm:$0xf] %vm334, %v2966
      %3032 = vst.msk [vmem:[%s3016 + $0xb4] sm:$0xf] %vm334, %v2967
      %3033 = vst.msk [vmem:[%s3016 + $0xc8] sm:$0xf] %vm334, %v2968
      %3034 = vst.msk [vmem:[%s3016 + $0xcc] sm:$0xf] %vm334, %v2969
      %3035 = vst.msk [vmem:[%s3016 + $0xe0] sm:$0xf] %vm334, %v2970
      %3036 = vst.msk [vmem:[%s3016 + $0xe4] sm:$0xf] %vm334, %v2971
      %3037 = vst.msk [vmem:[%s3016 + $0xf8] sm:$0xf] %vm334, %v2972
      %3038 = vst.msk [vmem:[%s3016 + $0xfc] sm:$0xf] %vm334, %v2973
      %3039 = vst.msk [vmem:[%s3016 + $0x110] sm:$0xf] %vm334, %v2974
      %3040 = vst.msk [vmem:[%s3016 + $0x114] sm:$0xf] %vm334, %v2975
      %3041 = vst.msk [vmem:[%s3016 + $0x128] sm:$0xf] %vm334, %v2976
      %3042 = vst.msk [vmem:[%s3016 + $0x12c] sm:$0xf] %vm334, %v2977
      %3043 = vst.msk [vmem:[%s3016 + $0x140] sm:$0xf] %vm334, %v2978
      %3044 = vst.msk [vmem:[%s3016 + $0x144] sm:$0xf] %vm334, %v2979
      %3045 = vst.msk [vmem:[%s3016 + $0x158] sm:$0xf] %vm334, %v2980
      %3046 = vst.msk [vmem:[%s3016 + $0x15c] sm:$0xf] %vm334, %v2981
      %3047 = vst.msk [vmem:[%s3016 + $0x170] sm:$0xf] %vm334, %v2982
      %3048 = vst.msk [vmem:[%s3016 + $0x174] sm:$0xf] %vm334, %v2983
      %v3049 = vld [vmem:[#allocation2 + $0x4] sm:$0xf]
      %v3050 = vld [vmem:[#allocation2 + $0x8] sm:$0xf]
      %v3051 = vld [vmem:[#allocation2 + $0xc] sm:$0xf]
      %v3052 = vld [vmem:[#allocation2 + $0x10] sm:$0xf]
      %v3053 = vld [vmem:[#allocation2 + $0x1c] sm:$0xf]
      %v3054 = vld [vmem:[#allocation2 + $0x20] sm:$0xf]
      %v3055 = vld [vmem:[#allocation2 + $0x24] sm:$0xf]
      %v3056 = vld [vmem:[#allocation2 + $0x28] sm:$0xf]
      %v3057 = vld [vmem:[#allocation2 + $0x34] sm:$0xf]
      %v3058 = vld [vmem:[#allocation2 + $0x38] sm:$0xf]
      %v3059 = vld [vmem:[#allocation2 + $0x3c] sm:$0xf]
      %v3060 = vld [vmem:[#allocation2 + $0x40] sm:$0xf]
      %v3061 = vld [vmem:[#allocation2 + $0x4c] sm:$0xf]
      %v3062 = vld [vmem:[#allocation2 + $0x50] sm:$0xf]
      %v3063 = vld [vmem:[#allocation2 + $0x54] sm:$0xf]
      %v3064 = vld [vmem:[#allocation2 + $0x58] sm:$0xf]
      %v3065 = vld [vmem:[#allocation2 + $0x64] sm:$0xf]
      %v3066 = vld [vmem:[#allocation2 + $0x68] sm:$0xf]
      %v3067 = vld [vmem:[#allocation2 + $0x6c] sm:$0xf]
      %v3068 = vld [vmem:[#allocation2 + $0x70] sm:$0xf]
      %v3069 = vld [vmem:[#allocation2 + $0x7c] sm:$0xf]
      %v3070 = vld [vmem:[#allocation2 + $0x80] sm:$0xf]
      %v3071 = vld [vmem:[#allocation2 + $0x84] sm:$0xf]
      %v3072 = vld [vmem:[#allocation2 + $0x88] sm:$0xf]
      %v3073 = vld [vmem:[#allocation2 + $0x94] sm:$0xf]
      %v3074 = vld [vmem:[#allocation2 + $0x98] sm:$0xf]
      %v3075 = vld [vmem:[#allocation2 + $0x9c] sm:$0xf]
      %v3076 = vld [vmem:[#allocation2 + $0xa0] sm:$0xf]
      %v3077 = vld [vmem:[#allocation2 + $0xac] sm:$0xf]
      %v3078 = vld [vmem:[#allocation2 + $0xb0] sm:$0xf]
      %v3079 = vld [vmem:[#allocation2 + $0xb4] sm:$0xf]
      %v3080 = vld [vmem:[#allocation2 + $0xb8] sm:$0xf]
      %v3081 = vld [vmem:[#allocation2 + $0xc4] sm:$0xf]
      %v3082 = vld [vmem:[#allocation2 + $0xc8] sm:$0xf]
      %v3083 = vld [vmem:[#allocation2 + $0xcc] sm:$0xf]
      %v3084 = vld [vmem:[#allocation2 + $0xd0] sm:$0xf]
      %v3085 = vld [vmem:[#allocation2 + $0xdc] sm:$0xf]
      %v3086 = vld [vmem:[#allocation2 + $0xe0] sm:$0xf]
      %v3087 = vld [vmem:[#allocation2 + $0xe4] sm:$0xf]
      %v3088 = vld [vmem:[#allocation2 + $0xe8] sm:$0xf]
      %v3089 = vld [vmem:[#allocation2 + $0xf4] sm:$0xf]
      %v3090 = vld [vmem:[#allocation2 + $0xf8] sm:$0xf]
      %v3091 = vld [vmem:[#allocation2 + $0xfc] sm:$0xf]
      %v3092 = vld [vmem:[#allocation2 + $0x100] sm:$0xf]
      %v3093 = vld [vmem:[#allocation2 + $0x10c] sm:$0xf]
      %v3094 = vld [vmem:[#allocation2 + $0x110] sm:$0xf]
      %v3095 = vld [vmem:[#allocation2 + $0x114] sm:$0xf]
      %v3096 = vld [vmem:[#allocation2 + $0x118] sm:$0xf]
      %v3097 = vld [vmem:[#allocation2 + $0x124] sm:$0xf]
      %v3098 = vld [vmem:[#allocation2 + $0x128] sm:$0xf]
      %v3099 = vld [vmem:[#allocation2 + $0x12c] sm:$0xf]
      %v3100 = vld [vmem:[#allocation2 + $0x130] sm:$0xf]
      %v3101 = vld [vmem:[#allocation2 + $0x13c] sm:$0xf]
      %v3102 = vld [vmem:[#allocation2 + $0x140] sm:$0xf]
      %v3103 = vld [vmem:[#allocation2 + $0x144] sm:$0xf]
      %v3104 = vld [vmem:[#allocation2 + $0x148] sm:$0xf]
      %v3105 = vld [vmem:[#allocation2 + $0x154] sm:$0xf]
      %v3106 = vld [vmem:[#allocation2 + $0x158] sm:$0xf]
      %v3107 = vld [vmem:[#allocation2 + $0x15c] sm:$0xf]
      %v3108 = vld [vmem:[#allocation2 + $0x160] sm:$0xf]
      %v3109 = vld [vmem:[#allocation2 + $0x16c] sm:$0xf]
      %v3110 = vld [vmem:[#allocation2 + $0x170] sm:$0xf]
      %v3111 = vld [vmem:[#allocation2 + $0x174] sm:$0xf]
      %v3112 = vld [vmem:[#allocation2 + $0x178] sm:$0xf]
      %v3113 = vld [vmem:[#allocation2 + $0x184] sm:$0xf]
      %v3114 = vld [vmem:[#allocation2 + $0x188] sm:$0xf]
      %v3115 = vld [vmem:[#allocation2 + $0x18c] sm:$0xf]
      %v3116 = vld [vmem:[#allocation2 + $0x190] sm:$0xf]
      %v3117 = vld [vmem:[#allocation2 + $0x19c] sm:$0xf]
      %v3118 = vld [vmem:[#allocation2 + $0x1a0] sm:$0xf]
      %v3119 = vld [vmem:[#allocation2 + $0x1a4] sm:$0xf]
      %v3120 = vld [vmem:[#allocation2 + $0x1a8] sm:$0xf]
      %v3169 = vunpack.c.l.b16 %v3049
      %v3170 = vunpack.c.l.b16 %v3050
      %v3171 = vunpack.c.l.b16 %v3051
      %v3172 = vunpack.c.l.b16 %v3053
      %v3173 = vunpack.c.l.b16 %v3054
      %v3174 = vunpack.c.l.b16 %v3055
      %v3175 = vunpack.c.l.b16 %v3057
      %v3176 = vunpack.c.l.b16 %v3058
      %v3177 = vunpack.c.l.b16 %v3059
      %v3178 = vunpack.c.l.b16 %v3061
      %v3179 = vunpack.c.l.b16 %v3062
      %v3180 = vunpack.c.l.b16 %v3063
      %v3181 = vunpack.c.l.b16 %v3065
      %v3182 = vunpack.c.l.b16 %v3066
      %v3183 = vunpack.c.l.b16 %v3067
      %v3184 = vunpack.c.l.b16 %v3069
      %v3185 = vunpack.c.l.b16 %v3070
      %v3186 = vunpack.c.l.b16 %v3071
      %v3187 = vunpack.c.l.b16 %v3073
      %v3188 = vunpack.c.l.b16 %v3074
      %v3189 = vunpack.c.l.b16 %v3075
      %v3190 = vunpack.c.l.b16 %v3077
      %v3191 = vunpack.c.l.b16 %v3078
      %v3192 = vunpack.c.l.b16 %v3079
      %v3193 = vunpack.c.l.b16 %v3081
      %v3194 = vunpack.c.l.b16 %v3082
      %v3195 = vunpack.c.l.b16 %v3083
      %v3196 = vunpack.c.l.b16 %v3085
      %v3197 = vunpack.c.l.b16 %v3086
      %v3198 = vunpack.c.l.b16 %v3087
      %v3199 = vunpack.c.l.b16 %v3089
      %v3200 = vunpack.c.l.b16 %v3090
      %v3201 = vunpack.c.l.b16 %v3091
      %v3202 = vunpack.c.l.b16 %v3093
      %v3203 = vunpack.c.l.b16 %v3094
      %v3204 = vunpack.c.l.b16 %v3095
      %v3205 = vunpack.c.l.b16 %v3097
      %v3206 = vunpack.c.l.b16 %v3098
      %v3207 = vunpack.c.l.b16 %v3099
      %v3208 = vunpack.c.l.b16 %v3101
      %v3209 = vunpack.c.l.b16 %v3102
      %v3210 = vunpack.c.l.b16 %v3103
      %v3211 = vunpack.c.l.b16 %v3105
      %v3212 = vunpack.c.l.b16 %v3106
      %v3213 = vunpack.c.l.b16 %v3107
      %v3214 = vunpack.c.l.b16 %v3109
      %v3215 = vunpack.c.l.b16 %v3110
      %v3216 = vunpack.c.l.b16 %v3111
      %v3217 = vpack.c.b16 %v3170, %v3169
      %v3218 = vpack.c.b16 %v3171, %v3171
      %v3219 = vpack.c.b16 %v3173, %v3172
      %v3220 = vpack.c.b16 %v3174, %v3174
      %v3221 = vpack.c.b16 %v3176, %v3175
      %v3222 = vpack.c.b16 %v3177, %v3177
      %v3223 = vpack.c.b16 %v3179, %v3178
      %v3224 = vpack.c.b16 %v3180, %v3180
      %v3225 = vpack.c.b16 %v3182, %v3181
      %v3226 = vpack.c.b16 %v3183, %v3183
      %v3227 = vpack.c.b16 %v3185, %v3184
      %v3228 = vpack.c.b16 %v3186, %v3186
      %v3229 = vpack.c.b16 %v3188, %v3187
      %v3230 = vpack.c.b16 %v3189, %v3189
      %v3231 = vpack.c.b16 %v3191, %v3190
      %v3232 = vpack.c.b16 %v3192, %v3192
      %v3233 = vpack.c.b16 %v3194, %v3193
      %v3234 = vpack.c.b16 %v3195, %v3195
      %v3235 = vpack.c.b16 %v3197, %v3196
      %v3236 = vpack.c.b16 %v3198, %v3198
      %v3237 = vpack.c.b16 %v3200, %v3199
      %v3238 = vpack.c.b16 %v3201, %v3201
      %v3239 = vpack.c.b16 %v3203, %v3202
      %v3240 = vpack.c.b16 %v3204, %v3204
      %v3241 = vpack.c.b16 %v3206, %v3205
      %v3242 = vpack.c.b16 %v3207, %v3207
      %v3243 = vpack.c.b16 %v3209, %v3208
      %v3244 = vpack.c.b16 %v3210, %v3210
      %v3245 = vpack.c.b16 %v3212, %v3211
      %v3246 = vpack.c.b16 %v3213, %v3213
      %v3247 = vpack.c.b16 %v3215, %v3214
      %v3248 = vpack.c.b16 %v3216, %v3216
      %v3249 = vpack.c.b16 %v3171, %v3170
      %v3250 = vpack.c.b16 %v3174, %v3173
      %v3251 = vpack.c.b16 %v3177, %v3176
      %v3252 = vpack.c.b16 %v3180, %v3179
      %v3253 = vpack.c.b16 %v3183, %v3182
      %v3254 = vpack.c.b16 %v3186, %v3185
      %v3255 = vpack.c.b16 %v3189, %v3188
      %v3256 = vpack.c.b16 %v3192, %v3191
      %v3257 = vpack.c.b16 %v3195, %v3194
      %v3258 = vpack.c.b16 %v3198, %v3197
      %v3259 = vpack.c.b16 %v3201, %v3200
      %v3260 = vpack.c.b16 %v3204, %v3203
      %v3261 = vpack.c.b16 %v3207, %v3206
      %v3262 = vpack.c.b16 %v3210, %v3209
      %v3263 = vpack.c.b16 %v3213, %v3212
      %v3264 = vpack.c.b16 %v3216, %v3215
      %v3266 = vshrl.u32 %v3249, 16
      %v3268 = vrot.slane %v3266, 4
      %v3269 = vshll.u32 %v3249, 16
      %v3271 = vrot.slane %v3269, 5
      %v3272 = vor.u32 %v3268, %v3271
      %v3274 = vshrl.u32 %v3250, 16
      %v3276 = vrot.slane %v3274, 4
      %v3277 = vshll.u32 %v3250, 16
      %v3279 = vrot.slane %v3277, 5
      %v3280 = vor.u32 %v3276, %v3279
      %v3282 = vshrl.u32 %v3251, 16
      %v3284 = vrot.slane %v3282, 4
      %v3285 = vshll.u32 %v3251, 16
      %v3287 = vrot.slane %v3285, 5
      %v3288 = vor.u32 %v3284, %v3287
      %v3290 = vshrl.u32 %v3252, 16
      %v3292 = vrot.slane %v3290, 4
      %v3293 = vshll.u32 %v3252, 16
      %v3295 = vrot.slane %v3293, 5
      %v3296 = vor.u32 %v3292, %v3295
      %v3298 = vshrl.u32 %v3253, 16
      %v3300 = vrot.slane %v3298, 4
      %v3301 = vshll.u32 %v3253, 16
      %v3303 = vrot.slane %v3301, 5
      %v3304 = vor.u32 %v3300, %v3303
      %v3306 = vshrl.u32 %v3254, 16
      %v3308 = vrot.slane %v3306, 4
      %v3309 = vshll.u32 %v3254, 16
      %v3311 = vrot.slane %v3309, 5
      %v3312 = vor.u32 %v3308, %v3311
      %v3314 = vshrl.u32 %v3255, 16
      %v3316 = vrot.slane %v3314, 4
      %v3317 = vshll.u32 %v3255, 16
      %v3319 = vrot.slane %v3317, 5
      %v3320 = vor.u32 %v3316, %v3319
      %v3322 = vshrl.u32 %v3256, 16
      %v3324 = vrot.slane %v3322, 4
      %v3325 = vshll.u32 %v3256, 16
      %v3327 = vrot.slane %v3325, 5
      %v3328 = vor.u32 %v3324, %v3327
      %v3330 = vshrl.u32 %v3257, 16
      %v3332 = vrot.slane %v3330, 4
      %v3333 = vshll.u32 %v3257, 16
      %v3335 = vrot.slane %v3333, 5
      %v3336 = vor.u32 %v3332, %v3335
      %v3338 = vshrl.u32 %v3258, 16
      %v3340 = vrot.slane %v3338, 4
      %v3341 = vshll.u32 %v3258, 16
      %v3343 = vrot.slane %v3341, 5
      %v3344 = vor.u32 %v3340, %v3343
      %v3346 = vshrl.u32 %v3259, 16
      %v3348 = vrot.slane %v3346, 4
      %v3349 = vshll.u32 %v3259, 16
      %v3351 = vrot.slane %v3349, 5
      %v3352 = vor.u32 %v3348, %v3351
      %v3354 = vshrl.u32 %v3260, 16
      %v3356 = vrot.slane %v3354, 4
      %v3357 = vshll.u32 %v3260, 16
      %v3359 = vrot.slane %v3357, 5
      %v3360 = vor.u32 %v3356, %v3359
      %v3362 = vshrl.u32 %v3261, 16
      %v3364 = vrot.slane %v3362, 4
      %v3365 = vshll.u32 %v3261, 16
      %v3367 = vrot.slane %v3365, 5
      %v3368 = vor.u32 %v3364, %v3367
      %v3370 = vshrl.u32 %v3262, 16
      %v3372 = vrot.slane %v3370, 4
      %v3373 = vshll.u32 %v3262, 16
      %v3375 = vrot.slane %v3373, 5
      %v3376 = vor.u32 %v3372, %v3375
      %v3378 = vshrl.u32 %v3263, 16
      %v3380 = vrot.slane %v3378, 4
      %v3381 = vshll.u32 %v3263, 16
      %v3383 = vrot.slane %v3381, 5
      %v3384 = vor.u32 %v3380, %v3383
      %v3386 = vshrl.u32 %v3264, 16
      %v3388 = vrot.slane %v3386, 4
      %v3389 = vshll.u32 %v3264, 16
      %v3391 = vrot.slane %v3389, 5
      %v3392 = vor.u32 %v3388, %v3391
      %3393 = vrot.lane.b32.xlu0 %v3272, 16
      %v3394 = vpop.permute.xlu0 %3393
      %3395 = vrot.lane.b32.xlu0 %v3280, 16
      %v3396 = vpop.permute.xlu0 %3395
      %3397 = vrot.lane.b32.xlu0 %v3288, 16
      %v3398 = vpop.permute.xlu0 %3397
      %3399 = vrot.lane.b32.xlu0 %v3296, 16
      %v3400 = vpop.permute.xlu0 %3399
      %3401 = vrot.lane.b32.xlu0 %v3304, 16
      %v3402 = vpop.permute.xlu0 %3401
      %3403 = vrot.lane.b32.xlu0 %v3312, 16
      %v3404 = vpop.permute.xlu0 %3403
      %3405 = vrot.lane.b32.xlu0 %v3320, 16
      %v3406 = vpop.permute.xlu0 %3405
      %3407 = vrot.lane.b32.xlu0 %v3328, 16
      %v3408 = vpop.permute.xlu0 %3407
      %3409 = vrot.lane.b32.xlu0 %v3336, 16
      %v3410 = vpop.permute.xlu0 %3409
      %3411 = vrot.lane.b32.xlu0 %v3344, 16
      %v3412 = vpop.permute.xlu0 %3411
      %3413 = vrot.lane.b32.xlu0 %v3352, 16
      %v3414 = vpop.permute.xlu0 %3413
      %3415 = vrot.lane.b32.xlu0 %v3360, 16
      %v3416 = vpop.permute.xlu0 %3415
      %3417 = vrot.lane.b32.xlu0 %v3368, 16
      %v3418 = vpop.permute.xlu0 %3417
      %3419 = vrot.lane.b32.xlu0 %v3376, 16
      %v3420 = vpop.permute.xlu0 %3419
      %3421 = vrot.lane.b32.xlu0 %v3384, 16
      %v3422 = vpop.permute.xlu0 %3421
      %3423 = vrot.lane.b32.xlu0 %v3392, 16
      %v3424 = vpop.permute.xlu0 %3423
      %v3441 = vunpack.c.l.b16 %v3052
      %v3442 = vunpack.c.l.b16 %v3056
      %v3443 = vunpack.c.l.b16 %v3060
      %v3444 = vunpack.c.l.b16 %v3064
      %v3445 = vunpack.c.l.b16 %v3068
      %v3446 = vunpack.c.l.b16 %v3072
      %v3447 = vunpack.c.l.b16 %v3076
      %v3448 = vunpack.c.l.b16 %v3080
      %v3449 = vunpack.c.l.b16 %v3084
      %v3450 = vunpack.c.l.b16 %v3088
      %v3451 = vunpack.c.l.b16 %v3092
      %v3452 = vunpack.c.l.b16 %v3096
      %v3453 = vunpack.c.l.b16 %v3100
      %v3454 = vunpack.c.l.b16 %v3104
      %v3455 = vunpack.c.l.b16 %v3108
      %v3456 = vunpack.c.l.b16 %v3112
      %v3457 = vpack.c.b16 %v3441, %v3441
      %v3458 = vpack.c.b16 %v3442, %v3442
      %v3459 = vpack.c.b16 %v3443, %v3443
      %v3460 = vpack.c.b16 %v3444, %v3444
      %v3461 = vpack.c.b16 %v3445, %v3445
      %v3462 = vpack.c.b16 %v3446, %v3446
      %v3463 = vpack.c.b16 %v3447, %v3447
      %v3464 = vpack.c.b16 %v3448, %v3448
      %v3465 = vpack.c.b16 %v3449, %v3449
      %v3466 = vpack.c.b16 %v3450, %v3450
      %v3467 = vpack.c.b16 %v3451, %v3451
      %v3468 = vpack.c.b16 %v3452, %v3452
      %v3469 = vpack.c.b16 %v3453, %v3453
      %v3470 = vpack.c.b16 %v3454, %v3454
      %v3471 = vpack.c.b16 %v3455, %v3455
      %v3472 = vpack.c.b16 %v3456, %v3456
      %vm3473 = vcmask 1042432
      %v3474 = vrot.slane %v3249, 5
      %v3475 = vrot.slane %v3457, 5
      %v3476 = vsel %vm3473, %v3474, %v3475
      %v3477 = vrot.slane %v3250, 5
      %v3478 = vrot.slane %v3458, 5
      %v3479 = vsel %vm3473, %v3477, %v3478
      %v3480 = vrot.slane %v3251, 5
      %v3481 = vrot.slane %v3459, 5
      %v3482 = vsel %vm3473, %v3480, %v3481
      %v3483 = vrot.slane %v3252, 5
      %v3484 = vrot.slane %v3460, 5
      %v3485 = vsel %vm3473, %v3483, %v3484
      %v3486 = vrot.slane %v3253, 5
      %v3487 = vrot.slane %v3461, 5
      %v3488 = vsel %vm3473, %v3486, %v3487
      %v3489 = vrot.slane %v3254, 5
      %v3490 = vrot.slane %v3462, 5
      %v3491 = vsel %vm3473, %v3489, %v3490
      %v3492 = vrot.slane %v3255, 5
      %v3493 = vrot.slane %v3463, 5
      %v3494 = vsel %vm3473, %v3492, %v3493
      %v3495 = vrot.slane %v3256, 5
      %v3496 = vrot.slane %v3464, 5
      %v3497 = vsel %vm3473, %v3495, %v3496
      %v3498 = vrot.slane %v3257, 5
      %v3499 = vrot.slane %v3465, 5
      %v3500 = vsel %vm3473, %v3498, %v3499
      %v3501 = vrot.slane %v3258, 5
      %v3502 = vrot.slane %v3466, 5
      %v3503 = vsel %vm3473, %v3501, %v3502
      %v3504 = vrot.slane %v3259, 5
      %v3505 = vrot.slane %v3467, 5
      %v3506 = vsel %vm3473, %v3504, %v3505
      %v3507 = vrot.slane %v3260, 5
      %v3508 = vrot.slane %v3468, 5
      %v3509 = vsel %vm3473, %v3507, %v3508
      %v3510 = vrot.slane %v3261, 5
      %v3511 = vrot.slane %v3469, 5
      %v3512 = vsel %vm3473, %v3510, %v3511
      %v3513 = vrot.slane %v3262, 5
      %v3514 = vrot.slane %v3470, 5
      %v3515 = vsel %vm3473, %v3513, %v3514
      %v3516 = vrot.slane %v3263, 5
      %v3517 = vrot.slane %v3471, 5
      %v3518 = vsel %vm3473, %v3516, %v3517
      %v3519 = vrot.slane %v3264, 5
      %v3520 = vrot.slane %v3472, 5
      %v3521 = vsel %vm3473, %v3519, %v3520
      %3522 = vrot.lane.b32.xlu0 %v3474, 32
      %v3523 = vpop.permute.xlu0 %3522
      %3524 = vrot.lane.b32.xlu0 %v3476, 32
      %v3525 = vpop.permute.xlu0 %3524
      %3526 = vrot.lane.b32.xlu0 %v3477, 32
      %v3527 = vpop.permute.xlu0 %3526
      %3528 = vrot.lane.b32.xlu0 %v3479, 32
      %v3529 = vpop.permute.xlu0 %3528
      %3530 = vrot.lane.b32.xlu0 %v3480, 32
      %v3531 = vpop.permute.xlu0 %3530
      %3532 = vrot.lane.b32.xlu0 %v3482, 32
      %v3533 = vpop.permute.xlu0 %3532
      %3534 = vrot.lane.b32.xlu0 %v3483, 32
      %v3535 = vpop.permute.xlu0 %3534
      %3536 = vrot.lane.b32.xlu0 %v3485, 32
      %v3537 = vpop.permute.xlu0 %3536
      %3538 = vrot.lane.b32.xlu0 %v3486, 32
      %v3539 = vpop.permute.xlu0 %3538
      %3540 = vrot.lane.b32.xlu0 %v3488, 32
      %v3541 = vpop.permute.xlu0 %3540
      %3542 = vrot.lane.b32.xlu0 %v3489, 32
      %v3543 = vpop.permute.xlu0 %3542
      %3544 = vrot.lane.b32.xlu0 %v3491, 32
      %v3545 = vpop.permute.xlu0 %3544
      %3546 = vrot.lane.b32.xlu0 %v3492, 32
      %v3547 = vpop.permute.xlu0 %3546
      %3548 = vrot.lane.b32.xlu0 %v3494, 32
      %v3549 = vpop.permute.xlu0 %3548
      %3550 = vrot.lane.b32.xlu0 %v3495, 32
      %v3551 = vpop.permute.xlu0 %3550
      %3552 = vrot.lane.b32.xlu0 %v3497, 32
      %v3553 = vpop.permute.xlu0 %3552
      %3554 = vrot.lane.b32.xlu0 %v3498, 32
      %v3555 = vpop.permute.xlu0 %3554
      %3556 = vrot.lane.b32.xlu0 %v3500, 32
      %v3557 = vpop.permute.xlu0 %3556
      %3558 = vrot.lane.b32.xlu0 %v3501, 32
      %v3559 = vpop.permute.xlu0 %3558
      %3560 = vrot.lane.b32.xlu0 %v3503, 32
      %v3561 = vpop.permute.xlu0 %3560
      %3562 = vrot.lane.b32.xlu0 %v3504, 32
      %v3563 = vpop.permute.xlu0 %3562
      %3564 = vrot.lane.b32.xlu0 %v3506, 32
      %v3565 = vpop.permute.xlu0 %3564
      %3566 = vrot.lane.b32.xlu0 %v3507, 32
      %v3567 = vpop.permute.xlu0 %3566
      %3568 = vrot.lane.b32.xlu0 %v3509, 32
      %v3569 = vpop.permute.xlu0 %3568
      %3570 = vrot.lane.b32.xlu0 %v3510, 32
      %v3571 = vpop.permute.xlu0 %3570
      %3572 = vrot.lane.b32.xlu0 %v3512, 32
      %v3573 = vpop.permute.xlu0 %3572
      %3574 = vrot.lane.b32.xlu0 %v3513, 32
      %v3575 = vpop.permute.xlu0 %3574
      %3576 = vrot.lane.b32.xlu0 %v3515, 32
      %v3577 = vpop.permute.xlu0 %3576
      %3578 = vrot.lane.b32.xlu0 %v3516, 32
      %v3579 = vpop.permute.xlu0 %3578
      %3580 = vrot.lane.b32.xlu0 %v3518, 32
      %v3581 = vpop.permute.xlu0 %3580
      %3582 = vrot.lane.b32.xlu0 %v3519, 32
      %v3583 = vpop.permute.xlu0 %3582
      %3584 = vrot.lane.b32.xlu0 %v3521, 32
      %v3585 = vpop.permute.xlu0 %3584
      %v3589 = vunpack.c.l.b16 %v3113
      %v3590 = vunpack.c.l.b16 %v3114
      %v3591 = vunpack.c.l.b16 %v3115
      %v3592 = vpack.c.b16 %v3590, %v3589
      %v3593 = vpack.c.b16 %v3591, %v3591
      %3594 = vrot.lane.b32.xlu0 %v3219, 48
      %v3595 = vpop.permute.xlu0 %3594
      %3596 = vrot.lane.b32.xlu0 %v3220, 48
      %v3597 = vpop.permute.xlu0 %3596
      %3598 = vrot.lane.b32.xlu0 %v3221, 48
      %v3599 = vpop.permute.xlu0 %3598
      %3600 = vrot.lane.b32.xlu0 %v3222, 48
      %v3601 = vpop.permute.xlu0 %3600
      %3602 = vrot.lane.b32.xlu0 %v3223, 48
      %v3603 = vpop.permute.xlu0 %3602
      %3604 = vrot.lane.b32.xlu0 %v3224, 48
      %v3605 = vpop.permute.xlu0 %3604
      %3606 = vrot.lane.b32.xlu0 %v3225, 48
      %v3607 = vpop.permute.xlu0 %3606
      %3608 = vrot.lane.b32.xlu0 %v3226, 48
      %v3609 = vpop.permute.xlu0 %3608
      %3610 = vrot.lane.b32.xlu0 %v3227, 48
      %v3611 = vpop.permute.xlu0 %3610
      %3612 = vrot.lane.b32.xlu0 %v3228, 48
      %v3613 = vpop.permute.xlu0 %3612
      %3614 = vrot.lane.b32.xlu0 %v3229, 48
      %v3615 = vpop.permute.xlu0 %3614
      %3616 = vrot.lane.b32.xlu0 %v3230, 48
      %v3617 = vpop.permute.xlu0 %3616
      %3618 = vrot.lane.b32.xlu0 %v3231, 48
      %v3619 = vpop.permute.xlu0 %3618
      %3620 = vrot.lane.b32.xlu0 %v3232, 48
      %v3621 = vpop.permute.xlu0 %3620
      %3622 = vrot.lane.b32.xlu0 %v3233, 48
      %v3623 = vpop.permute.xlu0 %3622
      %3624 = vrot.lane.b32.xlu0 %v3234, 48
      %v3625 = vpop.permute.xlu0 %3624
      %3626 = vrot.lane.b32.xlu0 %v3235, 48
      %v3627 = vpop.permute.xlu0 %3626
      %3628 = vrot.lane.b32.xlu0 %v3236, 48
      %v3629 = vpop.permute.xlu0 %3628
      %3630 = vrot.lane.b32.xlu0 %v3237, 48
      %v3631 = vpop.permute.xlu0 %3630
      %3632 = vrot.lane.b32.xlu0 %v3238, 48
      %v3633 = vpop.permute.xlu0 %3632
      %3634 = vrot.lane.b32.xlu0 %v3239, 48
      %v3635 = vpop.permute.xlu0 %3634
      %3636 = vrot.lane.b32.xlu0 %v3240, 48
      %v3637 = vpop.permute.xlu0 %3636
      %3638 = vrot.lane.b32.xlu0 %v3241, 48
      %v3639 = vpop.permute.xlu0 %3638
      %3640 = vrot.lane.b32.xlu0 %v3242, 48
      %v3641 = vpop.permute.xlu0 %3640
      %3642 = vrot.lane.b32.xlu0 %v3243, 48
      %v3643 = vpop.permute.xlu0 %3642
      %3644 = vrot.lane.b32.xlu0 %v3244, 48
      %v3645 = vpop.permute.xlu0 %3644
      %3646 = vrot.lane.b32.xlu0 %v3245, 48
      %v3647 = vpop.permute.xlu0 %3646
      %3648 = vrot.lane.b32.xlu0 %v3246, 48
      %v3649 = vpop.permute.xlu0 %3648
      %3650 = vrot.lane.b32.xlu0 %v3247, 48
      %v3651 = vpop.permute.xlu0 %3650
      %3652 = vrot.lane.b32.xlu0 %v3248, 48
      %v3653 = vpop.permute.xlu0 %3652
      %3654 = vrot.lane.b32.xlu0 %v3592, 48
      %v3655 = vpop.permute.xlu0 %3654
      %3656 = vrot.lane.b32.xlu0 %v3593, 48
      %v3657 = vpop.permute.xlu0 %3656
      %v3658 = vpack.c.b16 %v3591, %v3590
      %v3660 = vshrl.u32 %v3658, 16
      %v3662 = vrot.slane %v3660, 4
      %v3663 = vshll.u32 %v3658, 16
      %v3665 = vrot.slane %v3663, 5
      %v3666 = vor.u32 %v3662, %v3665
      %3667 = vrot.lane.b32.xlu0 %v3280, 64
      %v3668 = vpop.permute.xlu0 %3667
      %3669 = vrot.lane.b32.xlu0 %v3288, 64
      %v3670 = vpop.permute.xlu0 %3669
      %3671 = vrot.lane.b32.xlu0 %v3296, 64
      %v3672 = vpop.permute.xlu0 %3671
      %3673 = vrot.lane.b32.xlu0 %v3304, 64
      %v3674 = vpop.permute.xlu0 %3673
      %3675 = vrot.lane.b32.xlu0 %v3312, 64
      %v3676 = vpop.permute.xlu0 %3675
      %3677 = vrot.lane.b32.xlu0 %v3320, 64
      %v3678 = vpop.permute.xlu0 %3677
      %3679 = vrot.lane.b32.xlu0 %v3328, 64
      %v3680 = vpop.permute.xlu0 %3679
      %3681 = vrot.lane.b32.xlu0 %v3336, 64
      %v3682 = vpop.permute.xlu0 %3681
      %3683 = vrot.lane.b32.xlu0 %v3344, 64
      %v3684 = vpop.permute.xlu0 %3683
      %3685 = vrot.lane.b32.xlu0 %v3352, 64
      %v3686 = vpop.permute.xlu0 %3685
      %3687 = vrot.lane.b32.xlu0 %v3360, 64
      %v3688 = vpop.permute.xlu0 %3687
      %3689 = vrot.lane.b32.xlu0 %v3368, 64
      %v3690 = vpop.permute.xlu0 %3689
      %3691 = vrot.lane.b32.xlu0 %v3376, 64
      %v3692 = vpop.permute.xlu0 %3691
      %3693 = vrot.lane.b32.xlu0 %v3384, 64
      %v3694 = vpop.permute.xlu0 %3693
      %3695 = vrot.lane.b32.xlu0 %v3392, 64
      %v3696 = vpop.permute.xlu0 %3695
      %3697 = vrot.lane.b32.xlu0 %v3666, 64
      %v3698 = vpop.permute.xlu0 %3697
      %v3700 = vunpack.c.l.b16 %v3116
      %v3701 = vpack.c.b16 %v3700, %v3700
      %v3702 = vrot.slane %v3658, 5
      %v3703 = vrot.slane %v3701, 5
      %v3704 = vsel %vm3473, %v3702, %v3703
      %3705 = vrot.lane.b32.xlu0 %v3477, 80
      %v3706 = vpop.permute.xlu0 %3705
      %3707 = vrot.lane.b32.xlu0 %v3479, 80
      %v3708 = vpop.permute.xlu0 %3707
      %3709 = vrot.lane.b32.xlu0 %v3480, 80
      %v3710 = vpop.permute.xlu0 %3709
      %3711 = vrot.lane.b32.xlu0 %v3482, 80
      %v3712 = vpop.permute.xlu0 %3711
      %3713 = vrot.lane.b32.xlu0 %v3483, 80
      %v3714 = vpop.permute.xlu0 %3713
      %3715 = vrot.lane.b32.xlu0 %v3485, 80
      %v3716 = vpop.permute.xlu0 %3715
      %3717 = vrot.lane.b32.xlu0 %v3486, 80
      %v3718 = vpop.permute.xlu0 %3717
      %3719 = vrot.lane.b32.xlu0 %v3488, 80
      %v3720 = vpop.permute.xlu0 %3719
      %3721 = vrot.lane.b32.xlu0 %v3489, 80
      %v3722 = vpop.permute.xlu0 %3721
      %3723 = vrot.lane.b32.xlu0 %v3491, 80
      %v3724 = vpop.permute.xlu0 %3723
      %3725 = vrot.lane.b32.xlu0 %v3492, 80
      %v3726 = vpop.permute.xlu0 %3725
      %3727 = vrot.lane.b32.xlu0 %v3494, 80
      %v3728 = vpop.permute.xlu0 %3727
      %3729 = vrot.lane.b32.xlu0 %v3495, 80
      %v3730 = vpop.permute.xlu0 %3729
      %3731 = vrot.lane.b32.xlu0 %v3497, 80
      %v3732 = vpop.permute.xlu0 %3731
      %3733 = vrot.lane.b32.xlu0 %v3498, 80
      %v3734 = vpop.permute.xlu0 %3733
      %3735 = vrot.lane.b32.xlu0 %v3500, 80
      %v3736 = vpop.permute.xlu0 %3735
      %3737 = vrot.lane.b32.xlu0 %v3501, 80
      %v3738 = vpop.permute.xlu0 %3737
      %3739 = vrot.lane.b32.xlu0 %v3503, 80
      %v3740 = vpop.permute.xlu0 %3739
      %3741 = vrot.lane.b32.xlu0 %v3504, 80
      %v3742 = vpop.permute.xlu0 %3741
      %3743 = vrot.lane.b32.xlu0 %v3506, 80
      %v3744 = vpop.permute.xlu0 %3743
      %3745 = vrot.lane.b32.xlu0 %v3507, 80
      %v3746 = vpop.permute.xlu0 %3745
      %3747 = vrot.lane.b32.xlu0 %v3509, 80
      %v3748 = vpop.permute.xlu0 %3747
      %3749 = vrot.lane.b32.xlu0 %v3510, 80
      %v3750 = vpop.permute.xlu0 %3749
      %3751 = vrot.lane.b32.xlu0 %v3512, 80
      %v3752 = vpop.permute.xlu0 %3751
      %3753 = vrot.lane.b32.xlu0 %v3513, 80
      %v3754 = vpop.permute.xlu0 %3753
      %3755 = vrot.lane.b32.xlu0 %v3515, 80
      %v3756 = vpop.permute.xlu0 %3755
      %3757 = vrot.lane.b32.xlu0 %v3516, 80
      %v3758 = vpop.permute.xlu0 %3757
      %3759 = vrot.lane.b32.xlu0 %v3518, 80
      %v3760 = vpop.permute.xlu0 %3759
      %3761 = vrot.lane.b32.xlu0 %v3519, 80
      %v3762 = vpop.permute.xlu0 %3761
      %3763 = vrot.lane.b32.xlu0 %v3521, 80
      %v3764 = vpop.permute.xlu0 %3763
      %3765 = vrot.lane.b32.xlu0 %v3702, 80
      %v3766 = vpop.permute.xlu0 %3765
      %3767 = vrot.lane.b32.xlu0 %v3704, 80
      %v3768 = vpop.permute.xlu0 %3767
      %v3772 = vunpack.c.l.b16 %v3117
      %v3773 = vunpack.c.l.b16 %v3118
      %v3774 = vunpack.c.l.b16 %v3119
      %v3775 = vpack.c.b16 %v3773, %v3772
      %v3776 = vpack.c.b16 %v3774, %v3774
      %3777 = vrot.lane.b32.xlu0 %v3221, 96
      %v3778 = vpop.permute.xlu0 %3777
      %3779 = vrot.lane.b32.xlu0 %v3222, 96
      %v3780 = vpop.permute.xlu0 %3779
      %3781 = vrot.lane.b32.xlu0 %v3223, 96
      %v3782 = vpop.permute.xlu0 %3781
      %3783 = vrot.lane.b32.xlu0 %v3224, 96
      %v3784 = vpop.permute.xlu0 %3783
      %3785 = vrot.lane.b32.xlu0 %v3225, 96
      %v3786 = vpop.permute.xlu0 %3785
      %3787 = vrot.lane.b32.xlu0 %v3226, 96
      %v3788 = vpop.permute.xlu0 %3787
      %3789 = vrot.lane.b32.xlu0 %v3227, 96
      %v3790 = vpop.permute.xlu0 %3789
      %3791 = vrot.lane.b32.xlu0 %v3228, 96
      %v3792 = vpop.permute.xlu0 %3791
      %3793 = vrot.lane.b32.xlu0 %v3229, 96
      %v3794 = vpop.permute.xlu0 %3793
      %3795 = vrot.lane.b32.xlu0 %v3230, 96
      %v3796 = vpop.permute.xlu0 %3795
      %3797 = vrot.lane.b32.xlu0 %v3231, 96
      %v3798 = vpop.permute.xlu0 %3797
      %3799 = vrot.lane.b32.xlu0 %v3232, 96
      %v3800 = vpop.permute.xlu0 %3799
      %3801 = vrot.lane.b32.xlu0 %v3233, 96
      %v3802 = vpop.permute.xlu0 %3801
      %3803 = vrot.lane.b32.xlu0 %v3234, 96
      %v3804 = vpop.permute.xlu0 %3803
      %3805 = vrot.lane.b32.xlu0 %v3235, 96
      %v3806 = vpop.permute.xlu0 %3805
      %3807 = vrot.lane.b32.xlu0 %v3236, 96
      %v3808 = vpop.permute.xlu0 %3807
      %3809 = vrot.lane.b32.xlu0 %v3237, 96
      %v3810 = vpop.permute.xlu0 %3809
      %3811 = vrot.lane.b32.xlu0 %v3238, 96
      %v3812 = vpop.permute.xlu0 %3811
      %3813 = vrot.lane.b32.xlu0 %v3239, 96
      %v3814 = vpop.permute.xlu0 %3813
      %3815 = vrot.lane.b32.xlu0 %v3240, 96
      %v3816 = vpop.permute.xlu0 %3815
      %3817 = vrot.lane.b32.xlu0 %v3241, 96
      %v3818 = vpop.permute.xlu0 %3817
      %3819 = vrot.lane.b32.xlu0 %v3242, 96
      %v3820 = vpop.permute.xlu0 %3819
      %3821 = vrot.lane.b32.xlu0 %v3243, 96
      %v3822 = vpop.permute.xlu0 %3821
      %3823 = vrot.lane.b32.xlu0 %v3244, 96
      %v3824 = vpop.permute.xlu0 %3823
      %3825 = vrot.lane.b32.xlu0 %v3245, 96
      %v3826 = vpop.permute.xlu0 %3825
      %3827 = vrot.lane.b32.xlu0 %v3246, 96
      %v3828 = vpop.permute.xlu0 %3827
      %3829 = vrot.lane.b32.xlu0 %v3247, 96
      %v3830 = vpop.permute.xlu0 %3829
      %3831 = vrot.lane.b32.xlu0 %v3248, 96
      %v3832 = vpop.permute.xlu0 %3831
      %3833 = vrot.lane.b32.xlu0 %v3592, 96
      %v3834 = vpop.permute.xlu0 %3833
      %3835 = vrot.lane.b32.xlu0 %v3593, 96
      %v3836 = vpop.permute.xlu0 %3835
      %3837 = vrot.lane.b32.xlu0 %v3775, 96
      %v3838 = vpop.permute.xlu0 %3837
      %3839 = vrot.lane.b32.xlu0 %v3776, 96
      %v3840 = vpop.permute.xlu0 %3839
      %v3841 = vpack.c.b16 %v3774, %v3773
      %v3843 = vshrl.u32 %v3841, 16
      %v3845 = vrot.slane %v3843, 4
      %v3846 = vshll.u32 %v3841, 16
      %v3848 = vrot.slane %v3846, 5
      %v3849 = vor.u32 %v3845, %v3848
      %3850 = vrot.lane.b32.xlu0 %v3288, 112
      %v3851 = vpop.permute.xlu0 %3850
      %3852 = vrot.lane.b32.xlu0 %v3296, 112
      %v3853 = vpop.permute.xlu0 %3852
      %3854 = vrot.lane.b32.xlu0 %v3304, 112
      %v3855 = vpop.permute.xlu0 %3854
      %3856 = vrot.lane.b32.xlu0 %v3312, 112
      %v3857 = vpop.permute.xlu0 %3856
      %3858 = vrot.lane.b32.xlu0 %v3320, 112
      %v3859 = vpop.permute.xlu0 %3858
      %3860 = vrot.lane.b32.xlu0 %v3328, 112
      %v3861 = vpop.permute.xlu0 %3860
      %3862 = vrot.lane.b32.xlu0 %v3336, 112
      %v3863 = vpop.permute.xlu0 %3862
      %3864 = vrot.lane.b32.xlu0 %v3344, 112
      %v3865 = vpop.permute.xlu0 %3864
      %3866 = vrot.lane.b32.xlu0 %v3352, 112
      %v3867 = vpop.permute.xlu0 %3866
      %3868 = vrot.lane.b32.xlu0 %v3360, 112
      %v3869 = vpop.permute.xlu0 %3868
      %3870 = vrot.lane.b32.xlu0 %v3368, 112
      %v3871 = vpop.permute.xlu0 %3870
      %3872 = vrot.lane.b32.xlu0 %v3376, 112
      %v3873 = vpop.permute.xlu0 %3872
      %3874 = vrot.lane.b32.xlu0 %v3384, 112
      %v3875 = vpop.permute.xlu0 %3874
      %3876 = vrot.lane.b32.xlu0 %v3392, 112
      %v3877 = vpop.permute.xlu0 %3876
      %3878 = vrot.lane.b32.xlu0 %v3666, 112
      %v3879 = vpop.permute.xlu0 %3878
      %3880 = vrot.lane.b32.xlu0 %v3849, 112
      %v3881 = vpop.permute.xlu0 %3880
      %v3883 = vunpack.c.l.b16 %v3120
      %v3884 = vpack.c.b16 %v3883, %v3883
      %v3885 = vrot.slane %v3841, 5
      %v3886 = vrot.slane %v3884, 5
      %v3887 = vsel %vm3473, %v3885, %v3886
      %vm3888 = vcmask 130048
      %v3891 = vsel %vm3888, %v3217, %v3394
      %v3893 = vsel %vm3888, %v3218, %v3394
      %v3896 = vsel %vm3888, %v3219, %v3396
      %v3898 = vsel %vm3888, %v3220, %v3396
      %v3901 = vsel %vm3888, %v3221, %v3398
      %v3903 = vsel %vm3888, %v3222, %v3398
      %v3906 = vsel %vm3888, %v3223, %v3400
      %v3908 = vsel %vm3888, %v3224, %v3400
      %v3911 = vsel %vm3888, %v3225, %v3402
      %v3913 = vsel %vm3888, %v3226, %v3402
      %v3916 = vsel %vm3888, %v3227, %v3404
      %v3918 = vsel %vm3888, %v3228, %v3404
      %v3921 = vsel %vm3888, %v3229, %v3406
      %v3923 = vsel %vm3888, %v3230, %v3406
      %v3926 = vsel %vm3888, %v3231, %v3408
      %v3928 = vsel %vm3888, %v3232, %v3408
      %v3931 = vsel %vm3888, %v3233, %v3410
      %v3933 = vsel %vm3888, %v3234, %v3410
      %v3936 = vsel %vm3888, %v3235, %v3412
      %v3938 = vsel %vm3888, %v3236, %v3412
      %v3941 = vsel %vm3888, %v3237, %v3414
      %v3943 = vsel %vm3888, %v3238, %v3414
      %v3946 = vsel %vm3888, %v3239, %v3416
      %v3948 = vsel %vm3888, %v3240, %v3416
      %v3951 = vsel %vm3888, %v3241, %v3418
      %v3953 = vsel %vm3888, %v3242, %v3418
      %v3956 = vsel %vm3888, %v3243, %v3420
      %v3958 = vsel %vm3888, %v3244, %v3420
      %v3961 = vsel %vm3888, %v3245, %v3422
      %v3963 = vsel %vm3888, %v3246, %v3422
      %v3966 = vsel %vm3888, %v3247, %v3424
      %v3968 = vsel %vm3888, %v3248, %v3424
      %vm3969 = vcmask 261120
      %v3971 = vsel %vm3969, %v3891, %v3523
      %v3973 = vsel %vm3969, %v3893, %v3525
      %v3975 = vsel %vm3969, %v3896, %v3527
      %v3977 = vsel %vm3969, %v3898, %v3529
      %v3979 = vsel %vm3969, %v3901, %v3531
      %v3981 = vsel %vm3969, %v3903, %v3533
      %v3983 = vsel %vm3969, %v3906, %v3535
      %v3985 = vsel %vm3969, %v3908, %v3537
      %v3987 = vsel %vm3969, %v3911, %v3539
      %v3989 = vsel %vm3969, %v3913, %v3541
      %v3991 = vsel %vm3969, %v3916, %v3543
      %v3993 = vsel %vm3969, %v3918, %v3545
      %v3995 = vsel %vm3969, %v3921, %v3547
      %v3997 = vsel %vm3969, %v3923, %v3549
      %v3999 = vsel %vm3969, %v3926, %v3551
      %v4001 = vsel %vm3969, %v3928, %v3553
      %v4003 = vsel %vm3969, %v3931, %v3555
      %v4005 = vsel %vm3969, %v3933, %v3557
      %v4007 = vsel %vm3969, %v3936, %v3559
      %v4009 = vsel %vm3969, %v3938, %v3561
      %v4011 = vsel %vm3969, %v3941, %v3563
      %v4013 = vsel %vm3969, %v3943, %v3565
      %v4015 = vsel %vm3969, %v3946, %v3567
      %v4017 = vsel %vm3969, %v3948, %v3569
      %v4019 = vsel %vm3969, %v3951, %v3571
      %v4021 = vsel %vm3969, %v3953, %v3573
      %v4023 = vsel %vm3969, %v3956, %v3575
      %v4025 = vsel %vm3969, %v3958, %v3577
      %v4027 = vsel %vm3969, %v3961, %v3579
      %v4029 = vsel %vm3969, %v3963, %v3581
      %v4031 = vsel %vm3969, %v3966, %v3583
      %v4033 = vsel %vm3969, %v3968, %v3585
      %vm4034 = vcmask 392192
      %v4036 = vsel %vm4034, %v3971, %v3595
      %v4038 = vsel %vm4034, %v3973, %v3597
      %v4040 = vsel %vm4034, %v3975, %v3599
      %v4042 = vsel %vm4034, %v3977, %v3601
      %v4044 = vsel %vm4034, %v3979, %v3603
      %v4046 = vsel %vm4034, %v3981, %v3605
      %v4048 = vsel %vm4034, %v3983, %v3607
      %v4050 = vsel %vm4034, %v3985, %v3609
      %v4052 = vsel %vm4034, %v3987, %v3611
      %v4054 = vsel %vm4034, %v3989, %v3613
      %v4056 = vsel %vm4034, %v3991, %v3615
      %v4058 = vsel %vm4034, %v3993, %v3617
      %v4060 = vsel %vm4034, %v3995, %v3619
      %v4062 = vsel %vm4034, %v3997, %v3621
      %v4064 = vsel %vm4034, %v3999, %v3623
      %v4066 = vsel %vm4034, %v4001, %v3625
      %v4068 = vsel %vm4034, %v4003, %v3627
      %v4070 = vsel %vm4034, %v4005, %v3629
      %v4072 = vsel %vm4034, %v4007, %v3631
      %v4074 = vsel %vm4034, %v4009, %v3633
      %v4076 = vsel %vm4034, %v4011, %v3635
      %v4078 = vsel %vm4034, %v4013, %v3637
      %v4080 = vsel %vm4034, %v4015, %v3639
      %v4082 = vsel %vm4034, %v4017, %v3641
      %v4084 = vsel %vm4034, %v4019, %v3643
      %v4086 = vsel %vm4034, %v4021, %v3645
      %v4088 = vsel %vm4034, %v4023, %v3647
      %v4090 = vsel %vm4034, %v4025, %v3649
      %v4092 = vsel %vm4034, %v4027, %v3651
      %v4094 = vsel %vm4034, %v4029, %v3653
      %v4096 = vsel %vm4034, %v4031, %v3655
      %v4098 = vsel %vm4034, %v4033, %v3657
      %vm4099 = vcmask 523264
      %v4101 = vsel %vm4099, %v4036, %v3668
      %v4102 = vsel %vm4099, %v4038, %v3668
      %v4104 = vsel %vm4099, %v4040, %v3670
      %v4105 = vsel %vm4099, %v4042, %v3670
      %v4107 = vsel %vm4099, %v4044, %v3672
      %v4108 = vsel %vm4099, %v4046, %v3672
      %v4110 = vsel %vm4099, %v4048, %v3674
      %v4111 = vsel %vm4099, %v4050, %v3674
      %v4113 = vsel %vm4099, %v4052, %v3676
      %v4114 = vsel %vm4099, %v4054, %v3676
      %v4116 = vsel %vm4099, %v4056, %v3678
      %v4117 = vsel %vm4099, %v4058, %v3678
      %v4119 = vsel %vm4099, %v4060, %v3680
      %v4120 = vsel %vm4099, %v4062, %v3680
      %v4122 = vsel %vm4099, %v4064, %v3682
      %v4123 = vsel %vm4099, %v4066, %v3682
      %v4125 = vsel %vm4099, %v4068, %v3684
      %v4126 = vsel %vm4099, %v4070, %v3684
      %v4128 = vsel %vm4099, %v4072, %v3686
      %v4129 = vsel %vm4099, %v4074, %v3686
      %v4131 = vsel %vm4099, %v4076, %v3688
      %v4132 = vsel %vm4099, %v4078, %v3688
      %v4134 = vsel %vm4099, %v4080, %v3690
      %v4135 = vsel %vm4099, %v4082, %v3690
      %v4137 = vsel %vm4099, %v4084, %v3692
      %v4138 = vsel %vm4099, %v4086, %v3692
      %v4140 = vsel %vm4099, %v4088, %v3694
      %v4141 = vsel %vm4099, %v4090, %v3694
      %v4143 = vsel %vm4099, %v4092, %v3696
      %v4144 = vsel %vm4099, %v4094, %v3696
      %v4146 = vsel %vm4099, %v4096, %v3698
      %v4147 = vsel %vm4099, %v4098, %v3698
      %vm4148 = vcmask 654336
      %v4150 = vsel %vm4148, %v4101, %v3706
      %v4152 = vsel %vm4148, %v4102, %v3708
      %v4154 = vsel %vm4148, %v4104, %v3710
      %v4156 = vsel %vm4148, %v4105, %v3712
      %v4158 = vsel %vm4148, %v4107, %v3714
      %v4160 = vsel %vm4148, %v4108, %v3716
      %v4162 = vsel %vm4148, %v4110, %v3718
      %v4164 = vsel %vm4148, %v4111, %v3720
      %v4166 = vsel %vm4148, %v4113, %v3722
      %v4168 = vsel %vm4148, %v4114, %v3724
      %v4170 = vsel %vm4148, %v4116, %v3726
      %v4172 = vsel %vm4148, %v4117, %v3728
      %v4174 = vsel %vm4148, %v4119, %v3730
      %v4176 = vsel %vm4148, %v4120, %v3732
      %v4178 = vsel %vm4148, %v4122, %v3734
      %v4180 = vsel %vm4148, %v4123, %v3736
      %v4182 = vsel %vm4148, %v4125, %v3738
      %v4184 = vsel %vm4148, %v4126, %v3740
      %v4186 = vsel %vm4148, %v4128, %v3742
      %v4188 = vsel %vm4148, %v4129, %v3744
      %v4190 = vsel %vm4148, %v4131, %v3746
      %v4192 = vsel %vm4148, %v4132, %v3748
      %v4194 = vsel %vm4148, %v4134, %v3750
      %v4196 = vsel %vm4148, %v4135, %v3752
      %v4198 = vsel %vm4148, %v4137, %v3754
      %v4200 = vsel %vm4148, %v4138, %v3756
      %v4202 = vsel %vm4148, %v4140, %v3758
      %v4204 = vsel %vm4148, %v4141, %v3760
      %v4206 = vsel %vm4148, %v4143, %v3762
      %v4208 = vsel %vm4148, %v4144, %v3764
      %v4210 = vsel %vm4148, %v4146, %v3766
      %v4212 = vsel %vm4148, %v4147, %v3768
      %vm4213 = vcmask 785408
      %v4215 = vsel %vm4213, %v4150, %v3778
      %v4217 = vsel %vm4213, %v4152, %v3780
      %v4219 = vsel %vm4213, %v4154, %v3782
      %v4221 = vsel %vm4213, %v4156, %v3784
      %v4223 = vsel %vm4213, %v4158, %v3786
      %v4225 = vsel %vm4213, %v4160, %v3788
      %v4227 = vsel %vm4213, %v4162, %v3790
      %v4229 = vsel %vm4213, %v4164, %v3792
      %v4231 = vsel %vm4213, %v4166, %v3794
      %v4233 = vsel %vm4213, %v4168, %v3796
      %v4235 = vsel %vm4213, %v4170, %v3798
      %v4237 = vsel %vm4213, %v4172, %v3800
      %v4239 = vsel %vm4213, %v4174, %v3802
      %v4241 = vsel %vm4213, %v4176, %v3804
      %v4243 = vsel %vm4213, %v4178, %v3806
      %v4245 = vsel %vm4213, %v4180, %v3808
      %v4247 = vsel %vm4213, %v4182, %v3810
      %v4249 = vsel %vm4213, %v4184, %v3812
      %v4251 = vsel %vm4213, %v4186, %v3814
      %v4253 = vsel %vm4213, %v4188, %v3816
      %v4255 = vsel %vm4213, %v4190, %v3818
      %v4257 = vsel %vm4213, %v4192, %v3820
      %v4259 = vsel %vm4213, %v4194, %v3822
      %v4261 = vsel %vm4213, %v4196, %v3824
      %v4263 = vsel %vm4213, %v4198, %v3826
      %v4265 = vsel %vm4213, %v4200, %v3828
      %v4267 = vsel %vm4213, %v4202, %v3830
      %v4269 = vsel %vm4213, %v4204, %v3832
      %v4271 = vsel %vm4213, %v4206, %v3834
      %v4273 = vsel %vm4213, %v4208, %v3836
      %v4275 = vsel %vm4213, %v4210, %v3838
      %v4277 = vsel %vm4213, %v4212, %v3840
      %vm4278 = vcmask 916480
      %v4280 = vsel %vm4278, %v4215, %v3851
      %v4281 = vsel %vm4278, %v4217, %v3851
      %v4283 = vsel %vm4278, %v4219, %v3853
      %v4284 = vsel %vm4278, %v4221, %v3853
      %v4286 = vsel %vm4278, %v4223, %v3855
      %v4287 = vsel %vm4278, %v4225, %v3855
      %v4289 = vsel %vm4278, %v4227, %v3857
      %v4290 = vsel %vm4278, %v4229, %v3857
      %v4292 = vsel %vm4278, %v4231, %v3859
      %v4293 = vsel %vm4278, %v4233, %v3859
      %v4295 = vsel %vm4278, %v4235, %v3861
      %v4296 = vsel %vm4278, %v4237, %v3861
      %v4298 = vsel %vm4278, %v4239, %v3863
      %v4299 = vsel %vm4278, %v4241, %v3863
      %v4301 = vsel %vm4278, %v4243, %v3865
      %v4302 = vsel %vm4278, %v4245, %v3865
      %v4304 = vsel %vm4278, %v4247, %v3867
      %v4305 = vsel %vm4278, %v4249, %v3867
      %v4307 = vsel %vm4278, %v4251, %v3869
      %v4308 = vsel %vm4278, %v4253, %v3869
      %v4310 = vsel %vm4278, %v4255, %v3871
      %v4311 = vsel %vm4278, %v4257, %v3871
      %v4313 = vsel %vm4278, %v4259, %v3873
      %v4314 = vsel %vm4278, %v4261, %v3873
      %v4316 = vsel %vm4278, %v4263, %v3875
      %v4317 = vsel %vm4278, %v4265, %v3875
      %v4319 = vsel %vm4278, %v4267, %v3877
      %v4320 = vsel %vm4278, %v4269, %v3877
      %v4322 = vsel %vm4278, %v4271, %v3879
      %v4323 = vsel %vm4278, %v4273, %v3879
      %v4325 = vsel %vm4278, %v4275, %v3881
      %v4326 = vsel %vm4278, %v4277, %v3881
      %v4327 = vld [vmem:[%s3] sm:$0xf]
      %v4328 = vld [vmem:[%s3 + $0x4] sm:$0xf]
      %v4329 = vld [vmem:[%s3 + $0x8] sm:$0xf]
      %v4330 = vld [vmem:[%s3 + $0xc] sm:$0xf]
      %v4331 = vld [vmem:[%s3 + $0x10] sm:$0xf]
      %v4332 = vld [vmem:[%s3 + $0x14] sm:$0xf]
      %v4333 = vld [vmem:[%s3 + $0x18] sm:$0xf]
      %v4334 = vld [vmem:[%s3 + $0x1c] sm:$0xf]
      %v4335 = vld [vmem:[%s3 + $0x20] sm:$0xf]
      %v4336 = vld [vmem:[%s3 + $0x24] sm:$0xf]
      %v4337 = vld [vmem:[%s3 + $0x28] sm:$0xf]
      %v4338 = vld [vmem:[%s3 + $0x2c] sm:$0xf]
      %v4339 = vld [vmem:[%s3 + $0x30] sm:$0xf]
      %v4340 = vld [vmem:[%s3 + $0x34] sm:$0xf]
      %v4341 = vld [vmem:[%s3 + $0x38] sm:$0xf]
      %v4342 = vld [vmem:[%s3 + $0x3c] sm:$0xf]
      %v4343 = vld [vmem:[%s3 + $0x40] sm:$0xf]
      %v4344 = vld [vmem:[%s3 + $0x44] sm:$0xf]
      %v4345 = vld [vmem:[%s4] sm:$0x1]
      %v4347 = vlaneseq
      %v4348 = vshrl.u32 %v4347, 7
      %v4349 = vsub.s32 0, %v4348
      %v4350 = vrot.slane %v4345, %v4349
      %vm4352 = vsmask.f32 4352
      %v4353 = vshrl.u32 %v4280, 16
      %v4355 = vrot.slane %v4353, 3
      %v4356 = vshll.u32 %v4280, 16
      %v4358 = vrot.slane %v4356, 4
      %v4359 = vor.u32 %v4355, %v4358
      %v4360 = vshrl.u32 %v4281, 16
      %v4362 = vrot.slane %v4360, 3
      %v4363 = vshll.u32 %v4281, 16
      %v4365 = vrot.slane %v4363, 4
      %v4366 = vor.u32 %v4362, %v4365
      %v4367 = vsel %vm4352, %v4359, %v4366
      %v4369 = vshrl.u32 %v3480, 16
      %v4371 = vrot.slane %v4369, 3
      %v4372 = vshll.u32 %v3480, 16
      %v4374 = vrot.slane %v4372, 4
      %v4375 = vor.u32 %v4371, %v4374
      %v4377 = vshrl.u32 %v3482, 16
      %v4379 = vrot.slane %v4377, 3
      %v4380 = vshll.u32 %v3482, 16
      %v4382 = vrot.slane %v4380, 4
      %v4383 = vor.u32 %v4379, %v4382
      %v4384 = vsel %vm4352, %v4375, %v4383
      %v4385 = vshrl.u32 %v4283, 16
      %v4387 = vrot.slane %v4385, 3
      %v4388 = vshll.u32 %v4283, 16
      %v4390 = vrot.slane %v4388, 4
      %v4391 = vor.u32 %v4387, %v4390
      %v4392 = vshrl.u32 %v4284, 16
      %v4394 = vrot.slane %v4392, 3
      %v4395 = vshll.u32 %v4284, 16
      %v4397 = vrot.slane %v4395, 4
      %v4398 = vor.u32 %v4394, %v4397
      %v4399 = vsel %vm4352, %v4391, %v4398
      %v4401 = vshrl.u32 %v3483, 16
      %v4403 = vrot.slane %v4401, 3
      %v4404 = vshll.u32 %v3483, 16
      %v4406 = vrot.slane %v4404, 4
      %v4407 = vor.u32 %v4403, %v4406
      %v4409 = vshrl.u32 %v3485, 16
      %v4411 = vrot.slane %v4409, 3
      %v4412 = vshll.u32 %v3485, 16
      %v4414 = vrot.slane %v4412, 4
      %v4415 = vor.u32 %v4411, %v4414
      %v4416 = vsel %vm4352, %v4407, %v4415
      %v4417 = vshrl.u32 %v4286, 16
      %v4419 = vrot.slane %v4417, 3
      %v4420 = vshll.u32 %v4286, 16
      %v4422 = vrot.slane %v4420, 4
      %v4423 = vor.u32 %v4419, %v4422
      %v4424 = vshrl.u32 %v4287, 16
      %v4426 = vrot.slane %v4424, 3
      %v4427 = vshll.u32 %v4287, 16
      %v4429 = vrot.slane %v4427, 4
      %v4430 = vor.u32 %v4426, %v4429
      %v4431 = vsel %vm4352, %v4423, %v4430
      %v4433 = vshrl.u32 %v3486, 16
      %v4435 = vrot.slane %v4433, 3
      %v4436 = vshll.u32 %v3486, 16
      %v4438 = vrot.slane %v4436, 4
      %v4439 = vor.u32 %v4435, %v4438
      %v4441 = vshrl.u32 %v3488, 16
      %v4443 = vrot.slane %v4441, 3
      %v4444 = vshll.u32 %v3488, 16
      %v4446 = vrot.slane %v4444, 4
      %v4447 = vor.u32 %v4443, %v4446
      %v4448 = vsel %vm4352, %v4439, %v4447
      %v4449 = vshrl.u32 %v4289, 16
      %v4451 = vrot.slane %v4449, 3
      %v4452 = vshll.u32 %v4289, 16
      %v4454 = vrot.slane %v4452, 4
      %v4455 = vor.u32 %v4451, %v4454
      %v4456 = vshrl.u32 %v4290, 16
      %v4458 = vrot.slane %v4456, 3
      %v4459 = vshll.u32 %v4290, 16
      %v4461 = vrot.slane %v4459, 4
      %v4462 = vor.u32 %v4458, %v4461
      %v4463 = vsel %vm4352, %v4455, %v4462
      %v4465 = vshrl.u32 %v3489, 16
      %v4467 = vrot.slane %v4465, 3
      %v4468 = vshll.u32 %v3489, 16
      %v4470 = vrot.slane %v4468, 4
      %v4471 = vor.u32 %v4467, %v4470
      %v4473 = vshrl.u32 %v3491, 16
      %v4475 = vrot.slane %v4473, 3
      %v4476 = vshll.u32 %v3491, 16
      %v4478 = vrot.slane %v4476, 4
      %v4479 = vor.u32 %v4475, %v4478
      %v4480 = vsel %vm4352, %v4471, %v4479
      %v4481 = vshrl.u32 %v4292, 16
      %v4483 = vrot.slane %v4481, 3
      %v4484 = vshll.u32 %v4292, 16
      %v4486 = vrot.slane %v4484, 4
      %v4487 = vor.u32 %v4483, %v4486
      %v4488 = vshrl.u32 %v4293, 16
      %v4490 = vrot.slane %v4488, 3
      %v4491 = vshll.u32 %v4293, 16
      %v4493 = vrot.slane %v4491, 4
      %v4494 = vor.u32 %v4490, %v4493
      %v4495 = vsel %vm4352, %v4487, %v4494
      %v4497 = vshrl.u32 %v3492, 16
      %v4499 = vrot.slane %v4497, 3
      %v4500 = vshll.u32 %v3492, 16
      %v4502 = vrot.slane %v4500, 4
      %v4503 = vor.u32 %v4499, %v4502
      %v4505 = vshrl.u32 %v3494, 16
      %v4507 = vrot.slane %v4505, 3
      %v4508 = vshll.u32 %v3494, 16
      %v4510 = vrot.slane %v4508, 4
      %v4511 = vor.u32 %v4507, %v4510
      %v4512 = vsel %vm4352, %v4503, %v4511
      %v4513 = vshrl.u32 %v4295, 16
      %v4515 = vrot.slane %v4513, 3
      %v4516 = vshll.u32 %v4295, 16
      %v4518 = vrot.slane %v4516, 4
      %v4519 = vor.u32 %v4515, %v4518
      %v4520 = vshrl.u32 %v4296, 16
      %v4522 = vrot.slane %v4520, 3
      %v4523 = vshll.u32 %v4296, 16
      %v4525 = vrot.slane %v4523, 4
      %v4526 = vor.u32 %v4522, %v4525
      %v4527 = vsel %vm4352, %v4519, %v4526
      %v4529 = vshrl.u32 %v3495, 16
      %v4531 = vrot.slane %v4529, 3
      %v4532 = vshll.u32 %v3495, 16
      %v4534 = vrot.slane %v4532, 4
      %v4535 = vor.u32 %v4531, %v4534
      %v4537 = vshrl.u32 %v3497, 16
      %v4539 = vrot.slane %v4537, 3
      %v4540 = vshll.u32 %v3497, 16
      %v4542 = vrot.slane %v4540, 4
      %v4543 = vor.u32 %v4539, %v4542
      %v4544 = vsel %vm4352, %v4535, %v4543
      %v4545 = vshrl.u32 %v4298, 16
      %v4547 = vrot.slane %v4545, 3
      %v4548 = vshll.u32 %v4298, 16
      %v4550 = vrot.slane %v4548, 4
      %v4551 = vor.u32 %v4547, %v4550
      %v4552 = vshrl.u32 %v4299, 16
      %v4554 = vrot.slane %v4552, 3
      %v4555 = vshll.u32 %v4299, 16
      %v4557 = vrot.slane %v4555, 4
      %v4558 = vor.u32 %v4554, %v4557
      %v4559 = vsel %vm4352, %v4551, %v4558
      %v4561 = vshrl.u32 %v3498, 16
      %v4563 = vrot.slane %v4561, 3
      %v4564 = vshll.u32 %v3498, 16
      %v4566 = vrot.slane %v4564, 4
      %v4567 = vor.u32 %v4563, %v4566
      %v4569 = vshrl.u32 %v3500, 16
      %v4571 = vrot.slane %v4569, 3
      %v4572 = vshll.u32 %v3500, 16
      %v4574 = vrot.slane %v4572, 4
      %v4575 = vor.u32 %v4571, %v4574
      %v4576 = vsel %vm4352, %v4567, %v4575
      %v4577 = vshrl.u32 %v4301, 16
      %v4579 = vrot.slane %v4577, 3
      %v4580 = vshll.u32 %v4301, 16
      %v4582 = vrot.slane %v4580, 4
      %v4583 = vor.u32 %v4579, %v4582
      %v4584 = vshrl.u32 %v4302, 16
      %v4586 = vrot.slane %v4584, 3
      %v4587 = vshll.u32 %v4302, 16
      %v4589 = vrot.slane %v4587, 4
      %v4590 = vor.u32 %v4586, %v4589
      %v4591 = vsel %vm4352, %v4583, %v4590
      %v4593 = vshrl.u32 %v3501, 16
      %v4595 = vrot.slane %v4593, 3
      %v4596 = vshll.u32 %v3501, 16
      %v4598 = vrot.slane %v4596, 4
      %v4599 = vor.u32 %v4595, %v4598
      %v4601 = vshrl.u32 %v3503, 16
      %v4603 = vrot.slane %v4601, 3
      %v4604 = vshll.u32 %v3503, 16
      %v4606 = vrot.slane %v4604, 4
      %v4607 = vor.u32 %v4603, %v4606
      %v4608 = vsel %vm4352, %v4599, %v4607
      %v4609 = vshrl.u32 %v4304, 16
      %v4611 = vrot.slane %v4609, 3
      %v4612 = vshll.u32 %v4304, 16
      %v4614 = vrot.slane %v4612, 4
      %v4615 = vor.u32 %v4611, %v4614
      %v4616 = vshrl.u32 %v4305, 16
      %v4618 = vrot.slane %v4616, 3
      %v4619 = vshll.u32 %v4305, 16
      %v4621 = vrot.slane %v4619, 4
      %v4622 = vor.u32 %v4618, %v4621
      %v4623 = vsel %vm4352, %v4615, %v4622
      %v4625 = vshrl.u32 %v3504, 16
      %v4627 = vrot.slane %v4625, 3
      %v4628 = vshll.u32 %v3504, 16
      %v4630 = vrot.slane %v4628, 4
      %v4631 = vor.u32 %v4627, %v4630
      %v4633 = vshrl.u32 %v3506, 16
      %v4635 = vrot.slane %v4633, 3
      %v4636 = vshll.u32 %v3506, 16
      %v4638 = vrot.slane %v4636, 4
      %v4639 = vor.u32 %v4635, %v4638
      %v4640 = vsel %vm4352, %v4631, %v4639
      %v4641 = vshrl.u32 %v4307, 16
      %v4643 = vrot.slane %v4641, 3
      %v4644 = vshll.u32 %v4307, 16
      %v4646 = vrot.slane %v4644, 4
      %v4647 = vor.u32 %v4643, %v4646
      %v4648 = vshrl.u32 %v4308, 16
      %v4650 = vrot.slane %v4648, 3
      %v4651 = vshll.u32 %v4308, 16
      %v4653 = vrot.slane %v4651, 4
      %v4654 = vor.u32 %v4650, %v4653
      %v4655 = vsel %vm4352, %v4647, %v4654
      %v4657 = vshrl.u32 %v3507, 16
      %v4659 = vrot.slane %v4657, 3
      %v4660 = vshll.u32 %v3507, 16
      %v4662 = vrot.slane %v4660, 4
      %v4663 = vor.u32 %v4659, %v4662
      %v4665 = vshrl.u32 %v3509, 16
      %v4667 = vrot.slane %v4665, 3
      %v4668 = vshll.u32 %v3509, 16
      %v4670 = vrot.slane %v4668, 4
      %v4671 = vor.u32 %v4667, %v4670
      %v4672 = vsel %vm4352, %v4663, %v4671
      %v4673 = vshrl.u32 %v4310, 16
      %v4675 = vrot.slane %v4673, 3
      %v4676 = vshll.u32 %v4310, 16
      %v4678 = vrot.slane %v4676, 4
      %v4679 = vor.u32 %v4675, %v4678
      %v4680 = vshrl.u32 %v4311, 16
      %v4682 = vrot.slane %v4680, 3
      %v4683 = vshll.u32 %v4311, 16
      %v4685 = vrot.slane %v4683, 4
      %v4686 = vor.u32 %v4682, %v4685
      %v4687 = vsel %vm4352, %v4679, %v4686
      %v4689 = vshrl.u32 %v3510, 16
      %v4691 = vrot.slane %v4689, 3
      %v4692 = vshll.u32 %v3510, 16
      %v4694 = vrot.slane %v4692, 4
      %v4695 = vor.u32 %v4691, %v4694
      %v4697 = vshrl.u32 %v3512, 16
      %v4699 = vrot.slane %v4697, 3
      %v4700 = vshll.u32 %v3512, 16
      %v4702 = vrot.slane %v4700, 4
      %v4703 = vor.u32 %v4699, %v4702
      %v4704 = vsel %vm4352, %v4695, %v4703
      %v4705 = vshrl.u32 %v4313, 16
      %v4707 = vrot.slane %v4705, 3
      %v4708 = vshll.u32 %v4313, 16
      %v4710 = vrot.slane %v4708, 4
      %v4711 = vor.u32 %v4707, %v4710
      %v4712 = vshrl.u32 %v4314, 16
      %v4714 = vrot.slane %v4712, 3
      %v4715 = vshll.u32 %v4314, 16
      %v4717 = vrot.slane %v4715, 4
      %v4718 = vor.u32 %v4714, %v4717
      %v4719 = vsel %vm4352, %v4711, %v4718
      %v4721 = vshrl.u32 %v3513, 16
      %v4723 = vrot.slane %v4721, 3
      %v4724 = vshll.u32 %v3513, 16
      %v4726 = vrot.slane %v4724, 4
      %v4727 = vor.u32 %v4723, %v4726
      %v4729 = vshrl.u32 %v3515, 16
      %v4731 = vrot.slane %v4729, 3
      %v4732 = vshll.u32 %v3515, 16
      %v4734 = vrot.slane %v4732, 4
      %v4735 = vor.u32 %v4731, %v4734
      %v4736 = vsel %vm4352, %v4727, %v4735
      %v4737 = vshrl.u32 %v4316, 16
      %v4739 = vrot.slane %v4737, 3
      %v4740 = vshll.u32 %v4316, 16
      %v4742 = vrot.slane %v4740, 4
      %v4743 = vor.u32 %v4739, %v4742
      %v4744 = vshrl.u32 %v4317, 16
      %v4746 = vrot.slane %v4744, 3
      %v4747 = vshll.u32 %v4317, 16
      %v4749 = vrot.slane %v4747, 4
      %v4750 = vor.u32 %v4746, %v4749
      %v4751 = vsel %vm4352, %v4743, %v4750
      %v4753 = vshrl.u32 %v3516, 16
      %v4755 = vrot.slane %v4753, 3
      %v4756 = vshll.u32 %v3516, 16
      %v4758 = vrot.slane %v4756, 4
      %v4759 = vor.u32 %v4755, %v4758
      %v4761 = vshrl.u32 %v3518, 16
      %v4763 = vrot.slane %v4761, 3
      %v4764 = vshll.u32 %v3518, 16
      %v4766 = vrot.slane %v4764, 4
      %v4767 = vor.u32 %v4763, %v4766
      %v4768 = vsel %vm4352, %v4759, %v4767
      %v4769 = vshrl.u32 %v4319, 16
      %v4771 = vrot.slane %v4769, 3
      %v4772 = vshll.u32 %v4319, 16
      %v4774 = vrot.slane %v4772, 4
      %v4775 = vor.u32 %v4771, %v4774
      %v4776 = vshrl.u32 %v4320, 16
      %v4778 = vrot.slane %v4776, 3
      %v4779 = vshll.u32 %v4320, 16
      %v4781 = vrot.slane %v4779, 4
      %v4782 = vor.u32 %v4778, %v4781
      %v4783 = vsel %vm4352, %v4775, %v4782
      %v4785 = vshrl.u32 %v3519, 16
      %v4787 = vrot.slane %v4785, 3
      %v4788 = vshll.u32 %v3519, 16
      %v4790 = vrot.slane %v4788, 4
      %v4791 = vor.u32 %v4787, %v4790
      %v4793 = vshrl.u32 %v3521, 16
      %v4795 = vrot.slane %v4793, 3
      %v4796 = vshll.u32 %v3521, 16
      %v4798 = vrot.slane %v4796, 4
      %v4799 = vor.u32 %v4795, %v4798
      %v4800 = vsel %vm4352, %v4791, %v4799
      %v4801 = vshrl.u32 %v4322, 16
      %v4803 = vrot.slane %v4801, 3
      %v4804 = vshll.u32 %v4322, 16
      %v4806 = vrot.slane %v4804, 4
      %v4807 = vor.u32 %v4803, %v4806
      %v4808 = vshrl.u32 %v4323, 16
      %v4810 = vrot.slane %v4808, 3
      %v4811 = vshll.u32 %v4323, 16
      %v4813 = vrot.slane %v4811, 4
      %v4814 = vor.u32 %v4810, %v4813
      %v4815 = vsel %vm4352, %v4807, %v4814
      %v4817 = vshrl.u32 %v3702, 16
      %v4819 = vrot.slane %v4817, 3
      %v4820 = vshll.u32 %v3702, 16
      %v4822 = vrot.slane %v4820, 4
      %v4823 = vor.u32 %v4819, %v4822
      %v4825 = vshrl.u32 %v3704, 16
      %v4827 = vrot.slane %v4825, 3
      %v4828 = vshll.u32 %v3704, 16
      %v4830 = vrot.slane %v4828, 4
      %v4831 = vor.u32 %v4827, %v4830
      %v4832 = vsel %vm4352, %v4823, %v4831
      %v4833 = vshrl.u32 %v4325, 16
      %v4835 = vrot.slane %v4833, 3
      %v4836 = vshll.u32 %v4325, 16
      %v4838 = vrot.slane %v4836, 4
      %v4839 = vor.u32 %v4835, %v4838
      %v4840 = vshrl.u32 %v4326, 16
      %v4842 = vrot.slane %v4840, 3
      %v4843 = vshll.u32 %v4326, 16
      %v4845 = vrot.slane %v4843, 4
      %v4846 = vor.u32 %v4842, %v4845
      %v4847 = vsel %vm4352, %v4839, %v4846
      %v4849 = vshrl.u32 %v3885, 16
      %v4851 = vrot.slane %v4849, 3
      %v4852 = vshll.u32 %v3885, 16
      %v4854 = vrot.slane %v4852, 4
      %v4855 = vor.u32 %v4851, %v4854
      %v4857 = vshrl.u32 %v3887, 16
      %v4859 = vrot.slane %v4857, 3
      %v4860 = vshll.u32 %v3887, 16
      %v4862 = vrot.slane %v4860, 4
      %v4863 = vor.u32 %v4859, %v4862
      %v4864 = vsel %vm4352, %v4855, %v4863
      %v4899 = vunpack.c.l.b16 %v4327
      %v4900 = vunpack.c.l.b16 %v4328
      %v4901 = vunpack.c.l.b16 %v4329
      %v4902 = vunpack.c.l.b16 %v4330
      %v4903 = vunpack.c.l.b16 %v4331
      %v4904 = vunpack.c.l.b16 %v4332
      %v4905 = vunpack.c.l.b16 %v4333
      %v4906 = vunpack.c.l.b16 %v4334
      %v4907 = vunpack.c.l.b16 %v4335
      %v4908 = vunpack.c.l.b16 %v4336
      %v4909 = vunpack.c.l.b16 %v4337
      %v4910 = vunpack.c.l.b16 %v4338
      %v4911 = vunpack.c.l.b16 %v4339
      %v4912 = vunpack.c.l.b16 %v4340
      %v4913 = vunpack.c.l.b16 %v4341
      %v4914 = vunpack.c.l.b16 %v4342
      %v4915 = vunpack.c.l.b16 %v4343
      %v4916 = vunpack.c.l.b16 %v4344
      %v4917 = vpack.c.b16 %v4900, %v4899
      %v4918 = vpack.c.b16 %v4902, %v4901
      %v4919 = vpack.c.b16 %v4904, %v4903
      %v4920 = vpack.c.b16 %v4906, %v4905
      %v4921 = vpack.c.b16 %v4908, %v4907
      %v4922 = vpack.c.b16 %v4910, %v4909
      %v4923 = vpack.c.b16 %v4912, %v4911
      %v4924 = vpack.c.b16 %v4914, %v4913
      %v4925 = vpack.c.b16 %v4916, %v4915
      %v4936 = vsel %vm3888, %v4384, 0
      %v4939 = vsel %vm3888, %v4416, 0
      %v4942 = vsel %vm3888, %v4448, 0
      %v4945 = vsel %vm3888, %v4480, 0
      %v4948 = vsel %vm3888, %v4512, 0
      %v4951 = vsel %vm3888, %v4544, 0
      %v4954 = vsel %vm3888, %v4576, 0
      %v4957 = vsel %vm3888, %v4608, 0
      %v4960 = vsel %vm3888, %v4640, 0
      %v4963 = vsel %vm3888, %v4672, 0
      %v4966 = vsel %vm3888, %v4704, 0
      %v4969 = vsel %vm3888, %v4736, 0
      %v4972 = vsel %vm3888, %v4768, 0
      %v4975 = vsel %vm3888, %v4800, 0
      %v4978 = vsel %vm3888, %v4832, 0
      %v4981 = vsel %vm3888, %v4864, 0
      %4983 = vmatprep.subr.bf16.mxu0 0
      %4984 = vmatpush1.bf16.msra.mxu0 %v4924
      %4985 = vmatprep.subr.bf16.mxu0 0
      %4986 = vmatpush1.bf16.msra.mxu0 %v4923
      %4987 = vmatprep.subr.bf16.mxu0 0
      %4988 = vmatpush1.bf16.msra.mxu0 %v4922
      %4989 = vmatprep.subr.bf16.mxu0 0
      %4990 = vmatpush1.bf16.msra.mxu0 %v4921
      %4991 = vmatprep.subr.bf16.mxu0 0
      %4992 = vmatpush1.bf16.msra.mxu0 %v4920
      %4993 = vmatprep.subr.bf16.mxu0 0
      %4994 = vmatpush1.bf16.msra.mxu0 %v4919
      %4995 = vmatprep.subr.bf16.mxu0 0
      %4996 = vmatpush1.bf16.msra.mxu0 %v4918
      %4997 = vmatprep.subr.bf16.mxu0 0
      %4998 = vmatpush1.bf16.msra.mxu0 %v4917
      %4999 = vmatprep.subr.bf16.mxu0 0
      %5000 = vmatpush2.bf16.msra.mxu0 0
      %5001 = vmatprep.subr.bf16.mxu0 0
      %5002 = vmatpush2.bf16.msra.mxu0 0
      %5003 = vmatprep.subr.bf16.mxu0 0
      %5004 = vmatpush2.bf16.msra.mxu0 0
      %5005 = vmatprep.subr.bf16.mxu0 0
      %5006 = vmatpush2.bf16.msra.mxu0 0
      %5007 = vmatprep.subr.bf16.mxu0 0
      %5008 = vmatpush2.bf16.msra.mxu0 0
      %5009 = vmatprep.subr.bf16.mxu0 0
      %5010 = vmatpush2.bf16.msra.mxu0 0
      %5011 = vmatprep.subr.bf16.mxu0 0
      %5012 = vmatpush2.bf16.msra.mxu0 0
      %5013 = vmatprep.subr.bf16.mxu0 0
      %5014 = vmatpush2.bf16.msra.mxu0 %v4925
      %5015 = vmatprep.mubr.bf16.mxu0 %v4936
      %5016 = vmatmul.mubr.bf16.gmra.mxu0 %v4367
      %v5017 = vpop.f32.mrf.mxu0
      %v5018 = vadd.f32 %v4350, %v5017
      %v5019 = vpop.f32.mrf.mxu0
      %v5020 = vpop.f32.mrf.mxu0
      %v5021 = vadd.f32 %v4350, %v5020
      %v5022 = vpop.f32.mrf.mxu0
      %5023 = vmatprep.mubr.bf16.mxu0 %v4939
      %5024 = vmatmul.mubr.bf16.gmra.mxu0 %v4399
      %v5025 = vpop.f32.mrf.mxu0
      %v5026 = vadd.f32 %v4350, %v5025
      %v5027 = vpop.f32.mrf.mxu0
      %v5028 = vpop.f32.mrf.mxu0
      %v5029 = vadd.f32 %v4350, %v5028
      %v5030 = vpop.f32.mrf.mxu0
      %5031 = vmatprep.mubr.bf16.mxu0 %v4942
      %5032 = vmatmul.mubr.bf16.gmra.mxu0 %v4431
      %v5033 = vpop.f32.mrf.mxu0
      %v5034 = vadd.f32 %v4350, %v5033
      %v5035 = vpop.f32.mrf.mxu0
      %v5036 = vpop.f32.mrf.mxu0
      %v5037 = vadd.f32 %v4350, %v5036
      %v5038 = vpop.f32.mrf.mxu0
      %5039 = vmatprep.mubr.bf16.mxu0 %v4945
      %5040 = vmatmul.mubr.bf16.gmra.mxu0 %v4463
      %v5041 = vpop.f32.mrf.mxu0
      %v5042 = vadd.f32 %v4350, %v5041
      %v5043 = vpop.f32.mrf.mxu0
      %v5044 = vpop.f32.mrf.mxu0
      %v5045 = vadd.f32 %v4350, %v5044
      %v5046 = vpop.f32.mrf.mxu0
      %5047 = vmatprep.mubr.bf16.mxu0 %v4948
      %5048 = vmatmul.mubr.bf16.gmra.mxu0 %v4495
      %v5049 = vpop.f32.mrf.mxu0
      %v5050 = vadd.f32 %v4350, %v5049
      %v5051 = vpop.f32.mrf.mxu0
      %v5052 = vpop.f32.mrf.mxu0
      %v5053 = vadd.f32 %v4350, %v5052
      %v5054 = vpop.f32.mrf.mxu0
      %5055 = vmatprep.mubr.bf16.mxu0 %v4951
      %5056 = vmatmul.mubr.bf16.gmra.mxu0 %v4527
      %v5057 = vpop.f32.mrf.mxu0
      %v5058 = vadd.f32 %v4350, %v5057
      %v5059 = vpop.f32.mrf.mxu0
      %v5060 = vpop.f32.mrf.mxu0
      %v5061 = vadd.f32 %v4350, %v5060
      %v5062 = vpop.f32.mrf.mxu0
      %5063 = vmatprep.mubr.bf16.mxu0 %v4954
      %5064 = vmatmul.mubr.bf16.gmra.mxu0 %v4559
      %v5065 = vpop.f32.mrf.mxu0
      %v5066 = vadd.f32 %v4350, %v5065
      %v5067 = vpop.f32.mrf.mxu0
      %v5068 = vpop.f32.mrf.mxu0
      %v5069 = vadd.f32 %v4350, %v5068
      %v5070 = vpop.f32.mrf.mxu0
      %5071 = vmatprep.mubr.bf16.mxu0 %v4957
      %5072 = vmatmul.mubr.bf16.gmra.mxu0 %v4591
      %v5073 = vpop.f32.mrf.mxu0
      %v5074 = vadd.f32 %v4350, %v5073
      %v5075 = vpop.f32.mrf.mxu0
      %v5076 = vpop.f32.mrf.mxu0
      %v5077 = vadd.f32 %v4350, %v5076
      %v5078 = vpop.f32.mrf.mxu0
      %5079 = vmatprep.mubr.bf16.mxu0 %v4960
      %5080 = vmatmul.mubr.bf16.gmra.mxu0 %v4623
      %v5081 = vpop.f32.mrf.mxu0
      %v5082 = vadd.f32 %v4350, %v5081
      %v5083 = vpop.f32.mrf.mxu0
      %v5084 = vpop.f32.mrf.mxu0
      %v5085 = vadd.f32 %v4350, %v5084
      %v5086 = vpop.f32.mrf.mxu0
      %5087 = vmatprep.mubr.bf16.mxu0 %v4963
      %5088 = vmatmul.mubr.bf16.gmra.mxu0 %v4655
      %v5089 = vpop.f32.mrf.mxu0
      %v5090 = vadd.f32 %v4350, %v5089
      %v5091 = vpop.f32.mrf.mxu0
      %v5092 = vpop.f32.mrf.mxu0
      %v5093 = vadd.f32 %v4350, %v5092
      %v5094 = vpop.f32.mrf.mxu0
      %5095 = vmatprep.mubr.bf16.mxu0 %v4966
      %5096 = vmatmul.mubr.bf16.gmra.mxu0 %v4687
      %v5097 = vpop.f32.mrf.mxu0
      %v5098 = vadd.f32 %v4350, %v5097
      %v5099 = vpop.f32.mrf.mxu0
      %v5100 = vpop.f32.mrf.mxu0
      %v5101 = vadd.f32 %v4350, %v5100
      %v5102 = vpop.f32.mrf.mxu0
      %5103 = vmatprep.mubr.bf16.mxu0 %v4969
      %5104 = vmatmul.mubr.bf16.gmra.mxu0 %v4719
      %v5105 = vpop.f32.mrf.mxu0
      %v5106 = vadd.f32 %v4350, %v5105
      %v5107 = vpop.f32.mrf.mxu0
      %v5108 = vpop.f32.mrf.mxu0
      %v5109 = vadd.f32 %v4350, %v5108
      %v5110 = vpop.f32.mrf.mxu0
      %5111 = vmatprep.mubr.bf16.mxu0 %v4972
      %5112 = vmatmul.mubr.bf16.gmra.mxu0 %v4751
      %v5113 = vpop.f32.mrf.mxu0
      %v5114 = vadd.f32 %v4350, %v5113
      %v5115 = vpop.f32.mrf.mxu0
      %v5116 = vpop.f32.mrf.mxu0
      %v5117 = vadd.f32 %v4350, %v5116
      %v5118 = vpop.f32.mrf.mxu0
      %5119 = vmatprep.mubr.bf16.mxu0 %v4975
      %5120 = vmatmul.mubr.bf16.gmra.mxu0 %v4783
      %v5121 = vpop.f32.mrf.mxu0
      %v5122 = vadd.f32 %v4350, %v5121
      %v5123 = vpop.f32.mrf.mxu0
      %v5124 = vpop.f32.mrf.mxu0
      %v5125 = vadd.f32 %v4350, %v5124
      %v5126 = vpop.f32.mrf.mxu0
      %5127 = vmatprep.mubr.bf16.mxu0 %v4978
      %5128 = vmatmul.mubr.bf16.gmra.mxu0 %v4815
      %v5129 = vpop.f32.mrf.mxu0
      %v5130 = vadd.f32 %v4350, %v5129
      %v5131 = vpop.f32.mrf.mxu0
      %v5132 = vpop.f32.mrf.mxu0
      %v5133 = vadd.f32 %v4350, %v5132
      %v5134 = vpop.f32.mrf.mxu0
      %5135 = vmatprep.mubr.bf16.mxu0 %v4981
      %5136 = vmatmul.mubr.bf16.gmra.mxu0 %v4847
      %v5137 = vpop.f32.mrf.mxu0
      %v5138 = vadd.f32 %v4350, %v5137
      %v5139 = vpop.f32.mrf.mxu0
      %v5140 = vpop.f32.mrf.mxu0
      %v5141 = vadd.f32 %v4350, %v5140
      %v5142 = vpop.f32.mrf.mxu0
      %5143 = vdwg.mxu0
      %vm5144 = vcmp.gt.f32.partialorder %v5018, 0.0
      %vm5145 = vcmp.gt.f32.partialorder %v5021, 0.0
      %vm5146 = vcmp.gt.f32.partialorder %v5026, 0.0
      %vm5147 = vcmp.gt.f32.partialorder %v5029, 0.0
      %vm5148 = vcmp.gt.f32.partialorder %v5034, 0.0
      %vm5149 = vcmp.gt.f32.partialorder %v5037, 0.0
      %vm5150 = vcmp.gt.f32.partialorder %v5042, 0.0
      %vm5151 = vcmp.gt.f32.partialorder %v5045, 0.0
      %vm5152 = vcmp.gt.f32.partialorder %v5050, 0.0
      %vm5153 = vcmp.gt.f32.partialorder %v5053, 0.0
      %vm5154 = vcmp.gt.f32.partialorder %v5058, 0.0
      %vm5155 = vcmp.gt.f32.partialorder %v5061, 0.0
      %vm5156 = vcmp.gt.f32.partialorder %v5066, 0.0
      %vm5157 = vcmp.gt.f32.partialorder %v5069, 0.0
      %vm5158 = vcmp.gt.f32.partialorder %v5074, 0.0
      %vm5159 = vcmp.gt.f32.partialorder %v5077, 0.0
      %vm5160 = vcmp.gt.f32.partialorder %v5082, 0.0
      %vm5161 = vcmp.gt.f32.partialorder %v5085, 0.0
      %vm5162 = vcmp.gt.f32.partialorder %v5090, 0.0
      %vm5163 = vcmp.gt.f32.partialorder %v5093, 0.0
      %vm5164 = vcmp.gt.f32.partialorder %v5098, 0.0
      %vm5165 = vcmp.gt.f32.partialorder %v5101, 0.0
      %vm5166 = vcmp.gt.f32.partialorder %v5106, 0.0
      %vm5167 = vcmp.gt.f32.partialorder %v5109, 0.0
      %vm5168 = vcmp.gt.f32.partialorder %v5114, 0.0
      %vm5169 = vcmp.gt.f32.partialorder %v5117, 0.0
      %vm5170 = vcmp.gt.f32.partialorder %v5122, 0.0
      %vm5171 = vcmp.gt.f32.partialorder %v5125, 0.0
      %vm5172 = vcmp.gt.f32.partialorder %v5130, 0.0
      %vm5173 = vcmp.gt.f32.partialorder %v5133, 0.0
      %vm5174 = vcmp.gt.f32.partialorder %v5138, 0.0
      %vm5175 = vcmp.gt.f32.partialorder %v5141, 0.0
      %v5176 = vmul.f32 %v5018, 0.01
      %v5177 = vmul.f32 %v5021, 0.01
      %v5178 = vmul.f32 %v5026, 0.01
      %v5179 = vmul.f32 %v5029, 0.01
      %v5180 = vmul.f32 %v5034, 0.01
      %v5181 = vmul.f32 %v5037, 0.01
      %v5182 = vmul.f32 %v5042, 0.01
      %v5183 = vmul.f32 %v5045, 0.01
      %v5184 = vmul.f32 %v5050, 0.01
      %v5185 = vmul.f32 %v5053, 0.01
      %v5186 = vmul.f32 %v5058, 0.01
      %v5187 = vmul.f32 %v5061, 0.01
      %v5188 = vmul.f32 %v5066, 0.01
      %v5189 = vmul.f32 %v5069, 0.01
      %v5190 = vmul.f32 %v5074, 0.01
      %v5191 = vmul.f32 %v5077, 0.01
      %v5192 = vmul.f32 %v5082, 0.01
      %v5193 = vmul.f32 %v5085, 0.01
      %v5194 = vmul.f32 %v5090, 0.01
      %v5195 = vmul.f32 %v5093, 0.01
      %v5196 = vmul.f32 %v5098, 0.01
      %v5197 = vmul.f32 %v5101, 0.01
      %v5198 = vmul.f32 %v5106, 0.01
      %v5199 = vmul.f32 %v5109, 0.01
      %v5200 = vmul.f32 %v5114, 0.01
      %v5201 = vmul.f32 %v5117, 0.01
      %v5202 = vmul.f32 %v5122, 0.01
      %v5203 = vmul.f32 %v5125, 0.01
      %v5204 = vmul.f32 %v5130, 0.01
      %v5205 = vmul.f32 %v5133, 0.01
      %v5206 = vmul.f32 %v5138, 0.01
      %v5207 = vmul.f32 %v5141, 0.01
      %v5208 = vsel %vm5144, %v5018, %v5176
      %v5209 = vsel %vm5145, %v5021, %v5177
      %v5210 = vsel %vm5146, %v5026, %v5178
      %v5211 = vsel %vm5147, %v5029, %v5179
      %v5212 = vsel %vm5148, %v5034, %v5180
      %v5213 = vsel %vm5149, %v5037, %v5181
      %v5214 = vsel %vm5150, %v5042, %v5182
      %v5215 = vsel %vm5151, %v5045, %v5183
      %v5216 = vsel %vm5152, %v5050, %v5184
      %v5217 = vsel %vm5153, %v5053, %v5185
      %v5218 = vsel %vm5154, %v5058, %v5186
      %v5219 = vsel %vm5155, %v5061, %v5187
      %v5220 = vsel %vm5156, %v5066, %v5188
      %v5221 = vsel %vm5157, %v5069, %v5189
      %v5222 = vsel %vm5158, %v5074, %v5190
      %v5223 = vsel %vm5159, %v5077, %v5191
      %v5224 = vsel %vm5160, %v5082, %v5192
      %v5225 = vsel %vm5161, %v5085, %v5193
      %v5226 = vsel %vm5162, %v5090, %v5194
      %v5227 = vsel %vm5163, %v5093, %v5195
      %v5228 = vsel %vm5164, %v5098, %v5196
      %v5229 = vsel %vm5165, %v5101, %v5197
      %v5230 = vsel %vm5166, %v5106, %v5198
      %v5231 = vsel %vm5167, %v5109, %v5199
      %v5232 = vsel %vm5168, %v5114, %v5200
      %v5233 = vsel %vm5169, %v5117, %v5201
      %v5234 = vsel %vm5170, %v5122, %v5202
      %v5235 = vsel %vm5171, %v5125, %v5203
      %v5236 = vsel %vm5172, %v5130, %v5204
      %v5237 = vsel %vm5173, %v5133, %v5205
      %v5238 = vsel %vm5174, %v5138, %v5206
      %v5239 = vsel %vm5175, %v5141, %v5207
      %v5240 = vpack.c.bf16 %v5209, %v5208
      %v5241 = vpack.c.bf16 %v5211, %v5210
      %v5242 = vpack.c.bf16 %v5213, %v5212
      %v5243 = vpack.c.bf16 %v5215, %v5214
      %v5244 = vpack.c.bf16 %v5217, %v5216
      %v5245 = vpack.c.bf16 %v5219, %v5218
      %v5246 = vpack.c.bf16 %v5221, %v5220
      %v5247 = vpack.c.bf16 %v5223, %v5222
      %v5248 = vpack.c.bf16 %v5225, %v5224
      %v5249 = vpack.c.bf16 %v5227, %v5226
      %v5250 = vpack.c.bf16 %v5229, %v5228
      %v5251 = vpack.c.bf16 %v5231, %v5230
      %v5252 = vpack.c.bf16 %v5233, %v5232
      %v5253 = vpack.c.bf16 %v5235, %v5234
      %v5254 = vpack.c.bf16 %v5237, %v5236
      %v5255 = vpack.c.bf16 %v5239, %v5238
      %v5272 = vunpack.c.l.b16 %v5240
      %v5273 = vunpack.c.h.b16 %v5240
      %v5274 = vunpack.c.l.b16 %v5241
      %v5275 = vunpack.c.h.b16 %v5241
      %v5276 = vunpack.c.l.b16 %v5242
      %v5277 = vunpack.c.h.b16 %v5242
      %v5278 = vunpack.c.l.b16 %v5243
      %v5279 = vunpack.c.h.b16 %v5243
      %v5280 = vunpack.c.l.b16 %v5244
      %v5281 = vunpack.c.h.b16 %v5244
      %v5282 = vunpack.c.l.b16 %v5245
      %v5283 = vunpack.c.h.b16 %v5245
      %v5284 = vunpack.c.l.b16 %v5246
      %v5285 = vunpack.c.h.b16 %v5246
      %v5286 = vunpack.c.l.b16 %v5247
      %v5287 = vunpack.c.h.b16 %v5247
      %v5288 = vunpack.c.l.b16 %v5248
      %v5289 = vunpack.c.h.b16 %v5248
      %v5290 = vunpack.c.l.b16 %v5249
      %v5291 = vunpack.c.h.b16 %v5249
      %v5292 = vunpack.c.l.b16 %v5250
      %v5293 = vunpack.c.h.b16 %v5250
      %v5294 = vunpack.c.l.b16 %v5251
      %v5295 = vunpack.c.h.b16 %v5251
      %v5296 = vunpack.c.l.b16 %v5252
      %v5297 = vunpack.c.h.b16 %v5252
      %v5298 = vunpack.c.l.b16 %v5253
      %v5299 = vunpack.c.h.b16 %v5253
      %v5300 = vunpack.c.l.b16 %v5254
      %v5301 = vunpack.c.h.b16 %v5254
      %v5302 = vunpack.c.l.b16 %v5255
      %v5303 = vunpack.c.h.b16 %v5255
      %v5304 = vpack.c.b16 %v5272, %v5272
      %v5305 = vpack.c.b16 %v5273, %v5273
      %v5306 = vpack.c.b16 %v5274, %v5274
      %v5307 = vpack.c.b16 %v5275, %v5275
      %v5308 = vpack.c.b16 %v5276, %v5276
      %v5309 = vpack.c.b16 %v5277, %v5277
      %v5310 = vpack.c.b16 %v5278, %v5278
      %v5311 = vpack.c.b16 %v5279, %v5279
      %v5312 = vpack.c.b16 %v5280, %v5280
      %v5313 = vpack.c.b16 %v5281, %v5281
      %v5314 = vpack.c.b16 %v5282, %v5282
      %v5315 = vpack.c.b16 %v5283, %v5283
      %v5316 = vpack.c.b16 %v5284, %v5284
      %v5317 = vpack.c.b16 %v5285, %v5285
      %v5318 = vpack.c.b16 %v5286, %v5286
      %v5319 = vpack.c.b16 %v5287, %v5287
      %v5320 = vpack.c.b16 %v5288, %v5288
      %v5321 = vpack.c.b16 %v5289, %v5289
      %v5322 = vpack.c.b16 %v5290, %v5290
      %v5323 = vpack.c.b16 %v5291, %v5291
      %v5324 = vpack.c.b16 %v5292, %v5292
      %v5325 = vpack.c.b16 %v5293, %v5293
      %v5326 = vpack.c.b16 %v5294, %v5294
      %v5327 = vpack.c.b16 %v5295, %v5295
      %v5328 = vpack.c.b16 %v5296, %v5296
      %v5329 = vpack.c.b16 %v5297, %v5297
      %v5330 = vpack.c.b16 %v5298, %v5298
      %v5331 = vpack.c.b16 %v5299, %v5299
      %v5332 = vpack.c.b16 %v5300, %v5300
      %v5333 = vpack.c.b16 %v5301, %v5301
      %v5334 = vpack.c.b16 %v5302, %v5302
      %v5335 = vpack.c.b16 %v5303, %v5303
      %s5368 = scalar_lea.vmem [#allocation3], 24
      %5369 = vst.msk [vmem:[%s5368 + $0x8] sm:$0xf] %vm443, %v5304
      %5370 = vst.msk [vmem:[%s5368 + $0xc] sm:$0xf] %vm443, %v5305
      %5371 = vst.msk [vmem:[%s5368 + $0x20] sm:$0xf] %vm443, %v5306
      %5372 = vst.msk [vmem:[%s5368 + $0x24] sm:$0xf] %vm443, %v5307
      %5373 = vst.msk [vmem:[%s5368 + $0x38] sm:$0xf] %vm443, %v5308
      %5374 = vst.msk [vmem:[%s5368 + $0x3c] sm:$0xf] %vm443, %v5309
      %5375 = vst.msk [vmem:[%s5368 + $0x50] sm:$0xf] %vm443, %v5310
      %5376 = vst.msk [vmem:[%s5368 + $0x54] sm:$0xf] %vm443, %v5311
      %5377 = vst.msk [vmem:[%s5368 + $0x68] sm:$0xf] %vm443, %v5312
      %5378 = vst.msk [vmem:[%s5368 + $0x6c] sm:$0xf] %vm443, %v5313
      %5379 = vst.msk [vmem:[%s5368 + $0x80] sm:$0xf] %vm443, %v5314
      %5380 = vst.msk [vmem:[%s5368 + $0x84] sm:$0xf] %vm443, %v5315
      %5381 = vst.msk [vmem:[%s5368 + $0x98] sm:$0xf] %vm443, %v5316
      %5382 = vst.msk [vmem:[%s5368 + $0x9c] sm:$0xf] %vm443, %v5317
      %5383 = vst.msk [vmem:[%s5368 + $0xb0] sm:$0xf] %vm443, %v5318
      %5384 = vst.msk [vmem:[%s5368 + $0xb4] sm:$0xf] %vm443, %v5319
      %5385 = vst.msk [vmem:[%s5368 + $0xc8] sm:$0xf] %vm443, %v5320
      %5386 = vst.msk [vmem:[%s5368 + $0xcc] sm:$0xf] %vm443, %v5321
      %5387 = vst.msk [vmem:[%s5368 + $0xe0] sm:$0xf] %vm443, %v5322
      %5388 = vst.msk [vmem:[%s5368 + $0xe4] sm:$0xf] %vm443, %v5323
      %5389 = vst.msk [vmem:[%s5368 + $0xf8] sm:$0xf] %vm443, %v5324
      %5390 = vst.msk [vmem:[%s5368 + $0xfc] sm:$0xf] %vm443, %v5325
      %5391 = vst.msk [vmem:[%s5368 + $0x110] sm:$0xf] %vm443, %v5326
      %5392 = vst.msk [vmem:[%s5368 + $0x114] sm:$0xf] %vm443, %v5327
      %5393 = vst.msk [vmem:[%s5368 + $0x128] sm:$0xf] %vm443, %v5328
      %5394 = vst.msk [vmem:[%s5368 + $0x12c] sm:$0xf] %vm443, %v5329
      %5395 = vst.msk [vmem:[%s5368 + $0x140] sm:$0xf] %vm443, %v5330
      %5396 = vst.msk [vmem:[%s5368 + $0x144] sm:$0xf] %vm443, %v5331
      %5397 = vst.msk [vmem:[%s5368 + $0x158] sm:$0xf] %vm443, %v5332
      %5398 = vst.msk [vmem:[%s5368 + $0x15c] sm:$0xf] %vm443, %v5333
      %5399 = vst.msk [vmem:[%s5368 + $0x170] sm:$0xf] %vm443, %v5334
      %5400 = vst.msk [vmem:[%s5368 + $0x174] sm:$0xf] %vm443, %v5335
      %v5401 = vld [vmem:[#allocation3 + $0x4] sm:$0xf]
      %v5402 = vld [vmem:[#allocation3 + $0x8] sm:$0xf]
      %v5403 = vld [vmem:[#allocation3 + $0xc] sm:$0xf]
      %v5404 = vld [vmem:[#allocation3 + $0x10] sm:$0xf]
      %v5405 = vld [vmem:[#allocation3 + $0x1c] sm:$0xf]
      %v5406 = vld [vmem:[#allocation3 + $0x20] sm:$0xf]
      %v5407 = vld [vmem:[#allocation3 + $0x24] sm:$0xf]
      %v5408 = vld [vmem:[#allocation3 + $0x28] sm:$0xf]
      %v5409 = vld [vmem:[#allocation3 + $0x34] sm:$0xf]
      %v5410 = vld [vmem:[#allocation3 + $0x38] sm:$0xf]
      %v5411 = vld [vmem:[#allocation3 + $0x3c] sm:$0xf]
      %v5412 = vld [vmem:[#allocation3 + $0x40] sm:$0xf]
      %v5413 = vld [vmem:[#allocation3 + $0x4c] sm:$0xf]
      %v5414 = vld [vmem:[#allocation3 + $0x50] sm:$0xf]
      %v5415 = vld [vmem:[#allocation3 + $0x54] sm:$0xf]
      %v5416 = vld [vmem:[#allocation3 + $0x58] sm:$0xf]
      %v5417 = vld [vmem:[#allocation3 + $0x64] sm:$0xf]
      %v5418 = vld [vmem:[#allocation3 + $0x68] sm:$0xf]
      %v5419 = vld [vmem:[#allocation3 + $0x6c] sm:$0xf]
      %v5420 = vld [vmem:[#allocation3 + $0x70] sm:$0xf]
      %v5421 = vld [vmem:[#allocation3 + $0x7c] sm:$0xf]
      %v5422 = vld [vmem:[#allocation3 + $0x80] sm:$0xf]
      %v5423 = vld [vmem:[#allocation3 + $0x84] sm:$0xf]
      %v5424 = vld [vmem:[#allocation3 + $0x88] sm:$0xf]
      %v5425 = vld [vmem:[#allocation3 + $0x94] sm:$0xf]
      %v5426 = vld [vmem:[#allocation3 + $0x98] sm:$0xf]
      %v5427 = vld [vmem:[#allocation3 + $0x9c] sm:$0xf]
      %v5428 = vld [vmem:[#allocation3 + $0xa0] sm:$0xf]
      %v5429 = vld [vmem:[#allocation3 + $0xac] sm:$0xf]
      %v5430 = vld [vmem:[#allocation3 + $0xb0] sm:$0xf]
      %v5431 = vld [vmem:[#allocation3 + $0xb4] sm:$0xf]
      %v5432 = vld [vmem:[#allocation3 + $0xb8] sm:$0xf]
      %v5433 = vld [vmem:[#allocation3 + $0xc4] sm:$0xf]
      %v5434 = vld [vmem:[#allocation3 + $0xc8] sm:$0xf]
      %v5435 = vld [vmem:[#allocation3 + $0xcc] sm:$0xf]
      %v5436 = vld [vmem:[#allocation3 + $0xd0] sm:$0xf]
      %v5437 = vld [vmem:[#allocation3 + $0xdc] sm:$0xf]
      %v5438 = vld [vmem:[#allocation3 + $0xe0] sm:$0xf]
      %v5439 = vld [vmem:[#allocation3 + $0xe4] sm:$0xf]
      %v5440 = vld [vmem:[#allocation3 + $0xe8] sm:$0xf]
      %v5441 = vld [vmem:[#allocation3 + $0xf4] sm:$0xf]
      %v5442 = vld [vmem:[#allocation3 + $0xf8] sm:$0xf]
      %v5443 = vld [vmem:[#allocation3 + $0xfc] sm:$0xf]
      %v5444 = vld [vmem:[#allocation3 + $0x100] sm:$0xf]
      %v5445 = vld [vmem:[#allocation3 + $0x10c] sm:$0xf]
      %v5446 = vld [vmem:[#allocation3 + $0x110] sm:$0xf]
      %v5447 = vld [vmem:[#allocation3 + $0x114] sm:$0xf]
      %v5448 = vld [vmem:[#allocation3 + $0x118] sm:$0xf]
      %v5449 = vld [vmem:[#allocation3 + $0x124] sm:$0xf]
      %v5450 = vld [vmem:[#allocation3 + $0x128] sm:$0xf]
      %v5451 = vld [vmem:[#allocation3 + $0x12c] sm:$0xf]
      %v5452 = vld [vmem:[#allocation3 + $0x130] sm:$0xf]
      %v5453 = vld [vmem:[#allocation3 + $0x13c] sm:$0xf]
      %v5454 = vld [vmem:[#allocation3 + $0x140] sm:$0xf]
      %v5455 = vld [vmem:[#allocation3 + $0x144] sm:$0xf]
      %v5456 = vld [vmem:[#allocation3 + $0x148] sm:$0xf]
      %v5457 = vld [vmem:[#allocation3 + $0x154] sm:$0xf]
      %v5458 = vld [vmem:[#allocation3 + $0x158] sm:$0xf]
      %v5459 = vld [vmem:[#allocation3 + $0x15c] sm:$0xf]
      %v5460 = vld [vmem:[#allocation3 + $0x160] sm:$0xf]
      %v5461 = vld [vmem:[#allocation3 + $0x16c] sm:$0xf]
      %v5462 = vld [vmem:[#allocation3 + $0x170] sm:$0xf]
      %v5463 = vld [vmem:[#allocation3 + $0x174] sm:$0xf]
      %v5464 = vld [vmem:[#allocation3 + $0x178] sm:$0xf]
      %v5465 = vld [vmem:[#allocation3 + $0x184] sm:$0xf]
      %v5466 = vld [vmem:[#allocation3 + $0x188] sm:$0xf]
      %v5467 = vld [vmem:[#allocation3 + $0x18c] sm:$0xf]
      %v5468 = vld [vmem:[#allocation3 + $0x190] sm:$0xf]
      %v5469 = vld [vmem:[#allocation3 + $0x19c] sm:$0xf]
      %v5470 = vld [vmem:[#allocation3 + $0x1a0] sm:$0xf]
      %v5471 = vld [vmem:[#allocation3 + $0x1a4] sm:$0xf]
      %v5472 = vld [vmem:[#allocation3 + $0x1a8] sm:$0xf]
      %v5521 = vunpack.c.l.b16 %v5401
      %v5522 = vunpack.c.l.b16 %v5402
      %v5523 = vunpack.c.l.b16 %v5403
      %v5524 = vunpack.c.l.b16 %v5405
      %v5525 = vunpack.c.l.b16 %v5406
      %v5526 = vunpack.c.l.b16 %v5407
      %v5527 = vunpack.c.l.b16 %v5409
      %v5528 = vunpack.c.l.b16 %v5410
      %v5529 = vunpack.c.l.b16 %v5411
      %v5530 = vunpack.c.l.b16 %v5413
      %v5531 = vunpack.c.l.b16 %v5414
      %v5532 = vunpack.c.l.b16 %v5415
      %v5533 = vunpack.c.l.b16 %v5417
      %v5534 = vunpack.c.l.b16 %v5418
      %v5535 = vunpack.c.l.b16 %v5419
      %v5536 = vunpack.c.l.b16 %v5421
      %v5537 = vunpack.c.l.b16 %v5422
      %v5538 = vunpack.c.l.b16 %v5423
      %v5539 = vunpack.c.l.b16 %v5425
      %v5540 = vunpack.c.l.b16 %v5426
      %v5541 = vunpack.c.l.b16 %v5427
      %v5542 = vunpack.c.l.b16 %v5429
      %v5543 = vunpack.c.l.b16 %v5430
      %v5544 = vunpack.c.l.b16 %v5431
      %v5545 = vunpack.c.l.b16 %v5433
      %v5546 = vunpack.c.l.b16 %v5434
      %v5547 = vunpack.c.l.b16 %v5435
      %v5548 = vunpack.c.l.b16 %v5437
      %v5549 = vunpack.c.l.b16 %v5438
      %v5550 = vunpack.c.l.b16 %v5439
      %v5551 = vunpack.c.l.b16 %v5441
      %v5552 = vunpack.c.l.b16 %v5442
      %v5553 = vunpack.c.l.b16 %v5443
      %v5554 = vunpack.c.l.b16 %v5445
      %v5555 = vunpack.c.l.b16 %v5446
      %v5556 = vunpack.c.l.b16 %v5447
      %v5557 = vunpack.c.l.b16 %v5449
      %v5558 = vunpack.c.l.b16 %v5450
      %v5559 = vunpack.c.l.b16 %v5451
      %v5560 = vunpack.c.l.b16 %v5453
      %v5561 = vunpack.c.l.b16 %v5454
      %v5562 = vunpack.c.l.b16 %v5455
      %v5563 = vunpack.c.l.b16 %v5457
      %v5564 = vunpack.c.l.b16 %v5458
      %v5565 = vunpack.c.l.b16 %v5459
      %v5566 = vunpack.c.l.b16 %v5461
      %v5567 = vunpack.c.l.b16 %v5462
      %v5568 = vunpack.c.l.b16 %v5463
      %v5569 = vpack.c.b16 %v5522, %v5521
      %v5570 = vpack.c.b16 %v5523, %v5523
      %v5571 = vpack.c.b16 %v5525, %v5524
      %v5572 = vpack.c.b16 %v5526, %v5526
      %v5573 = vpack.c.b16 %v5528, %v5527
      %v5574 = vpack.c.b16 %v5529, %v5529
      %v5575 = vpack.c.b16 %v5531, %v5530
      %v5576 = vpack.c.b16 %v5532, %v5532
      %v5577 = vpack.c.b16 %v5534, %v5533
      %v5578 = vpack.c.b16 %v5535, %v5535
      %v5579 = vpack.c.b16 %v5537, %v5536
      %v5580 = vpack.c.b16 %v5538, %v5538
      %v5581 = vpack.c.b16 %v5540, %v5539
      %v5582 = vpack.c.b16 %v5541, %v5541
      %v5583 = vpack.c.b16 %v5543, %v5542
      %v5584 = vpack.c.b16 %v5544, %v5544
      %v5585 = vpack.c.b16 %v5546, %v5545
      %v5586 = vpack.c.b16 %v5547, %v5547
      %v5587 = vpack.c.b16 %v5549, %v5548
      %v5588 = vpack.c.b16 %v5550, %v5550
      %v5589 = vpack.c.b16 %v5552, %v5551
      %v5590 = vpack.c.b16 %v5553, %v5553
      %v5591 = vpack.c.b16 %v5555, %v5554
      %v5592 = vpack.c.b16 %v5556, %v5556
      %v5593 = vpack.c.b16 %v5558, %v5557
      %v5594 = vpack.c.b16 %v5559, %v5559
      %v5595 = vpack.c.b16 %v5561, %v5560
      %v5596 = vpack.c.b16 %v5562, %v5562
      %v5597 = vpack.c.b16 %v5564, %v5563
      %v5598 = vpack.c.b16 %v5565, %v5565
      %v5599 = vpack.c.b16 %v5567, %v5566
      %v5600 = vpack.c.b16 %v5568, %v5568
      %v5601 = vpack.c.b16 %v5523, %v5522
      %v5602 = vpack.c.b16 %v5526, %v5525
      %v5603 = vpack.c.b16 %v5529, %v5528
      %v5604 = vpack.c.b16 %v5532, %v5531
      %v5605 = vpack.c.b16 %v5535, %v5534
      %v5606 = vpack.c.b16 %v5538, %v5537
      %v5607 = vpack.c.b16 %v5541, %v5540
      %v5608 = vpack.c.b16 %v5544, %v5543
      %v5609 = vpack.c.b16 %v5547, %v5546
      %v5610 = vpack.c.b16 %v5550, %v5549
      %v5611 = vpack.c.b16 %v5553, %v5552
      %v5612 = vpack.c.b16 %v5556, %v5555
      %v5613 = vpack.c.b16 %v5559, %v5558
      %v5614 = vpack.c.b16 %v5562, %v5561
      %v5615 = vpack.c.b16 %v5565, %v5564
      %v5616 = vpack.c.b16 %v5568, %v5567
      %v5618 = vshrl.u32 %v5601, 16
      %v5620 = vrot.slane %v5618, 4
      %v5621 = vshll.u32 %v5601, 16
      %v5623 = vrot.slane %v5621, 5
      %v5624 = vor.u32 %v5620, %v5623
      %v5626 = vshrl.u32 %v5602, 16
      %v5628 = vrot.slane %v5626, 4
      %v5629 = vshll.u32 %v5602, 16
      %v5631 = vrot.slane %v5629, 5
      %v5632 = vor.u32 %v5628, %v5631
      %v5634 = vshrl.u32 %v5603, 16
      %v5636 = vrot.slane %v5634, 4
      %v5637 = vshll.u32 %v5603, 16
      %v5639 = vrot.slane %v5637, 5
      %v5640 = vor.u32 %v5636, %v5639
      %v5642 = vshrl.u32 %v5604, 16
      %v5644 = vrot.slane %v5642, 4
      %v5645 = vshll.u32 %v5604, 16
      %v5647 = vrot.slane %v5645, 5
      %v5648 = vor.u32 %v5644, %v5647
      %v5650 = vshrl.u32 %v5605, 16
      %v5652 = vrot.slane %v5650, 4
      %v5653 = vshll.u32 %v5605, 16
      %v5655 = vrot.slane %v5653, 5
      %v5656 = vor.u32 %v5652, %v5655
      %v5658 = vshrl.u32 %v5606, 16
      %v5660 = vrot.slane %v5658, 4
      %v5661 = vshll.u32 %v5606, 16
      %v5663 = vrot.slane %v5661, 5
      %v5664 = vor.u32 %v5660, %v5663
      %v5666 = vshrl.u32 %v5607, 16
      %v5668 = vrot.slane %v5666, 4
      %v5669 = vshll.u32 %v5607, 16
      %v5671 = vrot.slane %v5669, 5
      %v5672 = vor.u32 %v5668, %v5671
      %v5674 = vshrl.u32 %v5608, 16
      %v5676 = vrot.slane %v5674, 4
      %v5677 = vshll.u32 %v5608, 16
      %v5679 = vrot.slane %v5677, 5
      %v5680 = vor.u32 %v5676, %v5679
      %v5682 = vshrl.u32 %v5609, 16
      %v5684 = vrot.slane %v5682, 4
      %v5685 = vshll.u32 %v5609, 16
      %v5687 = vrot.slane %v5685, 5
      %v5688 = vor.u32 %v5684, %v5687
      %v5690 = vshrl.u32 %v5610, 16
      %v5692 = vrot.slane %v5690, 4
      %v5693 = vshll.u32 %v5610, 16
      %v5695 = vrot.slane %v5693, 5
      %v5696 = vor.u32 %v5692, %v5695
      %v5698 = vshrl.u32 %v5611, 16
      %v5700 = vrot.slane %v5698, 4
      %v5701 = vshll.u32 %v5611, 16
      %v5703 = vrot.slane %v5701, 5
      %v5704 = vor.u32 %v5700, %v5703
      %v5706 = vshrl.u32 %v5612, 16
      %v5708 = vrot.slane %v5706, 4
      %v5709 = vshll.u32 %v5612, 16
      %v5711 = vrot.slane %v5709, 5
      %v5712 = vor.u32 %v5708, %v5711
      %v5714 = vshrl.u32 %v5613, 16
      %v5716 = vrot.slane %v5714, 4
      %v5717 = vshll.u32 %v5613, 16
      %v5719 = vrot.slane %v5717, 5
      %v5720 = vor.u32 %v5716, %v5719
      %v5722 = vshrl.u32 %v5614, 16
      %v5724 = vrot.slane %v5722, 4
      %v5725 = vshll.u32 %v5614, 16
      %v5727 = vrot.slane %v5725, 5
      %v5728 = vor.u32 %v5724, %v5727
      %v5730 = vshrl.u32 %v5615, 16
      %v5732 = vrot.slane %v5730, 4
      %v5733 = vshll.u32 %v5615, 16
      %v5735 = vrot.slane %v5733, 5
      %v5736 = vor.u32 %v5732, %v5735
      %v5738 = vshrl.u32 %v5616, 16
      %v5740 = vrot.slane %v5738, 4
      %v5741 = vshll.u32 %v5616, 16
      %v5743 = vrot.slane %v5741, 5
      %v5744 = vor.u32 %v5740, %v5743
      %5745 = vrot.lane.b32.xlu0 %v5624, 32
      %v5746 = vpop.permute.xlu0 %5745
      %5747 = vrot.lane.b32.xlu0 %v5632, 32
      %v5748 = vpop.permute.xlu0 %5747
      %5749 = vrot.lane.b32.xlu0 %v5640, 32
      %v5750 = vpop.permute.xlu0 %5749
      %5751 = vrot.lane.b32.xlu0 %v5648, 32
      %v5752 = vpop.permute.xlu0 %5751
      %5753 = vrot.lane.b32.xlu0 %v5656, 32
      %v5754 = vpop.permute.xlu0 %5753
      %5755 = vrot.lane.b32.xlu0 %v5664, 32
      %v5756 = vpop.permute.xlu0 %5755
      %5757 = vrot.lane.b32.xlu0 %v5672, 32
      %v5758 = vpop.permute.xlu0 %5757
      %5759 = vrot.lane.b32.xlu0 %v5680, 32
      %v5760 = vpop.permute.xlu0 %5759
      %5761 = vrot.lane.b32.xlu0 %v5688, 32
      %v5762 = vpop.permute.xlu0 %5761
      %5763 = vrot.lane.b32.xlu0 %v5696, 32
      %v5764 = vpop.permute.xlu0 %5763
      %5765 = vrot.lane.b32.xlu0 %v5704, 32
      %v5766 = vpop.permute.xlu0 %5765
      %5767 = vrot.lane.b32.xlu0 %v5712, 32
      %v5768 = vpop.permute.xlu0 %5767
      %5769 = vrot.lane.b32.xlu0 %v5720, 32
      %v5770 = vpop.permute.xlu0 %5769
      %5771 = vrot.lane.b32.xlu0 %v5728, 32
      %v5772 = vpop.permute.xlu0 %5771
      %5773 = vrot.lane.b32.xlu0 %v5736, 32
      %v5774 = vpop.permute.xlu0 %5773
      %5775 = vrot.lane.b32.xlu0 %v5744, 32
      %v5776 = vpop.permute.xlu0 %5775
      %v5793 = vunpack.c.l.b16 %v5404
      %v5794 = vunpack.c.l.b16 %v5408
      %v5795 = vunpack.c.l.b16 %v5412
      %v5796 = vunpack.c.l.b16 %v5416
      %v5797 = vunpack.c.l.b16 %v5420
      %v5798 = vunpack.c.l.b16 %v5424
      %v5799 = vunpack.c.l.b16 %v5428
      %v5800 = vunpack.c.l.b16 %v5432
      %v5801 = vunpack.c.l.b16 %v5436
      %v5802 = vunpack.c.l.b16 %v5440
      %v5803 = vunpack.c.l.b16 %v5444
      %v5804 = vunpack.c.l.b16 %v5448
      %v5805 = vunpack.c.l.b16 %v5452
      %v5806 = vunpack.c.l.b16 %v5456
      %v5807 = vunpack.c.l.b16 %v5460
      %v5808 = vunpack.c.l.b16 %v5464
      %v5809 = vpack.c.b16 %v5793, %v5793
      %v5810 = vpack.c.b16 %v5794, %v5794
      %v5811 = vpack.c.b16 %v5795, %v5795
      %v5812 = vpack.c.b16 %v5796, %v5796
      %v5813 = vpack.c.b16 %v5797, %v5797
      %v5814 = vpack.c.b16 %v5798, %v5798
      %v5815 = vpack.c.b16 %v5799, %v5799
      %v5816 = vpack.c.b16 %v5800, %v5800
      %v5817 = vpack.c.b16 %v5801, %v5801
      %v5818 = vpack.c.b16 %v5802, %v5802
      %v5819 = vpack.c.b16 %v5803, %v5803
      %v5820 = vpack.c.b16 %v5804, %v5804
      %v5821 = vpack.c.b16 %v5805, %v5805
      %v5822 = vpack.c.b16 %v5806, %v5806
      %v5823 = vpack.c.b16 %v5807, %v5807
      %v5824 = vpack.c.b16 %v5808, %v5808
      %v5825 = vrot.slane %v5601, 5
      %v5826 = vrot.slane %v5809, 5
      %v5827 = vsel %vm3473, %v5825, %v5826
      %v5828 = vrot.slane %v5602, 5
      %v5829 = vrot.slane %v5810, 5
      %v5830 = vsel %vm3473, %v5828, %v5829
      %v5831 = vrot.slane %v5603, 5
      %v5832 = vrot.slane %v5811, 5
      %v5833 = vsel %vm3473, %v5831, %v5832
      %v5834 = vrot.slane %v5604, 5
      %v5835 = vrot.slane %v5812, 5
      %v5836 = vsel %vm3473, %v5834, %v5835
      %v5837 = vrot.slane %v5605, 5
      %v5838 = vrot.slane %v5813, 5
      %v5839 = vsel %vm3473, %v5837, %v5838
      %v5840 = vrot.slane %v5606, 5
      %v5841 = vrot.slane %v5814, 5
      %v5842 = vsel %vm3473, %v5840, %v5841
      %v5843 = vrot.slane %v5607, 5
      %v5844 = vrot.slane %v5815, 5
      %v5845 = vsel %vm3473, %v5843, %v5844
      %v5846 = vrot.slane %v5608, 5
      %v5847 = vrot.slane %v5816, 5
      %v5848 = vsel %vm3473, %v5846, %v5847
      %v5849 = vrot.slane %v5609, 5
      %v5850 = vrot.slane %v5817, 5
      %v5851 = vsel %vm3473, %v5849, %v5850
      %v5852 = vrot.slane %v5610, 5
      %v5853 = vrot.slane %v5818, 5
      %v5854 = vsel %vm3473, %v5852, %v5853
      %v5855 = vrot.slane %v5611, 5
      %v5856 = vrot.slane %v5819, 5
      %v5857 = vsel %vm3473, %v5855, %v5856
      %v5858 = vrot.slane %v5612, 5
      %v5859 = vrot.slane %v5820, 5
      %v5860 = vsel %vm3473, %v5858, %v5859
      %v5861 = vrot.slane %v5613, 5
      %v5862 = vrot.slane %v5821, 5
      %v5863 = vsel %vm3473, %v5861, %v5862
      %v5864 = vrot.slane %v5614, 5
      %v5865 = vrot.slane %v5822, 5
      %v5866 = vsel %vm3473, %v5864, %v5865
      %v5867 = vrot.slane %v5615, 5
      %v5868 = vrot.slane %v5823, 5
      %v5869 = vsel %vm3473, %v5867, %v5868
      %v5870 = vrot.slane %v5616, 5
      %v5871 = vrot.slane %v5824, 5
      %v5872 = vsel %vm3473, %v5870, %v5871
      %5873 = vrot.lane.b32.xlu0 %v5825, 64
      %v5874 = vpop.permute.xlu0 %5873
      %5875 = vrot.lane.b32.xlu0 %v5827, 64
      %v5876 = vpop.permute.xlu0 %5875
      %5877 = vrot.lane.b32.xlu0 %v5828, 64
      %v5878 = vpop.permute.xlu0 %5877
      %5879 = vrot.lane.b32.xlu0 %v5830, 64
      %v5880 = vpop.permute.xlu0 %5879
      %5881 = vrot.lane.b32.xlu0 %v5831, 64
      %v5882 = vpop.permute.xlu0 %5881
      %5883 = vrot.lane.b32.xlu0 %v5833, 64
      %v5884 = vpop.permute.xlu0 %5883
      %5885 = vrot.lane.b32.xlu0 %v5834, 64
      %v5886 = vpop.permute.xlu0 %5885
      %5887 = vrot.lane.b32.xlu0 %v5836, 64
      %v5888 = vpop.permute.xlu0 %5887
      %5889 = vrot.lane.b32.xlu0 %v5837, 64
      %v5890 = vpop.permute.xlu0 %5889
      %5891 = vrot.lane.b32.xlu0 %v5839, 64
      %v5892 = vpop.permute.xlu0 %5891
      %5893 = vrot.lane.b32.xlu0 %v5840, 64
      %v5894 = vpop.permute.xlu0 %5893
      %5895 = vrot.lane.b32.xlu0 %v5842, 64
      %v5896 = vpop.permute.xlu0 %5895
      %5897 = vrot.lane.b32.xlu0 %v5843, 64
      %v5898 = vpop.permute.xlu0 %5897
      %5899 = vrot.lane.b32.xlu0 %v5845, 64
      %v5900 = vpop.permute.xlu0 %5899
      %5901 = vrot.lane.b32.xlu0 %v5846, 64
      %v5902 = vpop.permute.xlu0 %5901
      %5903 = vrot.lane.b32.xlu0 %v5848, 64
      %v5904 = vpop.permute.xlu0 %5903
      %5905 = vrot.lane.b32.xlu0 %v5849, 64
      %v5906 = vpop.permute.xlu0 %5905
      %5907 = vrot.lane.b32.xlu0 %v5851, 64
      %v5908 = vpop.permute.xlu0 %5907
      %5909 = vrot.lane.b32.xlu0 %v5852, 64
      %v5910 = vpop.permute.xlu0 %5909
      %5911 = vrot.lane.b32.xlu0 %v5854, 64
      %v5912 = vpop.permute.xlu0 %5911
      %5913 = vrot.lane.b32.xlu0 %v5855, 64
      %v5914 = vpop.permute.xlu0 %5913
      %5915 = vrot.lane.b32.xlu0 %v5857, 64
      %v5916 = vpop.permute.xlu0 %5915
      %5917 = vrot.lane.b32.xlu0 %v5858, 64
      %v5918 = vpop.permute.xlu0 %5917
      %5919 = vrot.lane.b32.xlu0 %v5860, 64
      %v5920 = vpop.permute.xlu0 %5919
      %5921 = vrot.lane.b32.xlu0 %v5861, 64
      %v5922 = vpop.permute.xlu0 %5921
      %5923 = vrot.lane.b32.xlu0 %v5863, 64
      %v5924 = vpop.permute.xlu0 %5923
      %5925 = vrot.lane.b32.xlu0 %v5864, 64
      %v5926 = vpop.permute.xlu0 %5925
      %5927 = vrot.lane.b32.xlu0 %v5866, 64
      %v5928 = vpop.permute.xlu0 %5927
      %5929 = vrot.lane.b32.xlu0 %v5867, 64
      %v5930 = vpop.permute.xlu0 %5929
      %5931 = vrot.lane.b32.xlu0 %v5869, 64
      %v5932 = vpop.permute.xlu0 %5931
      %5933 = vrot.lane.b32.xlu0 %v5870, 64
      %v5934 = vpop.permute.xlu0 %5933
      %5935 = vrot.lane.b32.xlu0 %v5872, 64
      %v5936 = vpop.permute.xlu0 %5935
      %v5940 = vunpack.c.l.b16 %v5465
      %v5941 = vunpack.c.l.b16 %v5466
      %v5942 = vunpack.c.l.b16 %v5467
      %v5943 = vpack.c.b16 %v5941, %v5940
      %v5944 = vpack.c.b16 %v5942, %v5942
      %5945 = vrot.lane.b32.xlu0 %v5571, 96
      %v5946 = vpop.permute.xlu0 %5945
      %5947 = vrot.lane.b32.xlu0 %v5572, 96
      %v5948 = vpop.permute.xlu0 %5947
      %5949 = vrot.lane.b32.xlu0 %v5573, 96
      %v5950 = vpop.permute.xlu0 %5949
      %5951 = vrot.lane.b32.xlu0 %v5574, 96
      %v5952 = vpop.permute.xlu0 %5951
      %5953 = vrot.lane.b32.xlu0 %v5575, 96
      %v5954 = vpop.permute.xlu0 %5953
      %5955 = vrot.lane.b32.xlu0 %v5576, 96
      %v5956 = vpop.permute.xlu0 %5955
      %5957 = vrot.lane.b32.xlu0 %v5577, 96
      %v5958 = vpop.permute.xlu0 %5957
      %5959 = vrot.lane.b32.xlu0 %v5578, 96
      %v5960 = vpop.permute.xlu0 %5959
      %5961 = vrot.lane.b32.xlu0 %v5579, 96
      %v5962 = vpop.permute.xlu0 %5961
      %5963 = vrot.lane.b32.xlu0 %v5580, 96
      %v5964 = vpop.permute.xlu0 %5963
      %5965 = vrot.lane.b32.xlu0 %v5581, 96
      %v5966 = vpop.permute.xlu0 %5965
      %5967 = vrot.lane.b32.xlu0 %v5582, 96
      %v5968 = vpop.permute.xlu0 %5967
      %5969 = vrot.lane.b32.xlu0 %v5583, 96
      %v5970 = vpop.permute.xlu0 %5969
      %5971 = vrot.lane.b32.xlu0 %v5584, 96
      %v5972 = vpop.permute.xlu0 %5971
      %5973 = vrot.lane.b32.xlu0 %v5585, 96
      %v5974 = vpop.permute.xlu0 %5973
      %5975 = vrot.lane.b32.xlu0 %v5586, 96
      %v5976 = vpop.permute.xlu0 %5975
      %5977 = vrot.lane.b32.xlu0 %v5587, 96
      %v5978 = vpop.permute.xlu0 %5977
      %5979 = vrot.lane.b32.xlu0 %v5588, 96
      %v5980 = vpop.permute.xlu0 %5979
      %5981 = vrot.lane.b32.xlu0 %v5589, 96
      %v5982 = vpop.permute.xlu0 %5981
      %5983 = vrot.lane.b32.xlu0 %v5590, 96
      %v5984 = vpop.permute.xlu0 %5983
      %5985 = vrot.lane.b32.xlu0 %v5591, 96
      %v5986 = vpop.permute.xlu0 %5985
      %5987 = vrot.lane.b32.xlu0 %v5592, 96
      %v5988 = vpop.permute.xlu0 %5987
      %5989 = vrot.lane.b32.xlu0 %v5593, 96
      %v5990 = vpop.permute.xlu0 %5989
      %5991 = vrot.lane.b32.xlu0 %v5594, 96
      %v5992 = vpop.permute.xlu0 %5991
      %5993 = vrot.lane.b32.xlu0 %v5595, 96
      %v5994 = vpop.permute.xlu0 %5993
      %5995 = vrot.lane.b32.xlu0 %v5596, 96
      %v5996 = vpop.permute.xlu0 %5995
      %5997 = vrot.lane.b32.xlu0 %v5597, 96
      %v5998 = vpop.permute.xlu0 %5997
      %5999 = vrot.lane.b32.xlu0 %v5598, 96
      %v6000 = vpop.permute.xlu0 %5999
      %6001 = vrot.lane.b32.xlu0 %v5599, 96
      %v6002 = vpop.permute.xlu0 %6001
      %6003 = vrot.lane.b32.xlu0 %v5600, 96
      %v6004 = vpop.permute.xlu0 %6003
      %6005 = vrot.lane.b32.xlu0 %v5943, 96
      %v6006 = vpop.permute.xlu0 %6005
      %6007 = vrot.lane.b32.xlu0 %v5944, 96
      %v6008 = vpop.permute.xlu0 %6007
      %v6009 = vpack.c.b16 %v5942, %v5941
      %v6011 = vshrl.u32 %v6009, 16
      %v6013 = vrot.slane %v6011, 4
      %v6014 = vshll.u32 %v6009, 16
      %v6016 = vrot.slane %v6014, 5
      %v6017 = vor.u32 %v6013, %v6016
      %v6019 = vunpack.c.l.b16 %v5468
      %v6020 = vpack.c.b16 %v6019, %v6019
      %v6021 = vrot.slane %v6009, 5
      %v6022 = vrot.slane %v6020, 5
      %v6023 = vsel %vm3473, %v6021, %v6022
      %6024 = vrot.lane.b32.xlu0 %v5828, 32
      %v6025 = vpop.permute.xlu0 %6024
      %6026 = vrot.lane.b32.xlu0 %v5830, 32
      %v6027 = vpop.permute.xlu0 %6026
      %6028 = vrot.lane.b32.xlu0 %v5831, 32
      %v6029 = vpop.permute.xlu0 %6028
      %6030 = vrot.lane.b32.xlu0 %v5833, 32
      %v6031 = vpop.permute.xlu0 %6030
      %6032 = vrot.lane.b32.xlu0 %v5834, 32
      %v6033 = vpop.permute.xlu0 %6032
      %6034 = vrot.lane.b32.xlu0 %v5836, 32
      %v6035 = vpop.permute.xlu0 %6034
      %6036 = vrot.lane.b32.xlu0 %v5837, 32
      %v6037 = vpop.permute.xlu0 %6036
      %6038 = vrot.lane.b32.xlu0 %v5839, 32
      %v6039 = vpop.permute.xlu0 %6038
      %6040 = vrot.lane.b32.xlu0 %v5840, 32
      %v6041 = vpop.permute.xlu0 %6040
      %6042 = vrot.lane.b32.xlu0 %v5842, 32
      %v6043 = vpop.permute.xlu0 %6042
      %6044 = vrot.lane.b32.xlu0 %v5843, 32
      %v6045 = vpop.permute.xlu0 %6044
      %6046 = vrot.lane.b32.xlu0 %v5845, 32
      %v6047 = vpop.permute.xlu0 %6046
      %6048 = vrot.lane.b32.xlu0 %v5846, 32
      %v6049 = vpop.permute.xlu0 %6048
      %6050 = vrot.lane.b32.xlu0 %v5848, 32
      %v6051 = vpop.permute.xlu0 %6050
      %6052 = vrot.lane.b32.xlu0 %v5849, 32
      %v6053 = vpop.permute.xlu0 %6052
      %6054 = vrot.lane.b32.xlu0 %v5851, 32
      %v6055 = vpop.permute.xlu0 %6054
      %6056 = vrot.lane.b32.xlu0 %v5852, 32
      %v6057 = vpop.permute.xlu0 %6056
      %6058 = vrot.lane.b32.xlu0 %v5854, 32
      %v6059 = vpop.permute.xlu0 %6058
      %6060 = vrot.lane.b32.xlu0 %v5855, 32
      %v6061 = vpop.permute.xlu0 %6060
      %6062 = vrot.lane.b32.xlu0 %v5857, 32
      %v6063 = vpop.permute.xlu0 %6062
      %6064 = vrot.lane.b32.xlu0 %v5858, 32
      %v6065 = vpop.permute.xlu0 %6064
      %6066 = vrot.lane.b32.xlu0 %v5860, 32
      %v6067 = vpop.permute.xlu0 %6066
      %6068 = vrot.lane.b32.xlu0 %v5861, 32
      %v6069 = vpop.permute.xlu0 %6068
      %6070 = vrot.lane.b32.xlu0 %v5863, 32
      %v6071 = vpop.permute.xlu0 %6070
      %6072 = vrot.lane.b32.xlu0 %v5864, 32
      %v6073 = vpop.permute.xlu0 %6072
      %6074 = vrot.lane.b32.xlu0 %v5866, 32
      %v6075 = vpop.permute.xlu0 %6074
      %6076 = vrot.lane.b32.xlu0 %v5867, 32
      %v6077 = vpop.permute.xlu0 %6076
      %6078 = vrot.lane.b32.xlu0 %v5869, 32
      %v6079 = vpop.permute.xlu0 %6078
      %6080 = vrot.lane.b32.xlu0 %v5870, 32
      %v6081 = vpop.permute.xlu0 %6080
      %6082 = vrot.lane.b32.xlu0 %v5872, 32
      %v6083 = vpop.permute.xlu0 %6082
      %6084 = vrot.lane.b32.xlu0 %v6021, 32
      %v6085 = vpop.permute.xlu0 %6084
      %6086 = vrot.lane.b32.xlu0 %v6023, 32
      %v6087 = vpop.permute.xlu0 %6086
      %v6091 = vunpack.c.l.b16 %v5469
      %v6092 = vunpack.c.l.b16 %v5470
      %v6093 = vunpack.c.l.b16 %v5471
      %v6094 = vpack.c.b16 %v6092, %v6091
      %v6095 = vpack.c.b16 %v6093, %v6093
      %6096 = vrot.lane.b32.xlu0 %v5573, 64
      %v6097 = vpop.permute.xlu0 %6096
      %6098 = vrot.lane.b32.xlu0 %v5574, 64
      %v6099 = vpop.permute.xlu0 %6098
      %6100 = vrot.lane.b32.xlu0 %v5575, 64
      %v6101 = vpop.permute.xlu0 %6100
      %6102 = vrot.lane.b32.xlu0 %v5576, 64
      %v6103 = vpop.permute.xlu0 %6102
      %6104 = vrot.lane.b32.xlu0 %v5577, 64
      %v6105 = vpop.permute.xlu0 %6104
      %6106 = vrot.lane.b32.xlu0 %v5578, 64
      %v6107 = vpop.permute.xlu0 %6106
      %6108 = vrot.lane.b32.xlu0 %v5579, 64
      %v6109 = vpop.permute.xlu0 %6108
      %6110 = vrot.lane.b32.xlu0 %v5580, 64
      %v6111 = vpop.permute.xlu0 %6110
      %6112 = vrot.lane.b32.xlu0 %v5581, 64
      %v6113 = vpop.permute.xlu0 %6112
      %6114 = vrot.lane.b32.xlu0 %v5582, 64
      %v6115 = vpop.permute.xlu0 %6114
      %6116 = vrot.lane.b32.xlu0 %v5583, 64
      %v6117 = vpop.permute.xlu0 %6116
      %6118 = vrot.lane.b32.xlu0 %v5584, 64
      %v6119 = vpop.permute.xlu0 %6118
      %6120 = vrot.lane.b32.xlu0 %v5585, 64
      %v6121 = vpop.permute.xlu0 %6120
      %6122 = vrot.lane.b32.xlu0 %v5586, 64
      %v6123 = vpop.permute.xlu0 %6122
      %6124 = vrot.lane.b32.xlu0 %v5587, 64
      %v6125 = vpop.permute.xlu0 %6124
      %6126 = vrot.lane.b32.xlu0 %v5588, 64
      %v6127 = vpop.permute.xlu0 %6126
      %6128 = vrot.lane.b32.xlu0 %v5589, 64
      %v6129 = vpop.permute.xlu0 %6128
      %6130 = vrot.lane.b32.xlu0 %v5590, 64
      %v6131 = vpop.permute.xlu0 %6130
      %6132 = vrot.lane.b32.xlu0 %v5591, 64
      %v6133 = vpop.permute.xlu0 %6132
      %6134 = vrot.lane.b32.xlu0 %v5592, 64
      %v6135 = vpop.permute.xlu0 %6134
      %6136 = vrot.lane.b32.xlu0 %v5593, 64
      %v6137 = vpop.permute.xlu0 %6136
      %6138 = vrot.lane.b32.xlu0 %v5594, 64
      %v6139 = vpop.permute.xlu0 %6138
      %6140 = vrot.lane.b32.xlu0 %v5595, 64
      %v6141 = vpop.permute.xlu0 %6140
      %6142 = vrot.lane.b32.xlu0 %v5596, 64
      %v6143 = vpop.permute.xlu0 %6142
      %6144 = vrot.lane.b32.xlu0 %v5597, 64
      %v6145 = vpop.permute.xlu0 %6144
      %6146 = vrot.lane.b32.xlu0 %v5598, 64
      %v6147 = vpop.permute.xlu0 %6146
      %6148 = vrot.lane.b32.xlu0 %v5599, 64
      %v6149 = vpop.permute.xlu0 %6148
      %6150 = vrot.lane.b32.xlu0 %v5600, 64
      %v6151 = vpop.permute.xlu0 %6150
      %6152 = vrot.lane.b32.xlu0 %v5943, 64
      %v6153 = vpop.permute.xlu0 %6152
      %6154 = vrot.lane.b32.xlu0 %v5944, 64
      %v6155 = vpop.permute.xlu0 %6154
      %6156 = vrot.lane.b32.xlu0 %v6094, 64
      %v6157 = vpop.permute.xlu0 %6156
      %6158 = vrot.lane.b32.xlu0 %v6095, 64
      %v6159 = vpop.permute.xlu0 %6158
      %v6160 = vpack.c.b16 %v6093, %v6092
      %v6162 = vshrl.u32 %v6160, 16
      %v6164 = vrot.slane %v6162, 4
      %v6165 = vshll.u32 %v6160, 16
      %v6167 = vrot.slane %v6165, 5
      %v6168 = vor.u32 %v6164, %v6167
      %6169 = vrot.lane.b32.xlu0 %v5640, 96
      %v6170 = vpop.permute.xlu0 %6169
      %6171 = vrot.lane.b32.xlu0 %v5648, 96
      %v6172 = vpop.permute.xlu0 %6171
      %6173 = vrot.lane.b32.xlu0 %v5656, 96
      %v6174 = vpop.permute.xlu0 %6173
      %6175 = vrot.lane.b32.xlu0 %v5664, 96
      %v6176 = vpop.permute.xlu0 %6175
      %6177 = vrot.lane.b32.xlu0 %v5672, 96
      %v6178 = vpop.permute.xlu0 %6177
      %6179 = vrot.lane.b32.xlu0 %v5680, 96
      %v6180 = vpop.permute.xlu0 %6179
      %6181 = vrot.lane.b32.xlu0 %v5688, 96
      %v6182 = vpop.permute.xlu0 %6181
      %6183 = vrot.lane.b32.xlu0 %v5696, 96
      %v6184 = vpop.permute.xlu0 %6183
      %6185 = vrot.lane.b32.xlu0 %v5704, 96
      %v6186 = vpop.permute.xlu0 %6185
      %6187 = vrot.lane.b32.xlu0 %v5712, 96
      %v6188 = vpop.permute.xlu0 %6187
      %6189 = vrot.lane.b32.xlu0 %v5720, 96
      %v6190 = vpop.permute.xlu0 %6189
      %6191 = vrot.lane.b32.xlu0 %v5728, 96
      %v6192 = vpop.permute.xlu0 %6191
      %6193 = vrot.lane.b32.xlu0 %v5736, 96
      %v6194 = vpop.permute.xlu0 %6193
      %6195 = vrot.lane.b32.xlu0 %v5744, 96
      %v6196 = vpop.permute.xlu0 %6195
      %6197 = vrot.lane.b32.xlu0 %v6017, 96
      %v6198 = vpop.permute.xlu0 %6197
      %6199 = vrot.lane.b32.xlu0 %v6168, 96
      %v6200 = vpop.permute.xlu0 %6199
      %v6202 = vunpack.c.l.b16 %v5472
      %v6203 = vpack.c.b16 %v6202, %v6202
      %v6204 = vrot.slane %v6160, 5
      %v6205 = vrot.slane %v6203, 5
      %v6206 = vsel %vm3473, %v6204, %v6205
      %v6209 = vsel %vm3969, %v5569, %v5746
      %v6211 = vsel %vm3969, %v5570, %v5746
      %v6214 = vsel %vm3969, %v5571, %v5748
      %v6216 = vsel %vm3969, %v5572, %v5748
      %v6219 = vsel %vm3969, %v5573, %v5750
      %v6221 = vsel %vm3969, %v5574, %v5750
      %v6224 = vsel %vm3969, %v5575, %v5752
      %v6226 = vsel %vm3969, %v5576, %v5752
      %v6229 = vsel %vm3969, %v5577, %v5754
      %v6231 = vsel %vm3969, %v5578, %v5754
      %v6234 = vsel %vm3969, %v5579, %v5756
      %v6236 = vsel %vm3969, %v5580, %v5756
      %v6239 = vsel %vm3969, %v5581, %v5758
      %v6241 = vsel %vm3969, %v5582, %v5758
      %v6244 = vsel %vm3969, %v5583, %v5760
      %v6246 = vsel %vm3969, %v5584, %v5760
      %v6249 = vsel %vm3969, %v5585, %v5762
      %v6251 = vsel %vm3969, %v5586, %v5762
      %v6254 = vsel %vm3969, %v5587, %v5764
      %v6256 = vsel %vm3969, %v5588, %v5764
      %v6259 = vsel %vm3969, %v5589, %v5766
      %v6261 = vsel %vm3969, %v5590, %v5766
      %v6264 = vsel %vm3969, %v5591, %v5768
      %v6266 = vsel %vm3969, %v5592, %v5768
      %v6269 = vsel %vm3969, %v5593, %v5770
      %v6271 = vsel %vm3969, %v5594, %v5770
      %v6274 = vsel %vm3969, %v5595, %v5772
      %v6276 = vsel %vm3969, %v5596, %v5772
      %v6279 = vsel %vm3969, %v5597, %v5774
      %v6281 = vsel %vm3969, %v5598, %v5774
      %v6284 = vsel %vm3969, %v5599, %v5776
      %v6286 = vsel %vm3969, %v5600, %v5776
      %v6288 = vsel %vm4099, %v6209, %v5874
      %v6290 = vsel %vm4099, %v6211, %v5876
      %v6292 = vsel %vm4099, %v6214, %v5878
      %v6294 = vsel %vm4099, %v6216, %v5880
      %v6296 = vsel %vm4099, %v6219, %v5882
      %v6298 = vsel %vm4099, %v6221, %v5884
      %v6300 = vsel %vm4099, %v6224, %v5886
      %v6302 = vsel %vm4099, %v6226, %v5888
      %v6304 = vsel %vm4099, %v6229, %v5890
      %v6306 = vsel %vm4099, %v6231, %v5892
      %v6308 = vsel %vm4099, %v6234, %v5894
      %v6310 = vsel %vm4099, %v6236, %v5896
      %v6312 = vsel %vm4099, %v6239, %v5898
      %v6314 = vsel %vm4099, %v6241, %v5900
      %v6316 = vsel %vm4099, %v6244, %v5902
      %v6318 = vsel %vm4099, %v6246, %v5904
      %v6320 = vsel %vm4099, %v6249, %v5906
      %v6322 = vsel %vm4099, %v6251, %v5908
      %v6324 = vsel %vm4099, %v6254, %v5910
      %v6326 = vsel %vm4099, %v6256, %v5912
      %v6328 = vsel %vm4099, %v6259, %v5914
      %v6330 = vsel %vm4099, %v6261, %v5916
      %v6332 = vsel %vm4099, %v6264, %v5918
      %v6334 = vsel %vm4099, %v6266, %v5920
      %v6336 = vsel %vm4099, %v6269, %v5922
      %v6338 = vsel %vm4099, %v6271, %v5924
      %v6340 = vsel %vm4099, %v6274, %v5926
      %v6342 = vsel %vm4099, %v6276, %v5928
      %v6344 = vsel %vm4099, %v6279, %v5930
      %v6346 = vsel %vm4099, %v6281, %v5932
      %v6348 = vsel %vm4099, %v6284, %v5934
      %v6350 = vsel %vm4099, %v6286, %v5936
      %v6352 = vsel %vm4213, %v6288, %v5946
      %v6354 = vsel %vm4213, %v6290, %v5948
      %v6356 = vsel %vm4213, %v6292, %v5950
      %v6358 = vsel %vm4213, %v6294, %v5952
      %v6360 = vsel %vm4213, %v6296, %v5954
      %v6362 = vsel %vm4213, %v6298, %v5956
      %v6364 = vsel %vm4213, %v6300, %v5958
      %v6366 = vsel %vm4213, %v6302, %v5960
      %v6368 = vsel %vm4213, %v6304, %v5962
      %v6370 = vsel %vm4213, %v6306, %v5964
      %v6372 = vsel %vm4213, %v6308, %v5966
      %v6374 = vsel %vm4213, %v6310, %v5968
      %v6376 = vsel %vm4213, %v6312, %v5970
      %v6378 = vsel %vm4213, %v6314, %v5972
      %v6380 = vsel %vm4213, %v6316, %v5974
      %v6382 = vsel %vm4213, %v6318, %v5976
      %v6384 = vsel %vm4213, %v6320, %v5978
      %v6386 = vsel %vm4213, %v6322, %v5980
      %v6388 = vsel %vm4213, %v6324, %v5982
      %v6390 = vsel %vm4213, %v6326, %v5984
      %v6392 = vsel %vm4213, %v6328, %v5986
      %v6394 = vsel %vm4213, %v6330, %v5988
      %v6396 = vsel %vm4213, %v6332, %v5990
      %v6398 = vsel %vm4213, %v6334, %v5992
      %v6400 = vsel %vm4213, %v6336, %v5994
      %v6402 = vsel %vm4213, %v6338, %v5996
      %v6404 = vsel %vm4213, %v6340, %v5998
      %v6406 = vsel %vm4213, %v6342, %v6000
      %v6408 = vsel %vm4213, %v6344, %v6002
      %v6410 = vsel %vm4213, %v6346, %v6004
      %v6412 = vsel %vm4213, %v6348, %v6006
      %v6414 = vsel %vm4213, %v6350, %v6008
      %v6417 = vsel %vm3969, %v5632, %v6025
      %v6419 = vsel %vm3969, %v5632, %v6027
      %v6422 = vsel %vm3969, %v5640, %v6029
      %v6424 = vsel %vm3969, %v5640, %v6031
      %v6427 = vsel %vm3969, %v5648, %v6033
      %v6429 = vsel %vm3969, %v5648, %v6035
      %v6432 = vsel %vm3969, %v5656, %v6037
      %v6434 = vsel %vm3969, %v5656, %v6039
      %v6437 = vsel %vm3969, %v5664, %v6041
      %v6439 = vsel %vm3969, %v5664, %v6043
      %v6442 = vsel %vm3969, %v5672, %v6045
      %v6444 = vsel %vm3969, %v5672, %v6047
      %v6447 = vsel %vm3969, %v5680, %v6049
      %v6449 = vsel %vm3969, %v5680, %v6051
      %v6452 = vsel %vm3969, %v5688, %v6053
      %v6454 = vsel %vm3969, %v5688, %v6055
      %v6457 = vsel %vm3969, %v5696, %v6057
      %v6459 = vsel %vm3969, %v5696, %v6059
      %v6462 = vsel %vm3969, %v5704, %v6061
      %v6464 = vsel %vm3969, %v5704, %v6063
      %v6467 = vsel %vm3969, %v5712, %v6065
      %v6469 = vsel %vm3969, %v5712, %v6067
      %v6472 = vsel %vm3969, %v5720, %v6069
      %v6474 = vsel %vm3969, %v5720, %v6071
      %v6477 = vsel %vm3969, %v5728, %v6073
      %v6479 = vsel %vm3969, %v5728, %v6075
      %v6482 = vsel %vm3969, %v5736, %v6077
      %v6484 = vsel %vm3969, %v5736, %v6079
      %v6487 = vsel %vm3969, %v5744, %v6081
      %v6489 = vsel %vm3969, %v5744, %v6083
      %v6492 = vsel %vm3969, %v6017, %v6085
      %v6494 = vsel %vm3969, %v6017, %v6087
      %v6496 = vsel %vm4099, %v6417, %v6097
      %v6498 = vsel %vm4099, %v6419, %v6099
      %v6500 = vsel %vm4099, %v6422, %v6101
      %v6502 = vsel %vm4099, %v6424, %v6103
      %v6504 = vsel %vm4099, %v6427, %v6105
      %v6506 = vsel %vm4099, %v6429, %v6107
      %v6508 = vsel %vm4099, %v6432, %v6109
      %v6510 = vsel %vm4099, %v6434, %v6111
      %v6512 = vsel %vm4099, %v6437, %v6113
      %v6514 = vsel %vm4099, %v6439, %v6115
      %v6516 = vsel %vm4099, %v6442, %v6117
      %v6518 = vsel %vm4099, %v6444, %v6119
      %v6520 = vsel %vm4099, %v6447, %v6121
      %v6522 = vsel %vm4099, %v6449, %v6123
      %v6524 = vsel %vm4099, %v6452, %v6125
      %v6526 = vsel %vm4099, %v6454, %v6127
      %v6528 = vsel %vm4099, %v6457, %v6129
      %v6530 = vsel %vm4099, %v6459, %v6131
      %v6532 = vsel %vm4099, %v6462, %v6133
      %v6534 = vsel %vm4099, %v6464, %v6135
      %v6536 = vsel %vm4099, %v6467, %v6137
      %v6538 = vsel %vm4099, %v6469, %v6139
      %v6540 = vsel %vm4099, %v6472, %v6141
      %v6542 = vsel %vm4099, %v6474, %v6143
      %v6544 = vsel %vm4099, %v6477, %v6145
      %v6546 = vsel %vm4099, %v6479, %v6147
      %v6548 = vsel %vm4099, %v6482, %v6149
      %v6550 = vsel %vm4099, %v6484, %v6151
      %v6552 = vsel %vm4099, %v6487, %v6153
      %v6554 = vsel %vm4099, %v6489, %v6155
      %v6556 = vsel %vm4099, %v6492, %v6157
      %v6558 = vsel %vm4099, %v6494, %v6159
      %v6560 = vsel %vm4213, %v6496, %v6170
      %v6561 = vsel %vm4213, %v6498, %v6170
      %v6563 = vsel %vm4213, %v6500, %v6172
      %v6564 = vsel %vm4213, %v6502, %v6172
      %v6566 = vsel %vm4213, %v6504, %v6174
      %v6567 = vsel %vm4213, %v6506, %v6174
      %v6569 = vsel %vm4213, %v6508, %v6176
      %v6570 = vsel %vm4213, %v6510, %v6176
      %v6572 = vsel %vm4213, %v6512, %v6178
      %v6573 = vsel %vm4213, %v6514, %v6178
      %v6575 = vsel %vm4213, %v6516, %v6180
      %v6576 = vsel %vm4213, %v6518, %v6180
      %v6578 = vsel %vm4213, %v6520, %v6182
      %v6579 = vsel %vm4213, %v6522, %v6182
      %v6581 = vsel %vm4213, %v6524, %v6184
      %v6582 = vsel %vm4213, %v6526, %v6184
      %v6584 = vsel %vm4213, %v6528, %v6186
      %v6585 = vsel %vm4213, %v6530, %v6186
      %v6587 = vsel %vm4213, %v6532, %v6188
      %v6588 = vsel %vm4213, %v6534, %v6188
      %v6590 = vsel %vm4213, %v6536, %v6190
      %v6591 = vsel %vm4213, %v6538, %v6190
      %v6593 = vsel %vm4213, %v6540, %v6192
      %v6594 = vsel %vm4213, %v6542, %v6192
      %v6596 = vsel %vm4213, %v6544, %v6194
      %v6597 = vsel %vm4213, %v6546, %v6194
      %v6599 = vsel %vm4213, %v6548, %v6196
      %v6600 = vsel %vm4213, %v6550, %v6196
      %v6602 = vsel %vm4213, %v6552, %v6198
      %v6603 = vsel %vm4213, %v6554, %v6198
      %v6605 = vsel %vm4213, %v6556, %v6200
      %v6606 = vsel %vm4213, %v6558, %v6200
      %v6607 = vld [vmem:[%s5] sm:$0xf]
      %v6608 = vld [vmem:[%s5 + $0x4] sm:$0xf]
      %v6609 = vld [vmem:[%s5 + $0x8] sm:$0xf]
      %v6610 = vld [vmem:[%s5 + $0xc] sm:$0xf]
      %v6611 = vld [vmem:[%s5 + $0x10] sm:$0xf]
      %v6612 = vld [vmem:[%s5 + $0x14] sm:$0xf]
      %v6613 = vld [vmem:[%s5 + $0x18] sm:$0xf]
      %v6614 = vld [vmem:[%s5 + $0x1c] sm:$0xf]
      %v6615 = vld [vmem:[%s5 + $0x20] sm:$0xf]
      %v6616 = vld [vmem:[%s5 + $0x24] sm:$0xf]
      %v6617 = vld [vmem:[%s5 + $0x28] sm:$0xf]
      %v6618 = vld [vmem:[%s5 + $0x2c] sm:$0xf]
      %v6619 = vld [vmem:[%s5 + $0x30] sm:$0xf]
      %v6620 = vld [vmem:[%s5 + $0x34] sm:$0xf]
      %v6621 = vld [vmem:[%s5 + $0x38] sm:$0xf]
      %v6622 = vld [vmem:[%s5 + $0x3c] sm:$0xf]
      %v6623 = vld [vmem:[%s5 + $0x40] sm:$0xf]
      %v6624 = vld [vmem:[%s5 + $0x44] sm:$0xf]
      %v6625 = vld [vmem:[%s5 + $0x48] sm:$0xf]
      %v6626 = vld [vmem:[%s5 + $0x4c] sm:$0xf]
      %v6627 = vld [vmem:[%s5 + $0x50] sm:$0xf]
      %v6628 = vld [vmem:[%s5 + $0x54] sm:$0xf]
      %v6629 = vld [vmem:[%s5 + $0x58] sm:$0xf]
      %v6630 = vld [vmem:[%s5 + $0x5c] sm:$0xf]
      %v6631 = vld [vmem:[%s5 + $0x60] sm:$0xf]
      %v6632 = vld [vmem:[%s5 + $0x64] sm:$0xf]
      %v6633 = vld [vmem:[%s5 + $0x68] sm:$0xf]
      %v6634 = vld [vmem:[%s5 + $0x6c] sm:$0xf]
      %v6635 = vld [vmem:[%s5 + $0x70] sm:$0xf]
      %v6636 = vld [vmem:[%s5 + $0x74] sm:$0xf]
      %v6637 = vld [vmem:[%s5 + $0x78] sm:$0xf]
      %v6638 = vld [vmem:[%s5 + $0x7c] sm:$0xf]
      %v6639 = vld [vmem:[%s5 + $0x80] sm:$0xf]
      %v6640 = vld [vmem:[%s5 + $0x84] sm:$0xf]
      %v6641 = vld [vmem:[%s5 + $0x88] sm:$0xf]
      %v6642 = vld [vmem:[%s5 + $0x8c] sm:$0xf]
      %v6643 = vld [vmem:[%s6] sm:$0x1]
      %v6645 = vlaneseq
      %v6646 = vshrl.u32 %v6645, 7
      %v6647 = vsub.s32 0, %v6646
      %v6648 = vrot.slane %v6643, %v6647
      %v6650 = vshrl.u32 %v6352, 16
      %v6652 = vrot.slane %v6650, 3
      %v6653 = vshll.u32 %v6352, 16
      %v6655 = vrot.slane %v6653, 4
      %v6656 = vor.u32 %v6652, %v6655
      %v6657 = vshrl.u32 %v6354, 16
      %v6659 = vrot.slane %v6657, 3
      %v6660 = vshll.u32 %v6354, 16
      %v6662 = vrot.slane %v6660, 4
      %v6663 = vor.u32 %v6659, %v6662
      %v6664 = vsel %vm4352, %v6656, %v6663
      %v6665 = vshrl.u32 %v6560, 16
      %v6667 = vrot.slane %v6665, 3
      %v6668 = vshll.u32 %v6560, 16
      %v6670 = vrot.slane %v6668, 4
      %v6671 = vor.u32 %v6667, %v6670
      %v6672 = vshrl.u32 %v6561, 16
      %v6674 = vrot.slane %v6672, 3
      %v6675 = vshll.u32 %v6561, 16
      %v6677 = vrot.slane %v6675, 4
      %v6678 = vor.u32 %v6674, %v6677
      %v6679 = vsel %vm4352, %v6671, %v6678
      %v6681 = vshrl.u32 %v5831, 16
      %v6683 = vrot.slane %v6681, 3
      %v6684 = vshll.u32 %v5831, 16
      %v6686 = vrot.slane %v6684, 4
      %v6687 = vor.u32 %v6683, %v6686
      %v6689 = vshrl.u32 %v5833, 16
      %v6691 = vrot.slane %v6689, 3
      %v6692 = vshll.u32 %v5833, 16
      %v6694 = vrot.slane %v6692, 4
      %v6695 = vor.u32 %v6691, %v6694
      %v6696 = vsel %vm4352, %v6687, %v6695
      %v6697 = vshrl.u32 %v6356, 16
      %v6699 = vrot.slane %v6697, 3
      %v6700 = vshll.u32 %v6356, 16
      %v6702 = vrot.slane %v6700, 4
      %v6703 = vor.u32 %v6699, %v6702
      %v6704 = vshrl.u32 %v6358, 16
      %v6706 = vrot.slane %v6704, 3
      %v6707 = vshll.u32 %v6358, 16
      %v6709 = vrot.slane %v6707, 4
      %v6710 = vor.u32 %v6706, %v6709
      %v6711 = vsel %vm4352, %v6703, %v6710
      %v6712 = vshrl.u32 %v6563, 16
      %v6714 = vrot.slane %v6712, 3
      %v6715 = vshll.u32 %v6563, 16
      %v6717 = vrot.slane %v6715, 4
      %v6718 = vor.u32 %v6714, %v6717
      %v6719 = vshrl.u32 %v6564, 16
      %v6721 = vrot.slane %v6719, 3
      %v6722 = vshll.u32 %v6564, 16
      %v6724 = vrot.slane %v6722, 4
      %v6725 = vor.u32 %v6721, %v6724
      %v6726 = vsel %vm4352, %v6718, %v6725
      %v6728 = vshrl.u32 %v5834, 16
      %v6730 = vrot.slane %v6728, 3
      %v6731 = vshll.u32 %v5834, 16
      %v6733 = vrot.slane %v6731, 4
      %v6734 = vor.u32 %v6730, %v6733
      %v6736 = vshrl.u32 %v5836, 16
      %v6738 = vrot.slane %v6736, 3
      %v6739 = vshll.u32 %v5836, 16
      %v6741 = vrot.slane %v6739, 4
      %v6742 = vor.u32 %v6738, %v6741
      %v6743 = vsel %vm4352, %v6734, %v6742
      %v6744 = vshrl.u32 %v6360, 16
      %v6746 = vrot.slane %v6744, 3
      %v6747 = vshll.u32 %v6360, 16
      %v6749 = vrot.slane %v6747, 4
      %v6750 = vor.u32 %v6746, %v6749
      %v6751 = vshrl.u32 %v6362, 16
      %v6753 = vrot.slane %v6751, 3
      %v6754 = vshll.u32 %v6362, 16
      %v6756 = vrot.slane %v6754, 4
      %v6757 = vor.u32 %v6753, %v6756
      %v6758 = vsel %vm4352, %v6750, %v6757
      %v6759 = vshrl.u32 %v6566, 16
      %v6761 = vrot.slane %v6759, 3
      %v6762 = vshll.u32 %v6566, 16
      %v6764 = vrot.slane %v6762, 4
      %v6765 = vor.u32 %v6761, %v6764
      %v6766 = vshrl.u32 %v6567, 16
      %v6768 = vrot.slane %v6766, 3
      %v6769 = vshll.u32 %v6567, 16
      %v6771 = vrot.slane %v6769, 4
      %v6772 = vor.u32 %v6768, %v6771
      %v6773 = vsel %vm4352, %v6765, %v6772
      %v6775 = vshrl.u32 %v5837, 16
      %v6777 = vrot.slane %v6775, 3
      %v6778 = vshll.u32 %v5837, 16
      %v6780 = vrot.slane %v6778, 4
      %v6781 = vor.u32 %v6777, %v6780
      %v6783 = vshrl.u32 %v5839, 16
      %v6785 = vrot.slane %v6783, 3
      %v6786 = vshll.u32 %v5839, 16
      %v6788 = vrot.slane %v6786, 4
      %v6789 = vor.u32 %v6785, %v6788
      %v6790 = vsel %vm4352, %v6781, %v6789
      %v6791 = vshrl.u32 %v6364, 16
      %v6793 = vrot.slane %v6791, 3
      %v6794 = vshll.u32 %v6364, 16
      %v6796 = vrot.slane %v6794, 4
      %v6797 = vor.u32 %v6793, %v6796
      %v6798 = vshrl.u32 %v6366, 16
      %v6800 = vrot.slane %v6798, 3
      %v6801 = vshll.u32 %v6366, 16
      %v6803 = vrot.slane %v6801, 4
      %v6804 = vor.u32 %v6800, %v6803
      %v6805 = vsel %vm4352, %v6797, %v6804
      %v6806 = vshrl.u32 %v6569, 16
      %v6808 = vrot.slane %v6806, 3
      %v6809 = vshll.u32 %v6569, 16
      %v6811 = vrot.slane %v6809, 4
      %v6812 = vor.u32 %v6808, %v6811
      %v6813 = vshrl.u32 %v6570, 16
      %v6815 = vrot.slane %v6813, 3
      %v6816 = vshll.u32 %v6570, 16
      %v6818 = vrot.slane %v6816, 4
      %v6819 = vor.u32 %v6815, %v6818
      %v6820 = vsel %vm4352, %v6812, %v6819
      %v6822 = vshrl.u32 %v5840, 16
      %v6824 = vrot.slane %v6822, 3
      %v6825 = vshll.u32 %v5840, 16
      %v6827 = vrot.slane %v6825, 4
      %v6828 = vor.u32 %v6824, %v6827
      %v6830 = vshrl.u32 %v5842, 16
      %v6832 = vrot.slane %v6830, 3
      %v6833 = vshll.u32 %v5842, 16
      %v6835 = vrot.slane %v6833, 4
      %v6836 = vor.u32 %v6832, %v6835
      %v6837 = vsel %vm4352, %v6828, %v6836
      %v6838 = vshrl.u32 %v6368, 16
      %v6840 = vrot.slane %v6838, 3
      %v6841 = vshll.u32 %v6368, 16
      %v6843 = vrot.slane %v6841, 4
      %v6844 = vor.u32 %v6840, %v6843
      %v6845 = vshrl.u32 %v6370, 16
      %v6847 = vrot.slane %v6845, 3
      %v6848 = vshll.u32 %v6370, 16
      %v6850 = vrot.slane %v6848, 4
      %v6851 = vor.u32 %v6847, %v6850
      %v6852 = vsel %vm4352, %v6844, %v6851
      %v6853 = vshrl.u32 %v6572, 16
      %v6855 = vrot.slane %v6853, 3
      %v6856 = vshll.u32 %v6572, 16
      %v6858 = vrot.slane %v6856, 4
      %v6859 = vor.u32 %v6855, %v6858
      %v6860 = vshrl.u32 %v6573, 16
      %v6862 = vrot.slane %v6860, 3
      %v6863 = vshll.u32 %v6573, 16
      %v6865 = vrot.slane %v6863, 4
      %v6866 = vor.u32 %v6862, %v6865
      %v6867 = vsel %vm4352, %v6859, %v6866
      %v6869 = vshrl.u32 %v5843, 16
      %v6871 = vrot.slane %v6869, 3
      %v6872 = vshll.u32 %v5843, 16
      %v6874 = vrot.slane %v6872, 4
      %v6875 = vor.u32 %v6871, %v6874
      %v6877 = vshrl.u32 %v5845, 16
      %v6879 = vrot.slane %v6877, 3
      %v6880 = vshll.u32 %v5845, 16
      %v6882 = vrot.slane %v6880, 4
      %v6883 = vor.u32 %v6879, %v6882
      %v6884 = vsel %vm4352, %v6875, %v6883
      %v6885 = vshrl.u32 %v6372, 16
      %v6887 = vrot.slane %v6885, 3
      %v6888 = vshll.u32 %v6372, 16
      %v6890 = vrot.slane %v6888, 4
      %v6891 = vor.u32 %v6887, %v6890
      %v6892 = vshrl.u32 %v6374, 16
      %v6894 = vrot.slane %v6892, 3
      %v6895 = vshll.u32 %v6374, 16
      %v6897 = vrot.slane %v6895, 4
      %v6898 = vor.u32 %v6894, %v6897
      %v6899 = vsel %vm4352, %v6891, %v6898
      %v6900 = vshrl.u32 %v6575, 16
      %v6902 = vrot.slane %v6900, 3
      %v6903 = vshll.u32 %v6575, 16
      %v6905 = vrot.slane %v6903, 4
      %v6906 = vor.u32 %v6902, %v6905
      %v6907 = vshrl.u32 %v6576, 16
      %v6909 = vrot.slane %v6907, 3
      %v6910 = vshll.u32 %v6576, 16
      %v6912 = vrot.slane %v6910, 4
      %v6913 = vor.u32 %v6909, %v6912
      %v6914 = vsel %vm4352, %v6906, %v6913
      %v6916 = vshrl.u32 %v5846, 16
      %v6918 = vrot.slane %v6916, 3
      %v6919 = vshll.u32 %v5846, 16
      %v6921 = vrot.slane %v6919, 4
      %v6922 = vor.u32 %v6918, %v6921
      %v6924 = vshrl.u32 %v5848, 16
      %v6926 = vrot.slane %v6924, 3
      %v6927 = vshll.u32 %v5848, 16
      %v6929 = vrot.slane %v6927, 4
      %v6930 = vor.u32 %v6926, %v6929
      %v6931 = vsel %vm4352, %v6922, %v6930
      %v6932 = vshrl.u32 %v6376, 16
      %v6934 = vrot.slane %v6932, 3
      %v6935 = vshll.u32 %v6376, 16
      %v6937 = vrot.slane %v6935, 4
      %v6938 = vor.u32 %v6934, %v6937
      %v6939 = vshrl.u32 %v6378, 16
      %v6941 = vrot.slane %v6939, 3
      %v6942 = vshll.u32 %v6378, 16
      %v6944 = vrot.slane %v6942, 4
      %v6945 = vor.u32 %v6941, %v6944
      %v6946 = vsel %vm4352, %v6938, %v6945
      %v6947 = vshrl.u32 %v6578, 16
      %v6949 = vrot.slane %v6947, 3
      %v6950 = vshll.u32 %v6578, 16
      %v6952 = vrot.slane %v6950, 4
      %v6953 = vor.u32 %v6949, %v6952
      %v6954 = vshrl.u32 %v6579, 16
      %v6956 = vrot.slane %v6954, 3
      %v6957 = vshll.u32 %v6579, 16
      %v6959 = vrot.slane %v6957, 4
      %v6960 = vor.u32 %v6956, %v6959
      %v6961 = vsel %vm4352, %v6953, %v6960
      %v6963 = vshrl.u32 %v5849, 16
      %v6965 = vrot.slane %v6963, 3
      %v6966 = vshll.u32 %v5849, 16
      %v6968 = vrot.slane %v6966, 4
      %v6969 = vor.u32 %v6965, %v6968
      %v6971 = vshrl.u32 %v5851, 16
      %v6973 = vrot.slane %v6971, 3
      %v6974 = vshll.u32 %v5851, 16
      %v6976 = vrot.slane %v6974, 4
      %v6977 = vor.u32 %v6973, %v6976
      %v6978 = vsel %vm4352, %v6969, %v6977
      %v6979 = vshrl.u32 %v6380, 16
      %v6981 = vrot.slane %v6979, 3
      %v6982 = vshll.u32 %v6380, 16
      %v6984 = vrot.slane %v6982, 4
      %v6985 = vor.u32 %v6981, %v6984
      %v6986 = vshrl.u32 %v6382, 16
      %v6988 = vrot.slane %v6986, 3
      %v6989 = vshll.u32 %v6382, 16
      %v6991 = vrot.slane %v6989, 4
      %v6992 = vor.u32 %v6988, %v6991
      %v6993 = vsel %vm4352, %v6985, %v6992
      %v6994 = vshrl.u32 %v6581, 16
      %v6996 = vrot.slane %v6994, 3
      %v6997 = vshll.u32 %v6581, 16
      %v6999 = vrot.slane %v6997, 4
      %v7000 = vor.u32 %v6996, %v6999
      %v7001 = vshrl.u32 %v6582, 16
      %v7003 = vrot.slane %v7001, 3
      %v7004 = vshll.u32 %v6582, 16
      %v7006 = vrot.slane %v7004, 4
      %v7007 = vor.u32 %v7003, %v7006
      %v7008 = vsel %vm4352, %v7000, %v7007
      %v7010 = vshrl.u32 %v5852, 16
      %v7012 = vrot.slane %v7010, 3
      %v7013 = vshll.u32 %v5852, 16
      %v7015 = vrot.slane %v7013, 4
      %v7016 = vor.u32 %v7012, %v7015
      %v7018 = vshrl.u32 %v5854, 16
      %v7020 = vrot.slane %v7018, 3
      %v7021 = vshll.u32 %v5854, 16
      %v7023 = vrot.slane %v7021, 4
      %v7024 = vor.u32 %v7020, %v7023
      %v7025 = vsel %vm4352, %v7016, %v7024
      %v7026 = vshrl.u32 %v6384, 16
      %v7028 = vrot.slane %v7026, 3
      %v7029 = vshll.u32 %v6384, 16
      %v7031 = vrot.slane %v7029, 4
      %v7032 = vor.u32 %v7028, %v7031
      %v7033 = vshrl.u32 %v6386, 16
      %v7035 = vrot.slane %v7033, 3
      %v7036 = vshll.u32 %v6386, 16
      %v7038 = vrot.slane %v7036, 4
      %v7039 = vor.u32 %v7035, %v7038
      %v7040 = vsel %vm4352, %v7032, %v7039
      %v7041 = vshrl.u32 %v6584, 16
      %v7043 = vrot.slane %v7041, 3
      %v7044 = vshll.u32 %v6584, 16
      %v7046 = vrot.slane %v7044, 4
      %v7047 = vor.u32 %v7043, %v7046
      %v7048 = vshrl.u32 %v6585, 16
      %v7050 = vrot.slane %v7048, 3
      %v7051 = vshll.u32 %v6585, 16
      %v7053 = vrot.slane %v7051, 4
      %v7054 = vor.u32 %v7050, %v7053
      %v7055 = vsel %vm4352, %v7047, %v7054
      %v7057 = vshrl.u32 %v5855, 16
      %v7059 = vrot.slane %v7057, 3
      %v7060 = vshll.u32 %v5855, 16
      %v7062 = vrot.slane %v7060, 4
      %v7063 = vor.u32 %v7059, %v7062
      %v7065 = vshrl.u32 %v5857, 16
      %v7067 = vrot.slane %v7065, 3
      %v7068 = vshll.u32 %v5857, 16
      %v7070 = vrot.slane %v7068, 4
      %v7071 = vor.u32 %v7067, %v7070
      %v7072 = vsel %vm4352, %v7063, %v7071
      %v7073 = vshrl.u32 %v6388, 16
      %v7075 = vrot.slane %v7073, 3
      %v7076 = vshll.u32 %v6388, 16
      %v7078 = vrot.slane %v7076, 4
      %v7079 = vor.u32 %v7075, %v7078
      %v7080 = vshrl.u32 %v6390, 16
      %v7082 = vrot.slane %v7080, 3
      %v7083 = vshll.u32 %v6390, 16
      %v7085 = vrot.slane %v7083, 4
      %v7086 = vor.u32 %v7082, %v7085
      %v7087 = vsel %vm4352, %v7079, %v7086
      %v7088 = vshrl.u32 %v6587, 16
      %v7090 = vrot.slane %v7088, 3
      %v7091 = vshll.u32 %v6587, 16
      %v7093 = vrot.slane %v7091, 4
      %v7094 = vor.u32 %v7090, %v7093
      %v7095 = vshrl.u32 %v6588, 16
      %v7097 = vrot.slane %v7095, 3
      %v7098 = vshll.u32 %v6588, 16
      %v7100 = vrot.slane %v7098, 4
      %v7101 = vor.u32 %v7097, %v7100
      %v7102 = vsel %vm4352, %v7094, %v7101
      %v7104 = vshrl.u32 %v5858, 16
      %v7106 = vrot.slane %v7104, 3
      %v7107 = vshll.u32 %v5858, 16
      %v7109 = vrot.slane %v7107, 4
      %v7110 = vor.u32 %v7106, %v7109
      %v7112 = vshrl.u32 %v5860, 16
      %v7114 = vrot.slane %v7112, 3
      %v7115 = vshll.u32 %v5860, 16
      %v7117 = vrot.slane %v7115, 4
      %v7118 = vor.u32 %v7114, %v7117
      %v7119 = vsel %vm4352, %v7110, %v7118
      %v7120 = vshrl.u32 %v6392, 16
      %v7122 = vrot.slane %v7120, 3
      %v7123 = vshll.u32 %v6392, 16
      %v7125 = vrot.slane %v7123, 4
      %v7126 = vor.u32 %v7122, %v7125
      %v7127 = vshrl.u32 %v6394, 16
      %v7129 = vrot.slane %v7127, 3
      %v7130 = vshll.u32 %v6394, 16
      %v7132 = vrot.slane %v7130, 4
      %v7133 = vor.u32 %v7129, %v7132
      %v7134 = vsel %vm4352, %v7126, %v7133
      %v7135 = vshrl.u32 %v6590, 16
      %v7137 = vrot.slane %v7135, 3
      %v7138 = vshll.u32 %v6590, 16
      %v7140 = vrot.slane %v7138, 4
      %v7141 = vor.u32 %v7137, %v7140
      %v7142 = vshrl.u32 %v6591, 16
      %v7144 = vrot.slane %v7142, 3
      %v7145 = vshll.u32 %v6591, 16
      %v7147 = vrot.slane %v7145, 4
      %v7148 = vor.u32 %v7144, %v7147
      %v7149 = vsel %vm4352, %v7141, %v7148
      %v7151 = vshrl.u32 %v5861, 16
      %v7153 = vrot.slane %v7151, 3
      %v7154 = vshll.u32 %v5861, 16
      %v7156 = vrot.slane %v7154, 4
      %v7157 = vor.u32 %v7153, %v7156
      %v7159 = vshrl.u32 %v5863, 16
      %v7161 = vrot.slane %v7159, 3
      %v7162 = vshll.u32 %v5863, 16
      %v7164 = vrot.slane %v7162, 4
      %v7165 = vor.u32 %v7161, %v7164
      %v7166 = vsel %vm4352, %v7157, %v7165
      %v7167 = vshrl.u32 %v6396, 16
      %v7169 = vrot.slane %v7167, 3
      %v7170 = vshll.u32 %v6396, 16
      %v7172 = vrot.slane %v7170, 4
      %v7173 = vor.u32 %v7169, %v7172
      %v7174 = vshrl.u32 %v6398, 16
      %v7176 = vrot.slane %v7174, 3
      %v7177 = vshll.u32 %v6398, 16
      %v7179 = vrot.slane %v7177, 4
      %v7180 = vor.u32 %v7176, %v7179
      %v7181 = vsel %vm4352, %v7173, %v7180
      %v7182 = vshrl.u32 %v6593, 16
      %v7184 = vrot.slane %v7182, 3
      %v7185 = vshll.u32 %v6593, 16
      %v7187 = vrot.slane %v7185, 4
      %v7188 = vor.u32 %v7184, %v7187
      %v7189 = vshrl.u32 %v6594, 16
      %v7191 = vrot.slane %v7189, 3
      %v7192 = vshll.u32 %v6594, 16
      %v7194 = vrot.slane %v7192, 4
      %v7195 = vor.u32 %v7191, %v7194
      %v7196 = vsel %vm4352, %v7188, %v7195
      %v7198 = vshrl.u32 %v5864, 16
      %v7200 = vrot.slane %v7198, 3
      %v7201 = vshll.u32 %v5864, 16
      %v7203 = vrot.slane %v7201, 4
      %v7204 = vor.u32 %v7200, %v7203
      %v7206 = vshrl.u32 %v5866, 16
      %v7208 = vrot.slane %v7206, 3
      %v7209 = vshll.u32 %v5866, 16
      %v7211 = vrot.slane %v7209, 4
      %v7212 = vor.u32 %v7208, %v7211
      %v7213 = vsel %vm4352, %v7204, %v7212
      %v7214 = vshrl.u32 %v6400, 16
      %v7216 = vrot.slane %v7214, 3
      %v7217 = vshll.u32 %v6400, 16
      %v7219 = vrot.slane %v7217, 4
      %v7220 = vor.u32 %v7216, %v7219
      %v7221 = vshrl.u32 %v6402, 16
      %v7223 = vrot.slane %v7221, 3
      %v7224 = vshll.u32 %v6402, 16
      %v7226 = vrot.slane %v7224, 4
      %v7227 = vor.u32 %v7223, %v7226
      %v7228 = vsel %vm4352, %v7220, %v7227
      %v7229 = vshrl.u32 %v6596, 16
      %v7231 = vrot.slane %v7229, 3
      %v7232 = vshll.u32 %v6596, 16
      %v7234 = vrot.slane %v7232, 4
      %v7235 = vor.u32 %v7231, %v7234
      %v7236 = vshrl.u32 %v6597, 16
      %v7238 = vrot.slane %v7236, 3
      %v7239 = vshll.u32 %v6597, 16
      %v7241 = vrot.slane %v7239, 4
      %v7242 = vor.u32 %v7238, %v7241
      %v7243 = vsel %vm4352, %v7235, %v7242
      %v7245 = vshrl.u32 %v5867, 16
      %v7247 = vrot.slane %v7245, 3
      %v7248 = vshll.u32 %v5867, 16
      %v7250 = vrot.slane %v7248, 4
      %v7251 = vor.u32 %v7247, %v7250
      %v7253 = vshrl.u32 %v5869, 16
      %v7255 = vrot.slane %v7253, 3
      %v7256 = vshll.u32 %v5869, 16
      %v7258 = vrot.slane %v7256, 4
      %v7259 = vor.u32 %v7255, %v7258
      %v7260 = vsel %vm4352, %v7251, %v7259
      %v7261 = vshrl.u32 %v6404, 16
      %v7263 = vrot.slane %v7261, 3
      %v7264 = vshll.u32 %v6404, 16
      %v7266 = vrot.slane %v7264, 4
      %v7267 = vor.u32 %v7263, %v7266
      %v7268 = vshrl.u32 %v6406, 16
      %v7270 = vrot.slane %v7268, 3
      %v7271 = vshll.u32 %v6406, 16
      %v7273 = vrot.slane %v7271, 4
      %v7274 = vor.u32 %v7270, %v7273
      %v7275 = vsel %vm4352, %v7267, %v7274
      %v7276 = vshrl.u32 %v6599, 16
      %v7278 = vrot.slane %v7276, 3
      %v7279 = vshll.u32 %v6599, 16
      %v7281 = vrot.slane %v7279, 4
      %v7282 = vor.u32 %v7278, %v7281
      %v7283 = vshrl.u32 %v6600, 16
      %v7285 = vrot.slane %v7283, 3
      %v7286 = vshll.u32 %v6600, 16
      %v7288 = vrot.slane %v7286, 4
      %v7289 = vor.u32 %v7285, %v7288
      %v7290 = vsel %vm4352, %v7282, %v7289
      %v7292 = vshrl.u32 %v5870, 16
      %v7294 = vrot.slane %v7292, 3
      %v7295 = vshll.u32 %v5870, 16
      %v7297 = vrot.slane %v7295, 4
      %v7298 = vor.u32 %v7294, %v7297
      %v7300 = vshrl.u32 %v5872, 16
      %v7302 = vrot.slane %v7300, 3
      %v7303 = vshll.u32 %v5872, 16
      %v7305 = vrot.slane %v7303, 4
      %v7306 = vor.u32 %v7302, %v7305
      %v7307 = vsel %vm4352, %v7298, %v7306
      %v7308 = vshrl.u32 %v6408, 16
      %v7310 = vrot.slane %v7308, 3
      %v7311 = vshll.u32 %v6408, 16
      %v7313 = vrot.slane %v7311, 4
      %v7314 = vor.u32 %v7310, %v7313
      %v7315 = vshrl.u32 %v6410, 16
      %v7317 = vrot.slane %v7315, 3
      %v7318 = vshll.u32 %v6410, 16
      %v7320 = vrot.slane %v7318, 4
      %v7321 = vor.u32 %v7317, %v7320
      %v7322 = vsel %vm4352, %v7314, %v7321
      %v7323 = vshrl.u32 %v6602, 16
      %v7325 = vrot.slane %v7323, 3
      %v7326 = vshll.u32 %v6602, 16
      %v7328 = vrot.slane %v7326, 4
      %v7329 = vor.u32 %v7325, %v7328
      %v7330 = vshrl.u32 %v6603, 16
      %v7332 = vrot.slane %v7330, 3
      %v7333 = vshll.u32 %v6603, 16
      %v7335 = vrot.slane %v7333, 4
      %v7336 = vor.u32 %v7332, %v7335
      %v7337 = vsel %vm4352, %v7329, %v7336
      %v7339 = vshrl.u32 %v6021, 16
      %v7341 = vrot.slane %v7339, 3
      %v7342 = vshll.u32 %v6021, 16
      %v7344 = vrot.slane %v7342, 4
      %v7345 = vor.u32 %v7341, %v7344
      %v7347 = vshrl.u32 %v6023, 16
      %v7349 = vrot.slane %v7347, 3
      %v7350 = vshll.u32 %v6023, 16
      %v7352 = vrot.slane %v7350, 4
      %v7353 = vor.u32 %v7349, %v7352
      %v7354 = vsel %vm4352, %v7345, %v7353
      %v7355 = vshrl.u32 %v6412, 16
      %v7357 = vrot.slane %v7355, 3
      %v7358 = vshll.u32 %v6412, 16
      %v7360 = vrot.slane %v7358, 4
      %v7361 = vor.u32 %v7357, %v7360
      %v7362 = vshrl.u32 %v6414, 16
      %v7364 = vrot.slane %v7362, 3
      %v7365 = vshll.u32 %v6414, 16
      %v7367 = vrot.slane %v7365, 4
      %v7368 = vor.u32 %v7364, %v7367
      %v7369 = vsel %vm4352, %v7361, %v7368
      %v7370 = vshrl.u32 %v6605, 16
      %v7372 = vrot.slane %v7370, 3
      %v7373 = vshll.u32 %v6605, 16
      %v7375 = vrot.slane %v7373, 4
      %v7376 = vor.u32 %v7372, %v7375
      %v7377 = vshrl.u32 %v6606, 16
      %v7379 = vrot.slane %v7377, 3
      %v7380 = vshll.u32 %v6606, 16
      %v7382 = vrot.slane %v7380, 4
      %v7383 = vor.u32 %v7379, %v7382
      %v7384 = vsel %vm4352, %v7376, %v7383
      %v7386 = vshrl.u32 %v6204, 16
      %v7388 = vrot.slane %v7386, 3
      %v7389 = vshll.u32 %v6204, 16
      %v7391 = vrot.slane %v7389, 4
      %v7392 = vor.u32 %v7388, %v7391
      %v7394 = vshrl.u32 %v6206, 16
      %v7396 = vrot.slane %v7394, 3
      %v7397 = vshll.u32 %v6206, 16
      %v7399 = vrot.slane %v7397, 4
      %v7400 = vor.u32 %v7396, %v7399
      %v7401 = vsel %vm4352, %v7392, %v7400
      %v7470 = vunpack.c.l.b16 %v6607
      %v7471 = vunpack.c.l.b16 %v6608
      %v7472 = vunpack.c.l.b16 %v6609
      %v7473 = vunpack.c.l.b16 %v6610
      %v7474 = vunpack.c.l.b16 %v6611
      %v7475 = vunpack.c.l.b16 %v6612
      %v7476 = vunpack.c.l.b16 %v6613
      %v7477 = vunpack.c.l.b16 %v6614
      %v7478 = vunpack.c.l.b16 %v6615
      %v7479 = vunpack.c.l.b16 %v6616
      %v7480 = vunpack.c.l.b16 %v6617
      %v7481 = vunpack.c.l.b16 %v6618
      %v7482 = vunpack.c.l.b16 %v6619
      %v7483 = vunpack.c.l.b16 %v6620
      %v7484 = vunpack.c.l.b16 %v6621
      %v7485 = vunpack.c.l.b16 %v6622
      %v7486 = vunpack.c.l.b16 %v6623
      %v7487 = vunpack.c.l.b16 %v6624
      %v7488 = vunpack.c.l.b16 %v6625
      %v7489 = vunpack.c.l.b16 %v6626
      %v7490 = vunpack.c.l.b16 %v6627
      %v7491 = vunpack.c.l.b16 %v6628
      %v7492 = vunpack.c.l.b16 %v6629
      %v7493 = vunpack.c.l.b16 %v6630
      %v7494 = vunpack.c.l.b16 %v6631
      %v7495 = vunpack.c.l.b16 %v6632
      %v7496 = vunpack.c.l.b16 %v6633
      %v7497 = vunpack.c.l.b16 %v6634
      %v7498 = vunpack.c.l.b16 %v6635
      %v7499 = vunpack.c.l.b16 %v6636
      %v7500 = vunpack.c.l.b16 %v6637
      %v7501 = vunpack.c.l.b16 %v6638
      %v7502 = vunpack.c.l.b16 %v6639
      %v7503 = vunpack.c.l.b16 %v6640
      %v7504 = vunpack.c.l.b16 %v6641
      %v7505 = vunpack.c.l.b16 %v6642
      %v7506 = vpack.c.b16 %v7471, %v7470
      %v7507 = vpack.c.b16 %v7473, %v7472
      %v7508 = vpack.c.b16 %v7475, %v7474
      %v7509 = vpack.c.b16 %v7477, %v7476
      %v7510 = vpack.c.b16 %v7479, %v7478
      %v7511 = vpack.c.b16 %v7481, %v7480
      %v7512 = vpack.c.b16 %v7483, %v7482
      %v7513 = vpack.c.b16 %v7485, %v7484
      %v7514 = vpack.c.b16 %v7487, %v7486
      %v7515 = vpack.c.b16 %v7489, %v7488
      %v7516 = vpack.c.b16 %v7491, %v7490
      %v7517 = vpack.c.b16 %v7493, %v7492
      %v7518 = vpack.c.b16 %v7495, %v7494
      %v7519 = vpack.c.b16 %v7497, %v7496
      %v7520 = vpack.c.b16 %v7499, %v7498
      %v7521 = vpack.c.b16 %v7501, %v7500
      %v7522 = vpack.c.b16 %v7503, %v7502
      %v7523 = vpack.c.b16 %v7505, %v7504
      %v7543 = vsel %vm3969, %v6696, 0
      %v7546 = vsel %vm3969, %v6743, 0
      %v7549 = vsel %vm3969, %v6790, 0
      %v7552 = vsel %vm3969, %v6837, 0
      %v7555 = vsel %vm3969, %v6884, 0
      %v7558 = vsel %vm3969, %v6931, 0
      %v7561 = vsel %vm3969, %v6978, 0
      %v7564 = vsel %vm3969, %v7025, 0
      %v7567 = vsel %vm3969, %v7072, 0
      %v7570 = vsel %vm3969, %v7119, 0
      %v7573 = vsel %vm3969, %v7166, 0
      %v7576 = vsel %vm3969, %v7213, 0
      %v7579 = vsel %vm3969, %v7260, 0
      %v7582 = vsel %vm3969, %v7307, 0
      %v7585 = vsel %vm3969, %v7354, 0
      %v7588 = vsel %vm3969, %v7401, 0
      %7590 = vmatprep.subr.bf16.mxu0 0
      %7591 = vmatpush1.bf16.msra.mxu0 %v7513
      %7592 = vmatprep.subr.bf16.mxu0 0
      %7593 = vmatpush1.bf16.msra.mxu0 %v7512
      %7594 = vmatprep.subr.bf16.mxu0 0
      %7595 = vmatpush1.bf16.msra.mxu0 %v7511
      %7596 = vmatprep.subr.bf16.mxu0 0
      %7597 = vmatpush1.bf16.msra.mxu0 %v7510
      %7598 = vmatprep.subr.bf16.mxu0 0
      %7599 = vmatpush1.bf16.msra.mxu0 %v7509
      %7600 = vmatprep.subr.bf16.mxu0 0
      %7601 = vmatpush1.bf16.msra.mxu0 %v7508
      %7602 = vmatprep.subr.bf16.mxu0 0
      %7603 = vmatpush1.bf16.msra.mxu0 %v7507
      %7604 = vmatprep.subr.bf16.mxu0 0
      %7605 = vmatpush1.bf16.msra.mxu0 %v7506
      %7606 = vmatprep.subr.bf16.mxu0 0
      %7607 = vmatpush2.bf16.msra.mxu0 %v7521
      %7608 = vmatprep.subr.bf16.mxu0 0
      %7609 = vmatpush2.bf16.msra.mxu0 %v7520
      %7610 = vmatprep.subr.bf16.mxu0 0
      %7611 = vmatpush2.bf16.msra.mxu0 %v7519
      %7612 = vmatprep.subr.bf16.mxu0 0
      %7613 = vmatpush2.bf16.msra.mxu0 %v7518
      %7614 = vmatprep.subr.bf16.mxu0 0
      %7615 = vmatpush2.bf16.msra.mxu0 %v7517
      %7616 = vmatprep.subr.bf16.mxu0 0
      %7617 = vmatpush2.bf16.msra.mxu0 %v7516
      %7618 = vmatprep.subr.bf16.mxu0 0
      %7619 = vmatpush2.bf16.msra.mxu0 %v7515
      %7620 = vmatprep.subr.bf16.mxu0 0
      %7621 = vmatpush2.bf16.msra.mxu0 %v7514
      %7622 = vmatprep.mubr.bf16.mxu0 %v6679
      %7623 = vmatmul.mubr.bf16.gmra.mxu0 %v6664
      %v7624 = vpop.f32.mrf.mxu0
      %v7625 = vadd.f32 %v6648, %v7624
      %v7626 = vpop.f32.mrf.mxu0
      %v7627 = vpop.f32.mrf.mxu0
      %v7628 = vadd.f32 %v6648, %v7627
      %v7629 = vpop.f32.mrf.mxu0
      %7630 = vmatprep.mubr.bf16.mxu0 %v6726
      %7631 = vmatmul.mubr.bf16.gmra.mxu0 %v6711
      %v7632 = vpop.f32.mrf.mxu0
      %v7633 = vadd.f32 %v6648, %v7632
      %v7634 = vpop.f32.mrf.mxu0
      %v7635 = vpop.f32.mrf.mxu0
      %v7636 = vadd.f32 %v6648, %v7635
      %v7637 = vpop.f32.mrf.mxu0
      %7638 = vmatprep.mubr.bf16.mxu0 %v6773
      %7639 = vmatmul.mubr.bf16.gmra.mxu0 %v6758
      %v7640 = vpop.f32.mrf.mxu0
      %v7641 = vadd.f32 %v6648, %v7640
      %v7642 = vpop.f32.mrf.mxu0
      %v7643 = vpop.f32.mrf.mxu0
      %v7644 = vadd.f32 %v6648, %v7643
      %v7645 = vpop.f32.mrf.mxu0
      %7646 = vmatprep.mubr.bf16.mxu0 %v6820
      %7647 = vmatmul.mubr.bf16.gmra.mxu0 %v6805
      %v7648 = vpop.f32.mrf.mxu0
      %v7649 = vadd.f32 %v6648, %v7648
      %v7650 = vpop.f32.mrf.mxu0
      %v7651 = vpop.f32.mrf.mxu0
      %v7652 = vadd.f32 %v6648, %v7651
      %v7653 = vpop.f32.mrf.mxu0
      %7654 = vmatprep.mubr.bf16.mxu0 %v6867
      %7655 = vmatmul.mubr.bf16.gmra.mxu0 %v6852
      %v7656 = vpop.f32.mrf.mxu0
      %v7657 = vadd.f32 %v6648, %v7656
      %v7658 = vpop.f32.mrf.mxu0
      %v7659 = vpop.f32.mrf.mxu0
      %v7660 = vadd.f32 %v6648, %v7659
      %v7661 = vpop.f32.mrf.mxu0
      %7662 = vmatprep.mubr.bf16.mxu0 %v6914
      %7663 = vmatmul.mubr.bf16.gmra.mxu0 %v6899
      %v7664 = vpop.f32.mrf.mxu0
      %v7665 = vadd.f32 %v6648, %v7664
      %v7666 = vpop.f32.mrf.mxu0
      %v7667 = vpop.f32.mrf.mxu0
      %v7668 = vadd.f32 %v6648, %v7667
      %v7669 = vpop.f32.mrf.mxu0
      %7670 = vmatprep.mubr.bf16.mxu0 %v6961
      %7671 = vmatmul.mubr.bf16.gmra.mxu0 %v6946
      %v7672 = vpop.f32.mrf.mxu0
      %v7673 = vadd.f32 %v6648, %v7672
      %v7674 = vpop.f32.mrf.mxu0
      %v7675 = vpop.f32.mrf.mxu0
      %v7676 = vadd.f32 %v6648, %v7675
      %v7677 = vpop.f32.mrf.mxu0
      %7678 = vmatprep.mubr.bf16.mxu0 %v7008
      %7679 = vmatmul.mubr.bf16.gmra.mxu0 %v6993
      %v7680 = vpop.f32.mrf.mxu0
      %v7681 = vadd.f32 %v6648, %v7680
      %v7682 = vpop.f32.mrf.mxu0
      %v7683 = vpop.f32.mrf.mxu0
      %v7684 = vadd.f32 %v6648, %v7683
      %v7685 = vpop.f32.mrf.mxu0
      %7686 = vmatprep.mubr.bf16.mxu0 %v7055
      %7687 = vmatmul.mubr.bf16.gmra.mxu0 %v7040
      %v7688 = vpop.f32.mrf.mxu0
      %v7689 = vadd.f32 %v6648, %v7688
      %v7690 = vpop.f32.mrf.mxu0
      %v7691 = vpop.f32.mrf.mxu0
      %v7692 = vadd.f32 %v6648, %v7691
      %v7693 = vpop.f32.mrf.mxu0
      %7694 = vmatprep.mubr.bf16.mxu0 %v7102
      %7695 = vmatmul.mubr.bf16.gmra.mxu0 %v7087
      %v7696 = vpop.f32.mrf.mxu0
      %v7697 = vadd.f32 %v6648, %v7696
      %v7698 = vpop.f32.mrf.mxu0
      %v7699 = vpop.f32.mrf.mxu0
      %v7700 = vadd.f32 %v6648, %v7699
      %v7701 = vpop.f32.mrf.mxu0
      %7702 = vmatprep.mubr.bf16.mxu0 %v7149
      %7703 = vmatmul.mubr.bf16.gmra.mxu0 %v7134
      %v7704 = vpop.f32.mrf.mxu0
      %v7705 = vadd.f32 %v6648, %v7704
      %v7706 = vpop.f32.mrf.mxu0
      %v7707 = vpop.f32.mrf.mxu0
      %v7708 = vadd.f32 %v6648, %v7707
      %v7709 = vpop.f32.mrf.mxu0
      %7710 = vmatprep.mubr.bf16.mxu0 %v7196
      %7711 = vmatmul.mubr.bf16.gmra.mxu0 %v7181
      %v7712 = vpop.f32.mrf.mxu0
      %v7713 = vadd.f32 %v6648, %v7712
      %v7714 = vpop.f32.mrf.mxu0
      %v7715 = vpop.f32.mrf.mxu0
      %v7716 = vadd.f32 %v6648, %v7715
      %v7717 = vpop.f32.mrf.mxu0
      %7718 = vmatprep.mubr.bf16.mxu0 %v7243
      %7719 = vmatmul.mubr.bf16.gmra.mxu0 %v7228
      %v7720 = vpop.f32.mrf.mxu0
      %v7721 = vadd.f32 %v6648, %v7720
      %v7722 = vpop.f32.mrf.mxu0
      %v7723 = vpop.f32.mrf.mxu0
      %v7724 = vadd.f32 %v6648, %v7723
      %v7725 = vpop.f32.mrf.mxu0
      %7726 = vmatprep.mubr.bf16.mxu0 %v7290
      %7727 = vmatmul.mubr.bf16.gmra.mxu0 %v7275
      %v7728 = vpop.f32.mrf.mxu0
      %v7729 = vadd.f32 %v6648, %v7728
      %v7730 = vpop.f32.mrf.mxu0
      %v7731 = vpop.f32.mrf.mxu0
      %v7732 = vadd.f32 %v6648, %v7731
      %v7733 = vpop.f32.mrf.mxu0
      %7734 = vmatprep.mubr.bf16.mxu0 %v7337
      %7735 = vmatmul.mubr.bf16.gmra.mxu0 %v7322
      %v7736 = vpop.f32.mrf.mxu0
      %v7737 = vadd.f32 %v6648, %v7736
      %v7738 = vpop.f32.mrf.mxu0
      %v7739 = vpop.f32.mrf.mxu0
      %v7740 = vadd.f32 %v6648, %v7739
      %v7741 = vpop.f32.mrf.mxu0
      %7742 = vmatprep.mubr.bf16.mxu0 %v7384
      %7743 = vmatmul.mubr.bf16.gmra.mxu0 %v7369
      %v7744 = vpop.f32.mrf.mxu0
      %v7745 = vadd.f32 %v6648, %v7744
      %v7746 = vpop.f32.mrf.mxu0
      %v7747 = vpop.f32.mrf.mxu0
      %v7748 = vadd.f32 %v6648, %v7747
      %v7749 = vpop.f32.mrf.mxu0
      %7750 = vdwg.mxu0
      %7751 = vmatprep.subr.bf16.mxu0 0
      %7752 = vmatpush1.bf16.msra.mxu0 0
      %7753 = vmatprep.subr.bf16.mxu0 0
      %7754 = vmatpush1.bf16.msra.mxu0 0
      %7755 = vmatprep.subr.bf16.mxu0 0
      %7756 = vmatpush1.bf16.msra.mxu0 0
      %7757 = vmatprep.subr.bf16.mxu0 0
      %7758 = vmatpush1.bf16.msra.mxu0 0
      %7759 = vmatprep.subr.bf16.mxu0 0
      %7760 = vmatpush1.bf16.msra.mxu0 0
      %7761 = vmatprep.subr.bf16.mxu0 0
      %7762 = vmatpush1.bf16.msra.mxu0 0
      %7763 = vmatprep.subr.bf16.mxu0 0
      %7764 = vmatpush1.bf16.msra.mxu0 %v7523
      %7765 = vmatprep.subr.bf16.mxu0 0
      %7766 = vmatpush1.bf16.msra.mxu0 %v7522
      %7767 = vmatprep.subr.bf16.mxu0 0
      %7768 = vmatpush2.bf16.msra.mxu0 0
      %7769 = vmatprep.subr.bf16.mxu0 0
      %7770 = vmatpush2.bf16.msra.mxu0 0
      %7771 = vmatprep.subr.bf16.mxu0 0
      %7772 = vmatpush2.bf16.msra.mxu0 0
      %7773 = vmatprep.subr.bf16.mxu0 0
      %7774 = vmatpush2.bf16.msra.mxu0 0
      %7775 = vmatprep.subr.bf16.mxu0 0
      %7776 = vmatpush2.bf16.msra.mxu0 0
      %7777 = vmatprep.subr.bf16.mxu0 0
      %7778 = vmatpush2.bf16.msra.mxu0 0
      %7779 = vmatprep.subr.bf16.mxu0 0
      %7780 = vmatpush2.bf16.msra.mxu0 0
      %7781 = vmatprep.subr.bf16.mxu0 0
      %7782 = vmatpush2.bf16.msra.mxu0 0
      %7783 = vmatprep.mubr.bf16.mxu0 0
      %7784 = vmatmul.mubr.bf16.gmra.mxu0 %v7543
      %v7785 = vpop.f32.mrf.mxu0
      %v7786 = vadd.f32 %v7625, %v7785
      %v7787 = vpop.f32.mrf.mxu0
      %v7788 = vpop.f32.mrf.mxu0
      %v7789 = vadd.f32 %v7628, %v7788
      %v7790 = vpop.f32.mrf.mxu0
      %7791 = vmatprep.mubr.bf16.mxu0 0
      %7792 = vmatmul.mubr.bf16.gmra.mxu0 %v7546
      %v7793 = vpop.f32.mrf.mxu0
      %v7794 = vadd.f32 %v7633, %v7793
      %v7795 = vpop.f32.mrf.mxu0
      %v7796 = vpop.f32.mrf.mxu0
      %v7797 = vadd.f32 %v7636, %v7796
      %v7798 = vpop.f32.mrf.mxu0
      %7799 = vmatprep.mubr.bf16.mxu0 0
      %7800 = vmatmul.mubr.bf16.gmra.mxu0 %v7549
      %v7801 = vpop.f32.mrf.mxu0
      %v7802 = vadd.f32 %v7641, %v7801
      %v7803 = vpop.f32.mrf.mxu0
      %v7804 = vpop.f32.mrf.mxu0
      %v7805 = vadd.f32 %v7644, %v7804
      %v7806 = vpop.f32.mrf.mxu0
      %7807 = vmatprep.mubr.bf16.mxu0 0
      %7808 = vmatmul.mubr.bf16.gmra.mxu0 %v7552
      %v7809 = vpop.f32.mrf.mxu0
      %v7810 = vadd.f32 %v7649, %v7809
      %v7811 = vpop.f32.mrf.mxu0
      %v7812 = vpop.f32.mrf.mxu0
      %v7813 = vadd.f32 %v7652, %v7812
      %v7814 = vpop.f32.mrf.mxu0
      %7815 = vmatprep.mubr.bf16.mxu0 0
      %7816 = vmatmul.mubr.bf16.gmra.mxu0 %v7555
      %v7817 = vpop.f32.mrf.mxu0
      %v7818 = vadd.f32 %v7657, %v7817
      %v7819 = vpop.f32.mrf.mxu0
      %v7820 = vpop.f32.mrf.mxu0
      %v7821 = vadd.f32 %v7660, %v7820
      %v7822 = vpop.f32.mrf.mxu0
      %7823 = vmatprep.mubr.bf16.mxu0 0
      %7824 = vmatmul.mubr.bf16.gmra.mxu0 %v7558
      %v7825 = vpop.f32.mrf.mxu0
      %v7826 = vadd.f32 %v7665, %v7825
      %v7827 = vpop.f32.mrf.mxu0
      %v7828 = vpop.f32.mrf.mxu0
      %v7829 = vadd.f32 %v7668, %v7828
      %v7830 = vpop.f32.mrf.mxu0
      %7831 = vmatprep.mubr.bf16.mxu0 0
      %7832 = vmatmul.mubr.bf16.gmra.mxu0 %v7561
      %v7833 = vpop.f32.mrf.mxu0
      %v7834 = vadd.f32 %v7673, %v7833
      %v7835 = vpop.f32.mrf.mxu0
      %v7836 = vpop.f32.mrf.mxu0
      %v7837 = vadd.f32 %v7676, %v7836
      %v7838 = vpop.f32.mrf.mxu0
      %7839 = vmatprep.mubr.bf16.mxu0 0
      %7840 = vmatmul.mubr.bf16.gmra.mxu0 %v7564
      %v7841 = vpop.f32.mrf.mxu0
      %v7842 = vadd.f32 %v7681, %v7841
      %v7843 = vpop.f32.mrf.mxu0
      %v7844 = vpop.f32.mrf.mxu0
      %v7845 = vadd.f32 %v7684, %v7844
      %v7846 = vpop.f32.mrf.mxu0
      %7847 = vmatprep.mubr.bf16.mxu0 0
      %7848 = vmatmul.mubr.bf16.gmra.mxu0 %v7567
      %v7849 = vpop.f32.mrf.mxu0
      %v7850 = vadd.f32 %v7689, %v7849
      %v7851 = vpop.f32.mrf.mxu0
      %v7852 = vpop.f32.mrf.mxu0
      %v7853 = vadd.f32 %v7692, %v7852
      %v7854 = vpop.f32.mrf.mxu0
      %7855 = vmatprep.mubr.bf16.mxu0 0
      %7856 = vmatmul.mubr.bf16.gmra.mxu0 %v7570
      %v7857 = vpop.f32.mrf.mxu0
      %v7858 = vadd.f32 %v7697, %v7857
      %v7859 = vpop.f32.mrf.mxu0
      %v7860 = vpop.f32.mrf.mxu0
      %v7861 = vadd.f32 %v7700, %v7860
      %v7862 = vpop.f32.mrf.mxu0
      %7863 = vmatprep.mubr.bf16.mxu0 0
      %7864 = vmatmul.mubr.bf16.gmra.mxu0 %v7573
      %v7865 = vpop.f32.mrf.mxu0
      %v7866 = vadd.f32 %v7705, %v7865
      %v7867 = vpop.f32.mrf.mxu0
      %v7868 = vpop.f32.mrf.mxu0
      %v7869 = vadd.f32 %v7708, %v7868
      %v7870 = vpop.f32.mrf.mxu0
      %7871 = vmatprep.mubr.bf16.mxu0 0
      %7872 = vmatmul.mubr.bf16.gmra.mxu0 %v7576
      %v7873 = vpop.f32.mrf.mxu0
      %v7874 = vadd.f32 %v7713, %v7873
      %v7875 = vpop.f32.mrf.mxu0
      %v7876 = vpop.f32.mrf.mxu0
      %v7877 = vadd.f32 %v7716, %v7876
      %v7878 = vpop.f32.mrf.mxu0
      %7879 = vmatprep.mubr.bf16.mxu0 0
      %7880 = vmatmul.mubr.bf16.gmra.mxu0 %v7579
      %v7881 = vpop.f32.mrf.mxu0
      %v7882 = vadd.f32 %v7721, %v7881
      %v7883 = vpop.f32.mrf.mxu0
      %v7884 = vpop.f32.mrf.mxu0
      %v7885 = vadd.f32 %v7724, %v7884
      %v7886 = vpop.f32.mrf.mxu0
      %7887 = vmatprep.mubr.bf16.mxu0 0
      %7888 = vmatmul.mubr.bf16.gmra.mxu0 %v7582
      %v7889 = vpop.f32.mrf.mxu0
      %v7890 = vadd.f32 %v7729, %v7889
      %v7891 = vpop.f32.mrf.mxu0
      %v7892 = vpop.f32.mrf.mxu0
      %v7893 = vadd.f32 %v7732, %v7892
      %v7894 = vpop.f32.mrf.mxu0
      %7895 = vmatprep.mubr.bf16.mxu0 0
      %7896 = vmatmul.mubr.bf16.gmra.mxu0 %v7585
      %v7897 = vpop.f32.mrf.mxu0
      %v7898 = vadd.f32 %v7737, %v7897
      %v7899 = vpop.f32.mrf.mxu0
      %v7900 = vpop.f32.mrf.mxu0
      %v7901 = vadd.f32 %v7740, %v7900
      %v7902 = vpop.f32.mrf.mxu0
      %7903 = vmatprep.mubr.bf16.mxu0 0
      %7904 = vmatmul.mubr.bf16.gmra.mxu0 %v7588
      %v7905 = vpop.f32.mrf.mxu0
      %v7906 = vadd.f32 %v7745, %v7905
      %v7907 = vpop.f32.mrf.mxu0
      %v7908 = vpop.f32.mrf.mxu0
      %v7909 = vadd.f32 %v7748, %v7908
      %v7910 = vpop.f32.mrf.mxu0
      %7911 = vdwg.mxu0
      %vm7912 = vcmp.gt.f32.partialorder %v7786, 0.0
      %vm7913 = vcmp.gt.f32.partialorder %v7789, 0.0
      %vm7914 = vcmp.gt.f32.partialorder %v7794, 0.0
      %vm7915 = vcmp.gt.f32.partialorder %v7797, 0.0
      %vm7916 = vcmp.gt.f32.partialorder %v7802, 0.0
      %vm7917 = vcmp.gt.f32.partialorder %v7805, 0.0
      %vm7918 = vcmp.gt.f32.partialorder %v7810, 0.0
      %vm7919 = vcmp.gt.f32.partialorder %v7813, 0.0
      %vm7920 = vcmp.gt.f32.partialorder %v7818, 0.0
      %vm7921 = vcmp.gt.f32.partialorder %v7821, 0.0
      %vm7922 = vcmp.gt.f32.partialorder %v7826, 0.0
      %vm7923 = vcmp.gt.f32.partialorder %v7829, 0.0
      %vm7924 = vcmp.gt.f32.partialorder %v7834, 0.0
      %vm7925 = vcmp.gt.f32.partialorder %v7837, 0.0
      %vm7926 = vcmp.gt.f32.partialorder %v7842, 0.0
      %vm7927 = vcmp.gt.f32.partialorder %v7845, 0.0
      %vm7928 = vcmp.gt.f32.partialorder %v7850, 0.0
      %vm7929 = vcmp.gt.f32.partialorder %v7853, 0.0
      %vm7930 = vcmp.gt.f32.partialorder %v7858, 0.0
      %vm7931 = vcmp.gt.f32.partialorder %v7861, 0.0
      %vm7932 = vcmp.gt.f32.partialorder %v7866, 0.0
      %vm7933 = vcmp.gt.f32.partialorder %v7869, 0.0
      %vm7934 = vcmp.gt.f32.partialorder %v7874, 0.0
      %vm7935 = vcmp.gt.f32.partialorder %v7877, 0.0
      %vm7936 = vcmp.gt.f32.partialorder %v7882, 0.0
      %vm7937 = vcmp.gt.f32.partialorder %v7885, 0.0
      %vm7938 = vcmp.gt.f32.partialorder %v7890, 0.0
      %vm7939 = vcmp.gt.f32.partialorder %v7893, 0.0
      %vm7940 = vcmp.gt.f32.partialorder %v7898, 0.0
      %vm7941 = vcmp.gt.f32.partialorder %v7901, 0.0
      %vm7942 = vcmp.gt.f32.partialorder %v7906, 0.0
      %vm7943 = vcmp.gt.f32.partialorder %v7909, 0.0
      %v7944 = vmul.f32 %v7786, 0.01
      %v7945 = vmul.f32 %v7789, 0.01
      %v7946 = vmul.f32 %v7794, 0.01
      %v7947 = vmul.f32 %v7797, 0.01
      %v7948 = vmul.f32 %v7802, 0.01
      %v7949 = vmul.f32 %v7805, 0.01
      %v7950 = vmul.f32 %v7810, 0.01
      %v7951 = vmul.f32 %v7813, 0.01
      %v7952 = vmul.f32 %v7818, 0.01
      %v7953 = vmul.f32 %v7821, 0.01
      %v7954 = vmul.f32 %v7826, 0.01
      %v7955 = vmul.f32 %v7829, 0.01
      %v7956 = vmul.f32 %v7834, 0.01
      %v7957 = vmul.f32 %v7837, 0.01
      %v7958 = vmul.f32 %v7842, 0.01
      %v7959 = vmul.f32 %v7845, 0.01
      %v7960 = vmul.f32 %v7850, 0.01
      %v7961 = vmul.f32 %v7853, 0.01
      %v7962 = vmul.f32 %v7858, 0.01
      %v7963 = vmul.f32 %v7861, 0.01
      %v7964 = vmul.f32 %v7866, 0.01
      %v7965 = vmul.f32 %v7869, 0.01
      %v7966 = vmul.f32 %v7874, 0.01
      %v7967 = vmul.f32 %v7877, 0.01
      %v7968 = vmul.f32 %v7882, 0.01
      %v7969 = vmul.f32 %v7885, 0.01
      %v7970 = vmul.f32 %v7890, 0.01
      %v7971 = vmul.f32 %v7893, 0.01
      %v7972 = vmul.f32 %v7898, 0.01
      %v7973 = vmul.f32 %v7901, 0.01
      %v7974 = vmul.f32 %v7906, 0.01
      %v7975 = vmul.f32 %v7909, 0.01
      %v7976 = vsel %vm7912, %v7786, %v7944
      %v7977 = vsel %vm7913, %v7789, %v7945
      %v7978 = vsel %vm7914, %v7794, %v7946
      %v7979 = vsel %vm7915, %v7797, %v7947
      %v7980 = vsel %vm7916, %v7802, %v7948
      %v7981 = vsel %vm7917, %v7805, %v7949
      %v7982 = vsel %vm7918, %v7810, %v7950
      %v7983 = vsel %vm7919, %v7813, %v7951
      %v7984 = vsel %vm7920, %v7818, %v7952
      %v7985 = vsel %vm7921, %v7821, %v7953
      %v7986 = vsel %vm7922, %v7826, %v7954
      %v7987 = vsel %vm7923, %v7829, %v7955
      %v7988 = vsel %vm7924, %v7834, %v7956
      %v7989 = vsel %vm7925, %v7837, %v7957
      %v7990 = vsel %vm7926, %v7842, %v7958
      %v7991 = vsel %vm7927, %v7845, %v7959
      %v7992 = vsel %vm7928, %v7850, %v7960
      %v7993 = vsel %vm7929, %v7853, %v7961
      %v7994 = vsel %vm7930, %v7858, %v7962
      %v7995 = vsel %vm7931, %v7861, %v7963
      %v7996 = vsel %vm7932, %v7866, %v7964
      %v7997 = vsel %vm7933, %v7869, %v7965
      %v7998 = vsel %vm7934, %v7874, %v7966
      %v7999 = vsel %vm7935, %v7877, %v7967
      %v8000 = vsel %vm7936, %v7882, %v7968
      %v8001 = vsel %vm7937, %v7885, %v7969
      %v8002 = vsel %vm7938, %v7890, %v7970
      %v8003 = vsel %vm7939, %v7893, %v7971
      %v8004 = vsel %vm7940, %v7898, %v7972
      %v8005 = vsel %vm7941, %v7901, %v7973
      %v8006 = vsel %vm7942, %v7906, %v7974
      %v8007 = vsel %vm7943, %v7909, %v7975
      %v8008 = vpack.c.bf16 %v7977, %v7976
      %v8009 = vpack.c.bf16 %v7979, %v7978
      %v8010 = vpack.c.bf16 %v7981, %v7980
      %v8011 = vpack.c.bf16 %v7983, %v7982
      %v8012 = vpack.c.bf16 %v7985, %v7984
      %v8013 = vpack.c.bf16 %v7987, %v7986
      %v8014 = vpack.c.bf16 %v7989, %v7988
      %v8015 = vpack.c.bf16 %v7991, %v7990
      %v8016 = vpack.c.bf16 %v7993, %v7992
      %v8017 = vpack.c.bf16 %v7995, %v7994
      %v8018 = vpack.c.bf16 %v7997, %v7996
      %v8019 = vpack.c.bf16 %v7999, %v7998
      %v8020 = vpack.c.bf16 %v8001, %v8000
      %v8021 = vpack.c.bf16 %v8003, %v8002
      %v8022 = vpack.c.bf16 %v8005, %v8004
      %v8023 = vpack.c.bf16 %v8007, %v8006
      %v8040 = vunpack.c.l.b16 %v8008
      %v8041 = vunpack.c.h.b16 %v8008
      %v8042 = vunpack.c.l.b16 %v8009
      %v8043 = vunpack.c.h.b16 %v8009
      %v8044 = vunpack.c.l.b16 %v8010
      %v8045 = vunpack.c.h.b16 %v8010
      %v8046 = vunpack.c.l.b16 %v8011
      %v8047 = vunpack.c.h.b16 %v8011
      %v8048 = vunpack.c.l.b16 %v8012
      %v8049 = vunpack.c.h.b16 %v8012
      %v8050 = vunpack.c.l.b16 %v8013
      %v8051 = vunpack.c.h.b16 %v8013
      %v8052 = vunpack.c.l.b16 %v8014
      %v8053 = vunpack.c.h.b16 %v8014
      %v8054 = vunpack.c.l.b16 %v8015
      %v8055 = vunpack.c.h.b16 %v8015
      %v8056 = vunpack.c.l.b16 %v8016
      %v8057 = vunpack.c.h.b16 %v8016
      %v8058 = vunpack.c.l.b16 %v8017
      %v8059 = vunpack.c.h.b16 %v8017
      %v8060 = vunpack.c.l.b16 %v8018
      %v8061 = vunpack.c.h.b16 %v8018
      %v8062 = vunpack.c.l.b16 %v8019
      %v8063 = vunpack.c.h.b16 %v8019
      %v8064 = vunpack.c.l.b16 %v8020
      %v8065 = vunpack.c.h.b16 %v8020
      %v8066 = vunpack.c.l.b16 %v8021
      %v8067 = vunpack.c.h.b16 %v8021
      %v8068 = vunpack.c.l.b16 %v8022
      %v8069 = vunpack.c.h.b16 %v8022
      %v8070 = vunpack.c.l.b16 %v8023
      %v8071 = vunpack.c.h.b16 %v8023
      %v8072 = vpack.c.b16 %v8040, %v8040
      %v8073 = vpack.c.b16 %v8041, %v8041
      %v8074 = vpack.c.b16 %v8042, %v8042
      %v8075 = vpack.c.b16 %v8043, %v8043
      %v8076 = vpack.c.b16 %v8044, %v8044
      %v8077 = vpack.c.b16 %v8045, %v8045
      %v8078 = vpack.c.b16 %v8046, %v8046
      %v8079 = vpack.c.b16 %v8047, %v8047
      %v8080 = vpack.c.b16 %v8048, %v8048
      %v8081 = vpack.c.b16 %v8049, %v8049
      %v8082 = vpack.c.b16 %v8050, %v8050
      %v8083 = vpack.c.b16 %v8051, %v8051
      %v8084 = vpack.c.b16 %v8052, %v8052
      %v8085 = vpack.c.b16 %v8053, %v8053
      %v8086 = vpack.c.b16 %v8054, %v8054
      %v8087 = vpack.c.b16 %v8055, %v8055
      %v8088 = vpack.c.b16 %v8056, %v8056
      %v8089 = vpack.c.b16 %v8057, %v8057
      %v8090 = vpack.c.b16 %v8058, %v8058
      %v8091 = vpack.c.b16 %v8059, %v8059
      %v8092 = vpack.c.b16 %v8060, %v8060
      %v8093 = vpack.c.b16 %v8061, %v8061
      %v8094 = vpack.c.b16 %v8062, %v8062
      %v8095 = vpack.c.b16 %v8063, %v8063
      %v8096 = vpack.c.b16 %v8064, %v8064
      %v8097 = vpack.c.b16 %v8065, %v8065
      %v8098 = vpack.c.b16 %v8066, %v8066
      %v8099 = vpack.c.b16 %v8067, %v8067
      %v8100 = vpack.c.b16 %v8068, %v8068
      %v8101 = vpack.c.b16 %v8069, %v8069
      %v8102 = vpack.c.b16 %v8070, %v8070
      %v8103 = vpack.c.b16 %v8071, %v8071
      %s8136 = scalar_lea.vmem [#allocation4], 24
      %8137 = vst.msk [vmem:[%s8136 + $0x8] sm:$0xf] %vm443, %v8072
      %8138 = vst.msk [vmem:[%s8136 + $0xc] sm:$0xf] %vm443, %v8073
      %8139 = vst.msk [vmem:[%s8136 + $0x20] sm:$0xf] %vm443, %v8074
      %8140 = vst.msk [vmem:[%s8136 + $0x24] sm:$0xf] %vm443, %v8075
      %8141 = vst.msk [vmem:[%s8136 + $0x38] sm:$0xf] %vm443, %v8076
      %8142 = vst.msk [vmem:[%s8136 + $0x3c] sm:$0xf] %vm443, %v8077
      %8143 = vst.msk [vmem:[%s8136 + $0x50] sm:$0xf] %vm443, %v8078
      %8144 = vst.msk [vmem:[%s8136 + $0x54] sm:$0xf] %vm443, %v8079
      %8145 = vst.msk [vmem:[%s8136 + $0x68] sm:$0xf] %vm443, %v8080
      %8146 = vst.msk [vmem:[%s8136 + $0x6c] sm:$0xf] %vm443, %v8081
      %8147 = vst.msk [vmem:[%s8136 + $0x80] sm:$0xf] %vm443, %v8082
      %8148 = vst.msk [vmem:[%s8136 + $0x84] sm:$0xf] %vm443, %v8083
      %8149 = vst.msk [vmem:[%s8136 + $0x98] sm:$0xf] %vm443, %v8084
      %8150 = vst.msk [vmem:[%s8136 + $0x9c] sm:$0xf] %vm443, %v8085
      %8151 = vst.msk [vmem:[%s8136 + $0xb0] sm:$0xf] %vm443, %v8086
      %8152 = vst.msk [vmem:[%s8136 + $0xb4] sm:$0xf] %vm443, %v8087
      %8153 = vst.msk [vmem:[%s8136 + $0xc8] sm:$0xf] %vm443, %v8088
      %8154 = vst.msk [vmem:[%s8136 + $0xcc] sm:$0xf] %vm443, %v8089
      %8155 = vst.msk [vmem:[%s8136 + $0xe0] sm:$0xf] %vm443, %v8090
      %8156 = vst.msk [vmem:[%s8136 + $0xe4] sm:$0xf] %vm443, %v8091
      %8157 = vst.msk [vmem:[%s8136 + $0xf8] sm:$0xf] %vm443, %v8092
      %8158 = vst.msk [vmem:[%s8136 + $0xfc] sm:$0xf] %vm443, %v8093
      %8159 = vst.msk [vmem:[%s8136 + $0x110] sm:$0xf] %vm443, %v8094
      %8160 = vst.msk [vmem:[%s8136 + $0x114] sm:$0xf] %vm443, %v8095
      %8161 = vst.msk [vmem:[%s8136 + $0x128] sm:$0xf] %vm443, %v8096
      %8162 = vst.msk [vmem:[%s8136 + $0x12c] sm:$0xf] %vm443, %v8097
      %8163 = vst.msk [vmem:[%s8136 + $0x140] sm:$0xf] %vm443, %v8098
      %8164 = vst.msk [vmem:[%s8136 + $0x144] sm:$0xf] %vm443, %v8099
      %8165 = vst.msk [vmem:[%s8136 + $0x158] sm:$0xf] %vm443, %v8100
      %8166 = vst.msk [vmem:[%s8136 + $0x15c] sm:$0xf] %vm443, %v8101
      %8167 = vst.msk [vmem:[%s8136 + $0x170] sm:$0xf] %vm443, %v8102
      %8168 = vst.msk [vmem:[%s8136 + $0x174] sm:$0xf] %vm443, %v8103
      %v8169 = vld [vmem:[#allocation4 + $0x4] sm:$0xf]
      %v8170 = vld [vmem:[#allocation4 + $0x8] sm:$0xf]
      %v8171 = vld [vmem:[#allocation4 + $0xc] sm:$0xf]
      %v8172 = vld [vmem:[#allocation4 + $0x10] sm:$0xf]
      %v8173 = vld [vmem:[#allocation4 + $0x1c] sm:$0xf]
      %v8174 = vld [vmem:[#allocation4 + $0x20] sm:$0xf]
      %v8175 = vld [vmem:[#allocation4 + $0x24] sm:$0xf]
      %v8176 = vld [vmem:[#allocation4 + $0x28] sm:$0xf]
      %v8177 = vld [vmem:[#allocation4 + $0x34] sm:$0xf]
      %v8178 = vld [vmem:[#allocation4 + $0x38] sm:$0xf]
      %v8179 = vld [vmem:[#allocation4 + $0x3c] sm:$0xf]
      %v8180 = vld [vmem:[#allocation4 + $0x40] sm:$0xf]
      %v8181 = vld [vmem:[#allocation4 + $0x4c] sm:$0xf]
      %v8182 = vld [vmem:[#allocation4 + $0x50] sm:$0xf]
      %v8183 = vld [vmem:[#allocation4 + $0x54] sm:$0xf]
      %v8184 = vld [vmem:[#allocation4 + $0x58] sm:$0xf]
      %v8185 = vld [vmem:[#allocation4 + $0x64] sm:$0xf]
      %v8186 = vld [vmem:[#allocation4 + $0x68] sm:$0xf]
      %v8187 = vld [vmem:[#allocation4 + $0x6c] sm:$0xf]
      %v8188 = vld [vmem:[#allocation4 + $0x70] sm:$0xf]
      %v8189 = vld [vmem:[#allocation4 + $0x7c] sm:$0xf]
      %v8190 = vld [vmem:[#allocation4 + $0x80] sm:$0xf]
      %v8191 = vld [vmem:[#allocation4 + $0x84] sm:$0xf]
      %v8192 = vld [vmem:[#allocation4 + $0x88] sm:$0xf]
      %v8193 = vld [vmem:[#allocation4 + $0x94] sm:$0xf]
      %v8194 = vld [vmem:[#allocation4 + $0x98] sm:$0xf]
      %v8195 = vld [vmem:[#allocation4 + $0x9c] sm:$0xf]
      %v8196 = vld [vmem:[#allocation4 + $0xa0] sm:$0xf]
      %v8197 = vld [vmem:[#allocation4 + $0xac] sm:$0xf]
      %v8198 = vld [vmem:[#allocation4 + $0xb0] sm:$0xf]
      %v8199 = vld [vmem:[#allocation4 + $0xb4] sm:$0xf]
      %v8200 = vld [vmem:[#allocation4 + $0xb8] sm:$0xf]
      %v8201 = vld [vmem:[#allocation4 + $0xc4] sm:$0xf]
      %v8202 = vld [vmem:[#allocation4 + $0xc8] sm:$0xf]
      %v8203 = vld [vmem:[#allocation4 + $0xcc] sm:$0xf]
      %v8204 = vld [vmem:[#allocation4 + $0xd0] sm:$0xf]
      %v8205 = vld [vmem:[#allocation4 + $0xdc] sm:$0xf]
      %v8206 = vld [vmem:[#allocation4 + $0xe0] sm:$0xf]
      %v8207 = vld [vmem:[#allocation4 + $0xe4] sm:$0xf]
      %v8208 = vld [vmem:[#allocation4 + $0xe8] sm:$0xf]
      %v8209 = vld [vmem:[#allocation4 + $0xf4] sm:$0xf]
      %v8210 = vld [vmem:[#allocation4 + $0xf8] sm:$0xf]
      %v8211 = vld [vmem:[#allocation4 + $0xfc] sm:$0xf]
      %v8212 = vld [vmem:[#allocation4 + $0x100] sm:$0xf]
      %v8213 = vld [vmem:[#allocation4 + $0x10c] sm:$0xf]
      %v8214 = vld [vmem:[#allocation4 + $0x110] sm:$0xf]
      %v8215 = vld [vmem:[#allocation4 + $0x114] sm:$0xf]
      %v8216 = vld [vmem:[#allocation4 + $0x118] sm:$0xf]
      %v8217 = vld [vmem:[#allocation4 + $0x124] sm:$0xf]
      %v8218 = vld [vmem:[#allocation4 + $0x128] sm:$0xf]
      %v8219 = vld [vmem:[#allocation4 + $0x12c] sm:$0xf]
      %v8220 = vld [vmem:[#allocation4 + $0x130] sm:$0xf]
      %v8221 = vld [vmem:[#allocation4 + $0x13c] sm:$0xf]
      %v8222 = vld [vmem:[#allocation4 + $0x140] sm:$0xf]
      %v8223 = vld [vmem:[#allocation4 + $0x144] sm:$0xf]
      %v8224 = vld [vmem:[#allocation4 + $0x148] sm:$0xf]
      %v8225 = vld [vmem:[#allocation4 + $0x154] sm:$0xf]
      %v8226 = vld [vmem:[#allocation4 + $0x158] sm:$0xf]
      %v8227 = vld [vmem:[#allocation4 + $0x15c] sm:$0xf]
      %v8228 = vld [vmem:[#allocation4 + $0x160] sm:$0xf]
      %v8229 = vld [vmem:[#allocation4 + $0x16c] sm:$0xf]
      %v8230 = vld [vmem:[#allocation4 + $0x170] sm:$0xf]
      %v8231 = vld [vmem:[#allocation4 + $0x174] sm:$0xf]
      %v8232 = vld [vmem:[#allocation4 + $0x178] sm:$0xf]
      %v8233 = vld [vmem:[#allocation4 + $0x184] sm:$0xf]
      %v8234 = vld [vmem:[#allocation4 + $0x188] sm:$0xf]
      %v8235 = vld [vmem:[#allocation4 + $0x18c] sm:$0xf]
      %v8236 = vld [vmem:[#allocation4 + $0x190] sm:$0xf]
      %v8237 = vld [vmem:[#allocation4 + $0x19c] sm:$0xf]
      %v8238 = vld [vmem:[#allocation4 + $0x1a0] sm:$0xf]
      %v8239 = vld [vmem:[#allocation4 + $0x1a4] sm:$0xf]
      %v8240 = vld [vmem:[#allocation4 + $0x1a8] sm:$0xf]
      %v8289 = vunpack.c.l.b16 %v8169
      %v8290 = vunpack.c.l.b16 %v8170
      %v8291 = vunpack.c.l.b16 %v8171
      %v8292 = vunpack.c.l.b16 %v8173
      %v8293 = vunpack.c.l.b16 %v8174
      %v8294 = vunpack.c.l.b16 %v8175
      %v8295 = vunpack.c.l.b16 %v8177
      %v8296 = vunpack.c.l.b16 %v8178
      %v8297 = vunpack.c.l.b16 %v8179
      %v8298 = vunpack.c.l.b16 %v8181
      %v8299 = vunpack.c.l.b16 %v8182
      %v8300 = vunpack.c.l.b16 %v8183
      %v8301 = vunpack.c.l.b16 %v8185
      %v8302 = vunpack.c.l.b16 %v8186
      %v8303 = vunpack.c.l.b16 %v8187
      %v8304 = vunpack.c.l.b16 %v8189
      %v8305 = vunpack.c.l.b16 %v8190
      %v8306 = vunpack.c.l.b16 %v8191
      %v8307 = vunpack.c.l.b16 %v8193
      %v8308 = vunpack.c.l.b16 %v8194
      %v8309 = vunpack.c.l.b16 %v8195
      %v8310 = vunpack.c.l.b16 %v8197
      %v8311 = vunpack.c.l.b16 %v8198
      %v8312 = vunpack.c.l.b16 %v8199
      %v8313 = vunpack.c.l.b16 %v8201
      %v8314 = vunpack.c.l.b16 %v8202
      %v8315 = vunpack.c.l.b16 %v8203
      %v8316 = vunpack.c.l.b16 %v8205
      %v8317 = vunpack.c.l.b16 %v8206
      %v8318 = vunpack.c.l.b16 %v8207
      %v8319 = vunpack.c.l.b16 %v8209
      %v8320 = vunpack.c.l.b16 %v8210
      %v8321 = vunpack.c.l.b16 %v8211
      %v8322 = vunpack.c.l.b16 %v8213
      %v8323 = vunpack.c.l.b16 %v8214
      %v8324 = vunpack.c.l.b16 %v8215
      %v8325 = vunpack.c.l.b16 %v8217
      %v8326 = vunpack.c.l.b16 %v8218
      %v8327 = vunpack.c.l.b16 %v8219
      %v8328 = vunpack.c.l.b16 %v8221
      %v8329 = vunpack.c.l.b16 %v8222
      %v8330 = vunpack.c.l.b16 %v8223
      %v8331 = vunpack.c.l.b16 %v8225
      %v8332 = vunpack.c.l.b16 %v8226
      %v8333 = vunpack.c.l.b16 %v8227
      %v8334 = vunpack.c.l.b16 %v8229
      %v8335 = vunpack.c.l.b16 %v8230
      %v8336 = vunpack.c.l.b16 %v8231
      %v8337 = vpack.c.b16 %v8290, %v8289
      %v8338 = vpack.c.b16 %v8291, %v8291
      %v8339 = vpack.c.b16 %v8293, %v8292
      %v8340 = vpack.c.b16 %v8294, %v8294
      %v8341 = vpack.c.b16 %v8296, %v8295
      %v8342 = vpack.c.b16 %v8297, %v8297
      %v8343 = vpack.c.b16 %v8299, %v8298
      %v8344 = vpack.c.b16 %v8300, %v8300
      %v8345 = vpack.c.b16 %v8302, %v8301
      %v8346 = vpack.c.b16 %v8303, %v8303
      %v8347 = vpack.c.b16 %v8305, %v8304
      %v8348 = vpack.c.b16 %v8306, %v8306
      %v8349 = vpack.c.b16 %v8308, %v8307
      %v8350 = vpack.c.b16 %v8309, %v8309
      %v8351 = vpack.c.b16 %v8311, %v8310
      %v8352 = vpack.c.b16 %v8312, %v8312
      %v8353 = vpack.c.b16 %v8314, %v8313
      %v8354 = vpack.c.b16 %v8315, %v8315
      %v8355 = vpack.c.b16 %v8317, %v8316
      %v8356 = vpack.c.b16 %v8318, %v8318
      %v8357 = vpack.c.b16 %v8320, %v8319
      %v8358 = vpack.c.b16 %v8321, %v8321
      %v8359 = vpack.c.b16 %v8323, %v8322
      %v8360 = vpack.c.b16 %v8324, %v8324
      %v8361 = vpack.c.b16 %v8326, %v8325
      %v8362 = vpack.c.b16 %v8327, %v8327
      %v8363 = vpack.c.b16 %v8329, %v8328
      %v8364 = vpack.c.b16 %v8330, %v8330
      %v8365 = vpack.c.b16 %v8332, %v8331
      %v8366 = vpack.c.b16 %v8333, %v8333
      %v8367 = vpack.c.b16 %v8335, %v8334
      %v8368 = vpack.c.b16 %v8336, %v8336
      %v8369 = vpack.c.b16 %v8291, %v8290
      %v8370 = vpack.c.b16 %v8294, %v8293
      %v8371 = vpack.c.b16 %v8297, %v8296
      %v8372 = vpack.c.b16 %v8300, %v8299
      %v8373 = vpack.c.b16 %v8303, %v8302
      %v8374 = vpack.c.b16 %v8306, %v8305
      %v8375 = vpack.c.b16 %v8309, %v8308
      %v8376 = vpack.c.b16 %v8312, %v8311
      %v8377 = vpack.c.b16 %v8315, %v8314
      %v8378 = vpack.c.b16 %v8318, %v8317
      %v8379 = vpack.c.b16 %v8321, %v8320
      %v8380 = vpack.c.b16 %v8324, %v8323
      %v8381 = vpack.c.b16 %v8327, %v8326
      %v8382 = vpack.c.b16 %v8330, %v8329
      %v8383 = vpack.c.b16 %v8333, %v8332
      %v8384 = vpack.c.b16 %v8336, %v8335
      %v8386 = vshrl.u32 %v8369, 16
      %v8388 = vrot.slane %v8386, 4
      %v8389 = vshll.u32 %v8369, 16
      %v8391 = vrot.slane %v8389, 5
      %v8392 = vor.u32 %v8388, %v8391
      %v8394 = vshrl.u32 %v8370, 16
      %v8396 = vrot.slane %v8394, 4
      %v8397 = vshll.u32 %v8370, 16
      %v8399 = vrot.slane %v8397, 5
      %v8400 = vor.u32 %v8396, %v8399
      %v8402 = vshrl.u32 %v8371, 16
      %v8404 = vrot.slane %v8402, 4
      %v8405 = vshll.u32 %v8371, 16
      %v8407 = vrot.slane %v8405, 5
      %v8408 = vor.u32 %v8404, %v8407
      %v8410 = vshrl.u32 %v8372, 16
      %v8412 = vrot.slane %v8410, 4
      %v8413 = vshll.u32 %v8372, 16
      %v8415 = vrot.slane %v8413, 5
      %v8416 = vor.u32 %v8412, %v8415
      %v8418 = vshrl.u32 %v8373, 16
      %v8420 = vrot.slane %v8418, 4
      %v8421 = vshll.u32 %v8373, 16
      %v8423 = vrot.slane %v8421, 5
      %v8424 = vor.u32 %v8420, %v8423
      %v8426 = vshrl.u32 %v8374, 16
      %v8428 = vrot.slane %v8426, 4
      %v8429 = vshll.u32 %v8374, 16
      %v8431 = vrot.slane %v8429, 5
      %v8432 = vor.u32 %v8428, %v8431
      %v8434 = vshrl.u32 %v8375, 16
      %v8436 = vrot.slane %v8434, 4
      %v8437 = vshll.u32 %v8375, 16
      %v8439 = vrot.slane %v8437, 5
      %v8440 = vor.u32 %v8436, %v8439
      %v8442 = vshrl.u32 %v8376, 16
      %v8444 = vrot.slane %v8442, 4
      %v8445 = vshll.u32 %v8376, 16
      %v8447 = vrot.slane %v8445, 5
      %v8448 = vor.u32 %v8444, %v8447
      %v8450 = vshrl.u32 %v8377, 16
      %v8452 = vrot.slane %v8450, 4
      %v8453 = vshll.u32 %v8377, 16
      %v8455 = vrot.slane %v8453, 5
      %v8456 = vor.u32 %v8452, %v8455
      %v8458 = vshrl.u32 %v8378, 16
      %v8460 = vrot.slane %v8458, 4
      %v8461 = vshll.u32 %v8378, 16
      %v8463 = vrot.slane %v8461, 5
      %v8464 = vor.u32 %v8460, %v8463
      %v8466 = vshrl.u32 %v8379, 16
      %v8468 = vrot.slane %v8466, 4
      %v8469 = vshll.u32 %v8379, 16
      %v8471 = vrot.slane %v8469, 5
      %v8472 = vor.u32 %v8468, %v8471
      %v8474 = vshrl.u32 %v8380, 16
      %v8476 = vrot.slane %v8474, 4
      %v8477 = vshll.u32 %v8380, 16
      %v8479 = vrot.slane %v8477, 5
      %v8480 = vor.u32 %v8476, %v8479
      %v8482 = vshrl.u32 %v8381, 16
      %v8484 = vrot.slane %v8482, 4
      %v8485 = vshll.u32 %v8381, 16
      %v8487 = vrot.slane %v8485, 5
      %v8488 = vor.u32 %v8484, %v8487
      %v8490 = vshrl.u32 %v8382, 16
      %v8492 = vrot.slane %v8490, 4
      %v8493 = vshll.u32 %v8382, 16
      %v8495 = vrot.slane %v8493, 5
      %v8496 = vor.u32 %v8492, %v8495
      %v8498 = vshrl.u32 %v8383, 16
      %v8500 = vrot.slane %v8498, 4
      %v8501 = vshll.u32 %v8383, 16
      %v8503 = vrot.slane %v8501, 5
      %v8504 = vor.u32 %v8500, %v8503
      %v8506 = vshrl.u32 %v8384, 16
      %v8508 = vrot.slane %v8506, 4
      %v8509 = vshll.u32 %v8384, 16
      %v8511 = vrot.slane %v8509, 5
      %v8512 = vor.u32 %v8508, %v8511
      %8513 = vrot.lane.b32.xlu0 %v8392, 32
      %v8514 = vpop.permute.xlu0 %8513
      %8515 = vrot.lane.b32.xlu0 %v8400, 32
      %v8516 = vpop.permute.xlu0 %8515
      %8517 = vrot.lane.b32.xlu0 %v8408, 32
      %v8518 = vpop.permute.xlu0 %8517
      %8519 = vrot.lane.b32.xlu0 %v8416, 32
      %v8520 = vpop.permute.xlu0 %8519
      %8521 = vrot.lane.b32.xlu0 %v8424, 32
      %v8522 = vpop.permute.xlu0 %8521
      %8523 = vrot.lane.b32.xlu0 %v8432, 32
      %v8524 = vpop.permute.xlu0 %8523
      %8525 = vrot.lane.b32.xlu0 %v8440, 32
      %v8526 = vpop.permute.xlu0 %8525
      %8527 = vrot.lane.b32.xlu0 %v8448, 32
      %v8528 = vpop.permute.xlu0 %8527
      %8529 = vrot.lane.b32.xlu0 %v8456, 32
      %v8530 = vpop.permute.xlu0 %8529
      %8531 = vrot.lane.b32.xlu0 %v8464, 32
      %v8532 = vpop.permute.xlu0 %8531
      %8533 = vrot.lane.b32.xlu0 %v8472, 32
      %v8534 = vpop.permute.xlu0 %8533
      %8535 = vrot.lane.b32.xlu0 %v8480, 32
      %v8536 = vpop.permute.xlu0 %8535
      %8537 = vrot.lane.b32.xlu0 %v8488, 32
      %v8538 = vpop.permute.xlu0 %8537
      %8539 = vrot.lane.b32.xlu0 %v8496, 32
      %v8540 = vpop.permute.xlu0 %8539
      %8541 = vrot.lane.b32.xlu0 %v8504, 32
      %v8542 = vpop.permute.xlu0 %8541
      %8543 = vrot.lane.b32.xlu0 %v8512, 32
      %v8544 = vpop.permute.xlu0 %8543
      %v8561 = vunpack.c.l.b16 %v8172
      %v8562 = vunpack.c.l.b16 %v8176
      %v8563 = vunpack.c.l.b16 %v8180
      %v8564 = vunpack.c.l.b16 %v8184
      %v8565 = vunpack.c.l.b16 %v8188
      %v8566 = vunpack.c.l.b16 %v8192
      %v8567 = vunpack.c.l.b16 %v8196
      %v8568 = vunpack.c.l.b16 %v8200
      %v8569 = vunpack.c.l.b16 %v8204
      %v8570 = vunpack.c.l.b16 %v8208
      %v8571 = vunpack.c.l.b16 %v8212
      %v8572 = vunpack.c.l.b16 %v8216
      %v8573 = vunpack.c.l.b16 %v8220
      %v8574 = vunpack.c.l.b16 %v8224
      %v8575 = vunpack.c.l.b16 %v8228
      %v8576 = vunpack.c.l.b16 %v8232
      %v8577 = vpack.c.b16 %v8561, %v8561
      %v8578 = vpack.c.b16 %v8562, %v8562
      %v8579 = vpack.c.b16 %v8563, %v8563
      %v8580 = vpack.c.b16 %v8564, %v8564
      %v8581 = vpack.c.b16 %v8565, %v8565
      %v8582 = vpack.c.b16 %v8566, %v8566
      %v8583 = vpack.c.b16 %v8567, %v8567
      %v8584 = vpack.c.b16 %v8568, %v8568
      %v8585 = vpack.c.b16 %v8569, %v8569
      %v8586 = vpack.c.b16 %v8570, %v8570
      %v8587 = vpack.c.b16 %v8571, %v8571
      %v8588 = vpack.c.b16 %v8572, %v8572
      %v8589 = vpack.c.b16 %v8573, %v8573
      %v8590 = vpack.c.b16 %v8574, %v8574
      %v8591 = vpack.c.b16 %v8575, %v8575
      %v8592 = vpack.c.b16 %v8576, %v8576
      %v8593 = vrot.slane %v8369, 5
      %v8594 = vrot.slane %v8577, 5
      %v8595 = vsel %vm3473, %v8593, %v8594
      %v8596 = vrot.slane %v8370, 5
      %v8597 = vrot.slane %v8578, 5
      %v8598 = vsel %vm3473, %v8596, %v8597
      %v8599 = vrot.slane %v8371, 5
      %v8600 = vrot.slane %v8579, 5
      %v8601 = vsel %vm3473, %v8599, %v8600
      %v8602 = vrot.slane %v8372, 5
      %v8603 = vrot.slane %v8580, 5
      %v8604 = vsel %vm3473, %v8602, %v8603
      %v8605 = vrot.slane %v8373, 5
      %v8606 = vrot.slane %v8581, 5
      %v8607 = vsel %vm3473, %v8605, %v8606
      %v8608 = vrot.slane %v8374, 5
      %v8609 = vrot.slane %v8582, 5
      %v8610 = vsel %vm3473, %v8608, %v8609
      %v8611 = vrot.slane %v8375, 5
      %v8612 = vrot.slane %v8583, 5
      %v8613 = vsel %vm3473, %v8611, %v8612
      %v8614 = vrot.slane %v8376, 5
      %v8615 = vrot.slane %v8584, 5
      %v8616 = vsel %vm3473, %v8614, %v8615
      %v8617 = vrot.slane %v8377, 5
      %v8618 = vrot.slane %v8585, 5
      %v8619 = vsel %vm3473, %v8617, %v8618
      %v8620 = vrot.slane %v8378, 5
      %v8621 = vrot.slane %v8586, 5
      %v8622 = vsel %vm3473, %v8620, %v8621
      %v8623 = vrot.slane %v8379, 5
      %v8624 = vrot.slane %v8587, 5
      %v8625 = vsel %vm3473, %v8623, %v8624
      %v8626 = vrot.slane %v8380, 5
      %v8627 = vrot.slane %v8588, 5
      %v8628 = vsel %vm3473, %v8626, %v8627
      %v8629 = vrot.slane %v8381, 5
      %v8630 = vrot.slane %v8589, 5
      %v8631 = vsel %vm3473, %v8629, %v8630
      %v8632 = vrot.slane %v8382, 5
      %v8633 = vrot.slane %v8590, 5
      %v8634 = vsel %vm3473, %v8632, %v8633
      %v8635 = vrot.slane %v8383, 5
      %v8636 = vrot.slane %v8591, 5
      %v8637 = vsel %vm3473, %v8635, %v8636
      %v8638 = vrot.slane %v8384, 5
      %v8639 = vrot.slane %v8592, 5
      %v8640 = vsel %vm3473, %v8638, %v8639
      %8641 = vrot.lane.b32.xlu0 %v8593, 64
      %v8642 = vpop.permute.xlu0 %8641
      %8643 = vrot.lane.b32.xlu0 %v8595, 64
      %v8644 = vpop.permute.xlu0 %8643
      %8645 = vrot.lane.b32.xlu0 %v8596, 64
      %v8646 = vpop.permute.xlu0 %8645
      %8647 = vrot.lane.b32.xlu0 %v8598, 64
      %v8648 = vpop.permute.xlu0 %8647
      %8649 = vrot.lane.b32.xlu0 %v8599, 64
      %v8650 = vpop.permute.xlu0 %8649
      %8651 = vrot.lane.b32.xlu0 %v8601, 64
      %v8652 = vpop.permute.xlu0 %8651
      %8653 = vrot.lane.b32.xlu0 %v8602, 64
      %v8654 = vpop.permute.xlu0 %8653
      %8655 = vrot.lane.b32.xlu0 %v8604, 64
      %v8656 = vpop.permute.xlu0 %8655
      %8657 = vrot.lane.b32.xlu0 %v8605, 64
      %v8658 = vpop.permute.xlu0 %8657
      %8659 = vrot.lane.b32.xlu0 %v8607, 64
      %v8660 = vpop.permute.xlu0 %8659
      %8661 = vrot.lane.b32.xlu0 %v8608, 64
      %v8662 = vpop.permute.xlu0 %8661
      %8663 = vrot.lane.b32.xlu0 %v8610, 64
      %v8664 = vpop.permute.xlu0 %8663
      %8665 = vrot.lane.b32.xlu0 %v8611, 64
      %v8666 = vpop.permute.xlu0 %8665
      %8667 = vrot.lane.b32.xlu0 %v8613, 64
      %v8668 = vpop.permute.xlu0 %8667
      %8669 = vrot.lane.b32.xlu0 %v8614, 64
      %v8670 = vpop.permute.xlu0 %8669
      %8671 = vrot.lane.b32.xlu0 %v8616, 64
      %v8672 = vpop.permute.xlu0 %8671
      %8673 = vrot.lane.b32.xlu0 %v8617, 64
      %v8674 = vpop.permute.xlu0 %8673
      %8675 = vrot.lane.b32.xlu0 %v8619, 64
      %v8676 = vpop.permute.xlu0 %8675
      %8677 = vrot.lane.b32.xlu0 %v8620, 64
      %v8678 = vpop.permute.xlu0 %8677
      %8679 = vrot.lane.b32.xlu0 %v8622, 64
      %v8680 = vpop.permute.xlu0 %8679
      %8681 = vrot.lane.b32.xlu0 %v8623, 64
      %v8682 = vpop.permute.xlu0 %8681
      %8683 = vrot.lane.b32.xlu0 %v8625, 64
      %v8684 = vpop.permute.xlu0 %8683
      %8685 = vrot.lane.b32.xlu0 %v8626, 64
      %v8686 = vpop.permute.xlu0 %8685
      %8687 = vrot.lane.b32.xlu0 %v8628, 64
      %v8688 = vpop.permute.xlu0 %8687
      %8689 = vrot.lane.b32.xlu0 %v8629, 64
      %v8690 = vpop.permute.xlu0 %8689
      %8691 = vrot.lane.b32.xlu0 %v8631, 64
      %v8692 = vpop.permute.xlu0 %8691
      %8693 = vrot.lane.b32.xlu0 %v8632, 64
      %v8694 = vpop.permute.xlu0 %8693
      %8695 = vrot.lane.b32.xlu0 %v8634, 64
      %v8696 = vpop.permute.xlu0 %8695
      %8697 = vrot.lane.b32.xlu0 %v8635, 64
      %v8698 = vpop.permute.xlu0 %8697
      %8699 = vrot.lane.b32.xlu0 %v8637, 64
      %v8700 = vpop.permute.xlu0 %8699
      %8701 = vrot.lane.b32.xlu0 %v8638, 64
      %v8702 = vpop.permute.xlu0 %8701
      %8703 = vrot.lane.b32.xlu0 %v8640, 64
      %v8704 = vpop.permute.xlu0 %8703
      %v8708 = vunpack.c.l.b16 %v8233
      %v8709 = vunpack.c.l.b16 %v8234
      %v8710 = vunpack.c.l.b16 %v8235
      %v8711 = vpack.c.b16 %v8709, %v8708
      %v8712 = vpack.c.b16 %v8710, %v8710
      %8713 = vrot.lane.b32.xlu0 %v8339, 96
      %v8714 = vpop.permute.xlu0 %8713
      %8715 = vrot.lane.b32.xlu0 %v8340, 96
      %v8716 = vpop.permute.xlu0 %8715
      %8717 = vrot.lane.b32.xlu0 %v8341, 96
      %v8718 = vpop.permute.xlu0 %8717
      %8719 = vrot.lane.b32.xlu0 %v8342, 96
      %v8720 = vpop.permute.xlu0 %8719
      %8721 = vrot.lane.b32.xlu0 %v8343, 96
      %v8722 = vpop.permute.xlu0 %8721
      %8723 = vrot.lane.b32.xlu0 %v8344, 96
      %v8724 = vpop.permute.xlu0 %8723
      %8725 = vrot.lane.b32.xlu0 %v8345, 96
      %v8726 = vpop.permute.xlu0 %8725
      %8727 = vrot.lane.b32.xlu0 %v8346, 96
      %v8728 = vpop.permute.xlu0 %8727
      %8729 = vrot.lane.b32.xlu0 %v8347, 96
      %v8730 = vpop.permute.xlu0 %8729
      %8731 = vrot.lane.b32.xlu0 %v8348, 96
      %v8732 = vpop.permute.xlu0 %8731
      %8733 = vrot.lane.b32.xlu0 %v8349, 96
      %v8734 = vpop.permute.xlu0 %8733
      %8735 = vrot.lane.b32.xlu0 %v8350, 96
      %v8736 = vpop.permute.xlu0 %8735
      %8737 = vrot.lane.b32.xlu0 %v8351, 96
      %v8738 = vpop.permute.xlu0 %8737
      %8739 = vrot.lane.b32.xlu0 %v8352, 96
      %v8740 = vpop.permute.xlu0 %8739
      %8741 = vrot.lane.b32.xlu0 %v8353, 96
      %v8742 = vpop.permute.xlu0 %8741
      %8743 = vrot.lane.b32.xlu0 %v8354, 96
      %v8744 = vpop.permute.xlu0 %8743
      %8745 = vrot.lane.b32.xlu0 %v8355, 96
      %v8746 = vpop.permute.xlu0 %8745
      %8747 = vrot.lane.b32.xlu0 %v8356, 96
      %v8748 = vpop.permute.xlu0 %8747
      %8749 = vrot.lane.b32.xlu0 %v8357, 96
      %v8750 = vpop.permute.xlu0 %8749
      %8751 = vrot.lane.b32.xlu0 %v8358, 96
      %v8752 = vpop.permute.xlu0 %8751
      %8753 = vrot.lane.b32.xlu0 %v8359, 96
      %v8754 = vpop.permute.xlu0 %8753
      %8755 = vrot.lane.b32.xlu0 %v8360, 96
      %v8756 = vpop.permute.xlu0 %8755
      %8757 = vrot.lane.b32.xlu0 %v8361, 96
      %v8758 = vpop.permute.xlu0 %8757
      %8759 = vrot.lane.b32.xlu0 %v8362, 96
      %v8760 = vpop.permute.xlu0 %8759
      %8761 = vrot.lane.b32.xlu0 %v8363, 96
      %v8762 = vpop.permute.xlu0 %8761
      %8763 = vrot.lane.b32.xlu0 %v8364, 96
      %v8764 = vpop.permute.xlu0 %8763
      %8765 = vrot.lane.b32.xlu0 %v8365, 96
      %v8766 = vpop.permute.xlu0 %8765
      %8767 = vrot.lane.b32.xlu0 %v8366, 96
      %v8768 = vpop.permute.xlu0 %8767
      %8769 = vrot.lane.b32.xlu0 %v8367, 96
      %v8770 = vpop.permute.xlu0 %8769
      %8771 = vrot.lane.b32.xlu0 %v8368, 96
      %v8772 = vpop.permute.xlu0 %8771
      %8773 = vrot.lane.b32.xlu0 %v8711, 96
      %v8774 = vpop.permute.xlu0 %8773
      %8775 = vrot.lane.b32.xlu0 %v8712, 96
      %v8776 = vpop.permute.xlu0 %8775
      %v8777 = vpack.c.b16 %v8710, %v8709
      %v8779 = vshrl.u32 %v8777, 16
      %v8781 = vrot.slane %v8779, 4
      %v8782 = vshll.u32 %v8777, 16
      %v8784 = vrot.slane %v8782, 5
      %v8785 = vor.u32 %v8781, %v8784
      %v8787 = vunpack.c.l.b16 %v8236
      %v8788 = vpack.c.b16 %v8787, %v8787
      %v8789 = vrot.slane %v8777, 5
      %v8790 = vrot.slane %v8788, 5
      %v8791 = vsel %vm3473, %v8789, %v8790
      %8792 = vrot.lane.b32.xlu0 %v8596, 32
      %v8793 = vpop.permute.xlu0 %8792
      %8794 = vrot.lane.b32.xlu0 %v8598, 32
      %v8795 = vpop.permute.xlu0 %8794
      %8796 = vrot.lane.b32.xlu0 %v8599, 32
      %v8797 = vpop.permute.xlu0 %8796
      %8798 = vrot.lane.b32.xlu0 %v8601, 32
      %v8799 = vpop.permute.xlu0 %8798
      %8800 = vrot.lane.b32.xlu0 %v8602, 32
      %v8801 = vpop.permute.xlu0 %8800
      %8802 = vrot.lane.b32.xlu0 %v8604, 32
      %v8803 = vpop.permute.xlu0 %8802
      %8804 = vrot.lane.b32.xlu0 %v8605, 32
      %v8805 = vpop.permute.xlu0 %8804
      %8806 = vrot.lane.b32.xlu0 %v8607, 32
      %v8807 = vpop.permute.xlu0 %8806
      %8808 = vrot.lane.b32.xlu0 %v8608, 32
      %v8809 = vpop.permute.xlu0 %8808
      %8810 = vrot.lane.b32.xlu0 %v8610, 32
      %v8811 = vpop.permute.xlu0 %8810
      %8812 = vrot.lane.b32.xlu0 %v8611, 32
      %v8813 = vpop.permute.xlu0 %8812
      %8814 = vrot.lane.b32.xlu0 %v8613, 32
      %v8815 = vpop.permute.xlu0 %8814
      %8816 = vrot.lane.b32.xlu0 %v8614, 32
      %v8817 = vpop.permute.xlu0 %8816
      %8818 = vrot.lane.b32.xlu0 %v8616, 32
      %v8819 = vpop.permute.xlu0 %8818
      %8820 = vrot.lane.b32.xlu0 %v8617, 32
      %v8821 = vpop.permute.xlu0 %8820
      %8822 = vrot.lane.b32.xlu0 %v8619, 32
      %v8823 = vpop.permute.xlu0 %8822
      %8824 = vrot.lane.b32.xlu0 %v8620, 32
      %v8825 = vpop.permute.xlu0 %8824
      %8826 = vrot.lane.b32.xlu0 %v8622, 32
      %v8827 = vpop.permute.xlu0 %8826
      %8828 = vrot.lane.b32.xlu0 %v8623, 32
      %v8829 = vpop.permute.xlu0 %8828
      %8830 = vrot.lane.b32.xlu0 %v8625, 32
      %v8831 = vpop.permute.xlu0 %8830
      %8832 = vrot.lane.b32.xlu0 %v8626, 32
      %v8833 = vpop.permute.xlu0 %8832
      %8834 = vrot.lane.b32.xlu0 %v8628, 32
      %v8835 = vpop.permute.xlu0 %8834
      %8836 = vrot.lane.b32.xlu0 %v8629, 32
      %v8837 = vpop.permute.xlu0 %8836
      %8838 = vrot.lane.b32.xlu0 %v8631, 32
      %v8839 = vpop.permute.xlu0 %8838
      %8840 = vrot.lane.b32.xlu0 %v8632, 32
      %v8841 = vpop.permute.xlu0 %8840
      %8842 = vrot.lane.b32.xlu0 %v8634, 32
      %v8843 = vpop.permute.xlu0 %8842
      %8844 = vrot.lane.b32.xlu0 %v8635, 32
      %v8845 = vpop.permute.xlu0 %8844
      %8846 = vrot.lane.b32.xlu0 %v8637, 32
      %v8847 = vpop.permute.xlu0 %8846
      %8848 = vrot.lane.b32.xlu0 %v8638, 32
      %v8849 = vpop.permute.xlu0 %8848
      %8850 = vrot.lane.b32.xlu0 %v8640, 32
      %v8851 = vpop.permute.xlu0 %8850
      %8852 = vrot.lane.b32.xlu0 %v8789, 32
      %v8853 = vpop.permute.xlu0 %8852
      %8854 = vrot.lane.b32.xlu0 %v8791, 32
      %v8855 = vpop.permute.xlu0 %8854
      %v8859 = vunpack.c.l.b16 %v8237
      %v8860 = vunpack.c.l.b16 %v8238
      %v8861 = vunpack.c.l.b16 %v8239
      %v8862 = vpack.c.b16 %v8860, %v8859
      %v8863 = vpack.c.b16 %v8861, %v8861
      %8864 = vrot.lane.b32.xlu0 %v8341, 64
      %v8865 = vpop.permute.xlu0 %8864
      %8866 = vrot.lane.b32.xlu0 %v8342, 64
      %v8867 = vpop.permute.xlu0 %8866
      %8868 = vrot.lane.b32.xlu0 %v8343, 64
      %v8869 = vpop.permute.xlu0 %8868
      %8870 = vrot.lane.b32.xlu0 %v8344, 64
      %v8871 = vpop.permute.xlu0 %8870
      %8872 = vrot.lane.b32.xlu0 %v8345, 64
      %v8873 = vpop.permute.xlu0 %8872
      %8874 = vrot.lane.b32.xlu0 %v8346, 64
      %v8875 = vpop.permute.xlu0 %8874
      %8876 = vrot.lane.b32.xlu0 %v8347, 64
      %v8877 = vpop.permute.xlu0 %8876
      %8878 = vrot.lane.b32.xlu0 %v8348, 64
      %v8879 = vpop.permute.xlu0 %8878
      %8880 = vrot.lane.b32.xlu0 %v8349, 64
      %v8881 = vpop.permute.xlu0 %8880
      %8882 = vrot.lane.b32.xlu0 %v8350, 64
      %v8883 = vpop.permute.xlu0 %8882
      %8884 = vrot.lane.b32.xlu0 %v8351, 64
      %v8885 = vpop.permute.xlu0 %8884
      %8886 = vrot.lane.b32.xlu0 %v8352, 64
      %v8887 = vpop.permute.xlu0 %8886
      %8888 = vrot.lane.b32.xlu0 %v8353, 64
      %v8889 = vpop.permute.xlu0 %8888
      %8890 = vrot.lane.b32.xlu0 %v8354, 64
      %v8891 = vpop.permute.xlu0 %8890
      %8892 = vrot.lane.b32.xlu0 %v8355, 64
      %v8893 = vpop.permute.xlu0 %8892
      %8894 = vrot.lane.b32.xlu0 %v8356, 64
      %v8895 = vpop.permute.xlu0 %8894
      %8896 = vrot.lane.b32.xlu0 %v8357, 64
      %v8897 = vpop.permute.xlu0 %8896
      %8898 = vrot.lane.b32.xlu0 %v8358, 64
      %v8899 = vpop.permute.xlu0 %8898
      %8900 = vrot.lane.b32.xlu0 %v8359, 64
      %v8901 = vpop.permute.xlu0 %8900
      %8902 = vrot.lane.b32.xlu0 %v8360, 64
      %v8903 = vpop.permute.xlu0 %8902
      %8904 = vrot.lane.b32.xlu0 %v8361, 64
      %v8905 = vpop.permute.xlu0 %8904
      %8906 = vrot.lane.b32.xlu0 %v8362, 64
      %v8907 = vpop.permute.xlu0 %8906
      %8908 = vrot.lane.b32.xlu0 %v8363, 64
      %v8909 = vpop.permute.xlu0 %8908
      %8910 = vrot.lane.b32.xlu0 %v8364, 64
      %v8911 = vpop.permute.xlu0 %8910
      %8912 = vrot.lane.b32.xlu0 %v8365, 64
      %v8913 = vpop.permute.xlu0 %8912
      %8914 = vrot.lane.b32.xlu0 %v8366, 64
      %v8915 = vpop.permute.xlu0 %8914
      %8916 = vrot.lane.b32.xlu0 %v8367, 64
      %v8917 = vpop.permute.xlu0 %8916
      %8918 = vrot.lane.b32.xlu0 %v8368, 64
      %v8919 = vpop.permute.xlu0 %8918
      %8920 = vrot.lane.b32.xlu0 %v8711, 64
      %v8921 = vpop.permute.xlu0 %8920
      %8922 = vrot.lane.b32.xlu0 %v8712, 64
      %v8923 = vpop.permute.xlu0 %8922
      %8924 = vrot.lane.b32.xlu0 %v8862, 64
      %v8925 = vpop.permute.xlu0 %8924
      %8926 = vrot.lane.b32.xlu0 %v8863, 64
      %v8927 = vpop.permute.xlu0 %8926
      %v8928 = vpack.c.b16 %v8861, %v8860
      %v8930 = vshrl.u32 %v8928, 16
      %v8932 = vrot.slane %v8930, 4
      %v8933 = vshll.u32 %v8928, 16
      %v8935 = vrot.slane %v8933, 5
      %v8936 = vor.u32 %v8932, %v8935
      %8937 = vrot.lane.b32.xlu0 %v8408, 96
      %v8938 = vpop.permute.xlu0 %8937
      %8939 = vrot.lane.b32.xlu0 %v8416, 96
      %v8940 = vpop.permute.xlu0 %8939
      %8941 = vrot.lane.b32.xlu0 %v8424, 96
      %v8942 = vpop.permute.xlu0 %8941
      %8943 = vrot.lane.b32.xlu0 %v8432, 96
      %v8944 = vpop.permute.xlu0 %8943
      %8945 = vrot.lane.b32.xlu0 %v8440, 96
      %v8946 = vpop.permute.xlu0 %8945
      %8947 = vrot.lane.b32.xlu0 %v8448, 96
      %v8948 = vpop.permute.xlu0 %8947
      %8949 = vrot.lane.b32.xlu0 %v8456, 96
      %v8950 = vpop.permute.xlu0 %8949
      %8951 = vrot.lane.b32.xlu0 %v8464, 96
      %v8952 = vpop.permute.xlu0 %8951
      %8953 = vrot.lane.b32.xlu0 %v8472, 96
      %v8954 = vpop.permute.xlu0 %8953
      %8955 = vrot.lane.b32.xlu0 %v8480, 96
      %v8956 = vpop.permute.xlu0 %8955
      %8957 = vrot.lane.b32.xlu0 %v8488, 96
      %v8958 = vpop.permute.xlu0 %8957
      %8959 = vrot.lane.b32.xlu0 %v8496, 96
      %v8960 = vpop.permute.xlu0 %8959
      %8961 = vrot.lane.b32.xlu0 %v8504, 96
      %v8962 = vpop.permute.xlu0 %8961
      %8963 = vrot.lane.b32.xlu0 %v8512, 96
      %v8964 = vpop.permute.xlu0 %8963
      %8965 = vrot.lane.b32.xlu0 %v8785, 96
      %v8966 = vpop.permute.xlu0 %8965
      %8967 = vrot.lane.b32.xlu0 %v8936, 96
      %v8968 = vpop.permute.xlu0 %8967
      %v8970 = vunpack.c.l.b16 %v8240
      %v8971 = vpack.c.b16 %v8970, %v8970
      %v8972 = vrot.slane %v8928, 5
      %v8973 = vrot.slane %v8971, 5
      %v8974 = vsel %vm3473, %v8972, %v8973
      %v8977 = vsel %vm3969, %v8337, %v8514
      %v8979 = vsel %vm3969, %v8338, %v8514
      %v8982 = vsel %vm3969, %v8339, %v8516
      %v8984 = vsel %vm3969, %v8340, %v8516
      %v8987 = vsel %vm3969, %v8341, %v8518
      %v8989 = vsel %vm3969, %v8342, %v8518
      %v8992 = vsel %vm3969, %v8343, %v8520
      %v8994 = vsel %vm3969, %v8344, %v8520
      %v8997 = vsel %vm3969, %v8345, %v8522
      %v8999 = vsel %vm3969, %v8346, %v8522
      %v9002 = vsel %vm3969, %v8347, %v8524
      %v9004 = vsel %vm3969, %v8348, %v8524
      %v9007 = vsel %vm3969, %v8349, %v8526
      %v9009 = vsel %vm3969, %v8350, %v8526
      %v9012 = vsel %vm3969, %v8351, %v8528
      %v9014 = vsel %vm3969, %v8352, %v8528
      %v9017 = vsel %vm3969, %v8353, %v8530
      %v9019 = vsel %vm3969, %v8354, %v8530
      %v9022 = vsel %vm3969, %v8355, %v8532
      %v9024 = vsel %vm3969, %v8356, %v8532
      %v9027 = vsel %vm3969, %v8357, %v8534
      %v9029 = vsel %vm3969, %v8358, %v8534
      %v9032 = vsel %vm3969, %v8359, %v8536
      %v9034 = vsel %vm3969, %v8360, %v8536
      %v9037 = vsel %vm3969, %v8361, %v8538
      %v9039 = vsel %vm3969, %v8362, %v8538
      %v9042 = vsel %vm3969, %v8363, %v8540
      %v9044 = vsel %vm3969, %v8364, %v8540
      %v9047 = vsel %vm3969, %v8365, %v8542
      %v9049 = vsel %vm3969, %v8366, %v8542
      %v9052 = vsel %vm3969, %v8367, %v8544
      %v9054 = vsel %vm3969, %v8368, %v8544
      %v9056 = vsel %vm4099, %v8977, %v8642
      %v9058 = vsel %vm4099, %v8979, %v8644
      %v9060 = vsel %vm4099, %v8982, %v8646
      %v9062 = vsel %vm4099, %v8984, %v8648
      %v9064 = vsel %vm4099, %v8987, %v8650
      %v9066 = vsel %vm4099, %v8989, %v8652
      %v9068 = vsel %vm4099, %v8992, %v8654
      %v9070 = vsel %vm4099, %v8994, %v8656
      %v9072 = vsel %vm4099, %v8997, %v8658
      %v9074 = vsel %vm4099, %v8999, %v8660
      %v9076 = vsel %vm4099, %v9002, %v8662
      %v9078 = vsel %vm4099, %v9004, %v8664
      %v9080 = vsel %vm4099, %v9007, %v8666
      %v9082 = vsel %vm4099, %v9009, %v8668
      %v9084 = vsel %vm4099, %v9012, %v8670
      %v9086 = vsel %vm4099, %v9014, %v8672
      %v9088 = vsel %vm4099, %v9017, %v8674
      %v9090 = vsel %vm4099, %v9019, %v8676
      %v9092 = vsel %vm4099, %v9022, %v8678
      %v9094 = vsel %vm4099, %v9024, %v8680
      %v9096 = vsel %vm4099, %v9027, %v8682
      %v9098 = vsel %vm4099, %v9029, %v8684
      %v9100 = vsel %vm4099, %v9032, %v8686
      %v9102 = vsel %vm4099, %v9034, %v8688
      %v9104 = vsel %vm4099, %v9037, %v8690
      %v9106 = vsel %vm4099, %v9039, %v8692
      %v9108 = vsel %vm4099, %v9042, %v8694
      %v9110 = vsel %vm4099, %v9044, %v8696
      %v9112 = vsel %vm4099, %v9047, %v8698
      %v9114 = vsel %vm4099, %v9049, %v8700
      %v9116 = vsel %vm4099, %v9052, %v8702
      %v9118 = vsel %vm4099, %v9054, %v8704
      %v9120 = vsel %vm4213, %v9056, %v8714
      %v9122 = vsel %vm4213, %v9058, %v8716
      %v9124 = vsel %vm4213, %v9060, %v8718
      %v9126 = vsel %vm4213, %v9062, %v8720
      %v9128 = vsel %vm4213, %v9064, %v8722
      %v9130 = vsel %vm4213, %v9066, %v8724
      %v9132 = vsel %vm4213, %v9068, %v8726
      %v9134 = vsel %vm4213, %v9070, %v8728
      %v9136 = vsel %vm4213, %v9072, %v8730
      %v9138 = vsel %vm4213, %v9074, %v8732
      %v9140 = vsel %vm4213, %v9076, %v8734
      %v9142 = vsel %vm4213, %v9078, %v8736
      %v9144 = vsel %vm4213, %v9080, %v8738
      %v9146 = vsel %vm4213, %v9082, %v8740
      %v9148 = vsel %vm4213, %v9084, %v8742
      %v9150 = vsel %vm4213, %v9086, %v8744
      %v9152 = vsel %vm4213, %v9088, %v8746
      %v9154 = vsel %vm4213, %v9090, %v8748
      %v9156 = vsel %vm4213, %v9092, %v8750
      %v9158 = vsel %vm4213, %v9094, %v8752
      %v9160 = vsel %vm4213, %v9096, %v8754
      %v9162 = vsel %vm4213, %v9098, %v8756
      %v9164 = vsel %vm4213, %v9100, %v8758
      %v9166 = vsel %vm4213, %v9102, %v8760
      %v9168 = vsel %vm4213, %v9104, %v8762
      %v9170 = vsel %vm4213, %v9106, %v8764
      %v9172 = vsel %vm4213, %v9108, %v8766
      %v9174 = vsel %vm4213, %v9110, %v8768
      %v9176 = vsel %vm4213, %v9112, %v8770
      %v9178 = vsel %vm4213, %v9114, %v8772
      %v9180 = vsel %vm4213, %v9116, %v8774
      %v9182 = vsel %vm4213, %v9118, %v8776
      %v9185 = vsel %vm3969, %v8400, %v8793
      %v9187 = vsel %vm3969, %v8400, %v8795
      %v9190 = vsel %vm3969, %v8408, %v8797
      %v9192 = vsel %vm3969, %v8408, %v8799
      %v9195 = vsel %vm3969, %v8416, %v8801
      %v9197 = vsel %vm3969, %v8416, %v8803
      %v9200 = vsel %vm3969, %v8424, %v8805
      %v9202 = vsel %vm3969, %v8424, %v8807
      %v9205 = vsel %vm3969, %v8432, %v8809
      %v9207 = vsel %vm3969, %v8432, %v8811
      %v9210 = vsel %vm3969, %v8440, %v8813
      %v9212 = vsel %vm3969, %v8440, %v8815
      %v9215 = vsel %vm3969, %v8448, %v8817
      %v9217 = vsel %vm3969, %v8448, %v8819
      %v9220 = vsel %vm3969, %v8456, %v8821
      %v9222 = vsel %vm3969, %v8456, %v8823
      %v9225 = vsel %vm3969, %v8464, %v8825
      %v9227 = vsel %vm3969, %v8464, %v8827
      %v9230 = vsel %vm3969, %v8472, %v8829
      %v9232 = vsel %vm3969, %v8472, %v8831
      %v9235 = vsel %vm3969, %v8480, %v8833
      %v9237 = vsel %vm3969, %v8480, %v8835
      %v9240 = vsel %vm3969, %v8488, %v8837
      %v9242 = vsel %vm3969, %v8488, %v8839
      %v9245 = vsel %vm3969, %v8496, %v8841
      %v9247 = vsel %vm3969, %v8496, %v8843
      %v9250 = vsel %vm3969, %v8504, %v8845
      %v9252 = vsel %vm3969, %v8504, %v8847
      %v9255 = vsel %vm3969, %v8512, %v8849
      %v9257 = vsel %vm3969, %v8512, %v8851
      %v9260 = vsel %vm3969, %v8785, %v8853
      %v9262 = vsel %vm3969, %v8785, %v8855
      %v9264 = vsel %vm4099, %v9185, %v8865
      %v9266 = vsel %vm4099, %v9187, %v8867
      %v9268 = vsel %vm4099, %v9190, %v8869
      %v9270 = vsel %vm4099, %v9192, %v8871
      %v9272 = vsel %vm4099, %v9195, %v8873
      %v9274 = vsel %vm4099, %v9197, %v8875
      %v9276 = vsel %vm4099, %v9200, %v8877
      %v9278 = vsel %vm4099, %v9202, %v8879
      %v9280 = vsel %vm4099, %v9205, %v8881
      %v9282 = vsel %vm4099, %v9207, %v8883
      %v9284 = vsel %vm4099, %v9210, %v8885
      %v9286 = vsel %vm4099, %v9212, %v8887
      %v9288 = vsel %vm4099, %v9215, %v8889
      %v9290 = vsel %vm4099, %v9217, %v8891
      %v9292 = vsel %vm4099, %v9220, %v8893
      %v9294 = vsel %vm4099, %v9222, %v8895
      %v9296 = vsel %vm4099, %v9225, %v8897
      %v9298 = vsel %vm4099, %v9227, %v8899
      %v9300 = vsel %vm4099, %v9230, %v8901
      %v9302 = vsel %vm4099, %v9232, %v8903
      %v9304 = vsel %vm4099, %v9235, %v8905
      %v9306 = vsel %vm4099, %v9237, %v8907
      %v9308 = vsel %vm4099, %v9240, %v8909
      %v9310 = vsel %vm4099, %v9242, %v8911
      %v9312 = vsel %vm4099, %v9245, %v8913
      %v9314 = vsel %vm4099, %v9247, %v8915
      %v9316 = vsel %vm4099, %v9250, %v8917
      %v9318 = vsel %vm4099, %v9252, %v8919
      %v9320 = vsel %vm4099, %v9255, %v8921
      %v9322 = vsel %vm4099, %v9257, %v8923
      %v9324 = vsel %vm4099, %v9260, %v8925
      %v9326 = vsel %vm4099, %v9262, %v8927
      %v9328 = vsel %vm4213, %v9264, %v8938
      %v9329 = vsel %vm4213, %v9266, %v8938
      %v9331 = vsel %vm4213, %v9268, %v8940
      %v9332 = vsel %vm4213, %v9270, %v8940
      %v9334 = vsel %vm4213, %v9272, %v8942
      %v9335 = vsel %vm4213, %v9274, %v8942
      %v9337 = vsel %vm4213, %v9276, %v8944
      %v9338 = vsel %vm4213, %v9278, %v8944
      %v9340 = vsel %vm4213, %v9280, %v8946
      %v9341 = vsel %vm4213, %v9282, %v8946
      %v9343 = vsel %vm4213, %v9284, %v8948
      %v9344 = vsel %vm4213, %v9286, %v8948
      %v9346 = vsel %vm4213, %v9288, %v8950
      %v9347 = vsel %vm4213, %v9290, %v8950
      %v9349 = vsel %vm4213, %v9292, %v8952
      %v9350 = vsel %vm4213, %v9294, %v8952
      %v9352 = vsel %vm4213, %v9296, %v8954
      %v9353 = vsel %vm4213, %v9298, %v8954
      %v9355 = vsel %vm4213, %v9300, %v8956
      %v9356 = vsel %vm4213, %v9302, %v8956
      %v9358 = vsel %vm4213, %v9304, %v8958
      %v9359 = vsel %vm4213, %v9306, %v8958
      %v9361 = vsel %vm4213, %v9308, %v8960
      %v9362 = vsel %vm4213, %v9310, %v8960
      %v9364 = vsel %vm4213, %v9312, %v8962
      %v9365 = vsel %vm4213, %v9314, %v8962
      %v9367 = vsel %vm4213, %v9316, %v8964
      %v9368 = vsel %vm4213, %v9318, %v8964
      %v9370 = vsel %vm4213, %v9320, %v8966
      %v9371 = vsel %vm4213, %v9322, %v8966
      %v9373 = vsel %vm4213, %v9324, %v8968
      %v9374 = vsel %vm4213, %v9326, %v8968
      %v9375 = vld [vmem:[%s7] sm:$0xf]
      %v9376 = vld [vmem:[%s7 + $0x4] sm:$0xf]
      %v9377 = vld [vmem:[%s7 + $0x8] sm:$0xf]
      %v9378 = vld [vmem:[%s7 + $0xc] sm:$0xf]
      %v9379 = vld [vmem:[%s7 + $0x10] sm:$0xf]
      %v9380 = vld [vmem:[%s7 + $0x14] sm:$0xf]
      %v9381 = vld [vmem:[%s7 + $0x18] sm:$0xf]
      %v9382 = vld [vmem:[%s7 + $0x1c] sm:$0xf]
      %v9383 = vld [vmem:[%s7 + $0x20] sm:$0xf]
      %v9384 = vld [vmem:[%s7 + $0x24] sm:$0xf]
      %v9385 = vld [vmem:[%s7 + $0x28] sm:$0xf]
      %v9386 = vld [vmem:[%s7 + $0x2c] sm:$0xf]
      %v9387 = vld [vmem:[%s7 + $0x30] sm:$0xf]
      %v9388 = vld [vmem:[%s7 + $0x34] sm:$0xf]
      %v9389 = vld [vmem:[%s7 + $0x38] sm:$0xf]
      %v9390 = vld [vmem:[%s7 + $0x3c] sm:$0xf]
      %v9391 = vld [vmem:[%s7 + $0x40] sm:$0xf]
      %v9392 = vld [vmem:[%s7 + $0x44] sm:$0xf]
      %v9393 = vld [vmem:[%s7 + $0x48] sm:$0xf]
      %v9394 = vld [vmem:[%s7 + $0x4c] sm:$0xf]
      %v9395 = vld [vmem:[%s7 + $0x50] sm:$0xf]
      %v9396 = vld [vmem:[%s7 + $0x54] sm:$0xf]
      %v9397 = vld [vmem:[%s7 + $0x58] sm:$0xf]
      %v9398 = vld [vmem:[%s7 + $0x5c] sm:$0xf]
      %v9399 = vld [vmem:[%s7 + $0x60] sm:$0xf]
      %v9400 = vld [vmem:[%s7 + $0x64] sm:$0xf]
      %v9401 = vld [vmem:[%s7 + $0x68] sm:$0xf]
      %v9402 = vld [vmem:[%s7 + $0x6c] sm:$0xf]
      %v9403 = vld [vmem:[%s7 + $0x70] sm:$0xf]
      %v9404 = vld [vmem:[%s7 + $0x74] sm:$0xf]
      %v9405 = vld [vmem:[%s7 + $0x78] sm:$0xf]
      %v9406 = vld [vmem:[%s7 + $0x7c] sm:$0xf]
      %v9407 = vld [vmem:[%s7 + $0x80] sm:$0xf]
      %v9408 = vld [vmem:[%s7 + $0x84] sm:$0xf]
      %v9409 = vld [vmem:[%s7 + $0x88] sm:$0xf]
      %v9410 = vld [vmem:[%s7 + $0x8c] sm:$0xf]
      %v9411 = vld [vmem:[%s8] sm:$0x1]
      %v9413 = vlaneseq
      %v9414 = vshrl.u32 %v9413, 7
      %v9415 = vsub.s32 0, %v9414
      %v9416 = vrot.slane %v9411, %v9415
      %v9418 = vshrl.u32 %v9120, 16
      %v9420 = vrot.slane %v9418, 3
      %v9421 = vshll.u32 %v9120, 16
      %v9423 = vrot.slane %v9421, 4
      %v9424 = vor.u32 %v9420, %v9423
      %v9425 = vshrl.u32 %v9122, 16
      %v9427 = vrot.slane %v9425, 3
      %v9428 = vshll.u32 %v9122, 16
      %v9430 = vrot.slane %v9428, 4
      %v9431 = vor.u32 %v9427, %v9430
      %v9432 = vsel %vm4352, %v9424, %v9431
      %v9433 = vshrl.u32 %v9328, 16
      %v9435 = vrot.slane %v9433, 3
      %v9436 = vshll.u32 %v9328, 16
      %v9438 = vrot.slane %v9436, 4
      %v9439 = vor.u32 %v9435, %v9438
      %v9440 = vshrl.u32 %v9329, 16
      %v9442 = vrot.slane %v9440, 3
      %v9443 = vshll.u32 %v9329, 16
      %v9445 = vrot.slane %v9443, 4
      %v9446 = vor.u32 %v9442, %v9445
      %v9447 = vsel %vm4352, %v9439, %v9446
      %v9449 = vshrl.u32 %v8599, 16
      %v9451 = vrot.slane %v9449, 3
      %v9452 = vshll.u32 %v8599, 16
      %v9454 = vrot.slane %v9452, 4
      %v9455 = vor.u32 %v9451, %v9454
      %v9457 = vshrl.u32 %v8601, 16
      %v9459 = vrot.slane %v9457, 3
      %v9460 = vshll.u32 %v8601, 16
      %v9462 = vrot.slane %v9460, 4
      %v9463 = vor.u32 %v9459, %v9462
      %v9464 = vsel %vm4352, %v9455, %v9463
      %v9465 = vshrl.u32 %v9124, 16
      %v9467 = vrot.slane %v9465, 3
      %v9468 = vshll.u32 %v9124, 16
      %v9470 = vrot.slane %v9468, 4
      %v9471 = vor.u32 %v9467, %v9470
      %v9472 = vshrl.u32 %v9126, 16
      %v9474 = vrot.slane %v9472, 3
      %v9475 = vshll.u32 %v9126, 16
      %v9477 = vrot.slane %v9475, 4
      %v9478 = vor.u32 %v9474, %v9477
      %v9479 = vsel %vm4352, %v9471, %v9478
      %v9480 = vshrl.u32 %v9331, 16
      %v9482 = vrot.slane %v9480, 3
      %v9483 = vshll.u32 %v9331, 16
      %v9485 = vrot.slane %v9483, 4
      %v9486 = vor.u32 %v9482, %v9485
      %v9487 = vshrl.u32 %v9332, 16
      %v9489 = vrot.slane %v9487, 3
      %v9490 = vshll.u32 %v9332, 16
      %v9492 = vrot.slane %v9490, 4
      %v9493 = vor.u32 %v9489, %v9492
      %v9494 = vsel %vm4352, %v9486, %v9493
      %v9496 = vshrl.u32 %v8602, 16
      %v9498 = vrot.slane %v9496, 3
      %v9499 = vshll.u32 %v8602, 16
      %v9501 = vrot.slane %v9499, 4
      %v9502 = vor.u32 %v9498, %v9501
      %v9504 = vshrl.u32 %v8604, 16
      %v9506 = vrot.slane %v9504, 3
      %v9507 = vshll.u32 %v8604, 16
      %v9509 = vrot.slane %v9507, 4
      %v9510 = vor.u32 %v9506, %v9509
      %v9511 = vsel %vm4352, %v9502, %v9510
      %v9512 = vshrl.u32 %v9128, 16
      %v9514 = vrot.slane %v9512, 3
      %v9515 = vshll.u32 %v9128, 16
      %v9517 = vrot.slane %v9515, 4
      %v9518 = vor.u32 %v9514, %v9517
      %v9519 = vshrl.u32 %v9130, 16
      %v9521 = vrot.slane %v9519, 3
      %v9522 = vshll.u32 %v9130, 16
      %v9524 = vrot.slane %v9522, 4
      %v9525 = vor.u32 %v9521, %v9524
      %v9526 = vsel %vm4352, %v9518, %v9525
      %v9527 = vshrl.u32 %v9334, 16
      %v9529 = vrot.slane %v9527, 3
      %v9530 = vshll.u32 %v9334, 16
      %v9532 = vrot.slane %v9530, 4
      %v9533 = vor.u32 %v9529, %v9532
      %v9534 = vshrl.u32 %v9335, 16
      %v9536 = vrot.slane %v9534, 3
      %v9537 = vshll.u32 %v9335, 16
      %v9539 = vrot.slane %v9537, 4
      %v9540 = vor.u32 %v9536, %v9539
      %v9541 = vsel %vm4352, %v9533, %v9540
      %v9543 = vshrl.u32 %v8605, 16
      %v9545 = vrot.slane %v9543, 3
      %v9546 = vshll.u32 %v8605, 16
      %v9548 = vrot.slane %v9546, 4
      %v9549 = vor.u32 %v9545, %v9548
      %v9551 = vshrl.u32 %v8607, 16
      %v9553 = vrot.slane %v9551, 3
      %v9554 = vshll.u32 %v8607, 16
      %v9556 = vrot.slane %v9554, 4
      %v9557 = vor.u32 %v9553, %v9556
      %v9558 = vsel %vm4352, %v9549, %v9557
      %v9559 = vshrl.u32 %v9132, 16
      %v9561 = vrot.slane %v9559, 3
      %v9562 = vshll.u32 %v9132, 16
      %v9564 = vrot.slane %v9562, 4
      %v9565 = vor.u32 %v9561, %v9564
      %v9566 = vshrl.u32 %v9134, 16
      %v9568 = vrot.slane %v9566, 3
      %v9569 = vshll.u32 %v9134, 16
      %v9571 = vrot.slane %v9569, 4
      %v9572 = vor.u32 %v9568, %v9571
      %v9573 = vsel %vm4352, %v9565, %v9572
      %v9574 = vshrl.u32 %v9337, 16
      %v9576 = vrot.slane %v9574, 3
      %v9577 = vshll.u32 %v9337, 16
      %v9579 = vrot.slane %v9577, 4
      %v9580 = vor.u32 %v9576, %v9579
      %v9581 = vshrl.u32 %v9338, 16
      %v9583 = vrot.slane %v9581, 3
      %v9584 = vshll.u32 %v9338, 16
      %v9586 = vrot.slane %v9584, 4
      %v9587 = vor.u32 %v9583, %v9586
      %v9588 = vsel %vm4352, %v9580, %v9587
      %v9590 = vshrl.u32 %v8608, 16
      %v9592 = vrot.slane %v9590, 3
      %v9593 = vshll.u32 %v8608, 16
      %v9595 = vrot.slane %v9593, 4
      %v9596 = vor.u32 %v9592, %v9595
      %v9598 = vshrl.u32 %v8610, 16
      %v9600 = vrot.slane %v9598, 3
      %v9601 = vshll.u32 %v8610, 16
      %v9603 = vrot.slane %v9601, 4
      %v9604 = vor.u32 %v9600, %v9603
      %v9605 = vsel %vm4352, %v9596, %v9604
      %v9606 = vshrl.u32 %v9136, 16
      %v9608 = vrot.slane %v9606, 3
      %v9609 = vshll.u32 %v9136, 16
      %v9611 = vrot.slane %v9609, 4
      %v9612 = vor.u32 %v9608, %v9611
      %v9613 = vshrl.u32 %v9138, 16
      %v9615 = vrot.slane %v9613, 3
      %v9616 = vshll.u32 %v9138, 16
      %v9618 = vrot.slane %v9616, 4
      %v9619 = vor.u32 %v9615, %v9618
      %v9620 = vsel %vm4352, %v9612, %v9619
      %v9621 = vshrl.u32 %v9340, 16
      %v9623 = vrot.slane %v9621, 3
      %v9624 = vshll.u32 %v9340, 16
      %v9626 = vrot.slane %v9624, 4
      %v9627 = vor.u32 %v9623, %v9626
      %v9628 = vshrl.u32 %v9341, 16
      %v9630 = vrot.slane %v9628, 3
      %v9631 = vshll.u32 %v9341, 16
      %v9633 = vrot.slane %v9631, 4
      %v9634 = vor.u32 %v9630, %v9633
      %v9635 = vsel %vm4352, %v9627, %v9634
      %v9637 = vshrl.u32 %v8611, 16
      %v9639 = vrot.slane %v9637, 3
      %v9640 = vshll.u32 %v8611, 16
      %v9642 = vrot.slane %v9640, 4
      %v9643 = vor.u32 %v9639, %v9642
      %v9645 = vshrl.u32 %v8613, 16
      %v9647 = vrot.slane %v9645, 3
      %v9648 = vshll.u32 %v8613, 16
      %v9650 = vrot.slane %v9648, 4
      %v9651 = vor.u32 %v9647, %v9650
      %v9652 = vsel %vm4352, %v9643, %v9651
      %v9653 = vshrl.u32 %v9140, 16
      %v9655 = vrot.slane %v9653, 3
      %v9656 = vshll.u32 %v9140, 16
      %v9658 = vrot.slane %v9656, 4
      %v9659 = vor.u32 %v9655, %v9658
      %v9660 = vshrl.u32 %v9142, 16
      %v9662 = vrot.slane %v9660, 3
      %v9663 = vshll.u32 %v9142, 16
      %v9665 = vrot.slane %v9663, 4
      %v9666 = vor.u32 %v9662, %v9665
      %v9667 = vsel %vm4352, %v9659, %v9666
      %v9668 = vshrl.u32 %v9343, 16
      %v9670 = vrot.slane %v9668, 3
      %v9671 = vshll.u32 %v9343, 16
      %v9673 = vrot.slane %v9671, 4
      %v9674 = vor.u32 %v9670, %v9673
      %v9675 = vshrl.u32 %v9344, 16
      %v9677 = vrot.slane %v9675, 3
      %v9678 = vshll.u32 %v9344, 16
      %v9680 = vrot.slane %v9678, 4
      %v9681 = vor.u32 %v9677, %v9680
      %v9682 = vsel %vm4352, %v9674, %v9681
      %v9684 = vshrl.u32 %v8614, 16
      %v9686 = vrot.slane %v9684, 3
      %v9687 = vshll.u32 %v8614, 16
      %v9689 = vrot.slane %v9687, 4
      %v9690 = vor.u32 %v9686, %v9689
      %v9692 = vshrl.u32 %v8616, 16
      %v9694 = vrot.slane %v9692, 3
      %v9695 = vshll.u32 %v8616, 16
      %v9697 = vrot.slane %v9695, 4
      %v9698 = vor.u32 %v9694, %v9697
      %v9699 = vsel %vm4352, %v9690, %v9698
      %v9700 = vshrl.u32 %v9144, 16
      %v9702 = vrot.slane %v9700, 3
      %v9703 = vshll.u32 %v9144, 16
      %v9705 = vrot.slane %v9703, 4
      %v9706 = vor.u32 %v9702, %v9705
      %v9707 = vshrl.u32 %v9146, 16
      %v9709 = vrot.slane %v9707, 3
      %v9710 = vshll.u32 %v9146, 16
      %v9712 = vrot.slane %v9710, 4
      %v9713 = vor.u32 %v9709, %v9712
      %v9714 = vsel %vm4352, %v9706, %v9713
      %v9715 = vshrl.u32 %v9346, 16
      %v9717 = vrot.slane %v9715, 3
      %v9718 = vshll.u32 %v9346, 16
      %v9720 = vrot.slane %v9718, 4
      %v9721 = vor.u32 %v9717, %v9720
      %v9722 = vshrl.u32 %v9347, 16
      %v9724 = vrot.slane %v9722, 3
      %v9725 = vshll.u32 %v9347, 16
      %v9727 = vrot.slane %v9725, 4
      %v9728 = vor.u32 %v9724, %v9727
      %v9729 = vsel %vm4352, %v9721, %v9728
      %v9731 = vshrl.u32 %v8617, 16
      %v9733 = vrot.slane %v9731, 3
      %v9734 = vshll.u32 %v8617, 16
      %v9736 = vrot.slane %v9734, 4
      %v9737 = vor.u32 %v9733, %v9736
      %v9739 = vshrl.u32 %v8619, 16
      %v9741 = vrot.slane %v9739, 3
      %v9742 = vshll.u32 %v8619, 16
      %v9744 = vrot.slane %v9742, 4
      %v9745 = vor.u32 %v9741, %v9744
      %v9746 = vsel %vm4352, %v9737, %v9745
      %v9747 = vshrl.u32 %v9148, 16
      %v9749 = vrot.slane %v9747, 3
      %v9750 = vshll.u32 %v9148, 16
      %v9752 = vrot.slane %v9750, 4
      %v9753 = vor.u32 %v9749, %v9752
      %v9754 = vshrl.u32 %v9150, 16
      %v9756 = vrot.slane %v9754, 3
      %v9757 = vshll.u32 %v9150, 16
      %v9759 = vrot.slane %v9757, 4
      %v9760 = vor.u32 %v9756, %v9759
      %v9761 = vsel %vm4352, %v9753, %v9760
      %v9762 = vshrl.u32 %v9349, 16
      %v9764 = vrot.slane %v9762, 3
      %v9765 = vshll.u32 %v9349, 16
      %v9767 = vrot.slane %v9765, 4
      %v9768 = vor.u32 %v9764, %v9767
      %v9769 = vshrl.u32 %v9350, 16
      %v9771 = vrot.slane %v9769, 3
      %v9772 = vshll.u32 %v9350, 16
      %v9774 = vrot.slane %v9772, 4
      %v9775 = vor.u32 %v9771, %v9774
      %v9776 = vsel %vm4352, %v9768, %v9775
      %v9778 = vshrl.u32 %v8620, 16
      %v9780 = vrot.slane %v9778, 3
      %v9781 = vshll.u32 %v8620, 16
      %v9783 = vrot.slane %v9781, 4
      %v9784 = vor.u32 %v9780, %v9783
      %v9786 = vshrl.u32 %v8622, 16
      %v9788 = vrot.slane %v9786, 3
      %v9789 = vshll.u32 %v8622, 16
      %v9791 = vrot.slane %v9789, 4
      %v9792 = vor.u32 %v9788, %v9791
      %v9793 = vsel %vm4352, %v9784, %v9792
      %v9794 = vshrl.u32 %v9152, 16
      %v9796 = vrot.slane %v9794, 3
      %v9797 = vshll.u32 %v9152, 16
      %v9799 = vrot.slane %v9797, 4
      %v9800 = vor.u32 %v9796, %v9799
      %v9801 = vshrl.u32 %v9154, 16
      %v9803 = vrot.slane %v9801, 3
      %v9804 = vshll.u32 %v9154, 16
      %v9806 = vrot.slane %v9804, 4
      %v9807 = vor.u32 %v9803, %v9806
      %v9808 = vsel %vm4352, %v9800, %v9807
      %v9809 = vshrl.u32 %v9352, 16
      %v9811 = vrot.slane %v9809, 3
      %v9812 = vshll.u32 %v9352, 16
      %v9814 = vrot.slane %v9812, 4
      %v9815 = vor.u32 %v9811, %v9814
      %v9816 = vshrl.u32 %v9353, 16
      %v9818 = vrot.slane %v9816, 3
      %v9819 = vshll.u32 %v9353, 16
      %v9821 = vrot.slane %v9819, 4
      %v9822 = vor.u32 %v9818, %v9821
      %v9823 = vsel %vm4352, %v9815, %v9822
      %v9825 = vshrl.u32 %v8623, 16
      %v9827 = vrot.slane %v9825, 3
      %v9828 = vshll.u32 %v8623, 16
      %v9830 = vrot.slane %v9828, 4
      %v9831 = vor.u32 %v9827, %v9830
      %v9833 = vshrl.u32 %v8625, 16
      %v9835 = vrot.slane %v9833, 3
      %v9836 = vshll.u32 %v8625, 16
      %v9838 = vrot.slane %v9836, 4
      %v9839 = vor.u32 %v9835, %v9838
      %v9840 = vsel %vm4352, %v9831, %v9839
      %v9841 = vshrl.u32 %v9156, 16
      %v9843 = vrot.slane %v9841, 3
      %v9844 = vshll.u32 %v9156, 16
      %v9846 = vrot.slane %v9844, 4
      %v9847 = vor.u32 %v9843, %v9846
      %v9848 = vshrl.u32 %v9158, 16
      %v9850 = vrot.slane %v9848, 3
      %v9851 = vshll.u32 %v9158, 16
      %v9853 = vrot.slane %v9851, 4
      %v9854 = vor.u32 %v9850, %v9853
      %v9855 = vsel %vm4352, %v9847, %v9854
      %v9856 = vshrl.u32 %v9355, 16
      %v9858 = vrot.slane %v9856, 3
      %v9859 = vshll.u32 %v9355, 16
      %v9861 = vrot.slane %v9859, 4
      %v9862 = vor.u32 %v9858, %v9861
      %v9863 = vshrl.u32 %v9356, 16
      %v9865 = vrot.slane %v9863, 3
      %v9866 = vshll.u32 %v9356, 16
      %v9868 = vrot.slane %v9866, 4
      %v9869 = vor.u32 %v9865, %v9868
      %v9870 = vsel %vm4352, %v9862, %v9869
      %v9872 = vshrl.u32 %v8626, 16
      %v9874 = vrot.slane %v9872, 3
      %v9875 = vshll.u32 %v8626, 16
      %v9877 = vrot.slane %v9875, 4
      %v9878 = vor.u32 %v9874, %v9877
      %v9880 = vshrl.u32 %v8628, 16
      %v9882 = vrot.slane %v9880, 3
      %v9883 = vshll.u32 %v8628, 16
      %v9885 = vrot.slane %v9883, 4
      %v9886 = vor.u32 %v9882, %v9885
      %v9887 = vsel %vm4352, %v9878, %v9886
      %v9888 = vshrl.u32 %v9160, 16
      %v9890 = vrot.slane %v9888, 3
      %v9891 = vshll.u32 %v9160, 16
      %v9893 = vrot.slane %v9891, 4
      %v9894 = vor.u32 %v9890, %v9893
      %v9895 = vshrl.u32 %v9162, 16
      %v9897 = vrot.slane %v9895, 3
      %v9898 = vshll.u32 %v9162, 16
      %v9900 = vrot.slane %v9898, 4
      %v9901 = vor.u32 %v9897, %v9900
      %v9902 = vsel %vm4352, %v9894, %v9901
      %v9903 = vshrl.u32 %v9358, 16
      %v9905 = vrot.slane %v9903, 3
      %v9906 = vshll.u32 %v9358, 16
      %v9908 = vrot.slane %v9906, 4
      %v9909 = vor.u32 %v9905, %v9908
      %v9910 = vshrl.u32 %v9359, 16
      %v9912 = vrot.slane %v9910, 3
      %v9913 = vshll.u32 %v9359, 16
      %v9915 = vrot.slane %v9913, 4
      %v9916 = vor.u32 %v9912, %v9915
      %v9917 = vsel %vm4352, %v9909, %v9916
      %v9919 = vshrl.u32 %v8629, 16
      %v9921 = vrot.slane %v9919, 3
      %v9922 = vshll.u32 %v8629, 16
      %v9924 = vrot.slane %v9922, 4
      %v9925 = vor.u32 %v9921, %v9924
      %v9927 = vshrl.u32 %v8631, 16
      %v9929 = vrot.slane %v9927, 3
      %v9930 = vshll.u32 %v8631, 16
      %v9932 = vrot.slane %v9930, 4
      %v9933 = vor.u32 %v9929, %v9932
      %v9934 = vsel %vm4352, %v9925, %v9933
      %v9935 = vshrl.u32 %v9164, 16
      %v9937 = vrot.slane %v9935, 3
      %v9938 = vshll.u32 %v9164, 16
      %v9940 = vrot.slane %v9938, 4
      %v9941 = vor.u32 %v9937, %v9940
      %v9942 = vshrl.u32 %v9166, 16
      %v9944 = vrot.slane %v9942, 3
      %v9945 = vshll.u32 %v9166, 16
      %v9947 = vrot.slane %v9945, 4
      %v9948 = vor.u32 %v9944, %v9947
      %v9949 = vsel %vm4352, %v9941, %v9948
      %v9950 = vshrl.u32 %v9361, 16
      %v9952 = vrot.slane %v9950, 3
      %v9953 = vshll.u32 %v9361, 16
      %v9955 = vrot.slane %v9953, 4
      %v9956 = vor.u32 %v9952, %v9955
      %v9957 = vshrl.u32 %v9362, 16
      %v9959 = vrot.slane %v9957, 3
      %v9960 = vshll.u32 %v9362, 16
      %v9962 = vrot.slane %v9960, 4
      %v9963 = vor.u32 %v9959, %v9962
      %v9964 = vsel %vm4352, %v9956, %v9963
      %v9966 = vshrl.u32 %v8632, 16
      %v9968 = vrot.slane %v9966, 3
      %v9969 = vshll.u32 %v8632, 16
      %v9971 = vrot.slane %v9969, 4
      %v9972 = vor.u32 %v9968, %v9971
      %v9974 = vshrl.u32 %v8634, 16
      %v9976 = vrot.slane %v9974, 3
      %v9977 = vshll.u32 %v8634, 16
      %v9979 = vrot.slane %v9977, 4
      %v9980 = vor.u32 %v9976, %v9979
      %v9981 = vsel %vm4352, %v9972, %v9980
      %v9982 = vshrl.u32 %v9168, 16
      %v9984 = vrot.slane %v9982, 3
      %v9985 = vshll.u32 %v9168, 16
      %v9987 = vrot.slane %v9985, 4
      %v9988 = vor.u32 %v9984, %v9987
      %v9989 = vshrl.u32 %v9170, 16
      %v9991 = vrot.slane %v9989, 3
      %v9992 = vshll.u32 %v9170, 16
      %v9994 = vrot.slane %v9992, 4
      %v9995 = vor.u32 %v9991, %v9994
      %v9996 = vsel %vm4352, %v9988, %v9995
      %v9997 = vshrl.u32 %v9364, 16
      %v9999 = vrot.slane %v9997, 3
      %v10000 = vshll.u32 %v9364, 16
      %v10002 = vrot.slane %v10000, 4
      %v10003 = vor.u32 %v9999, %v10002
      %v10004 = vshrl.u32 %v9365, 16
      %v10006 = vrot.slane %v10004, 3
      %v10007 = vshll.u32 %v9365, 16
      %v10009 = vrot.slane %v10007, 4
      %v10010 = vor.u32 %v10006, %v10009
      %v10011 = vsel %vm4352, %v10003, %v10010
      %v10013 = vshrl.u32 %v8635, 16
      %v10015 = vrot.slane %v10013, 3
      %v10016 = vshll.u32 %v8635, 16
      %v10018 = vrot.slane %v10016, 4
      %v10019 = vor.u32 %v10015, %v10018
      %v10021 = vshrl.u32 %v8637, 16
      %v10023 = vrot.slane %v10021, 3
      %v10024 = vshll.u32 %v8637, 16
      %v10026 = vrot.slane %v10024, 4
      %v10027 = vor.u32 %v10023, %v10026
      %v10028 = vsel %vm4352, %v10019, %v10027
      %v10029 = vshrl.u32 %v9172, 16
      %v10031 = vrot.slane %v10029, 3
      %v10032 = vshll.u32 %v9172, 16
      %v10034 = vrot.slane %v10032, 4
      %v10035 = vor.u32 %v10031, %v10034
      %v10036 = vshrl.u32 %v9174, 16
      %v10038 = vrot.slane %v10036, 3
      %v10039 = vshll.u32 %v9174, 16
      %v10041 = vrot.slane %v10039, 4
      %v10042 = vor.u32 %v10038, %v10041
      %v10043 = vsel %vm4352, %v10035, %v10042
      %v10044 = vshrl.u32 %v9367, 16
      %v10046 = vrot.slane %v10044, 3
      %v10047 = vshll.u32 %v9367, 16
      %v10049 = vrot.slane %v10047, 4
      %v10050 = vor.u32 %v10046, %v10049
      %v10051 = vshrl.u32 %v9368, 16
      %v10053 = vrot.slane %v10051, 3
      %v10054 = vshll.u32 %v9368, 16
      %v10056 = vrot.slane %v10054, 4
      %v10057 = vor.u32 %v10053, %v10056
      %v10058 = vsel %vm4352, %v10050, %v10057
      %v10060 = vshrl.u32 %v8638, 16
      %v10062 = vrot.slane %v10060, 3
      %v10063 = vshll.u32 %v8638, 16
      %v10065 = vrot.slane %v10063, 4
      %v10066 = vor.u32 %v10062, %v10065
      %v10068 = vshrl.u32 %v8640, 16
      %v10070 = vrot.slane %v10068, 3
      %v10071 = vshll.u32 %v8640, 16
      %v10073 = vrot.slane %v10071, 4
      %v10074 = vor.u32 %v10070, %v10073
      %v10075 = vsel %vm4352, %v10066, %v10074
      %v10076 = vshrl.u32 %v9176, 16
      %v10078 = vrot.slane %v10076, 3
      %v10079 = vshll.u32 %v9176, 16
      %v10081 = vrot.slane %v10079, 4
      %v10082 = vor.u32 %v10078, %v10081
      %v10083 = vshrl.u32 %v9178, 16
      %v10085 = vrot.slane %v10083, 3
      %v10086 = vshll.u32 %v9178, 16
      %v10088 = vrot.slane %v10086, 4
      %v10089 = vor.u32 %v10085, %v10088
      %v10090 = vsel %vm4352, %v10082, %v10089
      %v10091 = vshrl.u32 %v9370, 16
      %v10093 = vrot.slane %v10091, 3
      %v10094 = vshll.u32 %v9370, 16
      %v10096 = vrot.slane %v10094, 4
      %v10097 = vor.u32 %v10093, %v10096
      %v10098 = vshrl.u32 %v9371, 16
      %v10100 = vrot.slane %v10098, 3
      %v10101 = vshll.u32 %v9371, 16
      %v10103 = vrot.slane %v10101, 4
      %v10104 = vor.u32 %v10100, %v10103
      %v10105 = vsel %vm4352, %v10097, %v10104
      %v10107 = vshrl.u32 %v8789, 16
      %v10109 = vrot.slane %v10107, 3
      %v10110 = vshll.u32 %v8789, 16
      %v10112 = vrot.slane %v10110, 4
      %v10113 = vor.u32 %v10109, %v10112
      %v10115 = vshrl.u32 %v8791, 16
      %v10117 = vrot.slane %v10115, 3
      %v10118 = vshll.u32 %v8791, 16
      %v10120 = vrot.slane %v10118, 4
      %v10121 = vor.u32 %v10117, %v10120
      %v10122 = vsel %vm4352, %v10113, %v10121
      %v10123 = vshrl.u32 %v9180, 16
      %v10125 = vrot.slane %v10123, 3
      %v10126 = vshll.u32 %v9180, 16
      %v10128 = vrot.slane %v10126, 4
      %v10129 = vor.u32 %v10125, %v10128
      %v10130 = vshrl.u32 %v9182, 16
      %v10132 = vrot.slane %v10130, 3
      %v10133 = vshll.u32 %v9182, 16
      %v10135 = vrot.slane %v10133, 4
      %v10136 = vor.u32 %v10132, %v10135
      %v10137 = vsel %vm4352, %v10129, %v10136
      %v10138 = vshrl.u32 %v9373, 16
      %v10140 = vrot.slane %v10138, 3
      %v10141 = vshll.u32 %v9373, 16
      %v10143 = vrot.slane %v10141, 4
      %v10144 = vor.u32 %v10140, %v10143
      %v10145 = vshrl.u32 %v9374, 16
      %v10147 = vrot.slane %v10145, 3
      %v10148 = vshll.u32 %v9374, 16
      %v10150 = vrot.slane %v10148, 4
      %v10151 = vor.u32 %v10147, %v10150
      %v10152 = vsel %vm4352, %v10144, %v10151
      %v10154 = vshrl.u32 %v8972, 16
      %v10156 = vrot.slane %v10154, 3
      %v10157 = vshll.u32 %v8972, 16
      %v10159 = vrot.slane %v10157, 4
      %v10160 = vor.u32 %v10156, %v10159
      %v10162 = vshrl.u32 %v8974, 16
      %v10164 = vrot.slane %v10162, 3
      %v10165 = vshll.u32 %v8974, 16
      %v10167 = vrot.slane %v10165, 4
      %v10168 = vor.u32 %v10164, %v10167
      %v10169 = vsel %vm4352, %v10160, %v10168
      %v10238 = vunpack.c.l.b16 %v9375
      %v10239 = vunpack.c.l.b16 %v9376
      %v10240 = vunpack.c.l.b16 %v9377
      %v10241 = vunpack.c.l.b16 %v9378
      %v10242 = vunpack.c.l.b16 %v9379
      %v10243 = vunpack.c.l.b16 %v9380
      %v10244 = vunpack.c.l.b16 %v9381
      %v10245 = vunpack.c.l.b16 %v9382
      %v10246 = vunpack.c.l.b16 %v9383
      %v10247 = vunpack.c.l.b16 %v9384
      %v10248 = vunpack.c.l.b16 %v9385
      %v10249 = vunpack.c.l.b16 %v9386
      %v10250 = vunpack.c.l.b16 %v9387
      %v10251 = vunpack.c.l.b16 %v9388
      %v10252 = vunpack.c.l.b16 %v9389
      %v10253 = vunpack.c.l.b16 %v9390
      %v10254 = vunpack.c.l.b16 %v9391
      %v10255 = vunpack.c.l.b16 %v9392
      %v10256 = vunpack.c.l.b16 %v9393
      %v10257 = vunpack.c.l.b16 %v9394
      %v10258 = vunpack.c.l.b16 %v9395
      %v10259 = vunpack.c.l.b16 %v9396
      %v10260 = vunpack.c.l.b16 %v9397
      %v10261 = vunpack.c.l.b16 %v9398
      %v10262 = vunpack.c.l.b16 %v9399
      %v10263 = vunpack.c.l.b16 %v9400
      %v10264 = vunpack.c.l.b16 %v9401
      %v10265 = vunpack.c.l.b16 %v9402
      %v10266 = vunpack.c.l.b16 %v9403
      %v10267 = vunpack.c.l.b16 %v9404
      %v10268 = vunpack.c.l.b16 %v9405
      %v10269 = vunpack.c.l.b16 %v9406
      %v10270 = vunpack.c.l.b16 %v9407
      %v10271 = vunpack.c.l.b16 %v9408
      %v10272 = vunpack.c.l.b16 %v9409
      %v10273 = vunpack.c.l.b16 %v9410
      %v10274 = vpack.c.b16 %v10239, %v10238
      %v10275 = vpack.c.b16 %v10241, %v10240
      %v10276 = vpack.c.b16 %v10243, %v10242
      %v10277 = vpack.c.b16 %v10245, %v10244
      %v10278 = vpack.c.b16 %v10247, %v10246
      %v10279 = vpack.c.b16 %v10249, %v10248
      %v10280 = vpack.c.b16 %v10251, %v10250
      %v10281 = vpack.c.b16 %v10253, %v10252
      %v10282 = vpack.c.b16 %v10255, %v10254
      %v10283 = vpack.c.b16 %v10257, %v10256
      %v10284 = vpack.c.b16 %v10259, %v10258
      %v10285 = vpack.c.b16 %v10261, %v10260
      %v10286 = vpack.c.b16 %v10263, %v10262
      %v10287 = vpack.c.b16 %v10265, %v10264
      %v10288 = vpack.c.b16 %v10267, %v10266
      %v10289 = vpack.c.b16 %v10269, %v10268
      %v10290 = vpack.c.b16 %v10271, %v10270
      %v10291 = vpack.c.b16 %v10273, %v10272
      %v10311 = vsel %vm3969, %v9464, 0
      %v10314 = vsel %vm3969, %v9511, 0
      %v10317 = vsel %vm3969, %v9558, 0
      %v10320 = vsel %vm3969, %v9605, 0
      %v10323 = vsel %vm3969, %v9652, 0
      %v10326 = vsel %vm3969, %v9699, 0
      %v10329 = vsel %vm3969, %v9746, 0
      %v10332 = vsel %vm3969, %v9793, 0
      %v10335 = vsel %vm3969, %v9840, 0
      %v10338 = vsel %vm3969, %v9887, 0
      %v10341 = vsel %vm3969, %v9934, 0
      %v10344 = vsel %vm3969, %v9981, 0
      %v10347 = vsel %vm3969, %v10028, 0
      %v10350 = vsel %vm3969, %v10075, 0
      %v10353 = vsel %vm3969, %v10122, 0
      %v10356 = vsel %vm3969, %v10169, 0
      %10358 = vmatprep.subr.bf16.mxu0 0
      %10359 = vmatpush1.bf16.msra.mxu0 %v10281
      %10360 = vmatprep.subr.bf16.mxu0 0
      %10361 = vmatpush1.bf16.msra.mxu0 %v10280
      %10362 = vmatprep.subr.bf16.mxu0 0
      %10363 = vmatpush1.bf16.msra.mxu0 %v10279
      %10364 = vmatprep.subr.bf16.mxu0 0
      %10365 = vmatpush1.bf16.msra.mxu0 %v10278
      %10366 = vmatprep.subr.bf16.mxu0 0
      %10367 = vmatpush1.bf16.msra.mxu0 %v10277
      %10368 = vmatprep.subr.bf16.mxu0 0
      %10369 = vmatpush1.bf16.msra.mxu0 %v10276
      %10370 = vmatprep.subr.bf16.mxu0 0
      %10371 = vmatpush1.bf16.msra.mxu0 %v10275
      %10372 = vmatprep.subr.bf16.mxu0 0
      %10373 = vmatpush1.bf16.msra.mxu0 %v10274
      %10374 = vmatprep.subr.bf16.mxu0 0
      %10375 = vmatpush2.bf16.msra.mxu0 %v10289
      %10376 = vmatprep.subr.bf16.mxu0 0
      %10377 = vmatpush2.bf16.msra.mxu0 %v10288
      %10378 = vmatprep.subr.bf16.mxu0 0
      %10379 = vmatpush2.bf16.msra.mxu0 %v10287
      %10380 = vmatprep.subr.bf16.mxu0 0
      %10381 = vmatpush2.bf16.msra.mxu0 %v10286
      %10382 = vmatprep.subr.bf16.mxu0 0
      %10383 = vmatpush2.bf16.msra.mxu0 %v10285
      %10384 = vmatprep.subr.bf16.mxu0 0
      %10385 = vmatpush2.bf16.msra.mxu0 %v10284
      %10386 = vmatprep.subr.bf16.mxu0 0
      %10387 = vmatpush2.bf16.msra.mxu0 %v10283
      %10388 = vmatprep.subr.bf16.mxu0 0
      %10389 = vmatpush2.bf16.msra.mxu0 %v10282
      %10390 = vmatprep.mubr.bf16.mxu0 %v9447
      %10391 = vmatmul.mubr.bf16.gmra.mxu0 %v9432
      %v10392 = vpop.f32.mrf.mxu0
      %v10393 = vadd.f32 %v9416, %v10392
      %v10394 = vpop.f32.mrf.mxu0
      %v10395 = vpop.f32.mrf.mxu0
      %v10396 = vadd.f32 %v9416, %v10395
      %v10397 = vpop.f32.mrf.mxu0
      %10398 = vmatprep.mubr.bf16.mxu0 %v9494
      %10399 = vmatmul.mubr.bf16.gmra.mxu0 %v9479
      %v10400 = vpop.f32.mrf.mxu0
      %v10401 = vadd.f32 %v9416, %v10400
      %v10402 = vpop.f32.mrf.mxu0
      %v10403 = vpop.f32.mrf.mxu0
      %v10404 = vadd.f32 %v9416, %v10403
      %v10405 = vpop.f32.mrf.mxu0
      %10406 = vmatprep.mubr.bf16.mxu0 %v9541
      %10407 = vmatmul.mubr.bf16.gmra.mxu0 %v9526
      %v10408 = vpop.f32.mrf.mxu0
      %v10409 = vadd.f32 %v9416, %v10408
      %v10410 = vpop.f32.mrf.mxu0
      %v10411 = vpop.f32.mrf.mxu0
      %v10412 = vadd.f32 %v9416, %v10411
      %v10413 = vpop.f32.mrf.mxu0
      %10414 = vmatprep.mubr.bf16.mxu0 %v9588
      %10415 = vmatmul.mubr.bf16.gmra.mxu0 %v9573
      %v10416 = vpop.f32.mrf.mxu0
      %v10417 = vadd.f32 %v9416, %v10416
      %v10418 = vpop.f32.mrf.mxu0
      %v10419 = vpop.f32.mrf.mxu0
      %v10420 = vadd.f32 %v9416, %v10419
      %v10421 = vpop.f32.mrf.mxu0
      %10422 = vmatprep.mubr.bf16.mxu0 %v9635
      %10423 = vmatmul.mubr.bf16.gmra.mxu0 %v9620
      %v10424 = vpop.f32.mrf.mxu0
      %v10425 = vadd.f32 %v9416, %v10424
      %v10426 = vpop.f32.mrf.mxu0
      %v10427 = vpop.f32.mrf.mxu0
      %v10428 = vadd.f32 %v9416, %v10427
      %v10429 = vpop.f32.mrf.mxu0
      %10430 = vmatprep.mubr.bf16.mxu0 %v9682
      %10431 = vmatmul.mubr.bf16.gmra.mxu0 %v9667
      %v10432 = vpop.f32.mrf.mxu0
      %v10433 = vadd.f32 %v9416, %v10432
      %v10434 = vpop.f32.mrf.mxu0
      %v10435 = vpop.f32.mrf.mxu0
      %v10436 = vadd.f32 %v9416, %v10435
      %v10437 = vpop.f32.mrf.mxu0
      %10438 = vmatprep.mubr.bf16.mxu0 %v9729
      %10439 = vmatmul.mubr.bf16.gmra.mxu0 %v9714
      %v10440 = vpop.f32.mrf.mxu0
      %v10441 = vadd.f32 %v9416, %v10440
      %v10442 = vpop.f32.mrf.mxu0
      %v10443 = vpop.f32.mrf.mxu0
      %v10444 = vadd.f32 %v9416, %v10443
      %v10445 = vpop.f32.mrf.mxu0
      %10446 = vmatprep.mubr.bf16.mxu0 %v9776
      %10447 = vmatmul.mubr.bf16.gmra.mxu0 %v9761
      %v10448 = vpop.f32.mrf.mxu0
      %v10449 = vadd.f32 %v9416, %v10448
      %v10450 = vpop.f32.mrf.mxu0
      %v10451 = vpop.f32.mrf.mxu0
      %v10452 = vadd.f32 %v9416, %v10451
      %v10453 = vpop.f32.mrf.mxu0
      %10454 = vmatprep.mubr.bf16.mxu0 %v9823
      %10455 = vmatmul.mubr.bf16.gmra.mxu0 %v9808
      %v10456 = vpop.f32.mrf.mxu0
      %v10457 = vadd.f32 %v9416, %v10456
      %v10458 = vpop.f32.mrf.mxu0
      %v10459 = vpop.f32.mrf.mxu0
      %v10460 = vadd.f32 %v9416, %v10459
      %v10461 = vpop.f32.mrf.mxu0
      %10462 = vmatprep.mubr.bf16.mxu0 %v9870
      %10463 = vmatmul.mubr.bf16.gmra.mxu0 %v9855
      %v10464 = vpop.f32.mrf.mxu0
      %v10465 = vadd.f32 %v9416, %v10464
      %v10466 = vpop.f32.mrf.mxu0
      %v10467 = vpop.f32.mrf.mxu0
      %v10468 = vadd.f32 %v9416, %v10467
      %v10469 = vpop.f32.mrf.mxu0
      %10470 = vmatprep.mubr.bf16.mxu0 %v9917
      %10471 = vmatmul.mubr.bf16.gmra.mxu0 %v9902
      %v10472 = vpop.f32.mrf.mxu0
      %v10473 = vadd.f32 %v9416, %v10472
      %v10474 = vpop.f32.mrf.mxu0
      %v10475 = vpop.f32.mrf.mxu0
      %v10476 = vadd.f32 %v9416, %v10475
      %v10477 = vpop.f32.mrf.mxu0
      %10478 = vmatprep.mubr.bf16.mxu0 %v9964
      %10479 = vmatmul.mubr.bf16.gmra.mxu0 %v9949
      %v10480 = vpop.f32.mrf.mxu0
      %v10481 = vadd.f32 %v9416, %v10480
      %v10482 = vpop.f32.mrf.mxu0
      %v10483 = vpop.f32.mrf.mxu0
      %v10484 = vadd.f32 %v9416, %v10483
      %v10485 = vpop.f32.mrf.mxu0
      %10486 = vmatprep.mubr.bf16.mxu0 %v10011
      %10487 = vmatmul.mubr.bf16.gmra.mxu0 %v9996
      %v10488 = vpop.f32.mrf.mxu0
      %v10489 = vadd.f32 %v9416, %v10488
      %v10490 = vpop.f32.mrf.mxu0
      %v10491 = vpop.f32.mrf.mxu0
      %v10492 = vadd.f32 %v9416, %v10491
      %v10493 = vpop.f32.mrf.mxu0
      %10494 = vmatprep.mubr.bf16.mxu0 %v10058
      %10495 = vmatmul.mubr.bf16.gmra.mxu0 %v10043
      %v10496 = vpop.f32.mrf.mxu0
      %v10497 = vadd.f32 %v9416, %v10496
      %v10498 = vpop.f32.mrf.mxu0
      %v10499 = vpop.f32.mrf.mxu0
      %v10500 = vadd.f32 %v9416, %v10499
      %v10501 = vpop.f32.mrf.mxu0
      %10502 = vmatprep.mubr.bf16.mxu0 %v10105
      %10503 = vmatmul.mubr.bf16.gmra.mxu0 %v10090
      %v10504 = vpop.f32.mrf.mxu0
      %v10505 = vadd.f32 %v9416, %v10504
      %v10506 = vpop.f32.mrf.mxu0
      %v10507 = vpop.f32.mrf.mxu0
      %v10508 = vadd.f32 %v9416, %v10507
      %v10509 = vpop.f32.mrf.mxu0
      %10510 = vmatprep.mubr.bf16.mxu0 %v10152
      %10511 = vmatmul.mubr.bf16.gmra.mxu0 %v10137
      %v10512 = vpop.f32.mrf.mxu0
      %v10513 = vadd.f32 %v9416, %v10512
      %v10514 = vpop.f32.mrf.mxu0
      %v10515 = vpop.f32.mrf.mxu0
      %v10516 = vadd.f32 %v9416, %v10515
      %v10517 = vpop.f32.mrf.mxu0
      %10518 = vdwg.mxu0
      %10519 = vmatprep.subr.bf16.mxu0 0
      %10520 = vmatpush1.bf16.msra.mxu0 0
      %10521 = vmatprep.subr.bf16.mxu0 0
      %10522 = vmatpush1.bf16.msra.mxu0 0
      %10523 = vmatprep.subr.bf16.mxu0 0
      %10524 = vmatpush1.bf16.msra.mxu0 0
      %10525 = vmatprep.subr.bf16.mxu0 0
      %10526 = vmatpush1.bf16.msra.mxu0 0
      %10527 = vmatprep.subr.bf16.mxu0 0
      %10528 = vmatpush1.bf16.msra.mxu0 0
      %10529 = vmatprep.subr.bf16.mxu0 0
      %10530 = vmatpush1.bf16.msra.mxu0 0
      %10531 = vmatprep.subr.bf16.mxu0 0
      %10532 = vmatpush1.bf16.msra.mxu0 %v10291
      %10533 = vmatprep.subr.bf16.mxu0 0
      %10534 = vmatpush1.bf16.msra.mxu0 %v10290
      %10535 = vmatprep.subr.bf16.mxu0 0
      %10536 = vmatpush2.bf16.msra.mxu0 0
      %10537 = vmatprep.subr.bf16.mxu0 0
      %10538 = vmatpush2.bf16.msra.mxu0 0
      %10539 = vmatprep.subr.bf16.mxu0 0
      %10540 = vmatpush2.bf16.msra.mxu0 0
      %10541 = vmatprep.subr.bf16.mxu0 0
      %10542 = vmatpush2.bf16.msra.mxu0 0
      %10543 = vmatprep.subr.bf16.mxu0 0
      %10544 = vmatpush2.bf16.msra.mxu0 0
      %10545 = vmatprep.subr.bf16.mxu0 0
      %10546 = vmatpush2.bf16.msra.mxu0 0
      %10547 = vmatprep.subr.bf16.mxu0 0
      %10548 = vmatpush2.bf16.msra.mxu0 0
      %10549 = vmatprep.subr.bf16.mxu0 0
      %10550 = vmatpush2.bf16.msra.mxu0 0
      %10551 = vmatprep.mubr.bf16.mxu0 0
      %10552 = vmatmul.mubr.bf16.gmra.mxu0 %v10311
      %v10553 = vpop.f32.mrf.mxu0
      %v10554 = vadd.f32 %v10393, %v10553
      %v10555 = vpop.f32.mrf.mxu0
      %v10556 = vpop.f32.mrf.mxu0
      %v10557 = vadd.f32 %v10396, %v10556
      %v10558 = vpop.f32.mrf.mxu0
      %10559 = vmatprep.mubr.bf16.mxu0 0
      %10560 = vmatmul.mubr.bf16.gmra.mxu0 %v10314
      %v10561 = vpop.f32.mrf.mxu0
      %v10562 = vadd.f32 %v10401, %v10561
      %v10563 = vpop.f32.mrf.mxu0
      %v10564 = vpop.f32.mrf.mxu0
      %v10565 = vadd.f32 %v10404, %v10564
      %v10566 = vpop.f32.mrf.mxu0
      %10567 = vmatprep.mubr.bf16.mxu0 0
      %10568 = vmatmul.mubr.bf16.gmra.mxu0 %v10317
      %v10569 = vpop.f32.mrf.mxu0
      %v10570 = vadd.f32 %v10409, %v10569
      %v10571 = vpop.f32.mrf.mxu0
      %v10572 = vpop.f32.mrf.mxu0
      %v10573 = vadd.f32 %v10412, %v10572
      %v10574 = vpop.f32.mrf.mxu0
      %10575 = vmatprep.mubr.bf16.mxu0 0
      %10576 = vmatmul.mubr.bf16.gmra.mxu0 %v10320
      %v10577 = vpop.f32.mrf.mxu0
      %v10578 = vadd.f32 %v10417, %v10577
      %v10579 = vpop.f32.mrf.mxu0
      %v10580 = vpop.f32.mrf.mxu0
      %v10581 = vadd.f32 %v10420, %v10580
      %v10582 = vpop.f32.mrf.mxu0
      %10583 = vmatprep.mubr.bf16.mxu0 0
      %10584 = vmatmul.mubr.bf16.gmra.mxu0 %v10323
      %v10585 = vpop.f32.mrf.mxu0
      %v10586 = vadd.f32 %v10425, %v10585
      %v10587 = vpop.f32.mrf.mxu0
      %v10588 = vpop.f32.mrf.mxu0
      %v10589 = vadd.f32 %v10428, %v10588
      %v10590 = vpop.f32.mrf.mxu0
      %10591 = vmatprep.mubr.bf16.mxu0 0
      %10592 = vmatmul.mubr.bf16.gmra.mxu0 %v10326
      %v10593 = vpop.f32.mrf.mxu0
      %v10594 = vadd.f32 %v10433, %v10593
      %v10595 = vpop.f32.mrf.mxu0
      %v10596 = vpop.f32.mrf.mxu0
      %v10597 = vadd.f32 %v10436, %v10596
      %v10598 = vpop.f32.mrf.mxu0
      %10599 = vmatprep.mubr.bf16.mxu0 0
      %10600 = vmatmul.mubr.bf16.gmra.mxu0 %v10329
      %v10601 = vpop.f32.mrf.mxu0
      %v10602 = vadd.f32 %v10441, %v10601
      %v10603 = vpop.f32.mrf.mxu0
      %v10604 = vpop.f32.mrf.mxu0
      %v10605 = vadd.f32 %v10444, %v10604
      %v10606 = vpop.f32.mrf.mxu0
      %10607 = vmatprep.mubr.bf16.mxu0 0
      %10608 = vmatmul.mubr.bf16.gmra.mxu0 %v10332
      %v10609 = vpop.f32.mrf.mxu0
      %v10610 = vadd.f32 %v10449, %v10609
      %v10611 = vpop.f32.mrf.mxu0
      %v10612 = vpop.f32.mrf.mxu0
      %v10613 = vadd.f32 %v10452, %v10612
      %v10614 = vpop.f32.mrf.mxu0
      %10615 = vmatprep.mubr.bf16.mxu0 0
      %10616 = vmatmul.mubr.bf16.gmra.mxu0 %v10335
      %v10617 = vpop.f32.mrf.mxu0
      %v10618 = vadd.f32 %v10457, %v10617
      %v10619 = vpop.f32.mrf.mxu0
      %v10620 = vpop.f32.mrf.mxu0
      %v10621 = vadd.f32 %v10460, %v10620
      %v10622 = vpop.f32.mrf.mxu0
      %10623 = vmatprep.mubr.bf16.mxu0 0
      %10624 = vmatmul.mubr.bf16.gmra.mxu0 %v10338
      %v10625 = vpop.f32.mrf.mxu0
      %v10626 = vadd.f32 %v10465, %v10625
      %v10627 = vpop.f32.mrf.mxu0
      %v10628 = vpop.f32.mrf.mxu0
      %v10629 = vadd.f32 %v10468, %v10628
      %v10630 = vpop.f32.mrf.mxu0
      %10631 = vmatprep.mubr.bf16.mxu0 0
      %10632 = vmatmul.mubr.bf16.gmra.mxu0 %v10341
      %v10633 = vpop.f32.mrf.mxu0
      %v10634 = vadd.f32 %v10473, %v10633
      %v10635 = vpop.f32.mrf.mxu0
      %v10636 = vpop.f32.mrf.mxu0
      %v10637 = vadd.f32 %v10476, %v10636
      %v10638 = vpop.f32.mrf.mxu0
      %10639 = vmatprep.mubr.bf16.mxu0 0
      %10640 = vmatmul.mubr.bf16.gmra.mxu0 %v10344
      %v10641 = vpop.f32.mrf.mxu0
      %v10642 = vadd.f32 %v10481, %v10641
      %v10643 = vpop.f32.mrf.mxu0
      %v10644 = vpop.f32.mrf.mxu0
      %v10645 = vadd.f32 %v10484, %v10644
      %v10646 = vpop.f32.mrf.mxu0
      %10647 = vmatprep.mubr.bf16.mxu0 0
      %10648 = vmatmul.mubr.bf16.gmra.mxu0 %v10347
      %v10649 = vpop.f32.mrf.mxu0
      %v10650 = vadd.f32 %v10489, %v10649
      %v10651 = vpop.f32.mrf.mxu0
      %v10652 = vpop.f32.mrf.mxu0
      %v10653 = vadd.f32 %v10492, %v10652
      %v10654 = vpop.f32.mrf.mxu0
      %10655 = vmatprep.mubr.bf16.mxu0 0
      %10656 = vmatmul.mubr.bf16.gmra.mxu0 %v10350
      %v10657 = vpop.f32.mrf.mxu0
      %v10658 = vadd.f32 %v10497, %v10657
      %v10659 = vpop.f32.mrf.mxu0
      %v10660 = vpop.f32.mrf.mxu0
      %v10661 = vadd.f32 %v10500, %v10660
      %v10662 = vpop.f32.mrf.mxu0
      %10663 = vmatprep.mubr.bf16.mxu0 0
      %10664 = vmatmul.mubr.bf16.gmra.mxu0 %v10353
      %v10665 = vpop.f32.mrf.mxu0
      %v10666 = vadd.f32 %v10505, %v10665
      %v10667 = vpop.f32.mrf.mxu0
      %v10668 = vpop.f32.mrf.mxu0
      %v10669 = vadd.f32 %v10508, %v10668
      %v10670 = vpop.f32.mrf.mxu0
      %10671 = vmatprep.mubr.bf16.mxu0 0
      %10672 = vmatmul.mubr.bf16.gmra.mxu0 %v10356
      %v10673 = vpop.f32.mrf.mxu0
      %v10674 = vadd.f32 %v10513, %v10673
      %v10675 = vpop.f32.mrf.mxu0
      %v10676 = vpop.f32.mrf.mxu0
      %v10677 = vadd.f32 %v10516, %v10676
      %v10678 = vpop.f32.mrf.mxu0
      %10679 = vdwg.mxu0
      %v10680 = vtanh.pop %v10554
      %v10681 = vtanh.pop %v10557
      %v10682 = vtanh.pop %v10562
      %v10683 = vtanh.pop %v10565
      %v10684 = vtanh.pop %v10570
      %v10685 = vtanh.pop %v10573
      %v10686 = vtanh.pop %v10578
      %v10687 = vtanh.pop %v10581
      %v10688 = vtanh.pop %v10586
      %v10689 = vtanh.pop %v10589
      %v10690 = vtanh.pop %v10594
      %v10691 = vtanh.pop %v10597
      %v10692 = vtanh.pop %v10602
      %v10693 = vtanh.pop %v10605
      %v10694 = vtanh.pop %v10610
      %v10695 = vtanh.pop %v10613
      %v10696 = vtanh.pop %v10618
      %v10697 = vtanh.pop %v10621
      %v10698 = vtanh.pop %v10626
      %v10699 = vtanh.pop %v10629
      %v10700 = vtanh.pop %v10634
      %v10701 = vtanh.pop %v10637
      %v10702 = vtanh.pop %v10642
      %v10703 = vtanh.pop %v10645
      %v10704 = vtanh.pop %v10650
      %v10705 = vtanh.pop %v10653
      %v10706 = vtanh.pop %v10658
      %v10707 = vtanh.pop %v10661
      %v10708 = vtanh.pop %v10666
      %v10709 = vtanh.pop %v10669
      %v10710 = vtanh.pop %v10674
      %v10711 = vtanh.pop %v10677
      %vm10712 = vcmask 15360
      %10713 = vst.msk [vmem:[%s332] sm:$0xff] %vm10712, %v10680
      %10714 = vst.msk [vmem:[%s332 + $0x8] sm:$0xff] %vm10712, %v10681
      %10715 = vst.msk [vmem:[%s332 + $0x10] sm:$0xff] %vm10712, %v10682
      %10716 = vst.msk [vmem:[%s332 + $0x18] sm:$0xff] %vm10712, %v10683
      %10717 = vst.msk [vmem:[%s332 + $0x20] sm:$0xff] %vm10712, %v10684
      %10718 = vst.msk [vmem:[%s332 + $0x28] sm:$0xff] %vm10712, %v10685
      %10719 = vst.msk [vmem:[%s332 + $0x30] sm:$0xff] %vm10712, %v10686
      %10720 = vst.msk [vmem:[%s332 + $0x38] sm:$0xff] %vm10712, %v10687
      %10721 = vst.msk [vmem:[%s332 + $0x40] sm:$0xff] %vm10712, %v10688
      %10722 = vst.msk [vmem:[%s332 + $0x48] sm:$0xff] %vm10712, %v10689
      %10723 = vst.msk [vmem:[%s332 + $0x50] sm:$0xff] %vm10712, %v10690
      %10724 = vst.msk [vmem:[%s332 + $0x58] sm:$0xff] %vm10712, %v10691
      %10725 = vst.msk [vmem:[%s332 + $0x60] sm:$0xff] %vm10712, %v10692
      %10726 = vst.msk [vmem:[%s332 + $0x68] sm:$0xff] %vm10712, %v10693
      %10727 = vst.msk [vmem:[%s332 + $0x70] sm:$0xff] %vm10712, %v10694
      %10728 = vst.msk [vmem:[%s332 + $0x78] sm:$0xff] %vm10712, %v10695
      %10729 = vst.msk [vmem:[%s332 + $0x80] sm:$0xff] %vm10712, %v10696
      %10730 = vst.msk [vmem:[%s332 + $0x88] sm:$0xff] %vm10712, %v10697
      %10731 = vst.msk [vmem:[%s332 + $0x90] sm:$0xff] %vm10712, %v10698
      %10732 = vst.msk [vmem:[%s332 + $0x98] sm:$0xff] %vm10712, %v10699
      %10733 = vst.msk [vmem:[%s332 + $0xa0] sm:$0xff] %vm10712, %v10700
      %10734 = vst.msk [vmem:[%s332 + $0xa8] sm:$0xff] %vm10712, %v10701
      %10735 = vst.msk [vmem:[%s332 + $0xb0] sm:$0xff] %vm10712, %v10702
      %10736 = vst.msk [vmem:[%s332 + $0xb8] sm:$0xff] %vm10712, %v10703
      %10737 = vst.msk [vmem:[%s332 + $0xc0] sm:$0xff] %vm10712, %v10704
      %10738 = vst.msk [vmem:[%s332 + $0xc8] sm:$0xff] %vm10712, %v10705
      %10739 = vst.msk [vmem:[%s332 + $0xd0] sm:$0xff] %vm10712, %v10706
      %10740 = vst.msk [vmem:[%s332 + $0xd8] sm:$0xff] %vm10712, %v10707
      %10741 = vst.msk [vmem:[%s332 + $0xe0] sm:$0xff] %vm10712, %v10708
      %10742 = vst.msk [vmem:[%s332 + $0xe8] sm:$0xff] %vm10712, %v10709
      %10743 = vst.msk [vmem:[%s332 + $0xf0] sm:$0xff] %vm10712, %v10710
      %10744 = vst.msk [vmem:[%s332 + $0xf8] sm:$0xff] %vm10712, %v10711
      %p10745 = scmp.lt.s32.totalorder %s20, 1
      %s10746 = scalar_select %p10745, %s20, 1
      %s10747 = smul.addr %s10746, 32
      %s10748 = smul.addr %s10747, 8
      %s10749 = scalar_lea.vmem %s9, %s10748
      // Predicated region
      $region57: #{decompose_net_forward.1} parent=55 // pred_check
        %p10750 = pneg %p232
      $region58: #{decompose_net_forward.1} parent=55 // pred_check_branch
        %10752 = sbr.rel (%p10750) target = $region60
      $region59: #{decompose_net_forward.1} parent=55 // pred_region
        _
      $region60: #{decompose_net_forward.1} parent=55 // pred_fallthru
        _
    $region56: #{decompose_net_forward.1} parent=5 // pred_fallthru
      _
    %p10753 = scmp.le.s32.totalorder 2, %s15
    // Predicated region
    $region61: #{decompose_net_forward.1} parent=5 // pred_check
      %p10754 = pneg %p10753
    $region62: #{decompose_net_forward.1} parent=5 // pred_check_branch
      %10756 = sbr.rel (%p10754) target = $region64
    $region63: #{decompose_net_forward.1} parent=5 // pred_region
      %s10757 = ssub.s32 %s15, 2
      // Predicated region
      $region65: #{decompose_net_forward.1} parent=63 // pred_check
        %p10758 = pneg %p238
      $region66: #{decompose_net_forward.1} parent=63 // pred_check_branch
        %10760 = sbr.rel (%p10758) target = $region68
      $region67: #{decompose_net_forward.1} parent=63 // pred_region
        %p10761 = scmp.lt.s32.totalorder %s21, 1
        %s10762 = scalar_select %p10761, %s21, 1
        %s10763 = smul.addr %s10762, 32
        %s10764 = smul.addr %s10763, 8
        %s10765 = scalar_lea.vmem %s9, %s10764
      $region68: #{decompose_net_forward.1} parent=63 // pred_fallthru
        _
    $region64: #{decompose_net_forward.1} parent=5 // pred_fallthru
      _
  $region6: #{decompose_net_forward.1} parent=0 // loop_footer
    %s19 = sadd.s32 1, %s15
  $region7: #{decompose_net_forward.1} parent=0 // loop_footer_branch
    %14 = sbr.rel target = $region3
  $region8: #{decompose_net_forward.1} parent=0 // loop_exit
    _

</llo_original>
